<compile_context>
chip_gen: v5e
topology: v5e:2x2
jax: 0.10.0
libtpu: 0.0.40
codegen_flags: <defaults>
</compile_context>

<pallas_src>
import jax
import jax.numpy as jnp
from jax.experimental import pallas as pl
from jax.experimental.pallas import tpu as pltpu


# ---------------------------------------------------------------------------
# Kernel: the full encoder->decoder MLP on one batch tile, everything in VMEM.
# ---------------------------------------------------------------------------
def _autoencoder_kernel(x_ref,
                        w1, b1, w2, b2, w3, b3, w4, b4,   # encoder
                        w5, b5, w6, b6, w7, b7, w8, b8,   # decoder
                        o_ref):
    def linear(h_bf16, w_ref, b_ref):
        # bf16 MXU operands, f32 accumulation; bias broadcast / add in f32.
        return jnp.dot(h_bf16, w_ref[...],
                       preferred_element_type=jnp.float32) + b_ref[...]

    def relu_bf16(z_f32):
        # ReLU in f32, then carry the activation in bf16 (halves spill traffic).
        return jnp.maximum(z_f32, 0.0).astype(jnp.bfloat16)

    h = x_ref[...]                        # already bf16 (cast in the wrapper)

    # ---- encoder: Linear -> (Dropout=id) -> ReLU, x4 ----
    h = relu_bf16(linear(h, w1, b1))      # D   -> 512
    h = relu_bf16(linear(h, w2, b2))      # 512 -> 256
    h = relu_bf16(linear(h, w3, b3))      # 256 -> 64  (padded to 128 lanes)
    h = relu_bf16(linear(h, w4, b4))      # 64  -> 32  (padded to 128 lanes)

    # ---- decoder ----
    h = relu_bf16(linear(h, w5, b5))      # 32  -> 64  (padded to 128 lanes)
    h = relu_bf16(linear(h, w6, b6))      # 64  -> 256
    h = relu_bf16(linear(h, w7, b7))      # 256 -> 512
    z = linear(h, w8, b8)                 # 512 -> D   (f32 pre-activation)

    # Sigmoid via a single EUP tanh: sigmoid(z) = 0.5*tanh(0.5*z) + 0.5.
    o_ref[...] = (0.5 * jnp.tanh(0.5 * z) + 0.5).astype(o_ref.dtype)


# ---------------------------------------------------------------------------
# One-time parameter preparation (do this at model init, NOT per forward):
#   * zero-pad internal widths to multiples of 128 lanes (exact transform:
#     padded weight rows/cols and bias entries are zero, ReLU keeps padded
#     activation lanes at exactly 0, so they contribute nothing downstream),
#   * cast weights to bf16 for the MXU (biases stay f32).
# ---------------------------------------------------------------------------
def _round_up(d, m=128):
    return ((d + m - 1) // m) * m


def prepare_params(params):
    n = len(params)
    prepared = []
    for idx, (w, b) in enumerate(params):
        fin, fout = w.shape
        pin = fin if idx == 0 else _round_up(fin)          # keep first layer's D
        pout = fout if idx == n - 1 else _round_up(fout)   # keep last layer's D
        wp = jnp.zeros((pin, pout), jnp.float32).at[:fin, :fout].set(w)
        bp = jnp.zeros((1, pout), jnp.float32).at[:, :fout].set(b)
        prepared.append((wp.astype(jnp.bfloat16), bp))
    return prepared


# ---------------------------------------------------------------------------
# Wrapper.  `prepared` is the output of prepare_params() (cached by the
# caller); x is [B, D] (any float dtype, cast to bf16 here for HBM/DMA savings).
# ---------------------------------------------------------------------------
def vanilla_autoencoder(x, prepared, *, tile_b=256, out_dtype=jnp.bfloat16):
    B, D = x.shape
    assert D % 128 == 0, "feature dim must be lane-dense (multiple of 128)"
    tile_b = min(tile_b, B)
    assert B % tile_b == 0, "batch must be divisible by the batch tile"

    x_bf16 = x.astype(jnp.bfloat16)

    x_spec = pl.BlockSpec((tile_b, D), lambda i: (i, 0))
    out_spec = pl.BlockSpec((tile_b, D), lambda i: (i, 0))

    param_specs = []
    flat_params = []
    for (w, b) in prepared:
        param_specs.append(pl.BlockSpec(w.shape, lambda i: (0, 0)))
        param_specs.append(pl.BlockSpec(b.shape, lambda i: (0, 0)))
        flat_params.append(w)
        flat_params.append(b)

    # Advisory cost estimate for the XLA scheduler (bf16 in / bf16 weights /
    # out_dtype writeback).
    flops = int(2 * B * sum(int(w.shape[0]) * int(w.shape[1]) for (w, _) in prepared))
    transcendentals = int(B * D)  # one tanh per output element
    out_bytes = jnp.dtype(out_dtype).itemsize
    bytes_accessed = int(
        x_bf16.size * 2 + B * D * out_bytes
        + sum(int(w.size) * 2 + int(b.size) * 4 for (w, b) in prepared)
    )
    cost = pl.CostEstimate(flops=flops,
                           transcendentals=transcendentals,
                           bytes_accessed=bytes_accessed)

    kernel = pl.pallas_call(
        _autoencoder_kernel,
        out_shape=jax.ShapeDtypeStruct((B, D), out_dtype),
        grid_spec=pltpu.PrefetchScalarGridSpec(
            num_scalar_prefetch=0,
            grid=(B // tile_b,),
            in_specs=[x_spec] + param_specs,
            out_specs=out_spec,
        ),
        compiler_params=pltpu.CompilerParams(
            dimension_semantics=("parallel",),
        ),
        cost_estimate=cost,
    )
    return kernel(x_bf16, *flat_params)


# ---------------------------------------------------------------------------
# Deterministic parameter init (mimics PyTorch nn.Linear default: U(-k, k),
# k = 1/sqrt(fan_in)).  Weights stored [in, out]; biases stored [1, out].
# ---------------------------------------------------------------------------
def init_params(key, input_shape):
    dims = [
        (input_shape, 512), (512, 256), (256, 64), (64, 32),   # encoder
        (32, 64), (64, 256), (256, 512), (512, input_shape),   # decoder
    ]
    params = []
    for (fan_in, fan_out) in dims:
        key, kw, kb = jax.random.split(key, 3)
        bound = 1.0 / jnp.sqrt(fan_in)
        w = jax.random.uniform(kw, (fan_in, fan_out), jnp.float32, -bound, bound)
        b = jax.random.uniform(kb, (1, fan_out), jnp.float32, -bound, bound)
        params.append((w, b))
    return params


# ---------------------------------------------------------------------------
# Reference (pure JAX) matching the kernel's numerics: bf16 matmul operands,
# f32 accumulation / bias / ReLU, exact sigmoid.
# ---------------------------------------------------------------------------
def reference_forward(x, params):
    h = x.astype(jnp.float32)
    n = len(params)
    for idx, (w, b) in enumerate(params):
        h = jnp.dot(h.astype(jnp.bfloat16), w.astype(jnp.bfloat16),
                    preferred_element_type=jnp.float32) + b
        if idx < n - 1:
            h = jnp.maximum(h, 0.0)
        else:
            h = 1.0 / (1.0 + jnp.exp(-h))
    return h


if __name__ == "__main__":
    INPUT_SHAPE = 256   # feature dimension D of the autoencoder (lane-dense)
    BATCH = 512         # 2 batch tiles of 256 -> both v7x TensorCores active

    key = jax.random.PRNGKey(0)
    key, kx = jax.random.split(key)
    x = jax.random.uniform(kx, (BATCH, INPUT_SHAPE), jnp.float32)

    params = init_params(key, INPUT_SHAPE)
    prepared = prepare_params(params)   # one-time pad + bf16 cast, reused per call

    out = vanilla_autoencoder(x, prepared, tile_b=256, out_dtype=jnp.bfloat16)
    out = jax.block_until_ready(out)

    ref = reference_forward(x, params)
    assert out.shape == (BATCH, INPUT_SHAPE)
    out_f32 = out.astype(jnp.float32)
    assert bool(jnp.all(jnp.isfinite(out_f32)))
    # Loose tolerance: bf16 MXU operands / bf16 activation carry / bf16 output
    # / tanh-based sigmoid vs. the f32 reference.
    assert jnp.allclose(out_f32, ref, atol=1e-2, rtol=1e-2), "mismatch vs reference"

    print("KERNEL_OK")
</pallas_src>

<mosaic_0001>
module attributes {stable_mosaic.version = 11 : i64} {
  func.func @_autoencoder_kernel(%arg0: i32, %arg1: memref<256x256xbf16, #tpu.memory_space<vmem>>, %arg2: memref<256x512xbf16, #tpu.memory_space<vmem>>, %arg3: memref<1x512xf32, #tpu.memory_space<vmem>>, %arg4: memref<512x256xbf16, #tpu.memory_space<vmem>>, %arg5: memref<1x256xf32, #tpu.memory_space<vmem>>, %arg6: memref<256x128xbf16, #tpu.memory_space<vmem>>, %arg7: memref<1x128xf32, #tpu.memory_space<vmem>>, %arg8: memref<128x128xbf16, #tpu.memory_space<vmem>>, %arg9: memref<1x128xf32, #tpu.memory_space<vmem>>, %arg10: memref<128x128xbf16, #tpu.memory_space<vmem>>, %arg11: memref<1x128xf32, #tpu.memory_space<vmem>>, %arg12: memref<128x256xbf16, #tpu.memory_space<vmem>>, %arg13: memref<1x256xf32, #tpu.memory_space<vmem>>, %arg14: memref<256x512xbf16, #tpu.memory_space<vmem>>, %arg15: memref<1x512xf32, #tpu.memory_space<vmem>>, %arg16: memref<512x256xbf16, #tpu.memory_space<vmem>>, %arg17: memref<1x256xf32, #tpu.memory_space<vmem>>, %arg18: memref<256x256xbf16, #tpu.memory_space<vmem>>) attributes {dimension_semantics = [#tpu.dimension_semantics<parallel>], iteration_bounds = array<i64: 2>, scalar_prefetch = 0 : i64, scratch_operands = 0 : i64, tpu.core_type = #tpu.core_type<tc>, window_params = [{transform_indices = @transform_0, window_bounds = array<i64: 256, 256>}, {pipeline_mode = #tpu.pipeline_mode<synchronous>, transform_indices = @transform_1, window_bounds = array<i64: 256, 512>}, {pipeline_mode = #tpu.pipeline_mode<synchronous>, transform_indices = @transform_2, window_bounds = array<i64: 1, 512>}, {pipeline_mode = #tpu.pipeline_mode<synchronous>, transform_indices = @transform_3, window_bounds = array<i64: 512, 256>}, {pipeline_mode = #tpu.pipeline_mode<synchronous>, transform_indices = @transform_4, window_bounds = array<i64: 1, 256>}, {pipeline_mode = #tpu.pipeline_mode<synchronous>, transform_indices = @transform_5, window_bounds = array<i64: 256, 128>}, {pipeline_mode = #tpu.pipeline_mode<synchronous>, transform_indices = @transform_6, window_bounds = array<i64: 1, 128>}, {pipeline_mode = #tpu.pipeline_mode<synchronous>, transform_indices = @transform_7, window_bounds = array<i64: 128, 128>}, {pipeline_mode = #tpu.pipeline_mode<synchronous>, transform_indices = @transform_8, window_bounds = array<i64: 1, 128>}, {pipeline_mode = #tpu.pipeline_mode<synchronous>, transform_indices = @transform_9, window_bounds = array<i64: 128, 128>}, {pipeline_mode = #tpu.pipeline_mode<synchronous>, transform_indices = @transform_10, window_bounds = array<i64: 1, 128>}, {pipeline_mode = #tpu.pipeline_mode<synchronous>, transform_indices = @transform_11, window_bounds = array<i64: 128, 256>}, {pipeline_mode = #tpu.pipeline_mode<synchronous>, transform_indices = @transform_12, window_bounds = array<i64: 1, 256>}, {pipeline_mode = #tpu.pipeline_mode<synchronous>, transform_indices = @transform_13, window_bounds = array<i64: 256, 512>}, {pipeline_mode = #tpu.pipeline_mode<synchronous>, transform_indices = @transform_14, window_bounds = array<i64: 1, 512>}, {pipeline_mode = #tpu.pipeline_mode<synchronous>, transform_indices = @transform_15, window_bounds = array<i64: 512, 256>}, {pipeline_mode = #tpu.pipeline_mode<synchronous>, transform_indices = @transform_16, window_bounds = array<i64: 1, 256>}, {transform_indices = @transform_17, window_bounds = array<i64: 256, 256>}]} {
    %c0 = arith.constant 0 : index
    %c0_0 = arith.constant 0 : index
    %0 = vector.load %arg1[%c0, %c0_0] : memref<256x256xbf16, #tpu.memory_space<vmem>>, vector<256x256xbf16>
    %c0_1 = arith.constant 0 : index
    %c0_2 = arith.constant 0 : index
    %1 = vector.load %arg2[%c0_1, %c0_2] : memref<256x512xbf16, #tpu.memory_space<vmem>>, vector<256x512xbf16>
    %cst = arith.constant dense<0.000000e+00> : vector<256x512xf32>
    %2 = tpu.matmul %0, %1, %cst {dimension_numbers = #tpu.dot_dimension_numbers<[1], [0], [0], [1], [0, 0, 1, 1], [], []>} : vector<256x256xbf16>, vector<256x512xbf16>, vector<256x512xf32> -> vector<256x512xf32>
    %c0_3 = arith.constant 0 : index
    %c0_4 = arith.constant 0 : index
    %3 = vector.load %arg3[%c0_3, %c0_4] : memref<1x512xf32, #tpu.memory_space<vmem>>, vector<1x512xf32>
    %4 = vector.broadcast %3 : vector<1x512xf32> to vector<256x512xf32>
    %5 = arith.addf %2, %4 : vector<256x512xf32>
    %cst_5 = arith.constant 0.000000e+00 : f32
    %6 = vector.broadcast %cst_5 : f32 to vector<256x512xf32>
    %7 = arith.maximumf %5, %6 : vector<256x512xf32>
    %8 = arith.truncf %7 : vector<256x512xf32> to vector<256x512xbf16>
    %c0_6 = arith.constant 0 : index
    %c0_7 = arith.constant 0 : index
    %9 = vector.load %arg4[%c0_6, %c0_7] : memref<512x256xbf16, #tpu.memory_space<vmem>>, vector<512x256xbf16>
    %cst_8 = arith.constant dense<0.000000e+00> : vector<256x256xf32>
    %10 = tpu.matmul %8, %9, %cst_8 {dimension_numbers = #tpu.dot_dimension_numbers<[1], [0], [0], [1], [0, 0, 1, 1], [], []>} : vector<256x512xbf16>, vector<512x256xbf16>, vector<256x256xf32> -> vector<256x256xf32>
    %c0_9 = arith.constant 0 : index
    %c0_10 = arith.constant 0 : index
    %11 = vector.load %arg5[%c0_9, %c0_10] : memref<1x256xf32, #tpu.memory_space<vmem>>, vector<1x256xf32>
    %12 = vector.broadcast %11 : vector<1x256xf32> to vector<256x256xf32>
    %13 = arith.addf %10, %12 : vector<256x256xf32>
    %cst_11 = arith.constant 0.000000e+00 : f32
    %14 = vector.broadcast %cst_11 : f32 to vector<256x256xf32>
    %15 = arith.maximumf %13, %14 : vector<256x256xf32>
    %16 = arith.truncf %15 : vector<256x256xf32> to vector<256x256xbf16>
    %c0_12 = arith.constant 0 : index
    %c0_13 = arith.constant 0 : index
    %17 = vector.load %arg6[%c0_12, %c0_13] : memref<256x128xbf16, #tpu.memory_space<vmem>>, vector<256x128xbf16>
    %cst_14 = arith.constant dense<0.000000e+00> : vector<256x128xf32>
    %18 = tpu.matmul %16, %17, %cst_14 {dimension_numbers = #tpu.dot_dimension_numbers<[1], [0], [0], [1], [0, 0, 1, 1], [], []>} : vector<256x256xbf16>, vector<256x128xbf16>, vector<256x128xf32> -> vector<256x128xf32>
    %c0_15 = arith.constant 0 : index
    %c0_16 = arith.constant 0 : index
    %19 = vector.load %arg7[%c0_15, %c0_16] : memref<1x128xf32, #tpu.memory_space<vmem>>, vector<1x128xf32>
    %20 = vector.broadcast %19 : vector<1x128xf32> to vector<256x128xf32>
    %21 = arith.addf %18, %20 : vector<256x128xf32>
    %cst_17 = arith.constant 0.000000e+00 : f32
    %22 = vector.broadcast %cst_17 : f32 to vector<256x128xf32>
    %23 = arith.maximumf %21, %22 : vector<256x128xf32>
    %24 = arith.truncf %23 : vector<256x128xf32> to vector<256x128xbf16>
    %c0_18 = arith.constant 0 : index
    %c0_19 = arith.constant 0 : index
    %25 = vector.load %arg8[%c0_18, %c0_19] : memref<128x128xbf16, #tpu.memory_space<vmem>>, vector<128x128xbf16>
    %cst_20 = arith.constant dense<0.000000e+00> : vector<256x128xf32>
    %26 = tpu.matmul %24, %25, %cst_20 {dimension_numbers = #tpu.dot_dimension_numbers<[1], [0], [0], [1], [0, 0, 1, 1], [], []>} : vector<256x128xbf16>, vector<128x128xbf16>, vector<256x128xf32> -> vector<256x128xf32>
    %c0_21 = arith.constant 0 : index
    %c0_22 = arith.constant 0 : index
    %27 = vector.load %arg9[%c0_21, %c0_22] : memref<1x128xf32, #tpu.memory_space<vmem>>, vector<1x128xf32>
    %28 = vector.broadcast %27 : vector<1x128xf32> to vector<256x128xf32>
    %29 = arith.addf %26, %28 : vector<256x128xf32>
    %cst_23 = arith.constant 0.000000e+00 : f32
    %30 = vector.broadcast %cst_23 : f32 to vector<256x128xf32>
    %31 = arith.maximumf %29, %30 : vector<256x128xf32>
    %32 = arith.truncf %31 : vector<256x128xf32> to vector<256x128xbf16>
    %c0_24 = arith.constant 0 : index
    %c0_25 = arith.constant 0 : index
    %33 = vector.load %arg10[%c0_24, %c0_25] : memref<128x128xbf16, #tpu.memory_space<vmem>>, vector<128x128xbf16>
    %cst_26 = arith.constant dense<0.000000e+00> : vector<256x128xf32>
    %34 = tpu.matmul %32, %33, %cst_26 {dimension_numbers = #tpu.dot_dimension_numbers<[1], [0], [0], [1], [0, 0, 1, 1], [], []>} : vector<256x128xbf16>, vector<128x128xbf16>, vector<256x128xf32> -> vector<256x128xf32>
    %c0_27 = arith.constant 0 : index
    %c0_28 = arith.constant 0 : index
    %35 = vector.load %arg11[%c0_27, %c0_28] : memref<1x128xf32, #tpu.memory_space<vmem>>, vector<1x128xf32>
    %36 = vector.broadcast %35 : vector<1x128xf32> to vector<256x128xf32>
    %37 = arith.addf %34, %36 : vector<256x128xf32>
    %cst_29 = arith.constant 0.000000e+00 : f32
    %38 = vector.broadcast %cst_29 : f32 to vector<256x128xf32>
    %39 = arith.maximumf %37, %38 : vector<256x128xf32>
    %40 = arith.truncf %39 : vector<256x128xf32> to vector<256x128xbf16>
    %c0_30 = arith.constant 0 : index
    %c0_31 = arith.constant 0 : index
    %41 = vector.load %arg12[%c0_30, %c0_31] : memref<128x256xbf16, #tpu.memory_space<vmem>>, vector<128x256xbf16>
    %cst_32 = arith.constant dense<0.000000e+00> : vector<256x256xf32>
    %42 = tpu.matmul %40, %41, %cst_32 {dimension_numbers = #tpu.dot_dimension_numbers<[1], [0], [0], [1], [0, 0, 1, 1], [], []>} : vector<256x128xbf16>, vector<128x256xbf16>, vector<256x256xf32> -> vector<256x256xf32>
    %c0_33 = arith.constant 0 : index
    %c0_34 = arith.constant 0 : index
    %43 = vector.load %arg13[%c0_33, %c0_34] : memref<1x256xf32, #tpu.memory_space<vmem>>, vector<1x256xf32>
    %44 = vector.broadcast %43 : vector<1x256xf32> to vector<256x256xf32>
    %45 = arith.addf %42, %44 : vector<256x256xf32>
    %cst_35 = arith.constant 0.000000e+00 : f32
    %46 = vector.broadcast %cst_35 : f32 to vector<256x256xf32>
    %47 = arith.maximumf %45, %46 : vector<256x256xf32>
    %48 = arith.truncf %47 : vector<256x256xf32> to vector<256x256xbf16>
    %c0_36 = arith.constant 0 : index
    %c0_37 = arith.constant 0 : index
    %49 = vector.load %arg14[%c0_36, %c0_37] : memref<256x512xbf16, #tpu.memory_space<vmem>>, vector<256x512xbf16>
    %cst_38 = arith.constant dense<0.000000e+00> : vector<256x512xf32>
    %50 = tpu.matmul %48, %49, %cst_38 {dimension_numbers = #tpu.dot_dimension_numbers<[1], [0], [0], [1], [0, 0, 1, 1], [], []>} : vector<256x256xbf16>, vector<256x512xbf16>, vector<256x512xf32> -> vector<256x512xf32>
    %c0_39 = arith.constant 0 : index
    %c0_40 = arith.constant 0 : index
    %51 = vector.load %arg15[%c0_39, %c0_40] : memref<1x512xf32, #tpu.memory_space<vmem>>, vector<1x512xf32>
    %52 = vector.broadcast %51 : vector<1x512xf32> to vector<256x512xf32>
    %53 = arith.addf %50, %52 : vector<256x512xf32>
    %cst_41 = arith.constant 0.000000e+00 : f32
    %54 = vector.broadcast %cst_41 : f32 to vector<256x512xf32>
    %55 = arith.maximumf %53, %54 : vector<256x512xf32>
    %56 = arith.truncf %55 : vector<256x512xf32> to vector<256x512xbf16>
    %c0_42 = arith.constant 0 : index
    %c0_43 = arith.constant 0 : index
    %57 = vector.load %arg16[%c0_42, %c0_43] : memref<512x256xbf16, #tpu.memory_space<vmem>>, vector<512x256xbf16>
    %cst_44 = arith.constant dense<0.000000e+00> : vector<256x256xf32>
    %58 = tpu.matmul %56, %57, %cst_44 {dimension_numbers = #tpu.dot_dimension_numbers<[1], [0], [0], [1], [0, 0, 1, 1], [], []>} : vector<256x512xbf16>, vector<512x256xbf16>, vector<256x256xf32> -> vector<256x256xf32>
    %c0_45 = arith.constant 0 : index
    %c0_46 = arith.constant 0 : index
    %59 = vector.load %arg17[%c0_45, %c0_46] : memref<1x256xf32, #tpu.memory_space<vmem>>, vector<1x256xf32>
    %60 = vector.broadcast %59 : vector<1x256xf32> to vector<256x256xf32>
    %61 = arith.addf %58, %60 : vector<256x256xf32>
    %cst_47 = arith.constant 5.000000e-01 : f32
    %62 = vector.broadcast %cst_47 : f32 to vector<256x256xf32>
    %63 = arith.mulf %62, %61 : vector<256x256xf32>
    %64 = math.tanh %63 : vector<256x256xf32>
    %cst_48 = arith.constant 5.000000e-01 : f32
    %65 = vector.broadcast %cst_48 : f32 to vector<256x256xf32>
    %66 = arith.mulf %65, %64 : vector<256x256xf32>
    %cst_49 = arith.constant 5.000000e-01 : f32
    %67 = vector.broadcast %cst_49 : f32 to vector<256x256xf32>
    %68 = arith.addf %66, %67 : vector<256x256xf32>
    %69 = arith.truncf %68 : vector<256x256xf32> to vector<256x256xbf16>
    %c0_50 = arith.constant 0 : index
    %c0_51 = arith.constant 0 : index
    %70 = vector.load %arg18[%c0_50, %c0_51] : memref<256x256xbf16, #tpu.memory_space<vmem>>, vector<256x256xbf16>
    tpu.vector_store %arg18[%c0_50, %c0_51], %69 {strides = array<i32>} : memref<256x256xbf16, #tpu.memory_space<vmem>>, vector<256x256xbf16>,
    return
  }
  func.func @transform_0(%arg0: i32) -> (i32, i32) {
    %c0_i32 = arith.constant 0 : i32
    %c0_i32_0 = arith.constant 0 : i32
    return %arg0, %c0_i32 : i32, i32
  }
  func.func @transform_1(%arg0: i32) -> (i32, i32) {
    %c0_i32 = arith.constant 0 : i32
    %c0_i32_0 = arith.constant 0 : i32
    %c0_i32_1 = arith.constant 0 : i32
    return %c0_i32, %c0_i32_0 : i32, i32
  }
  func.func @transform_2(%arg0: i32) -> (i32, i32) {
    %c0_i32 = arith.constant 0 : i32
    %c0_i32_0 = arith.constant 0 : i32
    %c0_i32_1 = arith.constant 0 : i32
    return %c0_i32, %c0_i32_0 : i32, i32
  }
  func.func @transform_3(%arg0: i32) -> (i32, i32) {
    %c0_i32 = arith.constant 0 : i32
    %c0_i32_0 = arith.constant 0 : i32
    %c0_i32_1 = arith.constant 0 : i32
    return %c0_i32, %c0_i32_0 : i32, i32
  }
  func.func @transform_4(%arg0: i32) -> (i32, i32) {
    %c0_i32 = arith.constant 0 : i32
    %c0_i32_0 = arith.constant 0 : i32
    %c0_i32_1 = arith.constant 0 : i32
    return %c0_i32, %c0_i32_0 : i32, i32
  }
  func.func @transform_5(%arg0: i32) -> (i32, i32) {
    %c0_i32 = arith.constant 0 : i32
    %c0_i32_0 = arith.constant 0 : i32
    %c0_i32_1 = arith.constant 0 : i32
    return %c0_i32, %c0_i32_0 : i32, i32
  }
  func.func @transform_6(%arg0: i32) -> (i32, i32) {
    %c0_i32 = arith.constant 0 : i32
    %c0_i32_0 = arith.constant 0 : i32
    %c0_i32_1 = arith.constant 0 : i32
    return %c0_i32, %c0_i32_0 : i32, i32
  }
  func.func @transform_7(%arg0: i32) -> (i32, i32) {
    %c0_i32 = arith.constant 0 : i32
    %c0_i32_0 = arith.constant 0 : i32
    %c0_i32_1 = arith.constant 0 : i32
    return %c0_i32, %c0_i32_0 : i32, i32
  }
  func.func @transform_8(%arg0: i32) -> (i32, i32) {
    %c0_i32 = arith.constant 0 : i32
    %c0_i32_0 = arith.constant 0 : i32
    %c0_i32_1 = arith.constant 0 : i32
    return %c0_i32, %c0_i32_0 : i32, i32
  }
  func.func @transform_9(%arg0: i32) -> (i32, i32) {
    %c0_i32 = arith.constant 0 : i32
    %c0_i32_0 = arith.constant 0 : i32
    %c0_i32_1 = arith.constant 0 : i32
    return %c0_i32, %c0_i32_0 : i32, i32
  }
  func.func @transform_10(%arg0: i32) -> (i32, i32) {
    %c0_i32 = arith.constant 0 : i32
    %c0_i32_0 = arith.constant 0 : i32
    %c0_i32_1 = arith.constant 0 : i32
    return %c0_i32, %c0_i32_0 : i32, i32
  }
  func.func @transform_11(%arg0: i32) -> (i32, i32) {
    %c0_i32 = arith.constant 0 : i32
    %c0_i32_0 = arith.constant 0 : i32
    %c0_i32_1 = arith.constant 0 : i32
    return %c0_i32, %c0_i32_0 : i32, i32
  }
  func.func @transform_12(%arg0: i32) -> (i32, i32) {
    %c0_i32 = arith.constant 0 : i32
    %c0_i32_0 = arith.constant 0 : i32
    %c0_i32_1 = arith.constant 0 : i32
    return %c0_i32, %c0_i32_0 : i32, i32
  }
  func.func @transform_13(%arg0: i32) -> (i32, i32) {
    %c0_i32 = arith.constant 0 : i32
    %c0_i32_0 = arith.constant 0 : i32
    %c0_i32_1 = arith.constant 0 : i32
    return %c0_i32, %c0_i32_0 : i32, i32
  }
  func.func @transform_14(%arg0: i32) -> (i32, i32) {
    %c0_i32 = arith.constant 0 : i32
    %c0_i32_0 = arith.constant 0 : i32
    %c0_i32_1 = arith.constant 0 : i32
    return %c0_i32, %c0_i32_0 : i32, i32
  }
  func.func @transform_15(%arg0: i32) -> (i32, i32) {
    %c0_i32 = arith.constant 0 : i32
    %c0_i32_0 = arith.constant 0 : i32
    %c0_i32_1 = arith.constant 0 : i32
    return %c0_i32, %c0_i32_0 : i32, i32
  }
  func.func @transform_16(%arg0: i32) -> (i32, i32) {
    %c0_i32 = arith.constant 0 : i32
    %c0_i32_0 = arith.constant 0 : i32
    %c0_i32_1 = arith.constant 0 : i32
    return %c0_i32, %c0_i32_0 : i32, i32
  }
  func.func @transform_17(%arg0: i32) -> (i32, i32) {
    %c0_i32 = arith.constant 0 : i32
    %c0_i32_0 = arith.constant 0 : i32
    return %arg0, %c0_i32 : i32, i32
  }
}

</mosaic_0001>

<llo_original>
// kernel: tpu_custom_call.1
$region0: #{tpu_custom_call.1}
  #allocation0 [shape = 'u32[]', space=smem, size = 0x4, offset = 0x4, fixed_abs, tag = 'smem constant byte address 0x4 - core index']
  #allocation1 [shape = 'u32[72,128]{1,0:T(1,128)}', space=vmem, size = 0x9000, scoped, tag = 'internal scratch']
  %s0 = inlined_call_operand.hbm [shape: bf16[512,256], index: 0, kind: input, shape index: {}]
  %s1 = inlined_call_operand.hbm [shape: bf16[256,512], index: 1, kind: input, shape index: {}]
  %s2 = inlined_call_operand.hbm [shape: f32[1,512], index: 2, kind: input, shape index: {}]
  %s3 = inlined_call_operand.hbm [shape: bf16[512,256], index: 3, kind: input, shape index: {}]
  %s4 = inlined_call_operand.vmem [shape: f32[1,256], index: 4, kind: input, shape index: {}]
  %s5 = inlined_call_operand.hbm [shape: bf16[256,128], index: 5, kind: input, shape index: {}]
  %s6 = inlined_call_operand.hbm [shape: f32[1,128], index: 6, kind: input, shape index: {}]
  %s7 = inlined_call_operand.hbm [shape: bf16[128,128], index: 7, kind: input, shape index: {}]
  %s8 = inlined_call_operand.hbm [shape: f32[1,128], index: 8, kind: input, shape index: {}]
  %s9 = inlined_call_operand.hbm [shape: bf16[128,128], index: 9, kind: input, shape index: {}]
  %s10 = inlined_call_operand.hbm [shape: f32[1,128], index: 10, kind: input, shape index: {}]
  %s11 = inlined_call_operand.hbm [shape: bf16[128,256], index: 11, kind: input, shape index: {}]
  %s12 = inlined_call_operand.vmem [shape: f32[1,256], index: 12, kind: input, shape index: {}]
  %s13 = inlined_call_operand.hbm [shape: bf16[256,512], index: 13, kind: input, shape index: {}]
  %s14 = inlined_call_operand.vmem [shape: f32[1,512], index: 14, kind: input, shape index: {}]
  %s15 = inlined_call_operand.hbm [shape: bf16[512,256], index: 15, kind: input, shape index: {}]
  %s16 = inlined_call_operand.vmem [shape: f32[1,256], index: 16, kind: input, shape index: {}]
  %s17 = inlined_call_operand.hbm [shape: bf16[512,256], index: 17, kind: output, shape index: {}]
  %s18 = sld [smem:[#allocation0]]
  $region153: #{tpu_custom_call.1} parent=0
    _
  %s20 = ssub.s32 1, %s18
  %s21 = scalar_select 0, %s20, %s18
  $region1: #{tpu_custom_call.1} parent=0
    #allocation2 [shape = 'u8[262144]{0}', space=vmem, size = 0x40000, scoped, tag = 'input window, operand 0']
    #allocation3 [shape = 's32[2]{0}', space=sflag, size = 0x8, scoped, tag = 'scoped memory for tpu_custom_call.1']
    #allocation4 [shape = 's32[2]{0}', space=sflag, size = 0x8, scoped, tag = 'scoped memory for tpu_custom_call.1']
    #allocation5 [shape = 'u8[262144]{0}', space=vmem, size = 0x40000, scoped, tag = 'input window, operand 1, single buffered']
    #allocation6 [shape = 's32[1]{0}', space=sflag, size = 0x4, scoped, tag = 'scoped memory for tpu_custom_call.1']
    #allocation7 [shape = 'u8[2048]{0}', space=vmem, size = 0x800, scoped, tag = 'input window, operand 2, single buffered']
    #allocation8 [shape = 'u8[262144]{0}', space=vmem, size = 0x40000, scoped, tag = 'input window, operand 3, single buffered']
    #allocation9 [shape = 's32[1]{0}', space=sflag, size = 0x4, scoped, tag = 'scoped memory for tpu_custom_call.1']
    #allocation10 [shape = 'u8[65536]{0}', space=vmem, size = 0x10000, scoped, tag = 'input window, operand 5, single buffered']
    #allocation11 [shape = 'u8[512]{0}', space=vmem, size = 0x400, scoped, tag = 'input window, operand 6, single buffered']
    #allocation12 [shape = 's32[1]{0}', space=sflag, size = 0x4, scoped, tag = 'scoped memory for tpu_custom_call.1']
    #allocation13 [shape = 'u8[32768]{0}', space=vmem, size = 0x8000, scoped, tag = 'input window, operand 7, single buffered']
    #allocation14 [shape = 'u8[512]{0}', space=vmem, size = 0x400, scoped, tag = 'input window, operand 8, single buffered']
    #allocation15 [shape = 's32[1]{0}', space=sflag, size = 0x4, scoped, tag = 'scoped memory for tpu_custom_call.1']
    #allocation16 [shape = 'u8[32768]{0}', space=vmem, size = 0x8000, scoped, tag = 'input window, operand 9, single buffered']
    #allocation17 [shape = 'u8[512]{0}', space=vmem, size = 0x400, scoped, tag = 'input window, operand 10, single buffered']
    #allocation18 [shape = 's32[1]{0}', space=sflag, size = 0x4, scoped, tag = 'scoped memory for tpu_custom_call.1']
    #allocation19 [shape = 'u8[65536]{0}', space=vmem, size = 0x10000, scoped, tag = 'input window, operand 11, single buffered']
    #allocation20 [shape = 'u8[262144]{0}', space=vmem, size = 0x40000, scoped, tag = 'input window, operand 13, single buffered']
    #allocation21 [shape = 's32[1]{0}', space=sflag, size = 0x4, scoped, tag = 'scoped memory for tpu_custom_call.1']
    #allocation22 [shape = 'u8[262144]{0}', space=vmem, size = 0x40000, scoped, tag = 'input window, operand 15, single buffered']
    #allocation23 [shape = 'u8[262144]{0}', space=vmem, size = 0x40000, scoped, tag = 'output window, operand 0']
    %22 = vsyncpa [#allocation3], 0
    %s23 = scalar_lea.sflag [#allocation3], 1
    %24 = vsyncpa %s23, 0
    %25 = vsyncpa [#allocation6], 0
    %26 = vsyncpa [#allocation9], 0
    %27 = vsyncpa [#allocation12], 0
    %28 = vsyncpa [#allocation15], 0
    %29 = vsyncpa [#allocation18], 0
    %30 = vsyncpa [#allocation21], 0
    %31 = vsyncpa [#allocation4], 0
    %s32 = scalar_lea.sflag [#allocation4], 1
    %33 = vsyncpa %s32, 0
    loop: start=0, step=1, limit=4
    $region2: #{tpu_custom_call.1} parent=1 // loop_pre_header
      _
    $region3: #{tpu_custom_call.1} parent=1 // loop_header
      %s35 = sphi 0, %s39
      %p36 = scmp.ge.s32.totalorder %s35, 4
      %s45 = sphi 0, %s47
      %s48 = sphi 0, %s45
      %s49 = sphi 0, %s48
      %s65 = sphi 0, %s49
      %s69 = sphi 0, %s69
      %s71 = sphi 0, %s69
      %s72 = sphi 0, %s71
      %s86 = sphi 0, %s72
      %s90 = sphi 0, %s90
      %s92 = sphi 0, %s90
      %s93 = sphi 0, %s92
      %s107 = sphi 0, %s93
      %s111 = sphi 0, %s111
      %s113 = sphi 0, %s111
      %s114 = sphi 0, %s113
      %s128 = sphi 0, %s114
      %s132 = sphi 0, %s132
      %s134 = sphi 0, %s132
      %s135 = sphi 0, %s134
      %s149 = sphi 0, %s135
      %s153 = sphi 0, %s153
      %s155 = sphi 0, %s153
      %s156 = sphi 0, %s155
      %s170 = sphi 0, %s156
      %s174 = sphi 0, %s174
      %s176 = sphi 0, %s174
      %s177 = sphi 0, %s176
      %s191 = sphi 0, %s177
      %s195 = sphi 0, %s195
      %s197 = sphi 0, %s195
      %s198 = sphi 0, %s197
      %s212 = sphi 0, %s198
      %s216 = sphi 0, %s216
      %s218 = sphi 0, %s216
      %s219 = sphi 0, %s218
      %s233 = sphi 0, %s219
      %s237 = sphi 0, %s237
      %s239 = sphi 0, %s237
      %s240 = sphi 0, %s239
      %s254 = sphi 0, %s240
      %s258 = sphi 0, %s258
      %s260 = sphi 0, %s258
      %s261 = sphi 0, %s260
      %s275 = sphi 0, %s261
      %s279 = sphi 0, %s279
      %s281 = sphi 0, %s279
      %s282 = sphi 0, %s281
      %s296 = sphi 0, %s282
      %s300 = sphi 0, %s300
      %s302 = sphi 0, %s300
      %s303 = sphi 0, %s302
      %s317 = sphi 0, %s303
      %s321 = sphi 0, %s321
      %s323 = sphi 0, %s321
      %s324 = sphi 0, %s323
      %s338 = sphi 0, %s324
      %s342 = sphi 0, %s342
      %s344 = sphi 0, %s342
      %s345 = sphi 0, %s344
      %s359 = sphi 0, %s345
      %s363 = sphi 0, %s363
      %s365 = sphi 0, %s363
      %s366 = sphi 0, %s365
      %s380 = sphi 0, %s366
      %s384 = sphi 0, %s384
      %s386 = sphi 0, %s384
      %s387 = sphi 0, %s386
      %s401 = sphi 0, %s387
      %s407 = sphi 0, %s409
      %s410 = sphi 0, %s407
      %s411 = sphi 0, %s410
      %s427 = sphi 0, %s411
    $region4: #{tpu_custom_call.1} parent=1 // loop_header_branch
      %38 = sbr.rel (%p36) target = $region8
    $region5: #{tpu_custom_call.1} parent=1 // loop_body
      %s40 = ssub.s32 %s35, 1
      %s41 = ssub.s32 %s35, 2
      %s42 = sadd.s32 %s35, 1
      %s43 = ssub.s32 %s35, %s42
      %p44 = scmp.eq.s32.totalorder %s43, 0
      %s46 = sadd.s32 %s45, 1
      %s47 = scalar_select %p44, %s45, %s46
      %p50 = pneg %p44
      %p51 = scmp.eq.s32.totalorder %s35, 1
      %p52 = por %p50, %p51
      %p53 = scmp.ne.s32.totalorder %s45, %s48
      %p54 = scmp.eq.s32.totalorder %s35, 0
      %p55 = por %p53, %p54
      %p56 = scmp.ne.s32.totalorder %s45, %s48
      %p57 = scmp.eq.s32.totalorder %s40, 1
      %p58 = por %p56, %p57
      %p59 = scmp.ne.s32.totalorder %s48, %s49
      %p60 = scmp.eq.s32.totalorder %s40, 0
      %p61 = por %p59, %p60
      %p62 = scmp.ne.s32.totalorder %s48, %s49
      %p63 = scmp.eq.s32.totalorder %s41, 1
      %p64 = por %p62, %p63
      %p66 = scmp.ne.s32.totalorder %s49, %s65
      %p67 = scmp.eq.s32.totalorder %s41, 0
      %p68 = por %p66, %p67
      %s70 = sadd.s32 %s69, 1
      %p73 = scmp.eq.s32.totalorder %s35, 1
      %p74 = scmp.ne.s32.totalorder %s69, %s71
      %p75 = scmp.eq.s32.totalorder %s35, 0
      %p76 = por %p74, %p75
      %p77 = scmp.ne.s32.totalorder %s69, %s71
      %p78 = scmp.eq.s32.totalorder %s40, 1
      %p79 = por %p77, %p78
      %p80 = scmp.ne.s32.totalorder %s71, %s72
      %p81 = scmp.eq.s32.totalorder %s40, 0
      %p82 = por %p80, %p81
      %p83 = scmp.ne.s32.totalorder %s71, %s72
      %p84 = scmp.eq.s32.totalorder %s41, 1
      %p85 = por %p83, %p84
      %p87 = scmp.ne.s32.totalorder %s72, %s86
      %p88 = scmp.eq.s32.totalorder %s41, 0
      %p89 = por %p87, %p88
      %s91 = sadd.s32 %s90, 1
      %p94 = scmp.eq.s32.totalorder %s35, 1
      %p95 = scmp.ne.s32.totalorder %s90, %s92
      %p96 = scmp.eq.s32.totalorder %s35, 0
      %p97 = por %p95, %p96
      %p98 = scmp.ne.s32.totalorder %s90, %s92
      %p99 = scmp.eq.s32.totalorder %s40, 1
      %p100 = por %p98, %p99
      %p101 = scmp.ne.s32.totalorder %s92, %s93
      %p102 = scmp.eq.s32.totalorder %s40, 0
      %p103 = por %p101, %p102
      %p104 = scmp.ne.s32.totalorder %s92, %s93
      %p105 = scmp.eq.s32.totalorder %s41, 1
      %p106 = por %p104, %p105
      %p108 = scmp.ne.s32.totalorder %s93, %s107
      %p109 = scmp.eq.s32.totalorder %s41, 0
      %p110 = por %p108, %p109
      %s112 = sadd.s32 %s111, 1
      %p115 = scmp.eq.s32.totalorder %s35, 1
      %p116 = scmp.ne.s32.totalorder %s111, %s113
      %p117 = scmp.eq.s32.totalorder %s35, 0
      %p118 = por %p116, %p117
      %p119 = scmp.ne.s32.totalorder %s111, %s113
      %p120 = scmp.eq.s32.totalorder %s40, 1
      %p121 = por %p119, %p120
      %p122 = scmp.ne.s32.totalorder %s113, %s114
      %p123 = scmp.eq.s32.totalorder %s40, 0
      %p124 = por %p122, %p123
      %p125 = scmp.ne.s32.totalorder %s113, %s114
      %p126 = scmp.eq.s32.totalorder %s41, 1
      %p127 = por %p125, %p126
      %p129 = scmp.ne.s32.totalorder %s114, %s128
      %p130 = scmp.eq.s32.totalorder %s41, 0
      %p131 = por %p129, %p130
      %s133 = sadd.s32 %s132, 1
      %p136 = scmp.eq.s32.totalorder %s35, 1
      %p137 = scmp.ne.s32.totalorder %s132, %s134
      %p138 = scmp.eq.s32.totalorder %s35, 0
      %p139 = por %p137, %p138
      %p140 = scmp.ne.s32.totalorder %s132, %s134
      %p141 = scmp.eq.s32.totalorder %s40, 1
      %p142 = por %p140, %p141
      %p143 = scmp.ne.s32.totalorder %s134, %s135
      %p144 = scmp.eq.s32.totalorder %s40, 0
      %p145 = por %p143, %p144
      %p146 = scmp.ne.s32.totalorder %s134, %s135
      %p147 = scmp.eq.s32.totalorder %s41, 1
      %p148 = por %p146, %p147
      %p150 = scmp.ne.s32.totalorder %s135, %s149
      %p151 = scmp.eq.s32.totalorder %s41, 0
      %p152 = por %p150, %p151
      %s154 = sadd.s32 %s153, 1
      %p157 = scmp.eq.s32.totalorder %s35, 1
      %p158 = scmp.ne.s32.totalorder %s153, %s155
      %p159 = scmp.eq.s32.totalorder %s35, 0
      %p160 = por %p158, %p159
      %p161 = scmp.ne.s32.totalorder %s153, %s155
      %p162 = scmp.eq.s32.totalorder %s40, 1
      %p163 = por %p161, %p162
      %p164 = scmp.ne.s32.totalorder %s155, %s156
      %p165 = scmp.eq.s32.totalorder %s40, 0
      %p166 = por %p164, %p165
      %p167 = scmp.ne.s32.totalorder %s155, %s156
      %p168 = scmp.eq.s32.totalorder %s41, 1
      %p169 = por %p167, %p168
      %p171 = scmp.ne.s32.totalorder %s156, %s170
      %p172 = scmp.eq.s32.totalorder %s41, 0
      %p173 = por %p171, %p172
      %s175 = sadd.s32 %s174, 1
      %p178 = scmp.eq.s32.totalorder %s35, 1
      %p179 = scmp.ne.s32.totalorder %s174, %s176
      %p180 = scmp.eq.s32.totalorder %s35, 0
      %p181 = por %p179, %p180
      %p182 = scmp.ne.s32.totalorder %s174, %s176
      %p183 = scmp.eq.s32.totalorder %s40, 1
      %p184 = por %p182, %p183
      %p185 = scmp.ne.s32.totalorder %s176, %s177
      %p186 = scmp.eq.s32.totalorder %s40, 0
      %p187 = por %p185, %p186
      %p188 = scmp.ne.s32.totalorder %s176, %s177
      %p189 = scmp.eq.s32.totalorder %s41, 1
      %p190 = por %p188, %p189
      %p192 = scmp.ne.s32.totalorder %s177, %s191
      %p193 = scmp.eq.s32.totalorder %s41, 0
      %p194 = por %p192, %p193
      %s196 = sadd.s32 %s195, 1
      %p199 = scmp.eq.s32.totalorder %s35, 1
      %p200 = scmp.ne.s32.totalorder %s195, %s197
      %p201 = scmp.eq.s32.totalorder %s35, 0
      %p202 = por %p200, %p201
      %p203 = scmp.ne.s32.totalorder %s195, %s197
      %p204 = scmp.eq.s32.totalorder %s40, 1
      %p205 = por %p203, %p204
      %p206 = scmp.ne.s32.totalorder %s197, %s198
      %p207 = scmp.eq.s32.totalorder %s40, 0
      %p208 = por %p206, %p207
      %p209 = scmp.ne.s32.totalorder %s197, %s198
      %p210 = scmp.eq.s32.totalorder %s41, 1
      %p211 = por %p209, %p210
      %p213 = scmp.ne.s32.totalorder %s198, %s212
      %p214 = scmp.eq.s32.totalorder %s41, 0
      %p215 = por %p213, %p214
      %s217 = sadd.s32 %s216, 1
      %p220 = scmp.eq.s32.totalorder %s35, 1
      %p221 = scmp.ne.s32.totalorder %s216, %s218
      %p222 = scmp.eq.s32.totalorder %s35, 0
      %p223 = por %p221, %p222
      %p224 = scmp.ne.s32.totalorder %s216, %s218
      %p225 = scmp.eq.s32.totalorder %s40, 1
      %p226 = por %p224, %p225
      %p227 = scmp.ne.s32.totalorder %s218, %s219
      %p228 = scmp.eq.s32.totalorder %s40, 0
      %p229 = por %p227, %p228
      %p230 = scmp.ne.s32.totalorder %s218, %s219
      %p231 = scmp.eq.s32.totalorder %s41, 1
      %p232 = por %p230, %p231
      %p234 = scmp.ne.s32.totalorder %s219, %s233
      %p235 = scmp.eq.s32.totalorder %s41, 0
      %p236 = por %p234, %p235
      %s238 = sadd.s32 %s237, 1
      %p241 = scmp.eq.s32.totalorder %s35, 1
      %p242 = scmp.ne.s32.totalorder %s237, %s239
      %p243 = scmp.eq.s32.totalorder %s35, 0
      %p244 = por %p242, %p243
      %p245 = scmp.ne.s32.totalorder %s237, %s239
      %p246 = scmp.eq.s32.totalorder %s40, 1
      %p247 = por %p245, %p246
      %p248 = scmp.ne.s32.totalorder %s239, %s240
      %p249 = scmp.eq.s32.totalorder %s40, 0
      %p250 = por %p248, %p249
      %p251 = scmp.ne.s32.totalorder %s239, %s240
      %p252 = scmp.eq.s32.totalorder %s41, 1
      %p253 = por %p251, %p252
      %p255 = scmp.ne.s32.totalorder %s240, %s254
      %p256 = scmp.eq.s32.totalorder %s41, 0
      %p257 = por %p255, %p256
      %s259 = sadd.s32 %s258, 1
      %p262 = scmp.eq.s32.totalorder %s35, 1
      %p263 = scmp.ne.s32.totalorder %s258, %s260
      %p264 = scmp.eq.s32.totalorder %s35, 0
      %p265 = por %p263, %p264
      %p266 = scmp.ne.s32.totalorder %s258, %s260
      %p267 = scmp.eq.s32.totalorder %s40, 1
      %p268 = por %p266, %p267
      %p269 = scmp.ne.s32.totalorder %s260, %s261
      %p270 = scmp.eq.s32.totalorder %s40, 0
      %p271 = por %p269, %p270
      %p272 = scmp.ne.s32.totalorder %s260, %s261
      %p273 = scmp.eq.s32.totalorder %s41, 1
      %p274 = por %p272, %p273
      %p276 = scmp.ne.s32.totalorder %s261, %s275
      %p277 = scmp.eq.s32.totalorder %s41, 0
      %p278 = por %p276, %p277
      %s280 = sadd.s32 %s279, 1
      %p283 = scmp.eq.s32.totalorder %s35, 1
      %p284 = scmp.ne.s32.totalorder %s279, %s281
      %p285 = scmp.eq.s32.totalorder %s35, 0
      %p286 = por %p284, %p285
      %p287 = scmp.ne.s32.totalorder %s279, %s281
      %p288 = scmp.eq.s32.totalorder %s40, 1
      %p289 = por %p287, %p288
      %p290 = scmp.ne.s32.totalorder %s281, %s282
      %p291 = scmp.eq.s32.totalorder %s40, 0
      %p292 = por %p290, %p291
      %p293 = scmp.ne.s32.totalorder %s281, %s282
      %p294 = scmp.eq.s32.totalorder %s41, 1
      %p295 = por %p293, %p294
      %p297 = scmp.ne.s32.totalorder %s282, %s296
      %p298 = scmp.eq.s32.totalorder %s41, 0
      %p299 = por %p297, %p298
      %s301 = sadd.s32 %s300, 1
      %p304 = scmp.eq.s32.totalorder %s35, 1
      %p305 = scmp.ne.s32.totalorder %s300, %s302
      %p306 = scmp.eq.s32.totalorder %s35, 0
      %p307 = por %p305, %p306
      %p308 = scmp.ne.s32.totalorder %s300, %s302
      %p309 = scmp.eq.s32.totalorder %s40, 1
      %p310 = por %p308, %p309
      %p311 = scmp.ne.s32.totalorder %s302, %s303
      %p312 = scmp.eq.s32.totalorder %s40, 0
      %p313 = por %p311, %p312
      %p314 = scmp.ne.s32.totalorder %s302, %s303
      %p315 = scmp.eq.s32.totalorder %s41, 1
      %p316 = por %p314, %p315
      %p318 = scmp.ne.s32.totalorder %s303, %s317
      %p319 = scmp.eq.s32.totalorder %s41, 0
      %p320 = por %p318, %p319
      %s322 = sadd.s32 %s321, 1
      %p325 = scmp.eq.s32.totalorder %s35, 1
      %p326 = scmp.ne.s32.totalorder %s321, %s323
      %p327 = scmp.eq.s32.totalorder %s35, 0
      %p328 = por %p326, %p327
      %p329 = scmp.ne.s32.totalorder %s321, %s323
      %p330 = scmp.eq.s32.totalorder %s40, 1
      %p331 = por %p329, %p330
      %p332 = scmp.ne.s32.totalorder %s323, %s324
      %p333 = scmp.eq.s32.totalorder %s40, 0
      %p334 = por %p332, %p333
      %p335 = scmp.ne.s32.totalorder %s323, %s324
      %p336 = scmp.eq.s32.totalorder %s41, 1
      %p337 = por %p335, %p336
      %p339 = scmp.ne.s32.totalorder %s324, %s338
      %p340 = scmp.eq.s32.totalorder %s41, 0
      %p341 = por %p339, %p340
      %s343 = sadd.s32 %s342, 1
      %p346 = scmp.eq.s32.totalorder %s35, 1
      %p347 = scmp.ne.s32.totalorder %s342, %s344
      %p348 = scmp.eq.s32.totalorder %s35, 0
      %p349 = por %p347, %p348
      %p350 = scmp.ne.s32.totalorder %s342, %s344
      %p351 = scmp.eq.s32.totalorder %s40, 1
      %p352 = por %p350, %p351
      %p353 = scmp.ne.s32.totalorder %s344, %s345
      %p354 = scmp.eq.s32.totalorder %s40, 0
      %p355 = por %p353, %p354
      %p356 = scmp.ne.s32.totalorder %s344, %s345
      %p357 = scmp.eq.s32.totalorder %s41, 1
      %p358 = por %p356, %p357
      %p360 = scmp.ne.s32.totalorder %s345, %s359
      %p361 = scmp.eq.s32.totalorder %s41, 0
      %p362 = por %p360, %p361
      %s364 = sadd.s32 %s363, 1
      %p367 = scmp.eq.s32.totalorder %s35, 1
      %p368 = scmp.ne.s32.totalorder %s363, %s365
      %p369 = scmp.eq.s32.totalorder %s35, 0
      %p370 = por %p368, %p369
      %p371 = scmp.ne.s32.totalorder %s363, %s365
      %p372 = scmp.eq.s32.totalorder %s40, 1
      %p373 = por %p371, %p372
      %p374 = scmp.ne.s32.totalorder %s365, %s366
      %p375 = scmp.eq.s32.totalorder %s40, 0
      %p376 = por %p374, %p375
      %p377 = scmp.ne.s32.totalorder %s365, %s366
      %p378 = scmp.eq.s32.totalorder %s41, 1
      %p379 = por %p377, %p378
      %p381 = scmp.ne.s32.totalorder %s366, %s380
      %p382 = scmp.eq.s32.totalorder %s41, 0
      %p383 = por %p381, %p382
      %s385 = sadd.s32 %s384, 1
      %p388 = scmp.eq.s32.totalorder %s35, 1
      %p389 = scmp.ne.s32.totalorder %s384, %s386
      %p390 = scmp.eq.s32.totalorder %s35, 0
      %p391 = por %p389, %p390
      %p392 = scmp.ne.s32.totalorder %s384, %s386
      %p393 = scmp.eq.s32.totalorder %s40, 1
      %p394 = por %p392, %p393
      %p395 = scmp.ne.s32.totalorder %s386, %s387
      %p396 = scmp.eq.s32.totalorder %s40, 0
      %p397 = por %p395, %p396
      %p398 = scmp.ne.s32.totalorder %s386, %s387
      %p399 = scmp.eq.s32.totalorder %s41, 1
      %p400 = por %p398, %p399
      %p402 = scmp.ne.s32.totalorder %s387, %s401
      %p403 = scmp.eq.s32.totalorder %s41, 0
      %p404 = por %p402, %p403
      %s405 = ssub.s32 %s35, %s42
      %p406 = scmp.eq.s32.totalorder %s405, 0
      %s408 = sadd.s32 %s407, 1
      %s409 = scalar_select %p406, %s407, %s408
      %p412 = pneg %p406
      %p413 = scmp.eq.s32.totalorder %s35, 1
      %p414 = por %p412, %p413
      %p415 = scmp.ne.s32.totalorder %s407, %s410
      %p416 = scmp.eq.s32.totalorder %s35, 0
      %p417 = por %p415, %p416
      %p418 = scmp.ne.s32.totalorder %s407, %s410
      %p419 = scmp.eq.s32.totalorder %s40, 1
      %p420 = por %p418, %p419
      %p421 = scmp.ne.s32.totalorder %s410, %s411
      %p422 = scmp.eq.s32.totalorder %s40, 0
      %p423 = por %p421, %p422
      %p424 = scmp.ne.s32.totalorder %s410, %s411
      %p425 = scmp.eq.s32.totalorder %s41, 1
      %p426 = por %p424, %p425
      %p428 = scmp.ne.s32.totalorder %s411, %s427
      %p429 = scmp.eq.s32.totalorder %s41, 0
      %p430 = por %p428, %p429
      %p431 = scmp.le.s32.totalorder 1, %s35
      %p432 = scmp.lt.s32.totalorder %s35, 3
      %p433 = pnand %p431, %p432
      %p434 = pneg %p433
      // Predicated region
      $region9: #{tpu_custom_call.1} parent=5 // pred_check
        _
      $region10: #{tpu_custom_call.1} parent=5 // pred_check_branch
        %436 = sbr.rel (%p433) target = $region12
      $region11: #{tpu_custom_call.1} parent=5 // pred_region
        %s437 = ssub.s32 %s35, 1
        // Predicated region
        $region13: #{tpu_custom_call.1} parent=11 // pred_check
          %p438 = pneg %p82
        $region14: #{tpu_custom_call.1} parent=11 // pred_check_branch
          %440 = sbr.rel (%p438) target = $region16
        $region15: #{tpu_custom_call.1} parent=11 // pred_region
          %442 = vsyncadd [#allocation6], 0
          %s443 = sshll.u32 %s1, 4
          %s444 = int_to_ptr.hbm [resolvable:$true] %s443
          %s445 = sshll.u32 [#allocation5], 4
          %s446 = int_to_ptr.vmem [resolvable:$true] %s445
          %451 = dma.hbm_to_vmem [thread:$0]  %s444, 8192, %s446, [#allocation6], 256, 256, 16
        $region16: #{tpu_custom_call.1} parent=11 // pred_fallthru
          _
        // Predicated region
        $region17: #{tpu_custom_call.1} parent=11 // pred_check
          %p452 = pneg %p103
        $region18: #{tpu_custom_call.1} parent=11 // pred_check_branch
          %454 = sbr.rel (%p452) target = $region20
        $region19: #{tpu_custom_call.1} parent=11 // pred_region
          %456 = vsyncadd [#allocation6], 0
          %s458 = sshll.u32 %s2, 4
          %s459 = int_to_ptr.hbm [resolvable:$true] %s458
          %s460 = sshll.u32 [#allocation7], 4
          %s461 = int_to_ptr.vmem [resolvable:$true] %s460
          %463 = dma.hbm_to_vmem [thread:$0]  %s459, 64, %s461, [#allocation6]
        $region20: #{tpu_custom_call.1} parent=11 // pred_fallthru
          _
        // Predicated region
        $region21: #{tpu_custom_call.1} parent=11 // pred_check
          %p464 = pneg %p124
        $region22: #{tpu_custom_call.1} parent=11 // pred_check_branch
          %466 = sbr.rel (%p464) target = $region24
        $region23: #{tpu_custom_call.1} parent=11 // pred_region
          %468 = vsyncadd [#allocation9], 0
          %s469 = sshll.u32 %s3, 4
          %s470 = int_to_ptr.hbm [resolvable:$true] %s469
          %s471 = sshll.u32 [#allocation8], 4
          %s472 = int_to_ptr.vmem [resolvable:$true] %s471
          %477 = dma.hbm_to_vmem [thread:$0]  %s470, 8192, %s472, [#allocation9], 128, 128, 8
        $region24: #{tpu_custom_call.1} parent=11 // pred_fallthru
          _
        // Predicated region
        $region25: #{tpu_custom_call.1} parent=11 // pred_check
          %p478 = pneg %p145
        $region26: #{tpu_custom_call.1} parent=11 // pred_check_branch
          %480 = sbr.rel (%p478) target = $region28
        $region27: #{tpu_custom_call.1} parent=11 // pred_region
          _
        $region28: #{tpu_custom_call.1} parent=11 // pred_fallthru
          _
        // Predicated region
        $region29: #{tpu_custom_call.1} parent=11 // pred_check
          %p481 = pneg %p166
        $region30: #{tpu_custom_call.1} parent=11 // pred_check_branch
          %483 = sbr.rel (%p481) target = $region32
        $region31: #{tpu_custom_call.1} parent=11 // pred_region
          %485 = vsyncadd [#allocation9], 0
          %s486 = sshll.u32 %s5, 4
          %s487 = int_to_ptr.hbm [resolvable:$true] %s486
          %s488 = sshll.u32 [#allocation10], 4
          %s489 = int_to_ptr.vmem [resolvable:$true] %s488
          %494 = dma.hbm_to_vmem [thread:$0]  %s487, 2048, %s489, [#allocation9], 64, 64, 4
        $region32: #{tpu_custom_call.1} parent=11 // pred_fallthru
          _
        // Predicated region
        $region33: #{tpu_custom_call.1} parent=11 // pred_check
          %p495 = pneg %p187
        $region34: #{tpu_custom_call.1} parent=11 // pred_check_branch
          %497 = sbr.rel (%p495) target = $region36
        $region35: #{tpu_custom_call.1} parent=11 // pred_region
          %499 = vsyncadd [#allocation12], 0
          %s501 = sshll.u32 %s6, 4
          %s502 = int_to_ptr.hbm [resolvable:$true] %s501
          %s503 = sshll.u32 [#allocation11], 4
          %s504 = int_to_ptr.vmem [resolvable:$true] %s503
          %506 = dma.hbm_to_vmem [thread:$0]  %s502, 16, %s504, [#allocation12]
        $region36: #{tpu_custom_call.1} parent=11 // pred_fallthru
          _
        // Predicated region
        $region37: #{tpu_custom_call.1} parent=11 // pred_check
          %p507 = pneg %p208
        $region38: #{tpu_custom_call.1} parent=11 // pred_check_branch
          %509 = sbr.rel (%p507) target = $region40
        $region39: #{tpu_custom_call.1} parent=11 // pred_region
          %511 = vsyncadd [#allocation12], 0
          %s512 = sshll.u32 %s7, 4
          %s513 = int_to_ptr.hbm [resolvable:$true] %s512
          %s514 = sshll.u32 [#allocation13], 4
          %s515 = int_to_ptr.vmem [resolvable:$true] %s514
          %520 = dma.hbm_to_vmem [thread:$0]  %s513, 1024, %s515, [#allocation12], 64, 64, 4
        $region40: #{tpu_custom_call.1} parent=11 // pred_fallthru
          _
        // Predicated region
        $region41: #{tpu_custom_call.1} parent=11 // pred_check
          %p521 = pneg %p229
        $region42: #{tpu_custom_call.1} parent=11 // pred_check_branch
          %523 = sbr.rel (%p521) target = $region44
        $region43: #{tpu_custom_call.1} parent=11 // pred_region
          %525 = vsyncadd [#allocation15], 0
          %s527 = sshll.u32 %s8, 4
          %s528 = int_to_ptr.hbm [resolvable:$true] %s527
          %s529 = sshll.u32 [#allocation14], 4
          %s530 = int_to_ptr.vmem [resolvable:$true] %s529
          %532 = dma.hbm_to_vmem [thread:$0]  %s528, 16, %s530, [#allocation15]
        $region44: #{tpu_custom_call.1} parent=11 // pred_fallthru
          _
        // Predicated region
        $region45: #{tpu_custom_call.1} parent=11 // pred_check
          %p533 = pneg %p250
        $region46: #{tpu_custom_call.1} parent=11 // pred_check_branch
          %535 = sbr.rel (%p533) target = $region48
        $region47: #{tpu_custom_call.1} parent=11 // pred_region
          %537 = vsyncadd [#allocation15], 0
          %s538 = sshll.u32 %s9, 4
          %s539 = int_to_ptr.hbm [resolvable:$true] %s538
          %s540 = sshll.u32 [#allocation16], 4
          %s541 = int_to_ptr.vmem [resolvable:$true] %s540
          %546 = dma.hbm_to_vmem [thread:$0]  %s539, 1024, %s541, [#allocation15], 64, 64, 4
        $region48: #{tpu_custom_call.1} parent=11 // pred_fallthru
          _
        // Predicated region
        $region49: #{tpu_custom_call.1} parent=11 // pred_check
          %p547 = pneg %p271
        $region50: #{tpu_custom_call.1} parent=11 // pred_check_branch
          %549 = sbr.rel (%p547) target = $region52
        $region51: #{tpu_custom_call.1} parent=11 // pred_region
          %551 = vsyncadd [#allocation18], 0
          %s553 = sshll.u32 %s10, 4
          %s554 = int_to_ptr.hbm [resolvable:$true] %s553
          %s555 = sshll.u32 [#allocation17], 4
          %s556 = int_to_ptr.vmem [resolvable:$true] %s555
          %558 = dma.hbm_to_vmem [thread:$0]  %s554, 16, %s556, [#allocation18]
        $region52: #{tpu_custom_call.1} parent=11 // pred_fallthru
          _
        // Predicated region
        $region53: #{tpu_custom_call.1} parent=11 // pred_check
          %p559 = pneg %p292
        $region54: #{tpu_custom_call.1} parent=11 // pred_check_branch
          %561 = sbr.rel (%p559) target = $region56
        $region55: #{tpu_custom_call.1} parent=11 // pred_region
          %563 = vsyncadd [#allocation18], 0
          %s564 = sshll.u32 %s11, 4
          %s565 = int_to_ptr.hbm [resolvable:$true] %s564
          %s566 = sshll.u32 [#allocation19], 4
          %s567 = int_to_ptr.vmem [resolvable:$true] %s566
          %572 = dma.hbm_to_vmem [thread:$0]  %s565, 2048, %s567, [#allocation18], 128, 128, 8
        $region56: #{tpu_custom_call.1} parent=11 // pred_fallthru
          _
        // Predicated region
        $region57: #{tpu_custom_call.1} parent=11 // pred_check
          %p573 = pneg %p313
        $region58: #{tpu_custom_call.1} parent=11 // pred_check_branch
          %575 = sbr.rel (%p573) target = $region60
        $region59: #{tpu_custom_call.1} parent=11 // pred_region
          _
        $region60: #{tpu_custom_call.1} parent=11 // pred_fallthru
          _
        // Predicated region
        $region61: #{tpu_custom_call.1} parent=11 // pred_check
          %p576 = pneg %p334
        $region62: #{tpu_custom_call.1} parent=11 // pred_check_branch
          %578 = sbr.rel (%p576) target = $region64
        $region63: #{tpu_custom_call.1} parent=11 // pred_region
          %580 = vsyncadd [#allocation21], 0
          %s581 = sshll.u32 %s13, 4
          %s582 = int_to_ptr.hbm [resolvable:$true] %s581
          %s583 = sshll.u32 [#allocation20], 4
          %s584 = int_to_ptr.vmem [resolvable:$true] %s583
          %589 = dma.hbm_to_vmem [thread:$0]  %s582, 8192, %s584, [#allocation21], 256, 256, 16
        $region64: #{tpu_custom_call.1} parent=11 // pred_fallthru
          _
        // Predicated region
        $region65: #{tpu_custom_call.1} parent=11 // pred_check
          %p590 = pneg %p355
        $region66: #{tpu_custom_call.1} parent=11 // pred_check_branch
          %592 = sbr.rel (%p590) target = $region68
        $region67: #{tpu_custom_call.1} parent=11 // pred_region
          _
        $region68: #{tpu_custom_call.1} parent=11 // pred_fallthru
          _
        // Predicated region
        $region69: #{tpu_custom_call.1} parent=11 // pred_check
          %p593 = pneg %p376
        $region70: #{tpu_custom_call.1} parent=11 // pred_check_branch
          %595 = sbr.rel (%p593) target = $region72
        $region71: #{tpu_custom_call.1} parent=11 // pred_region
          %597 = vsyncadd [#allocation21], 0
          %s598 = sshll.u32 %s15, 4
          %s599 = int_to_ptr.hbm [resolvable:$true] %s598
          %s600 = sshll.u32 [#allocation22], 4
          %s601 = int_to_ptr.vmem [resolvable:$true] %s600
          %606 = dma.hbm_to_vmem [thread:$0]  %s599, 8192, %s601, [#allocation21], 128, 128, 8
        $region72: #{tpu_custom_call.1} parent=11 // pred_fallthru
          _
        // Predicated region
        $region73: #{tpu_custom_call.1} parent=11 // pred_check
          %p607 = pneg %p397
        $region74: #{tpu_custom_call.1} parent=11 // pred_check_branch
          %609 = sbr.rel (%p607) target = $region76
        $region75: #{tpu_custom_call.1} parent=11 // pred_region
          _
        $region76: #{tpu_custom_call.1} parent=11 // pred_fallthru
          _
      $region12: #{tpu_custom_call.1} parent=5 // pred_fallthru
        _
      %p610 = scmp.lt.s32.totalorder %s35, 2
      // Predicated region
      $region77: #{tpu_custom_call.1} parent=5 // pred_check
        %p611 = pneg %p610
      $region78: #{tpu_custom_call.1} parent=5 // pred_check_branch
        %613 = sbr.rel (%p611) target = $region80
      $region79: #{tpu_custom_call.1} parent=5 // pred_region
        // Predicated region
        $region81: #{tpu_custom_call.1} parent=79 // pred_check
          %p614 = pneg %p55
        $region82: #{tpu_custom_call.1} parent=79 // pred_check_branch
          %616 = sbr.rel (%p614) target = $region84
        $region83: #{tpu_custom_call.1} parent=79 // pred_region
          %s617 = sand.u32 %s45, 1
          %s618 = scalar_lea.sflag [#allocation3], %s617
          %s619 = sand.u32 %s45, 1
          %s620 = smul.addr %s619, 256
          %s621 = scalar_lea.vmem [#allocation2], %s620
          %s622 = smul.u32 32, %s35
          %624 = vsyncadd %s618, 0
          %s625 = smul.addr %s622, 2
          %s626 = smul.addr %s625, 4
          %s627 = scalar_lea.hbm %s0, %s626
          %s628 = sshll.u32 %s627, 4
          %s629 = int_to_ptr.hbm [resolvable:$true] %s628
          %s630 = sshll.u32 %s621, 4
          %s631 = int_to_ptr.vmem [resolvable:$true] %s630
          %636 = dma.hbm_to_vmem [thread:$0]  %s629, 4096, %s631, %s618, 128, 128, 8
        $region84: #{tpu_custom_call.1} parent=79 // pred_fallthru
          _
      $region80: #{tpu_custom_call.1} parent=5 // pred_fallthru
        _
      %p637 = scmp.le.s32.totalorder 1, %s35
      %p638 = scmp.lt.s32.totalorder %s35, 3
      %p639 = pnand %p637, %p638
      %p640 = pneg %p639
      // Predicated region
      $region85: #{tpu_custom_call.1} parent=5 // pred_check
        _
      $region86: #{tpu_custom_call.1} parent=5 // pred_check_branch
        %642 = sbr.rel (%p639) target = $region88
      $region87: #{tpu_custom_call.1} parent=5 // pred_region
        %s643 = ssub.s32 %s35, 1
        %s644 = sand.u32 %s48, 1
        %s645 = scalar_lea.sflag [#allocation3], %s644
        %s646 = sand.u32 %s48, 1
        %s647 = smul.addr %s646, 256
        %s648 = scalar_lea.vmem [#allocation2], %s647
        // Predicated region
        $region89: #{tpu_custom_call.1} parent=87 // pred_check
          %p649 = pneg %p61
        $region90: #{tpu_custom_call.1} parent=87 // pred_check_branch
          %651 = sbr.rel (%p649) target = $region92
        $region91: #{tpu_custom_call.1} parent=87 // pred_region
          %653 = dma.done %s645, 4096
        $region92: #{tpu_custom_call.1} parent=87 // pred_fallthru
          _
        // Predicated region
        $region93: #{tpu_custom_call.1} parent=87 // pred_check
          %p654 = pneg %p82
        $region94: #{tpu_custom_call.1} parent=87 // pred_check_branch
          %656 = sbr.rel (%p654) target = $region96
        $region95: #{tpu_custom_call.1} parent=87 // pred_region
          %658 = dma.done [#allocation6], 8192
        $region96: #{tpu_custom_call.1} parent=87 // pred_fallthru
          _
        // Predicated region
        $region97: #{tpu_custom_call.1} parent=87 // pred_check
          %p659 = pneg %p103
        $region98: #{tpu_custom_call.1} parent=87 // pred_check_branch
          %661 = sbr.rel (%p659) target = $region100
        $region99: #{tpu_custom_call.1} parent=87 // pred_region
          %663 = dma.done [#allocation6], 64
        $region100: #{tpu_custom_call.1} parent=87 // pred_fallthru
          _
        // Predicated region
        $region101: #{tpu_custom_call.1} parent=87 // pred_check
          %p664 = pneg %p124
        $region102: #{tpu_custom_call.1} parent=87 // pred_check_branch
          %666 = sbr.rel (%p664) target = $region104
        $region103: #{tpu_custom_call.1} parent=87 // pred_region
          %668 = dma.done [#allocation9], 8192
        $region104: #{tpu_custom_call.1} parent=87 // pred_fallthru
          _
        // Predicated region
        $region105: #{tpu_custom_call.1} parent=87 // pred_check
          %p669 = pneg %p166
        $region106: #{tpu_custom_call.1} parent=87 // pred_check_branch
          %671 = sbr.rel (%p669) target = $region108
        $region107: #{tpu_custom_call.1} parent=87 // pred_region
          %673 = dma.done [#allocation9], 2048
        $region108: #{tpu_custom_call.1} parent=87 // pred_fallthru
          _
        // Predicated region
        $region109: #{tpu_custom_call.1} parent=87 // pred_check
          %p674 = pneg %p187
        $region110: #{tpu_custom_call.1} parent=87 // pred_check_branch
          %676 = sbr.rel (%p674) target = $region112
        $region111: #{tpu_custom_call.1} parent=87 // pred_region
          %678 = dma.done [#allocation12], 16
        $region112: #{tpu_custom_call.1} parent=87 // pred_fallthru
          _
        // Predicated region
        $region113: #{tpu_custom_call.1} parent=87 // pred_check
          %p679 = pneg %p208
        $region114: #{tpu_custom_call.1} parent=87 // pred_check_branch
          %681 = sbr.rel (%p679) target = $region116
        $region115: #{tpu_custom_call.1} parent=87 // pred_region
          %683 = dma.done [#allocation12], 1024
        $region116: #{tpu_custom_call.1} parent=87 // pred_fallthru
          _
        // Predicated region
        $region117: #{tpu_custom_call.1} parent=87 // pred_check
          %p684 = pneg %p229
        $region118: #{tpu_custom_call.1} parent=87 // pred_check_branch
          %686 = sbr.rel (%p684) target = $region120
        $region119: #{tpu_custom_call.1} parent=87 // pred_region
          %688 = dma.done [#allocation15], 16
        $region120: #{tpu_custom_call.1} parent=87 // pred_fallthru
          _
        // Predicated region
        $region121: #{tpu_custom_call.1} parent=87 // pred_check
          %p689 = pneg %p250
        $region122: #{tpu_custom_call.1} parent=87 // pred_check_branch
          %691 = sbr.rel (%p689) target = $region124
        $region123: #{tpu_custom_call.1} parent=87 // pred_region
          %693 = dma.done [#allocation15], 1024
        $region124: #{tpu_custom_call.1} parent=87 // pred_fallthru
          _
        // Predicated region
        $region125: #{tpu_custom_call.1} parent=87 // pred_check
          %p694 = pneg %p271
        $region126: #{tpu_custom_call.1} parent=87 // pred_check_branch
          %696 = sbr.rel (%p694) target = $region128
        $region127: #{tpu_custom_call.1} parent=87 // pred_region
          %698 = dma.done [#allocation18], 16
        $region128: #{tpu_custom_call.1} parent=87 // pred_fallthru
          _
        // Predicated region
        $region129: #{tpu_custom_call.1} parent=87 // pred_check
          %p699 = pneg %p292
        $region130: #{tpu_custom_call.1} parent=87 // pred_check_branch
          %701 = sbr.rel (%p699) target = $region132
        $region131: #{tpu_custom_call.1} parent=87 // pred_region
          %703 = dma.done [#allocation18], 2048
        $region132: #{tpu_custom_call.1} parent=87 // pred_fallthru
          _
        // Predicated region
        $region133: #{tpu_custom_call.1} parent=87 // pred_check
          %p704 = pneg %p334
        $region134: #{tpu_custom_call.1} parent=87 // pred_check_branch
          %706 = sbr.rel (%p704) target = $region136
        $region135: #{tpu_custom_call.1} parent=87 // pred_region
          %708 = dma.done [#allocation21], 8192
        $region136: #{tpu_custom_call.1} parent=87 // pred_fallthru
          _
        // Predicated region
        $region137: #{tpu_custom_call.1} parent=87 // pred_check
          %p709 = pneg %p376
        $region138: #{tpu_custom_call.1} parent=87 // pred_check_branch
          %711 = sbr.rel (%p709) target = $region140
        $region139: #{tpu_custom_call.1} parent=87 // pred_region
          %713 = dma.done [#allocation21], 8192
        $region140: #{tpu_custom_call.1} parent=87 // pred_fallthru
          _
        %s714 = sand.u32 %s48, 1
        %s715 = scalar_lea.sflag [#allocation3], %s714
        %s716 = sand.u32 %s48, 1
        %s717 = smul.addr %s716, 256
        %s718 = scalar_lea.vmem [#allocation2], %s717
        %p719 = pneg %p61
        %p720 = pneg %p58
        %p721 = pneg %p82
        %p722 = pneg %p79
        %p723 = pneg %p103
        %p724 = pneg %p100
        %p725 = pneg %p124
        %p726 = pneg %p121
        %p727 = pneg %p145
        %p728 = pneg %p142
        %p729 = pneg %p166
        %p730 = pneg %p163
        %p731 = pneg %p187
        %p732 = pneg %p184
        %p733 = pneg %p208
        %p734 = pneg %p205
        %p735 = pneg %p229
        %p736 = pneg %p226
        %p737 = pneg %p250
        %p738 = pneg %p247
        %p739 = pneg %p271
        %p740 = pneg %p268
        %p741 = pneg %p292
        %p742 = pneg %p289
        %p743 = pneg %p313
        %p744 = pneg %p310
        %p745 = pneg %p334
        %p746 = pneg %p331
        %p747 = pneg %p355
        %p748 = pneg %p352
        %p749 = pneg %p376
        %p750 = pneg %p373
        %p751 = pneg %p397
        %p752 = pneg %p394
        %p753 = pneg %p423
        %p754 = pneg %p420
        %s755 = sand.u32 %s410, 1
        %s756 = scalar_lea.sflag [#allocation4], %s755
        %s757 = sand.u32 %s410, 1
        %s758 = smul.addr %s757, 256
        %s759 = scalar_lea.vmem [#allocation23], %s758
        %s760 = smul.u32 32, %s40
        %s761 = smul.u32 32, %s40
        %v762 = vld [vmem:[%s648] sm:$0xff]
        %v763 = vld [vmem:[%s648 + $0x8] sm:$0xff]
        %v764 = vld [vmem:[%s648 + $0x10] sm:$0xff]
        %v765 = vld [vmem:[%s648 + $0x18] sm:$0xff]
        %v766 = vld [vmem:[%s648 + $0x20] sm:$0xff]
        %v767 = vld [vmem:[%s648 + $0x28] sm:$0xff]
        %v768 = vld [vmem:[%s648 + $0x30] sm:$0xff]
        %v769 = vld [vmem:[%s648 + $0x38] sm:$0xff]
        %v770 = vld [vmem:[%s648 + $0x40] sm:$0xff]
        %v771 = vld [vmem:[%s648 + $0x48] sm:$0xff]
        %v772 = vld [vmem:[%s648 + $0x50] sm:$0xff]
        %v773 = vld [vmem:[%s648 + $0x58] sm:$0xff]
        %v774 = vld [vmem:[%s648 + $0x60] sm:$0xff]
        %v775 = vld [vmem:[%s648 + $0x68] sm:$0xff]
        %v776 = vld [vmem:[%s648 + $0x70] sm:$0xff]
        %v777 = vld [vmem:[%s648 + $0x78] sm:$0xff]
        %v778 = vld [vmem:[%s648 + $0x80] sm:$0xff]
        %v779 = vld [vmem:[%s648 + $0x88] sm:$0xff]
        %v780 = vld [vmem:[%s648 + $0x90] sm:$0xff]
        %v781 = vld [vmem:[%s648 + $0x98] sm:$0xff]
        %v782 = vld [vmem:[%s648 + $0xa0] sm:$0xff]
        %v783 = vld [vmem:[%s648 + $0xa8] sm:$0xff]
        %v784 = vld [vmem:[%s648 + $0xb0] sm:$0xff]
        %v785 = vld [vmem:[%s648 + $0xb8] sm:$0xff]
        %v786 = vld [vmem:[%s648 + $0xc0] sm:$0xff]
        %v787 = vld [vmem:[%s648 + $0xc8] sm:$0xff]
        %v788 = vld [vmem:[%s648 + $0xd0] sm:$0xff]
        %v789 = vld [vmem:[%s648 + $0xd8] sm:$0xff]
        %v790 = vld [vmem:[%s648 + $0xe0] sm:$0xff]
        %v791 = vld [vmem:[%s648 + $0xe8] sm:$0xff]
        %v792 = vld [vmem:[%s648 + $0xf0] sm:$0xff]
        %v793 = vld [vmem:[%s648 + $0xf8] sm:$0xff]
        %v794 = vld [vmem:[#allocation5] sm:$0xff]
        %v795 = vld [vmem:[#allocation5 + $0x8] sm:$0xff]
        %v796 = vld [vmem:[#allocation5 + $0x10] sm:$0xff]
        %v797 = vld [vmem:[#allocation5 + $0x18] sm:$0xff]
        %v798 = vld [vmem:[#allocation5 + $0x20] sm:$0xff]
        %v799 = vld [vmem:[#allocation5 + $0x28] sm:$0xff]
        %v800 = vld [vmem:[#allocation5 + $0x30] sm:$0xff]
        %v801 = vld [vmem:[#allocation5 + $0x38] sm:$0xff]
        %v802 = vld [vmem:[#allocation5 + $0x40] sm:$0xff]
        %v803 = vld [vmem:[#allocation5 + $0x48] sm:$0xff]
        %v804 = vld [vmem:[#allocation5 + $0x50] sm:$0xff]
        %v805 = vld [vmem:[#allocation5 + $0x58] sm:$0xff]
        %v806 = vld [vmem:[#allocation5 + $0x60] sm:$0xff]
        %v807 = vld [vmem:[#allocation5 + $0x68] sm:$0xff]
        %v808 = vld [vmem:[#allocation5 + $0x70] sm:$0xff]
        %v809 = vld [vmem:[#allocation5 + $0x78] sm:$0xff]
        %v810 = vld [vmem:[#allocation5 + $0x80] sm:$0xff]
        %v811 = vld [vmem:[#allocation5 + $0x88] sm:$0xff]
        %v812 = vld [vmem:[#allocation5 + $0x90] sm:$0xff]
        %v813 = vld [vmem:[#allocation5 + $0x98] sm:$0xff]
        %v814 = vld [vmem:[#allocation5 + $0xa0] sm:$0xff]
        %v815 = vld [vmem:[#allocation5 + $0xa8] sm:$0xff]
        %v816 = vld [vmem:[#allocation5 + $0xb0] sm:$0xff]
        %v817 = vld [vmem:[#allocation5 + $0xb8] sm:$0xff]
        %v818 = vld [vmem:[#allocation5 + $0xc0] sm:$0xff]
        %v819 = vld [vmem:[#allocation5 + $0xc8] sm:$0xff]
        %v820 = vld [vmem:[#allocation5 + $0xd0] sm:$0xff]
        %v821 = vld [vmem:[#allocation5 + $0xd8] sm:$0xff]
        %v822 = vld [vmem:[#allocation5 + $0xe0] sm:$0xff]
        %v823 = vld [vmem:[#allocation5 + $0xe8] sm:$0xff]
        %v824 = vld [vmem:[#allocation5 + $0xf0] sm:$0xff]
        %v825 = vld [vmem:[#allocation5 + $0xf8] sm:$0xff]
        %v826 = vld [vmem:[#allocation5 + $0x100] sm:$0xff]
        %v827 = vld [vmem:[#allocation5 + $0x108] sm:$0xff]
        %v828 = vld [vmem:[#allocation5 + $0x110] sm:$0xff]
        %v829 = vld [vmem:[#allocation5 + $0x118] sm:$0xff]
        %v830 = vld [vmem:[#allocation5 + $0x120] sm:$0xff]
        %v831 = vld [vmem:[#allocation5 + $0x128] sm:$0xff]
        %v832 = vld [vmem:[#allocation5 + $0x130] sm:$0xff]
        %v833 = vld [vmem:[#allocation5 + $0x138] sm:$0xff]
        %v834 = vld [vmem:[#allocation5 + $0x140] sm:$0xff]
        %v835 = vld [vmem:[#allocation5 + $0x148] sm:$0xff]
        %v836 = vld [vmem:[#allocation5 + $0x150] sm:$0xff]
        %v837 = vld [vmem:[#allocation5 + $0x158] sm:$0xff]
        %v838 = vld [vmem:[#allocation5 + $0x160] sm:$0xff]
        %v839 = vld [vmem:[#allocation5 + $0x168] sm:$0xff]
        %v840 = vld [vmem:[#allocation5 + $0x170] sm:$0xff]
        %v841 = vld [vmem:[#allocation5 + $0x178] sm:$0xff]
        %v842 = vld [vmem:[#allocation5 + $0x180] sm:$0xff]
        %v843 = vld [vmem:[#allocation5 + $0x188] sm:$0xff]
        %v844 = vld [vmem:[#allocation5 + $0x190] sm:$0xff]
        %v845 = vld [vmem:[#allocation5 + $0x198] sm:$0xff]
        %v846 = vld [vmem:[#allocation5 + $0x1a0] sm:$0xff]
        %v847 = vld [vmem:[#allocation5 + $0x1a8] sm:$0xff]
        %v848 = vld [vmem:[#allocation5 + $0x1b0] sm:$0xff]
        %v849 = vld [vmem:[#allocation5 + $0x1b8] sm:$0xff]
        %v850 = vld [vmem:[#allocation5 + $0x1c0] sm:$0xff]
        %v851 = vld [vmem:[#allocation5 + $0x1c8] sm:$0xff]
        %v852 = vld [vmem:[#allocation5 + $0x1d0] sm:$0xff]
        %v853 = vld [vmem:[#allocation5 + $0x1d8] sm:$0xff]
        %v854 = vld [vmem:[#allocation5 + $0x1e0] sm:$0xff]
        %v855 = vld [vmem:[#allocation5 + $0x1e8] sm:$0xff]
        %v856 = vld [vmem:[#allocation5 + $0x1f0] sm:$0xff]
        %v857 = vld [vmem:[#allocation5 + $0x1f8] sm:$0xff]
        %v858 = vld [vmem:[#allocation7] sm:$0xf]
        %v860 = vperm.slane %v858, 0
        %v861 = vperm.slane %v858, 1
        %v862 = vperm.slane %v858, 2
        %v863 = vperm.slane %v858, 3
        %v900 = vunpack.c.l.b16 %v762
        %v901 = vunpack.c.h.b16 %v762
        %v902 = vunpack.c.l.b16 %v763
        %v903 = vunpack.c.h.b16 %v763
        %v904 = vunpack.c.l.b16 %v764
        %v905 = vunpack.c.h.b16 %v764
        %v906 = vunpack.c.l.b16 %v765
        %v907 = vunpack.c.h.b16 %v765
        %v908 = vunpack.c.l.b16 %v766
        %v909 = vunpack.c.h.b16 %v766
        %v910 = vunpack.c.l.b16 %v767
        %v911 = vunpack.c.h.b16 %v767
        %v912 = vunpack.c.l.b16 %v768
        %v913 = vunpack.c.h.b16 %v768
        %v914 = vunpack.c.l.b16 %v769
        %v915 = vunpack.c.h.b16 %v769
        %v916 = vunpack.c.l.b16 %v770
        %v917 = vunpack.c.h.b16 %v770
        %v918 = vunpack.c.l.b16 %v771
        %v919 = vunpack.c.h.b16 %v771
        %v920 = vunpack.c.l.b16 %v772
        %v921 = vunpack.c.h.b16 %v772
        %v922 = vunpack.c.l.b16 %v773
        %v923 = vunpack.c.h.b16 %v773
        %v924 = vunpack.c.l.b16 %v774
        %v925 = vunpack.c.h.b16 %v774
        %v926 = vunpack.c.l.b16 %v775
        %v927 = vunpack.c.h.b16 %v775
        %v928 = vunpack.c.l.b16 %v776
        %v929 = vunpack.c.h.b16 %v776
        %v930 = vunpack.c.l.b16 %v777
        %v931 = vunpack.c.h.b16 %v777
        %v932 = vunpack.c.l.b16 %v778
        %v933 = vunpack.c.h.b16 %v778
        %v934 = vunpack.c.l.b16 %v779
        %v935 = vunpack.c.h.b16 %v779
        %v936 = vunpack.c.l.b16 %v780
        %v937 = vunpack.c.h.b16 %v780
        %v938 = vunpack.c.l.b16 %v781
        %v939 = vunpack.c.h.b16 %v781
        %v940 = vunpack.c.l.b16 %v782
        %v941 = vunpack.c.h.b16 %v782
        %v942 = vunpack.c.l.b16 %v783
        %v943 = vunpack.c.h.b16 %v783
        %v944 = vunpack.c.l.b16 %v784
        %v945 = vunpack.c.h.b16 %v784
        %v946 = vunpack.c.l.b16 %v785
        %v947 = vunpack.c.h.b16 %v785
        %v948 = vunpack.c.l.b16 %v786
        %v949 = vunpack.c.h.b16 %v786
        %v950 = vunpack.c.l.b16 %v787
        %v951 = vunpack.c.h.b16 %v787
        %v952 = vunpack.c.l.b16 %v788
        %v953 = vunpack.c.h.b16 %v788
        %v954 = vunpack.c.l.b16 %v789
        %v955 = vunpack.c.h.b16 %v789
        %v956 = vunpack.c.l.b16 %v790
        %v957 = vunpack.c.h.b16 %v790
        %v958 = vunpack.c.l.b16 %v791
        %v959 = vunpack.c.h.b16 %v791
        %v960 = vunpack.c.l.b16 %v792
        %v961 = vunpack.c.h.b16 %v792
        %v962 = vunpack.c.l.b16 %v793
        %v963 = vunpack.c.h.b16 %v793
        %v964 = vpack.c.b16 %v902, %v900
        %v965 = vpack.c.b16 %v903, %v901
        %v966 = vpack.c.b16 %v906, %v904
        %v967 = vpack.c.b16 %v907, %v905
        %v968 = vpack.c.b16 %v910, %v908
        %v969 = vpack.c.b16 %v911, %v909
        %v970 = vpack.c.b16 %v914, %v912
        %v971 = vpack.c.b16 %v915, %v913
        %v972 = vpack.c.b16 %v918, %v916
        %v973 = vpack.c.b16 %v919, %v917
        %v974 = vpack.c.b16 %v922, %v920
        %v975 = vpack.c.b16 %v923, %v921
        %v976 = vpack.c.b16 %v926, %v924
        %v977 = vpack.c.b16 %v927, %v925
        %v978 = vpack.c.b16 %v930, %v928
        %v979 = vpack.c.b16 %v931, %v929
        %v980 = vpack.c.b16 %v934, %v932
        %v981 = vpack.c.b16 %v935, %v933
        %v982 = vpack.c.b16 %v938, %v936
        %v983 = vpack.c.b16 %v939, %v937
        %v984 = vpack.c.b16 %v942, %v940
        %v985 = vpack.c.b16 %v943, %v941
        %v986 = vpack.c.b16 %v946, %v944
        %v987 = vpack.c.b16 %v947, %v945
        %v988 = vpack.c.b16 %v950, %v948
        %v989 = vpack.c.b16 %v951, %v949
        %v990 = vpack.c.b16 %v954, %v952
        %v991 = vpack.c.b16 %v955, %v953
        %v992 = vpack.c.b16 %v958, %v956
        %v993 = vpack.c.b16 %v959, %v957
        %v994 = vpack.c.b16 %v962, %v960
        %v995 = vpack.c.b16 %v963, %v961
        %v1092 = vunpack.c.l.b16 %v794
        %v1093 = vunpack.c.h.b16 %v794
        %v1094 = vunpack.c.l.b16 %v795
        %v1095 = vunpack.c.h.b16 %v795
        %v1096 = vunpack.c.l.b16 %v796
        %v1097 = vunpack.c.h.b16 %v796
        %v1098 = vunpack.c.l.b16 %v797
        %v1099 = vunpack.c.h.b16 %v797
        %v1100 = vunpack.c.l.b16 %v798
        %v1101 = vunpack.c.h.b16 %v798
        %v1102 = vunpack.c.l.b16 %v799
        %v1103 = vunpack.c.h.b16 %v799
        %v1104 = vunpack.c.l.b16 %v800
        %v1105 = vunpack.c.h.b16 %v800
        %v1106 = vunpack.c.l.b16 %v801
        %v1107 = vunpack.c.h.b16 %v801
        %v1108 = vunpack.c.l.b16 %v802
        %v1109 = vunpack.c.h.b16 %v802
        %v1110 = vunpack.c.l.b16 %v803
        %v1111 = vunpack.c.h.b16 %v803
        %v1112 = vunpack.c.l.b16 %v804
        %v1113 = vunpack.c.h.b16 %v804
        %v1114 = vunpack.c.l.b16 %v805
        %v1115 = vunpack.c.h.b16 %v805
        %v1116 = vunpack.c.l.b16 %v806
        %v1117 = vunpack.c.h.b16 %v806
        %v1118 = vunpack.c.l.b16 %v807
        %v1119 = vunpack.c.h.b16 %v807
        %v1120 = vunpack.c.l.b16 %v808
        %v1121 = vunpack.c.h.b16 %v808
        %v1122 = vunpack.c.l.b16 %v809
        %v1123 = vunpack.c.h.b16 %v809
        %v1124 = vunpack.c.l.b16 %v810
        %v1125 = vunpack.c.h.b16 %v810
        %v1126 = vunpack.c.l.b16 %v811
        %v1127 = vunpack.c.h.b16 %v811
        %v1128 = vunpack.c.l.b16 %v812
        %v1129 = vunpack.c.h.b16 %v812
        %v1130 = vunpack.c.l.b16 %v813
        %v1131 = vunpack.c.h.b16 %v813
        %v1132 = vunpack.c.l.b16 %v814
        %v1133 = vunpack.c.h.b16 %v814
        %v1134 = vunpack.c.l.b16 %v815
        %v1135 = vunpack.c.h.b16 %v815
        %v1136 = vunpack.c.l.b16 %v816
        %v1137 = vunpack.c.h.b16 %v816
        %v1138 = vunpack.c.l.b16 %v817
        %v1139 = vunpack.c.h.b16 %v817
        %v1140 = vunpack.c.l.b16 %v818
        %v1141 = vunpack.c.h.b16 %v818
        %v1142 = vunpack.c.l.b16 %v819
        %v1143 = vunpack.c.h.b16 %v819
        %v1144 = vunpack.c.l.b16 %v820
        %v1145 = vunpack.c.h.b16 %v820
        %v1146 = vunpack.c.l.b16 %v821
        %v1147 = vunpack.c.h.b16 %v821
        %v1148 = vunpack.c.l.b16 %v822
        %v1149 = vunpack.c.h.b16 %v822
        %v1150 = vunpack.c.l.b16 %v823
        %v1151 = vunpack.c.h.b16 %v823
        %v1152 = vunpack.c.l.b16 %v824
        %v1153 = vunpack.c.h.b16 %v824
        %v1154 = vunpack.c.l.b16 %v825
        %v1155 = vunpack.c.h.b16 %v825
        %v1156 = vunpack.c.l.b16 %v826
        %v1157 = vunpack.c.h.b16 %v826
        %v1158 = vunpack.c.l.b16 %v827
        %v1159 = vunpack.c.h.b16 %v827
        %v1160 = vunpack.c.l.b16 %v828
        %v1161 = vunpack.c.h.b16 %v828
        %v1162 = vunpack.c.l.b16 %v829
        %v1163 = vunpack.c.h.b16 %v829
        %v1164 = vunpack.c.l.b16 %v830
        %v1165 = vunpack.c.h.b16 %v830
        %v1166 = vunpack.c.l.b16 %v831
        %v1167 = vunpack.c.h.b16 %v831
        %v1168 = vunpack.c.l.b16 %v832
        %v1169 = vunpack.c.h.b16 %v832
        %v1170 = vunpack.c.l.b16 %v833
        %v1171 = vunpack.c.h.b16 %v833
        %v1172 = vunpack.c.l.b16 %v834
        %v1173 = vunpack.c.h.b16 %v834
        %v1174 = vunpack.c.l.b16 %v835
        %v1175 = vunpack.c.h.b16 %v835
        %v1176 = vunpack.c.l.b16 %v836
        %v1177 = vunpack.c.h.b16 %v836
        %v1178 = vunpack.c.l.b16 %v837
        %v1179 = vunpack.c.h.b16 %v837
        %v1180 = vunpack.c.l.b16 %v838
        %v1181 = vunpack.c.h.b16 %v838
        %v1182 = vunpack.c.l.b16 %v839
        %v1183 = vunpack.c.h.b16 %v839
        %v1184 = vunpack.c.l.b16 %v840
        %v1185 = vunpack.c.h.b16 %v840
        %v1186 = vunpack.c.l.b16 %v841
        %v1187 = vunpack.c.h.b16 %v841
        %v1188 = vunpack.c.l.b16 %v842
        %v1189 = vunpack.c.h.b16 %v842
        %v1190 = vunpack.c.l.b16 %v843
        %v1191 = vunpack.c.h.b16 %v843
        %v1192 = vunpack.c.l.b16 %v844
        %v1193 = vunpack.c.h.b16 %v844
        %v1194 = vunpack.c.l.b16 %v845
        %v1195 = vunpack.c.h.b16 %v845
        %v1196 = vunpack.c.l.b16 %v846
        %v1197 = vunpack.c.h.b16 %v846
        %v1198 = vunpack.c.l.b16 %v847
        %v1199 = vunpack.c.h.b16 %v847
        %v1200 = vunpack.c.l.b16 %v848
        %v1201 = vunpack.c.h.b16 %v848
        %v1202 = vunpack.c.l.b16 %v849
        %v1203 = vunpack.c.h.b16 %v849
        %v1204 = vunpack.c.l.b16 %v850
        %v1205 = vunpack.c.h.b16 %v850
        %v1206 = vunpack.c.l.b16 %v851
        %v1207 = vunpack.c.h.b16 %v851
        %v1208 = vunpack.c.l.b16 %v852
        %v1209 = vunpack.c.h.b16 %v852
        %v1210 = vunpack.c.l.b16 %v853
        %v1211 = vunpack.c.h.b16 %v853
        %v1212 = vunpack.c.l.b16 %v854
        %v1213 = vunpack.c.h.b16 %v854
        %v1214 = vunpack.c.l.b16 %v855
        %v1215 = vunpack.c.h.b16 %v855
        %v1216 = vunpack.c.l.b16 %v856
        %v1217 = vunpack.c.h.b16 %v856
        %v1218 = vunpack.c.l.b16 %v857
        %v1219 = vunpack.c.h.b16 %v857
        %v1220 = vpack.c.b16 %v1096, %v1092
        %v1221 = vpack.c.b16 %v1097, %v1093
        %v1222 = vpack.c.b16 %v1098, %v1094
        %v1223 = vpack.c.b16 %v1099, %v1095
        %v1224 = vpack.c.b16 %v1104, %v1100
        %v1225 = vpack.c.b16 %v1105, %v1101
        %v1226 = vpack.c.b16 %v1106, %v1102
        %v1227 = vpack.c.b16 %v1107, %v1103
        %v1228 = vpack.c.b16 %v1112, %v1108
        %v1229 = vpack.c.b16 %v1113, %v1109
        %v1230 = vpack.c.b16 %v1114, %v1110
        %v1231 = vpack.c.b16 %v1115, %v1111
        %v1232 = vpack.c.b16 %v1120, %v1116
        %v1233 = vpack.c.b16 %v1121, %v1117
        %v1234 = vpack.c.b16 %v1122, %v1118
        %v1235 = vpack.c.b16 %v1123, %v1119
        %v1236 = vpack.c.b16 %v1128, %v1124
        %v1237 = vpack.c.b16 %v1129, %v1125
        %v1238 = vpack.c.b16 %v1130, %v1126
        %v1239 = vpack.c.b16 %v1131, %v1127
        %v1240 = vpack.c.b16 %v1136, %v1132
        %v1241 = vpack.c.b16 %v1137, %v1133
        %v1242 = vpack.c.b16 %v1138, %v1134
        %v1243 = vpack.c.b16 %v1139, %v1135
        %v1244 = vpack.c.b16 %v1144, %v1140
        %v1245 = vpack.c.b16 %v1145, %v1141
        %v1246 = vpack.c.b16 %v1146, %v1142
        %v1247 = vpack.c.b16 %v1147, %v1143
        %v1248 = vpack.c.b16 %v1152, %v1148
        %v1249 = vpack.c.b16 %v1153, %v1149
        %v1250 = vpack.c.b16 %v1154, %v1150
        %v1251 = vpack.c.b16 %v1155, %v1151
        %v1252 = vpack.c.b16 %v1160, %v1156
        %v1253 = vpack.c.b16 %v1161, %v1157
        %v1254 = vpack.c.b16 %v1162, %v1158
        %v1255 = vpack.c.b16 %v1163, %v1159
        %v1256 = vpack.c.b16 %v1168, %v1164
        %v1257 = vpack.c.b16 %v1169, %v1165
        %v1258 = vpack.c.b16 %v1170, %v1166
        %v1259 = vpack.c.b16 %v1171, %v1167
        %v1260 = vpack.c.b16 %v1176, %v1172
        %v1261 = vpack.c.b16 %v1177, %v1173
        %v1262 = vpack.c.b16 %v1178, %v1174
        %v1263 = vpack.c.b16 %v1179, %v1175
        %v1264 = vpack.c.b16 %v1184, %v1180
        %v1265 = vpack.c.b16 %v1185, %v1181
        %v1266 = vpack.c.b16 %v1186, %v1182
        %v1267 = vpack.c.b16 %v1187, %v1183
        %v1268 = vpack.c.b16 %v1192, %v1188
        %v1269 = vpack.c.b16 %v1193, %v1189
        %v1270 = vpack.c.b16 %v1194, %v1190
        %v1271 = vpack.c.b16 %v1195, %v1191
        %v1272 = vpack.c.b16 %v1200, %v1196
        %v1273 = vpack.c.b16 %v1201, %v1197
        %v1274 = vpack.c.b16 %v1202, %v1198
        %v1275 = vpack.c.b16 %v1203, %v1199
        %v1276 = vpack.c.b16 %v1208, %v1204
        %v1277 = vpack.c.b16 %v1209, %v1205
        %v1278 = vpack.c.b16 %v1210, %v1206
        %v1279 = vpack.c.b16 %v1211, %v1207
        %v1280 = vpack.c.b16 %v1216, %v1212
        %v1281 = vpack.c.b16 %v1217, %v1213
        %v1282 = vpack.c.b16 %v1218, %v1214
        %v1283 = vpack.c.b16 %v1219, %v1215
        %1348 = vmatpush.bf16.msra.mxu0 %v1248
        %1349 = vmatpush.bf16.msra.mxu0 %v1244
        %1350 = vmatpush.bf16.msra.mxu0 %v1240
        %1351 = vmatpush.bf16.msra.mxu0 %v1236
        %1352 = vmatpush.bf16.msra.mxu0 %v1232
        %1353 = vmatpush.bf16.msra.mxu0 %v1228
        %1354 = vmatpush.bf16.msra.mxu0 %v1224
        %1355 = vmatpush.bf16.msra.mxu0 %v1220
        %1356 = vmatmul.bf16.gmra.mxu0 %v964
        %v1357 = vpop.f32.mrf.mxu0
        %v1358 = vadd.f32 %v860, %v1357
        %v1359 = vpop.f32.mrf.mxu0
        %v1360 = vadd.f32 %v860, %v1359
        %1361 = vmatmul.bf16.gmra.mxu0 %v966
        %v1362 = vpop.f32.mrf.mxu0
        %v1363 = vadd.f32 %v860, %v1362
        %v1364 = vpop.f32.mrf.mxu0
        %v1365 = vadd.f32 %v860, %v1364
        %1366 = vmatmul.bf16.gmra.mxu0 %v968
        %v1367 = vpop.f32.mrf.mxu0
        %v1368 = vadd.f32 %v860, %v1367
        %v1369 = vpop.f32.mrf.mxu0
        %v1370 = vadd.f32 %v860, %v1369
        %1371 = vmatmul.bf16.gmra.mxu0 %v970
        %v1372 = vpop.f32.mrf.mxu0
        %v1373 = vadd.f32 %v860, %v1372
        %v1374 = vpop.f32.mrf.mxu0
        %v1375 = vadd.f32 %v860, %v1374
        %1376 = vmatmul.bf16.gmra.mxu0 %v972
        %v1377 = vpop.f32.mrf.mxu0
        %v1378 = vadd.f32 %v860, %v1377
        %v1379 = vpop.f32.mrf.mxu0
        %v1380 = vadd.f32 %v860, %v1379
        %1381 = vmatmul.bf16.gmra.mxu0 %v974
        %v1382 = vpop.f32.mrf.mxu0
        %v1383 = vadd.f32 %v860, %v1382
        %v1384 = vpop.f32.mrf.mxu0
        %v1385 = vadd.f32 %v860, %v1384
        %1386 = vmatmul.bf16.gmra.mxu0 %v976
        %v1387 = vpop.f32.mrf.mxu0
        %v1388 = vadd.f32 %v860, %v1387
        %v1389 = vpop.f32.mrf.mxu0
        %v1390 = vadd.f32 %v860, %v1389
        %1391 = vmatmul.bf16.gmra.mxu0 %v978
        %v1392 = vpop.f32.mrf.mxu0
        %v1393 = vadd.f32 %v860, %v1392
        %v1394 = vpop.f32.mrf.mxu0
        %v1395 = vadd.f32 %v860, %v1394
        %1396 = vmatmul.bf16.gmra.mxu0 %v980
        %v1397 = vpop.f32.mrf.mxu0
        %v1398 = vadd.f32 %v860, %v1397
        %v1399 = vpop.f32.mrf.mxu0
        %v1400 = vadd.f32 %v860, %v1399
        %1401 = vmatmul.bf16.gmra.mxu0 %v982
        %v1402 = vpop.f32.mrf.mxu0
        %v1403 = vadd.f32 %v860, %v1402
        %v1404 = vpop.f32.mrf.mxu0
        %v1405 = vadd.f32 %v860, %v1404
        %1406 = vmatmul.bf16.gmra.mxu0 %v984
        %v1407 = vpop.f32.mrf.mxu0
        %v1408 = vadd.f32 %v860, %v1407
        %v1409 = vpop.f32.mrf.mxu0
        %v1410 = vadd.f32 %v860, %v1409
        %1411 = vmatmul.bf16.gmra.mxu0 %v986
        %v1412 = vpop.f32.mrf.mxu0
        %v1413 = vadd.f32 %v860, %v1412
        %v1414 = vpop.f32.mrf.mxu0
        %v1415 = vadd.f32 %v860, %v1414
        %1416 = vmatmul.bf16.gmra.mxu0 %v988
        %v1417 = vpop.f32.mrf.mxu0
        %v1418 = vadd.f32 %v860, %v1417
        %v1419 = vpop.f32.mrf.mxu0
        %v1420 = vadd.f32 %v860, %v1419
        %1421 = vmatmul.bf16.gmra.mxu0 %v990
        %v1422 = vpop.f32.mrf.mxu0
        %v1423 = vadd.f32 %v860, %v1422
        %v1424 = vpop.f32.mrf.mxu0
        %v1425 = vadd.f32 %v860, %v1424
        %1426 = vmatmul.bf16.gmra.mxu0 %v992
        %v1427 = vpop.f32.mrf.mxu0
        %v1428 = vadd.f32 %v860, %v1427
        %v1429 = vpop.f32.mrf.mxu0
        %v1430 = vadd.f32 %v860, %v1429
        %1431 = vmatmul.bf16.gmra.mxu0 %v994
        %v1432 = vpop.f32.mrf.mxu0
        %v1433 = vadd.f32 %v860, %v1432
        %v1434 = vpop.f32.mrf.mxu0
        %v1435 = vadd.f32 %v860, %v1434
        %1436 = vdwg.mxu0
        %1437 = vmatpush.bf16.msra.mxu0 %v1280
        %1438 = vmatpush.bf16.msra.mxu0 %v1276
        %1439 = vmatpush.bf16.msra.mxu0 %v1272
        %1440 = vmatpush.bf16.msra.mxu0 %v1268
        %1441 = vmatpush.bf16.msra.mxu0 %v1264
        %1442 = vmatpush.bf16.msra.mxu0 %v1260
        %1443 = vmatpush.bf16.msra.mxu0 %v1256
        %1444 = vmatpush.bf16.msra.mxu0 %v1252
        %1445 = vmatmul.bf16.gmra.mxu0 %v965
        %v1446 = vpop.f32.mrf.mxu0
        %v1447 = vadd.f32 %v1358, %v1446
        %v1448 = vpop.f32.mrf.mxu0
        %v1449 = vadd.f32 %v1360, %v1448
        %1450 = vmatmul.bf16.gmra.mxu0 %v967
        %v1451 = vpop.f32.mrf.mxu0
        %v1452 = vadd.f32 %v1363, %v1451
        %v1453 = vpop.f32.mrf.mxu0
        %v1454 = vadd.f32 %v1365, %v1453
        %1455 = vmatmul.bf16.gmra.mxu0 %v969
        %v1456 = vpop.f32.mrf.mxu0
        %v1457 = vadd.f32 %v1368, %v1456
        %v1458 = vpop.f32.mrf.mxu0
        %v1459 = vadd.f32 %v1370, %v1458
        %1460 = vmatmul.bf16.gmra.mxu0 %v971
        %v1461 = vpop.f32.mrf.mxu0
        %v1462 = vadd.f32 %v1373, %v1461
        %v1463 = vpop.f32.mrf.mxu0
        %v1464 = vadd.f32 %v1375, %v1463
        %1465 = vmatmul.bf16.gmra.mxu0 %v973
        %v1466 = vpop.f32.mrf.mxu0
        %v1467 = vadd.f32 %v1378, %v1466
        %v1468 = vpop.f32.mrf.mxu0
        %v1469 = vadd.f32 %v1380, %v1468
        %1470 = vmatmul.bf16.gmra.mxu0 %v975
        %v1471 = vpop.f32.mrf.mxu0
        %v1472 = vadd.f32 %v1383, %v1471
        %v1473 = vpop.f32.mrf.mxu0
        %v1474 = vadd.f32 %v1385, %v1473
        %1475 = vmatmul.bf16.gmra.mxu0 %v977
        %v1476 = vpop.f32.mrf.mxu0
        %v1477 = vadd.f32 %v1388, %v1476
        %v1478 = vpop.f32.mrf.mxu0
        %v1479 = vadd.f32 %v1390, %v1478
        %1480 = vmatmul.bf16.gmra.mxu0 %v979
        %v1481 = vpop.f32.mrf.mxu0
        %v1482 = vadd.f32 %v1393, %v1481
        %v1483 = vpop.f32.mrf.mxu0
        %v1484 = vadd.f32 %v1395, %v1483
        %1485 = vmatmul.bf16.gmra.mxu0 %v981
        %v1486 = vpop.f32.mrf.mxu0
        %v1487 = vadd.f32 %v1398, %v1486
        %v1488 = vpop.f32.mrf.mxu0
        %v1489 = vadd.f32 %v1400, %v1488
        %1490 = vmatmul.bf16.gmra.mxu0 %v983
        %v1491 = vpop.f32.mrf.mxu0
        %v1492 = vadd.f32 %v1403, %v1491
        %v1493 = vpop.f32.mrf.mxu0
        %v1494 = vadd.f32 %v1405, %v1493
        %1495 = vmatmul.bf16.gmra.mxu0 %v985
        %v1496 = vpop.f32.mrf.mxu0
        %v1497 = vadd.f32 %v1408, %v1496
        %v1498 = vpop.f32.mrf.mxu0
        %v1499 = vadd.f32 %v1410, %v1498
        %1500 = vmatmul.bf16.gmra.mxu0 %v987
        %v1501 = vpop.f32.mrf.mxu0
        %v1502 = vadd.f32 %v1413, %v1501
        %v1503 = vpop.f32.mrf.mxu0
        %v1504 = vadd.f32 %v1415, %v1503
        %1505 = vmatmul.bf16.gmra.mxu0 %v989
        %v1506 = vpop.f32.mrf.mxu0
        %v1507 = vadd.f32 %v1418, %v1506
        %v1508 = vpop.f32.mrf.mxu0
        %v1509 = vadd.f32 %v1420, %v1508
        %1510 = vmatmul.bf16.gmra.mxu0 %v991
        %v1511 = vpop.f32.mrf.mxu0
        %v1512 = vadd.f32 %v1423, %v1511
        %v1513 = vpop.f32.mrf.mxu0
        %v1514 = vadd.f32 %v1425, %v1513
        %1515 = vmatmul.bf16.gmra.mxu0 %v993
        %v1516 = vpop.f32.mrf.mxu0
        %v1517 = vadd.f32 %v1428, %v1516
        %v1518 = vpop.f32.mrf.mxu0
        %v1519 = vadd.f32 %v1430, %v1518
        %1520 = vmatmul.bf16.gmra.mxu0 %v995
        %v1521 = vpop.f32.mrf.mxu0
        %v1522 = vadd.f32 %v1433, %v1521
        %v1523 = vpop.f32.mrf.mxu0
        %v1524 = vadd.f32 %v1435, %v1523
        %1525 = vdwg.mxu0
        %1526 = vmatpush.bf16.msra.mxu0 %v1249
        %1527 = vmatpush.bf16.msra.mxu0 %v1245
        %1528 = vmatpush.bf16.msra.mxu0 %v1241
        %1529 = vmatpush.bf16.msra.mxu0 %v1237
        %1530 = vmatpush.bf16.msra.mxu0 %v1233
        %1531 = vmatpush.bf16.msra.mxu0 %v1229
        %1532 = vmatpush.bf16.msra.mxu0 %v1225
        %1533 = vmatpush.bf16.msra.mxu0 %v1221
        %1534 = vmatmul.bf16.gmra.mxu0 %v964
        %v1535 = vpop.f32.mrf.mxu0
        %v1536 = vadd.f32 %v861, %v1535
        %v1537 = vpop.f32.mrf.mxu0
        %v1538 = vadd.f32 %v861, %v1537
        %1539 = vmatmul.bf16.gmra.mxu0 %v966
        %v1540 = vpop.f32.mrf.mxu0
        %v1541 = vadd.f32 %v861, %v1540
        %v1542 = vpop.f32.mrf.mxu0
        %v1543 = vadd.f32 %v861, %v1542
        %1544 = vmatmul.bf16.gmra.mxu0 %v968
        %v1545 = vpop.f32.mrf.mxu0
        %v1546 = vadd.f32 %v861, %v1545
        %v1547 = vpop.f32.mrf.mxu0
        %v1548 = vadd.f32 %v861, %v1547
        %1549 = vmatmul.bf16.gmra.mxu0 %v970
        %v1550 = vpop.f32.mrf.mxu0
        %v1551 = vadd.f32 %v861, %v1550
        %v1552 = vpop.f32.mrf.mxu0
        %v1553 = vadd.f32 %v861, %v1552
        %1554 = vmatmul.bf16.gmra.mxu0 %v972
        %v1555 = vpop.f32.mrf.mxu0
        %v1556 = vadd.f32 %v861, %v1555
        %v1557 = vpop.f32.mrf.mxu0
        %v1558 = vadd.f32 %v861, %v1557
        %1559 = vmatmul.bf16.gmra.mxu0 %v974
        %v1560 = vpop.f32.mrf.mxu0
        %v1561 = vadd.f32 %v861, %v1560
        %v1562 = vpop.f32.mrf.mxu0
        %v1563 = vadd.f32 %v861, %v1562
        %1564 = vmatmul.bf16.gmra.mxu0 %v976
        %v1565 = vpop.f32.mrf.mxu0
        %v1566 = vadd.f32 %v861, %v1565
        %v1567 = vpop.f32.mrf.mxu0
        %v1568 = vadd.f32 %v861, %v1567
        %1569 = vmatmul.bf16.gmra.mxu0 %v978
        %v1570 = vpop.f32.mrf.mxu0
        %v1571 = vadd.f32 %v861, %v1570
        %v1572 = vpop.f32.mrf.mxu0
        %v1573 = vadd.f32 %v861, %v1572
        %1574 = vmatmul.bf16.gmra.mxu0 %v980
        %v1575 = vpop.f32.mrf.mxu0
        %v1576 = vadd.f32 %v861, %v1575
        %v1577 = vpop.f32.mrf.mxu0
        %v1578 = vadd.f32 %v861, %v1577
        %1579 = vmatmul.bf16.gmra.mxu0 %v982
        %v1580 = vpop.f32.mrf.mxu0
        %v1581 = vadd.f32 %v861, %v1580
        %v1582 = vpop.f32.mrf.mxu0
        %v1583 = vadd.f32 %v861, %v1582
        %1584 = vmatmul.bf16.gmra.mxu0 %v984
        %v1585 = vpop.f32.mrf.mxu0
        %v1586 = vadd.f32 %v861, %v1585
        %v1587 = vpop.f32.mrf.mxu0
        %v1588 = vadd.f32 %v861, %v1587
        %1589 = vmatmul.bf16.gmra.mxu0 %v986
        %v1590 = vpop.f32.mrf.mxu0
        %v1591 = vadd.f32 %v861, %v1590
        %v1592 = vpop.f32.mrf.mxu0
        %v1593 = vadd.f32 %v861, %v1592
        %1594 = vmatmul.bf16.gmra.mxu0 %v988
        %v1595 = vpop.f32.mrf.mxu0
        %v1596 = vadd.f32 %v861, %v1595
        %v1597 = vpop.f32.mrf.mxu0
        %v1598 = vadd.f32 %v861, %v1597
        %1599 = vmatmul.bf16.gmra.mxu0 %v990
        %v1600 = vpop.f32.mrf.mxu0
        %v1601 = vadd.f32 %v861, %v1600
        %v1602 = vpop.f32.mrf.mxu0
        %v1603 = vadd.f32 %v861, %v1602
        %1604 = vmatmul.bf16.gmra.mxu0 %v992
        %v1605 = vpop.f32.mrf.mxu0
        %v1606 = vadd.f32 %v861, %v1605
        %v1607 = vpop.f32.mrf.mxu0
        %v1608 = vadd.f32 %v861, %v1607
        %1609 = vmatmul.bf16.gmra.mxu0 %v994
        %v1610 = vpop.f32.mrf.mxu0
        %v1611 = vadd.f32 %v861, %v1610
        %v1612 = vpop.f32.mrf.mxu0
        %v1613 = vadd.f32 %v861, %v1612
        %1614 = vdwg.mxu0
        %1615 = vmatpush.bf16.msra.mxu0 %v1281
        %1616 = vmatpush.bf16.msra.mxu0 %v1277
        %1617 = vmatpush.bf16.msra.mxu0 %v1273
        %1618 = vmatpush.bf16.msra.mxu0 %v1269
        %1619 = vmatpush.bf16.msra.mxu0 %v1265
        %1620 = vmatpush.bf16.msra.mxu0 %v1261
        %1621 = vmatpush.bf16.msra.mxu0 %v1257
        %1622 = vmatpush.bf16.msra.mxu0 %v1253
        %1623 = vmatmul.bf16.gmra.mxu0 %v965
        %v1624 = vpop.f32.mrf.mxu0
        %v1625 = vadd.f32 %v1536, %v1624
        %v1626 = vpop.f32.mrf.mxu0
        %v1627 = vadd.f32 %v1538, %v1626
        %1628 = vmatmul.bf16.gmra.mxu0 %v967
        %v1629 = vpop.f32.mrf.mxu0
        %v1630 = vadd.f32 %v1541, %v1629
        %v1631 = vpop.f32.mrf.mxu0
        %v1632 = vadd.f32 %v1543, %v1631
        %1633 = vmatmul.bf16.gmra.mxu0 %v969
        %v1634 = vpop.f32.mrf.mxu0
        %v1635 = vadd.f32 %v1546, %v1634
        %v1636 = vpop.f32.mrf.mxu0
        %v1637 = vadd.f32 %v1548, %v1636
        %1638 = vmatmul.bf16.gmra.mxu0 %v971
        %v1639 = vpop.f32.mrf.mxu0
        %v1640 = vadd.f32 %v1551, %v1639
        %v1641 = vpop.f32.mrf.mxu0
        %v1642 = vadd.f32 %v1553, %v1641
        %1643 = vmatmul.bf16.gmra.mxu0 %v973
        %v1644 = vpop.f32.mrf.mxu0
        %v1645 = vadd.f32 %v1556, %v1644
        %v1646 = vpop.f32.mrf.mxu0
        %v1647 = vadd.f32 %v1558, %v1646
        %1648 = vmatmul.bf16.gmra.mxu0 %v975
        %v1649 = vpop.f32.mrf.mxu0
        %v1650 = vadd.f32 %v1561, %v1649
        %v1651 = vpop.f32.mrf.mxu0
        %v1652 = vadd.f32 %v1563, %v1651
        %1653 = vmatmul.bf16.gmra.mxu0 %v977
        %v1654 = vpop.f32.mrf.mxu0
        %v1655 = vadd.f32 %v1566, %v1654
        %v1656 = vpop.f32.mrf.mxu0
        %v1657 = vadd.f32 %v1568, %v1656
        %1658 = vmatmul.bf16.gmra.mxu0 %v979
        %v1659 = vpop.f32.mrf.mxu0
        %v1660 = vadd.f32 %v1571, %v1659
        %v1661 = vpop.f32.mrf.mxu0
        %v1662 = vadd.f32 %v1573, %v1661
        %1663 = vmatmul.bf16.gmra.mxu0 %v981
        %v1664 = vpop.f32.mrf.mxu0
        %v1665 = vadd.f32 %v1576, %v1664
        %v1666 = vpop.f32.mrf.mxu0
        %v1667 = vadd.f32 %v1578, %v1666
        %1668 = vmatmul.bf16.gmra.mxu0 %v983
        %v1669 = vpop.f32.mrf.mxu0
        %v1670 = vadd.f32 %v1581, %v1669
        %v1671 = vpop.f32.mrf.mxu0
        %v1672 = vadd.f32 %v1583, %v1671
        %1673 = vmatmul.bf16.gmra.mxu0 %v985
        %v1674 = vpop.f32.mrf.mxu0
        %v1675 = vadd.f32 %v1586, %v1674
        %v1676 = vpop.f32.mrf.mxu0
        %v1677 = vadd.f32 %v1588, %v1676
        %1678 = vmatmul.bf16.gmra.mxu0 %v987
        %v1679 = vpop.f32.mrf.mxu0
        %v1680 = vadd.f32 %v1591, %v1679
        %v1681 = vpop.f32.mrf.mxu0
        %v1682 = vadd.f32 %v1593, %v1681
        %1683 = vmatmul.bf16.gmra.mxu0 %v989
        %v1684 = vpop.f32.mrf.mxu0
        %v1685 = vadd.f32 %v1596, %v1684
        %v1686 = vpop.f32.mrf.mxu0
        %v1687 = vadd.f32 %v1598, %v1686
        %1688 = vmatmul.bf16.gmra.mxu0 %v991
        %v1689 = vpop.f32.mrf.mxu0
        %v1690 = vadd.f32 %v1601, %v1689
        %v1691 = vpop.f32.mrf.mxu0
        %v1692 = vadd.f32 %v1603, %v1691
        %1693 = vmatmul.bf16.gmra.mxu0 %v993
        %v1694 = vpop.f32.mrf.mxu0
        %v1695 = vadd.f32 %v1606, %v1694
        %v1696 = vpop.f32.mrf.mxu0
        %v1697 = vadd.f32 %v1608, %v1696
        %1698 = vmatmul.bf16.gmra.mxu0 %v995
        %v1699 = vpop.f32.mrf.mxu0
        %v1700 = vadd.f32 %v1611, %v1699
        %v1701 = vpop.f32.mrf.mxu0
        %v1702 = vadd.f32 %v1613, %v1701
        %1703 = vdwg.mxu0
        %1704 = vmatpush.bf16.msra.mxu0 %v1250
        %1705 = vmatpush.bf16.msra.mxu0 %v1246
        %1706 = vmatpush.bf16.msra.mxu0 %v1242
        %1707 = vmatpush.bf16.msra.mxu0 %v1238
        %1708 = vmatpush.bf16.msra.mxu0 %v1234
        %1709 = vmatpush.bf16.msra.mxu0 %v1230
        %1710 = vmatpush.bf16.msra.mxu0 %v1226
        %1711 = vmatpush.bf16.msra.mxu0 %v1222
        %1712 = vmatmul.bf16.gmra.mxu0 %v964
        %v1713 = vpop.f32.mrf.mxu0
        %v1714 = vadd.f32 %v862, %v1713
        %v1715 = vpop.f32.mrf.mxu0
        %v1716 = vadd.f32 %v862, %v1715
        %1717 = vmatmul.bf16.gmra.mxu0 %v966
        %v1718 = vpop.f32.mrf.mxu0
        %v1719 = vadd.f32 %v862, %v1718
        %v1720 = vpop.f32.mrf.mxu0
        %v1721 = vadd.f32 %v862, %v1720
        %1722 = vmatmul.bf16.gmra.mxu0 %v968
        %v1723 = vpop.f32.mrf.mxu0
        %v1724 = vadd.f32 %v862, %v1723
        %v1725 = vpop.f32.mrf.mxu0
        %v1726 = vadd.f32 %v862, %v1725
        %1727 = vmatmul.bf16.gmra.mxu0 %v970
        %v1728 = vpop.f32.mrf.mxu0
        %v1729 = vadd.f32 %v862, %v1728
        %v1730 = vpop.f32.mrf.mxu0
        %v1731 = vadd.f32 %v862, %v1730
        %1732 = vmatmul.bf16.gmra.mxu0 %v972
        %v1733 = vpop.f32.mrf.mxu0
        %v1734 = vadd.f32 %v862, %v1733
        %v1735 = vpop.f32.mrf.mxu0
        %v1736 = vadd.f32 %v862, %v1735
        %1737 = vmatmul.bf16.gmra.mxu0 %v974
        %v1738 = vpop.f32.mrf.mxu0
        %v1739 = vadd.f32 %v862, %v1738
        %v1740 = vpop.f32.mrf.mxu0
        %v1741 = vadd.f32 %v862, %v1740
        %1742 = vmatmul.bf16.gmra.mxu0 %v976
        %v1743 = vpop.f32.mrf.mxu0
        %v1744 = vadd.f32 %v862, %v1743
        %v1745 = vpop.f32.mrf.mxu0
        %v1746 = vadd.f32 %v862, %v1745
        %1747 = vmatmul.bf16.gmra.mxu0 %v978
        %v1748 = vpop.f32.mrf.mxu0
        %v1749 = vadd.f32 %v862, %v1748
        %v1750 = vpop.f32.mrf.mxu0
        %v1751 = vadd.f32 %v862, %v1750
        %1752 = vmatmul.bf16.gmra.mxu0 %v980
        %v1753 = vpop.f32.mrf.mxu0
        %v1754 = vadd.f32 %v862, %v1753
        %v1755 = vpop.f32.mrf.mxu0
        %v1756 = vadd.f32 %v862, %v1755
        %1757 = vmatmul.bf16.gmra.mxu0 %v982
        %v1758 = vpop.f32.mrf.mxu0
        %v1759 = vadd.f32 %v862, %v1758
        %v1760 = vpop.f32.mrf.mxu0
        %v1761 = vadd.f32 %v862, %v1760
        %1762 = vmatmul.bf16.gmra.mxu0 %v984
        %v1763 = vpop.f32.mrf.mxu0
        %v1764 = vadd.f32 %v862, %v1763
        %v1765 = vpop.f32.mrf.mxu0
        %v1766 = vadd.f32 %v862, %v1765
        %1767 = vmatmul.bf16.gmra.mxu0 %v986
        %v1768 = vpop.f32.mrf.mxu0
        %v1769 = vadd.f32 %v862, %v1768
        %v1770 = vpop.f32.mrf.mxu0
        %v1771 = vadd.f32 %v862, %v1770
        %1772 = vmatmul.bf16.gmra.mxu0 %v988
        %v1773 = vpop.f32.mrf.mxu0
        %v1774 = vadd.f32 %v862, %v1773
        %v1775 = vpop.f32.mrf.mxu0
        %v1776 = vadd.f32 %v862, %v1775
        %1777 = vmatmul.bf16.gmra.mxu0 %v990
        %v1778 = vpop.f32.mrf.mxu0
        %v1779 = vadd.f32 %v862, %v1778
        %v1780 = vpop.f32.mrf.mxu0
        %v1781 = vadd.f32 %v862, %v1780
        %1782 = vmatmul.bf16.gmra.mxu0 %v992
        %v1783 = vpop.f32.mrf.mxu0
        %v1784 = vadd.f32 %v862, %v1783
        %v1785 = vpop.f32.mrf.mxu0
        %v1786 = vadd.f32 %v862, %v1785
        %1787 = vmatmul.bf16.gmra.mxu0 %v994
        %v1788 = vpop.f32.mrf.mxu0
        %v1789 = vadd.f32 %v862, %v1788
        %v1790 = vpop.f32.mrf.mxu0
        %v1791 = vadd.f32 %v862, %v1790
        %1792 = vdwg.mxu0
        %1793 = vmatpush.bf16.msra.mxu0 %v1282
        %1794 = vmatpush.bf16.msra.mxu0 %v1278
        %1795 = vmatpush.bf16.msra.mxu0 %v1274
        %1796 = vmatpush.bf16.msra.mxu0 %v1270
        %1797 = vmatpush.bf16.msra.mxu0 %v1266
        %1798 = vmatpush.bf16.msra.mxu0 %v1262
        %1799 = vmatpush.bf16.msra.mxu0 %v1258
        %1800 = vmatpush.bf16.msra.mxu0 %v1254
        %1801 = vmatmul.bf16.gmra.mxu0 %v965
        %v1802 = vpop.f32.mrf.mxu0
        %v1803 = vadd.f32 %v1714, %v1802
        %v1804 = vpop.f32.mrf.mxu0
        %v1805 = vadd.f32 %v1716, %v1804
        %1806 = vmatmul.bf16.gmra.mxu0 %v967
        %v1807 = vpop.f32.mrf.mxu0
        %v1808 = vadd.f32 %v1719, %v1807
        %v1809 = vpop.f32.mrf.mxu0
        %v1810 = vadd.f32 %v1721, %v1809
        %1811 = vmatmul.bf16.gmra.mxu0 %v969
        %v1812 = vpop.f32.mrf.mxu0
        %v1813 = vadd.f32 %v1724, %v1812
        %v1814 = vpop.f32.mrf.mxu0
        %v1815 = vadd.f32 %v1726, %v1814
        %1816 = vmatmul.bf16.gmra.mxu0 %v971
        %v1817 = vpop.f32.mrf.mxu0
        %v1818 = vadd.f32 %v1729, %v1817
        %v1819 = vpop.f32.mrf.mxu0
        %v1820 = vadd.f32 %v1731, %v1819
        %1821 = vmatmul.bf16.gmra.mxu0 %v973
        %v1822 = vpop.f32.mrf.mxu0
        %v1823 = vadd.f32 %v1734, %v1822
        %v1824 = vpop.f32.mrf.mxu0
        %v1825 = vadd.f32 %v1736, %v1824
        %1826 = vmatmul.bf16.gmra.mxu0 %v975
        %v1827 = vpop.f32.mrf.mxu0
        %v1828 = vadd.f32 %v1739, %v1827
        %v1829 = vpop.f32.mrf.mxu0
        %v1830 = vadd.f32 %v1741, %v1829
        %1831 = vmatmul.bf16.gmra.mxu0 %v977
        %v1832 = vpop.f32.mrf.mxu0
        %v1833 = vadd.f32 %v1744, %v1832
        %v1834 = vpop.f32.mrf.mxu0
        %v1835 = vadd.f32 %v1746, %v1834
        %1836 = vmatmul.bf16.gmra.mxu0 %v979
        %v1837 = vpop.f32.mrf.mxu0
        %v1838 = vadd.f32 %v1749, %v1837
        %v1839 = vpop.f32.mrf.mxu0
        %v1840 = vadd.f32 %v1751, %v1839
        %1841 = vmatmul.bf16.gmra.mxu0 %v981
        %v1842 = vpop.f32.mrf.mxu0
        %v1843 = vadd.f32 %v1754, %v1842
        %v1844 = vpop.f32.mrf.mxu0
        %v1845 = vadd.f32 %v1756, %v1844
        %1846 = vmatmul.bf16.gmra.mxu0 %v983
        %v1847 = vpop.f32.mrf.mxu0
        %v1848 = vadd.f32 %v1759, %v1847
        %v1849 = vpop.f32.mrf.mxu0
        %v1850 = vadd.f32 %v1761, %v1849
        %1851 = vmatmul.bf16.gmra.mxu0 %v985
        %v1852 = vpop.f32.mrf.mxu0
        %v1853 = vadd.f32 %v1764, %v1852
        %v1854 = vpop.f32.mrf.mxu0
        %v1855 = vadd.f32 %v1766, %v1854
        %1856 = vmatmul.bf16.gmra.mxu0 %v987
        %v1857 = vpop.f32.mrf.mxu0
        %v1858 = vadd.f32 %v1769, %v1857
        %v1859 = vpop.f32.mrf.mxu0
        %v1860 = vadd.f32 %v1771, %v1859
        %1861 = vmatmul.bf16.gmra.mxu0 %v989
        %v1862 = vpop.f32.mrf.mxu0
        %v1863 = vadd.f32 %v1774, %v1862
        %v1864 = vpop.f32.mrf.mxu0
        %v1865 = vadd.f32 %v1776, %v1864
        %1866 = vmatmul.bf16.gmra.mxu0 %v991
        %v1867 = vpop.f32.mrf.mxu0
        %v1868 = vadd.f32 %v1779, %v1867
        %v1869 = vpop.f32.mrf.mxu0
        %v1870 = vadd.f32 %v1781, %v1869
        %1871 = vmatmul.bf16.gmra.mxu0 %v993
        %v1872 = vpop.f32.mrf.mxu0
        %v1873 = vadd.f32 %v1784, %v1872
        %v1874 = vpop.f32.mrf.mxu0
        %v1875 = vadd.f32 %v1786, %v1874
        %1876 = vmatmul.bf16.gmra.mxu0 %v995
        %v1877 = vpop.f32.mrf.mxu0
        %v1878 = vadd.f32 %v1789, %v1877
        %v1879 = vpop.f32.mrf.mxu0
        %v1880 = vadd.f32 %v1791, %v1879
        %1881 = vdwg.mxu0
        %1882 = vmatpush.bf16.msra.mxu0 %v1251
        %1883 = vmatpush.bf16.msra.mxu0 %v1247
        %1884 = vmatpush.bf16.msra.mxu0 %v1243
        %1885 = vmatpush.bf16.msra.mxu0 %v1239
        %1886 = vmatpush.bf16.msra.mxu0 %v1235
        %1887 = vmatpush.bf16.msra.mxu0 %v1231
        %1888 = vmatpush.bf16.msra.mxu0 %v1227
        %1889 = vmatpush.bf16.msra.mxu0 %v1223
        %1890 = vmatmul.bf16.gmra.mxu0 %v964
        %v1891 = vpop.f32.mrf.mxu0
        %v1892 = vadd.f32 %v863, %v1891
        %v1893 = vpop.f32.mrf.mxu0
        %v1894 = vadd.f32 %v863, %v1893
        %1895 = vmatmul.bf16.gmra.mxu0 %v966
        %v1896 = vpop.f32.mrf.mxu0
        %v1897 = vadd.f32 %v863, %v1896
        %v1898 = vpop.f32.mrf.mxu0
        %v1899 = vadd.f32 %v863, %v1898
        %1900 = vmatmul.bf16.gmra.mxu0 %v968
        %v1901 = vpop.f32.mrf.mxu0
        %v1902 = vadd.f32 %v863, %v1901
        %v1903 = vpop.f32.mrf.mxu0
        %v1904 = vadd.f32 %v863, %v1903
        %1905 = vmatmul.bf16.gmra.mxu0 %v970
        %v1906 = vpop.f32.mrf.mxu0
        %v1907 = vadd.f32 %v863, %v1906
        %v1908 = vpop.f32.mrf.mxu0
        %v1909 = vadd.f32 %v863, %v1908
        %1910 = vmatmul.bf16.gmra.mxu0 %v972
        %v1911 = vpop.f32.mrf.mxu0
        %v1912 = vadd.f32 %v863, %v1911
        %v1913 = vpop.f32.mrf.mxu0
        %v1914 = vadd.f32 %v863, %v1913
        %1915 = vmatmul.bf16.gmra.mxu0 %v974
        %v1916 = vpop.f32.mrf.mxu0
        %v1917 = vadd.f32 %v863, %v1916
        %v1918 = vpop.f32.mrf.mxu0
        %v1919 = vadd.f32 %v863, %v1918
        %1920 = vmatmul.bf16.gmra.mxu0 %v976
        %v1921 = vpop.f32.mrf.mxu0
        %v1922 = vadd.f32 %v863, %v1921
        %v1923 = vpop.f32.mrf.mxu0
        %v1924 = vadd.f32 %v863, %v1923
        %1925 = vmatmul.bf16.gmra.mxu0 %v978
        %v1926 = vpop.f32.mrf.mxu0
        %v1927 = vadd.f32 %v863, %v1926
        %v1928 = vpop.f32.mrf.mxu0
        %v1929 = vadd.f32 %v863, %v1928
        %1930 = vmatmul.bf16.gmra.mxu0 %v980
        %v1931 = vpop.f32.mrf.mxu0
        %v1932 = vadd.f32 %v863, %v1931
        %v1933 = vpop.f32.mrf.mxu0
        %v1934 = vadd.f32 %v863, %v1933
        %1935 = vmatmul.bf16.gmra.mxu0 %v982
        %v1936 = vpop.f32.mrf.mxu0
        %v1937 = vadd.f32 %v863, %v1936
        %v1938 = vpop.f32.mrf.mxu0
        %v1939 = vadd.f32 %v863, %v1938
        %1940 = vmatmul.bf16.gmra.mxu0 %v984
        %v1941 = vpop.f32.mrf.mxu0
        %v1942 = vadd.f32 %v863, %v1941
        %v1943 = vpop.f32.mrf.mxu0
        %v1944 = vadd.f32 %v863, %v1943
        %1945 = vmatmul.bf16.gmra.mxu0 %v986
        %v1946 = vpop.f32.mrf.mxu0
        %v1947 = vadd.f32 %v863, %v1946
        %v1948 = vpop.f32.mrf.mxu0
        %v1949 = vadd.f32 %v863, %v1948
        %1950 = vmatmul.bf16.gmra.mxu0 %v988
        %v1951 = vpop.f32.mrf.mxu0
        %v1952 = vadd.f32 %v863, %v1951
        %v1953 = vpop.f32.mrf.mxu0
        %v1954 = vadd.f32 %v863, %v1953
        %1955 = vmatmul.bf16.gmra.mxu0 %v990
        %v1956 = vpop.f32.mrf.mxu0
        %v1957 = vadd.f32 %v863, %v1956
        %v1958 = vpop.f32.mrf.mxu0
        %v1959 = vadd.f32 %v863, %v1958
        %1960 = vmatmul.bf16.gmra.mxu0 %v992
        %v1961 = vpop.f32.mrf.mxu0
        %v1962 = vadd.f32 %v863, %v1961
        %v1963 = vpop.f32.mrf.mxu0
        %v1964 = vadd.f32 %v863, %v1963
        %1965 = vmatmul.bf16.gmra.mxu0 %v994
        %v1966 = vpop.f32.mrf.mxu0
        %v1967 = vadd.f32 %v863, %v1966
        %v1968 = vpop.f32.mrf.mxu0
        %v1969 = vadd.f32 %v863, %v1968
        %1970 = vdwg.mxu0
        %1971 = vmatpush.bf16.msra.mxu0 %v1283
        %1972 = vmatpush.bf16.msra.mxu0 %v1279
        %1973 = vmatpush.bf16.msra.mxu0 %v1275
        %1974 = vmatpush.bf16.msra.mxu0 %v1271
        %1975 = vmatpush.bf16.msra.mxu0 %v1267
        %1976 = vmatpush.bf16.msra.mxu0 %v1263
        %1977 = vmatpush.bf16.msra.mxu0 %v1259
        %1978 = vmatpush.bf16.msra.mxu0 %v1255
        %1979 = vmatmul.bf16.gmra.mxu0 %v965
        %v1980 = vpop.f32.mrf.mxu0
        %v1981 = vadd.f32 %v1892, %v1980
        %v1982 = vpop.f32.mrf.mxu0
        %v1983 = vadd.f32 %v1894, %v1982
        %1984 = vmatmul.bf16.gmra.mxu0 %v967
        %v1985 = vpop.f32.mrf.mxu0
        %v1986 = vadd.f32 %v1897, %v1985
        %v1987 = vpop.f32.mrf.mxu0
        %v1988 = vadd.f32 %v1899, %v1987
        %1989 = vmatmul.bf16.gmra.mxu0 %v969
        %v1990 = vpop.f32.mrf.mxu0
        %v1991 = vadd.f32 %v1902, %v1990
        %v1992 = vpop.f32.mrf.mxu0
        %v1993 = vadd.f32 %v1904, %v1992
        %1994 = vmatmul.bf16.gmra.mxu0 %v971
        %v1995 = vpop.f32.mrf.mxu0
        %v1996 = vadd.f32 %v1907, %v1995
        %v1997 = vpop.f32.mrf.mxu0
        %v1998 = vadd.f32 %v1909, %v1997
        %1999 = vmatmul.bf16.gmra.mxu0 %v973
        %v2000 = vpop.f32.mrf.mxu0
        %v2001 = vadd.f32 %v1912, %v2000
        %v2002 = vpop.f32.mrf.mxu0
        %v2003 = vadd.f32 %v1914, %v2002
        %2004 = vmatmul.bf16.gmra.mxu0 %v975
        %v2005 = vpop.f32.mrf.mxu0
        %v2006 = vadd.f32 %v1917, %v2005
        %v2007 = vpop.f32.mrf.mxu0
        %v2008 = vadd.f32 %v1919, %v2007
        %2009 = vmatmul.bf16.gmra.mxu0 %v977
        %v2010 = vpop.f32.mrf.mxu0
        %v2011 = vadd.f32 %v1922, %v2010
        %v2012 = vpop.f32.mrf.mxu0
        %v2013 = vadd.f32 %v1924, %v2012
        %2014 = vmatmul.bf16.gmra.mxu0 %v979
        %v2015 = vpop.f32.mrf.mxu0
        %v2016 = vadd.f32 %v1927, %v2015
        %v2017 = vpop.f32.mrf.mxu0
        %v2018 = vadd.f32 %v1929, %v2017
        %2019 = vmatmul.bf16.gmra.mxu0 %v981
        %v2020 = vpop.f32.mrf.mxu0
        %v2021 = vadd.f32 %v1932, %v2020
        %v2022 = vpop.f32.mrf.mxu0
        %v2023 = vadd.f32 %v1934, %v2022
        %2024 = vmatmul.bf16.gmra.mxu0 %v983
        %v2025 = vpop.f32.mrf.mxu0
        %v2026 = vadd.f32 %v1937, %v2025
        %v2027 = vpop.f32.mrf.mxu0
        %v2028 = vadd.f32 %v1939, %v2027
        %2029 = vmatmul.bf16.gmra.mxu0 %v985
        %v2030 = vpop.f32.mrf.mxu0
        %v2031 = vadd.f32 %v1942, %v2030
        %v2032 = vpop.f32.mrf.mxu0
        %v2033 = vadd.f32 %v1944, %v2032
        %2034 = vmatmul.bf16.gmra.mxu0 %v987
        %v2035 = vpop.f32.mrf.mxu0
        %v2036 = vadd.f32 %v1947, %v2035
        %v2037 = vpop.f32.mrf.mxu0
        %v2038 = vadd.f32 %v1949, %v2037
        %2039 = vmatmul.bf16.gmra.mxu0 %v989
        %v2040 = vpop.f32.mrf.mxu0
        %v2041 = vadd.f32 %v1952, %v2040
        %v2042 = vpop.f32.mrf.mxu0
        %v2043 = vadd.f32 %v1954, %v2042
        %2044 = vmatmul.bf16.gmra.mxu0 %v991
        %v2045 = vpop.f32.mrf.mxu0
        %v2046 = vadd.f32 %v1957, %v2045
        %v2047 = vpop.f32.mrf.mxu0
        %v2048 = vadd.f32 %v1959, %v2047
        %2049 = vmatmul.bf16.gmra.mxu0 %v993
        %v2050 = vpop.f32.mrf.mxu0
        %v2051 = vadd.f32 %v1962, %v2050
        %v2052 = vpop.f32.mrf.mxu0
        %v2053 = vadd.f32 %v1964, %v2052
        %2054 = vmatmul.bf16.gmra.mxu0 %v995
        %v2055 = vpop.f32.mrf.mxu0
        %v2056 = vadd.f32 %v1967, %v2055
        %v2057 = vpop.f32.mrf.mxu0
        %v2058 = vadd.f32 %v1969, %v2057
        %2059 = vdwg.mxu0
        %v2060 = vmax.f32 %v1447, 0.0
        %v2061 = vmax.f32 %v1625, 0.0
        %v2062 = vmax.f32 %v1803, 0.0
        %v2063 = vmax.f32 %v1981, 0.0
        %v2064 = vmax.f32 %v1449, 0.0
        %v2065 = vmax.f32 %v1627, 0.0
        %v2066 = vmax.f32 %v1805, 0.0
        %v2067 = vmax.f32 %v1983, 0.0
        %v2068 = vmax.f32 %v1452, 0.0
        %v2069 = vmax.f32 %v1630, 0.0
        %v2070 = vmax.f32 %v1808, 0.0
        %v2071 = vmax.f32 %v1986, 0.0
        %v2072 = vmax.f32 %v1454, 0.0
        %v2073 = vmax.f32 %v1632, 0.0
        %v2074 = vmax.f32 %v1810, 0.0
        %v2075 = vmax.f32 %v1988, 0.0
        %v2076 = vmax.f32 %v1457, 0.0
        %v2077 = vmax.f32 %v1635, 0.0
        %v2078 = vmax.f32 %v1813, 0.0
        %v2079 = vmax.f32 %v1991, 0.0
        %v2080 = vmax.f32 %v1459, 0.0
        %v2081 = vmax.f32 %v1637, 0.0
        %v2082 = vmax.f32 %v1815, 0.0
        %v2083 = vmax.f32 %v1993, 0.0
        %v2084 = vmax.f32 %v1462, 0.0
        %v2085 = vmax.f32 %v1640, 0.0
        %v2086 = vmax.f32 %v1818, 0.0
        %v2087 = vmax.f32 %v1996, 0.0
        %v2088 = vmax.f32 %v1464, 0.0
        %v2089 = vmax.f32 %v1642, 0.0
        %v2090 = vmax.f32 %v1820, 0.0
        %v2091 = vmax.f32 %v1998, 0.0
        %v2092 = vmax.f32 %v1467, 0.0
        %v2093 = vmax.f32 %v1645, 0.0
        %v2094 = vmax.f32 %v1823, 0.0
        %v2095 = vmax.f32 %v2001, 0.0
        %v2096 = vmax.f32 %v1469, 0.0
        %v2097 = vmax.f32 %v1647, 0.0
        %v2098 = vmax.f32 %v1825, 0.0
        %v2099 = vmax.f32 %v2003, 0.0
        %v2100 = vmax.f32 %v1472, 0.0
        %v2101 = vmax.f32 %v1650, 0.0
        %v2102 = vmax.f32 %v1828, 0.0
        %v2103 = vmax.f32 %v2006, 0.0
        %v2104 = vmax.f32 %v1474, 0.0
        %v2105 = vmax.f32 %v1652, 0.0
        %v2106 = vmax.f32 %v1830, 0.0
        %v2107 = vmax.f32 %v2008, 0.0
        %v2108 = vmax.f32 %v1477, 0.0
        %v2109 = vmax.f32 %v1655, 0.0
        %v2110 = vmax.f32 %v1833, 0.0
        %v2111 = vmax.f32 %v2011, 0.0
        %v2112 = vmax.f32 %v1479, 0.0
        %v2113 = vmax.f32 %v1657, 0.0
        %v2114 = vmax.f32 %v1835, 0.0
        %v2115 = vmax.f32 %v2013, 0.0
        %v2116 = vmax.f32 %v1482, 0.0
        %v2117 = vmax.f32 %v1660, 0.0
        %v2118 = vmax.f32 %v1838, 0.0
        %v2119 = vmax.f32 %v2016, 0.0
        %v2120 = vmax.f32 %v1484, 0.0
        %v2121 = vmax.f32 %v1662, 0.0
        %v2122 = vmax.f32 %v1840, 0.0
        %v2123 = vmax.f32 %v2018, 0.0
        %v2124 = vmax.f32 %v1487, 0.0
        %v2125 = vmax.f32 %v1665, 0.0
        %v2126 = vmax.f32 %v1843, 0.0
        %v2127 = vmax.f32 %v2021, 0.0
        %v2128 = vmax.f32 %v1489, 0.0
        %v2129 = vmax.f32 %v1667, 0.0
        %v2130 = vmax.f32 %v1845, 0.0
        %v2131 = vmax.f32 %v2023, 0.0
        %v2132 = vmax.f32 %v1492, 0.0
        %v2133 = vmax.f32 %v1670, 0.0
        %v2134 = vmax.f32 %v1848, 0.0
        %v2135 = vmax.f32 %v2026, 0.0
        %v2136 = vmax.f32 %v1494, 0.0
        %v2137 = vmax.f32 %v1672, 0.0
        %v2138 = vmax.f32 %v1850, 0.0
        %v2139 = vmax.f32 %v2028, 0.0
        %v2140 = vmax.f32 %v1497, 0.0
        %v2141 = vmax.f32 %v1675, 0.0
        %v2142 = vmax.f32 %v1853, 0.0
        %v2143 = vmax.f32 %v2031, 0.0
        %v2144 = vmax.f32 %v1499, 0.0
        %v2145 = vmax.f32 %v1677, 0.0
        %v2146 = vmax.f32 %v1855, 0.0
        %v2147 = vmax.f32 %v2033, 0.0
        %v2148 = vmax.f32 %v1502, 0.0
        %v2149 = vmax.f32 %v1680, 0.0
        %v2150 = vmax.f32 %v1858, 0.0
        %v2151 = vmax.f32 %v2036, 0.0
        %v2152 = vmax.f32 %v1504, 0.0
        %v2153 = vmax.f32 %v1682, 0.0
        %v2154 = vmax.f32 %v1860, 0.0
        %v2155 = vmax.f32 %v2038, 0.0
        %v2156 = vmax.f32 %v1507, 0.0
        %v2157 = vmax.f32 %v1685, 0.0
        %v2158 = vmax.f32 %v1863, 0.0
        %v2159 = vmax.f32 %v2041, 0.0
        %v2160 = vmax.f32 %v1509, 0.0
        %v2161 = vmax.f32 %v1687, 0.0
        %v2162 = vmax.f32 %v1865, 0.0
        %v2163 = vmax.f32 %v2043, 0.0
        %v2164 = vmax.f32 %v1512, 0.0
        %v2165 = vmax.f32 %v1690, 0.0
        %v2166 = vmax.f32 %v1868, 0.0
        %v2167 = vmax.f32 %v2046, 0.0
        %v2168 = vmax.f32 %v1514, 0.0
        %v2169 = vmax.f32 %v1692, 0.0
        %v2170 = vmax.f32 %v1870, 0.0
        %v2171 = vmax.f32 %v2048, 0.0
        %v2172 = vmax.f32 %v1517, 0.0
        %v2173 = vmax.f32 %v1695, 0.0
        %v2174 = vmax.f32 %v1873, 0.0
        %v2175 = vmax.f32 %v2051, 0.0
        %v2176 = vmax.f32 %v1519, 0.0
        %v2177 = vmax.f32 %v1697, 0.0
        %v2178 = vmax.f32 %v1875, 0.0
        %v2179 = vmax.f32 %v2053, 0.0
        %v2180 = vmax.f32 %v1522, 0.0
        %v2181 = vmax.f32 %v1700, 0.0
        %v2182 = vmax.f32 %v1878, 0.0
        %v2183 = vmax.f32 %v2056, 0.0
        %v2184 = vmax.f32 %v1524, 0.0
        %v2185 = vmax.f32 %v1702, 0.0
        %v2186 = vmax.f32 %v1880, 0.0
        %v2187 = vmax.f32 %v2058, 0.0
        %v2188 = vpack.c.bf16 %v2064, %v2060
        %v2189 = vpack.c.bf16 %v2065, %v2061
        %v2190 = vpack.c.bf16 %v2066, %v2062
        %v2191 = vpack.c.bf16 %v2067, %v2063
        %v2192 = vpack.c.bf16 %v2072, %v2068
        %v2193 = vpack.c.bf16 %v2073, %v2069
        %v2194 = vpack.c.bf16 %v2074, %v2070
        %v2195 = vpack.c.bf16 %v2075, %v2071
        %v2196 = vpack.c.bf16 %v2080, %v2076
        %v2197 = vpack.c.bf16 %v2081, %v2077
        %v2198 = vpack.c.bf16 %v2082, %v2078
        %v2199 = vpack.c.bf16 %v2083, %v2079
        %v2200 = vpack.c.bf16 %v2088, %v2084
        %v2201 = vpack.c.bf16 %v2089, %v2085
        %v2202 = vpack.c.bf16 %v2090, %v2086
        %v2203 = vpack.c.bf16 %v2091, %v2087
        %v2204 = vpack.c.bf16 %v2096, %v2092
        %v2205 = vpack.c.bf16 %v2097, %v2093
        %v2206 = vpack.c.bf16 %v2098, %v2094
        %v2207 = vpack.c.bf16 %v2099, %v2095
        %v2208 = vpack.c.bf16 %v2104, %v2100
        %v2209 = vpack.c.bf16 %v2105, %v2101
        %v2210 = vpack.c.bf16 %v2106, %v2102
        %v2211 = vpack.c.bf16 %v2107, %v2103
        %v2212 = vpack.c.bf16 %v2112, %v2108
        %v2213 = vpack.c.bf16 %v2113, %v2109
        %v2214 = vpack.c.bf16 %v2114, %v2110
        %v2215 = vpack.c.bf16 %v2115, %v2111
        %v2216 = vpack.c.bf16 %v2120, %v2116
        %v2217 = vpack.c.bf16 %v2121, %v2117
        %v2218 = vpack.c.bf16 %v2122, %v2118
        %v2219 = vpack.c.bf16 %v2123, %v2119
        %v2220 = vpack.c.bf16 %v2128, %v2124
        %v2221 = vpack.c.bf16 %v2129, %v2125
        %v2222 = vpack.c.bf16 %v2130, %v2126
        %v2223 = vpack.c.bf16 %v2131, %v2127
        %v2224 = vpack.c.bf16 %v2136, %v2132
        %v2225 = vpack.c.bf16 %v2137, %v2133
        %v2226 = vpack.c.bf16 %v2138, %v2134
        %v2227 = vpack.c.bf16 %v2139, %v2135
        %v2228 = vpack.c.bf16 %v2144, %v2140
        %v2229 = vpack.c.bf16 %v2145, %v2141
        %v2230 = vpack.c.bf16 %v2146, %v2142
        %v2231 = vpack.c.bf16 %v2147, %v2143
        %v2232 = vpack.c.bf16 %v2152, %v2148
        %v2233 = vpack.c.bf16 %v2153, %v2149
        %v2234 = vpack.c.bf16 %v2154, %v2150
        %v2235 = vpack.c.bf16 %v2155, %v2151
        %v2236 = vpack.c.bf16 %v2160, %v2156
        %v2237 = vpack.c.bf16 %v2161, %v2157
        %v2238 = vpack.c.bf16 %v2162, %v2158
        %v2239 = vpack.c.bf16 %v2163, %v2159
        %v2240 = vpack.c.bf16 %v2168, %v2164
        %v2241 = vpack.c.bf16 %v2169, %v2165
        %v2242 = vpack.c.bf16 %v2170, %v2166
        %v2243 = vpack.c.bf16 %v2171, %v2167
        %v2244 = vpack.c.bf16 %v2176, %v2172
        %v2245 = vpack.c.bf16 %v2177, %v2173
        %v2246 = vpack.c.bf16 %v2178, %v2174
        %v2247 = vpack.c.bf16 %v2179, %v2175
        %v2248 = vpack.c.bf16 %v2184, %v2180
        %v2249 = vpack.c.bf16 %v2185, %v2181
        %v2250 = vpack.c.bf16 %v2186, %v2182
        %v2251 = vpack.c.bf16 %v2187, %v2183
        %v2252 = vld [vmem:[#allocation8] sm:$0xff]
        %v2253 = vld [vmem:[#allocation8 + $0x8] sm:$0xff]
        %v2254 = vld [vmem:[#allocation8 + $0x10] sm:$0xff]
        %v2255 = vld [vmem:[#allocation8 + $0x18] sm:$0xff]
        %v2256 = vld [vmem:[#allocation8 + $0x20] sm:$0xff]
        %v2257 = vld [vmem:[#allocation8 + $0x28] sm:$0xff]
        %v2258 = vld [vmem:[#allocation8 + $0x30] sm:$0xff]
        %v2259 = vld [vmem:[#allocation8 + $0x38] sm:$0xff]
        %v2260 = vld [vmem:[#allocation8 + $0x40] sm:$0xff]
        %v2261 = vld [vmem:[#allocation8 + $0x48] sm:$0xff]
        %v2262 = vld [vmem:[#allocation8 + $0x50] sm:$0xff]
        %v2263 = vld [vmem:[#allocation8 + $0x58] sm:$0xff]
        %v2264 = vld [vmem:[#allocation8 + $0x60] sm:$0xff]
        %v2265 = vld [vmem:[#allocation8 + $0x68] sm:$0xff]
        %v2266 = vld [vmem:[#allocation8 + $0x70] sm:$0xff]
        %v2267 = vld [vmem:[#allocation8 + $0x78] sm:$0xff]
        %v2268 = vld [vmem:[#allocation8 + $0x80] sm:$0xff]
        %v2269 = vld [vmem:[#allocation8 + $0x88] sm:$0xff]
        %v2270 = vld [vmem:[#allocation8 + $0x90] sm:$0xff]
        %v2271 = vld [vmem:[#allocation8 + $0x98] sm:$0xff]
        %v2272 = vld [vmem:[#allocation8 + $0xa0] sm:$0xff]
        %v2273 = vld [vmem:[#allocation8 + $0xa8] sm:$0xff]
        %v2274 = vld [vmem:[#allocation8 + $0xb0] sm:$0xff]
        %v2275 = vld [vmem:[#allocation8 + $0xb8] sm:$0xff]
        %v2276 = vld [vmem:[#allocation8 + $0xc0] sm:$0xff]
        %v2277 = vld [vmem:[#allocation8 + $0xc8] sm:$0xff]
        %v2278 = vld [vmem:[#allocation8 + $0xd0] sm:$0xff]
        %v2279 = vld [vmem:[#allocation8 + $0xd8] sm:$0xff]
        %v2280 = vld [vmem:[#allocation8 + $0xe0] sm:$0xff]
        %v2281 = vld [vmem:[#allocation8 + $0xe8] sm:$0xff]
        %v2282 = vld [vmem:[#allocation8 + $0xf0] sm:$0xff]
        %v2283 = vld [vmem:[#allocation8 + $0xf8] sm:$0xff]
        %v2284 = vld [vmem:[#allocation8 + $0x100] sm:$0xff]
        %v2285 = vld [vmem:[#allocation8 + $0x108] sm:$0xff]
        %v2286 = vld [vmem:[#allocation8 + $0x110] sm:$0xff]
        %v2287 = vld [vmem:[#allocation8 + $0x118] sm:$0xff]
        %v2288 = vld [vmem:[#allocation8 + $0x120] sm:$0xff]
        %v2289 = vld [vmem:[#allocation8 + $0x128] sm:$0xff]
        %v2290 = vld [vmem:[#allocation8 + $0x130] sm:$0xff]
        %v2291 = vld [vmem:[#allocation8 + $0x138] sm:$0xff]
        %v2292 = vld [vmem:[#allocation8 + $0x140] sm:$0xff]
        %v2293 = vld [vmem:[#allocation8 + $0x148] sm:$0xff]
        %v2294 = vld [vmem:[#allocation8 + $0x150] sm:$0xff]
        %v2295 = vld [vmem:[#allocation8 + $0x158] sm:$0xff]
        %v2296 = vld [vmem:[#allocation8 + $0x160] sm:$0xff]
        %v2297 = vld [vmem:[#allocation8 + $0x168] sm:$0xff]
        %v2298 = vld [vmem:[#allocation8 + $0x170] sm:$0xff]
        %v2299 = vld [vmem:[#allocation8 + $0x178] sm:$0xff]
        %v2300 = vld [vmem:[#allocation8 + $0x180] sm:$0xff]
        %v2301 = vld [vmem:[#allocation8 + $0x188] sm:$0xff]
        %v2302 = vld [vmem:[#allocation8 + $0x190] sm:$0xff]
        %v2303 = vld [vmem:[#allocation8 + $0x198] sm:$0xff]
        %v2304 = vld [vmem:[#allocation8 + $0x1a0] sm:$0xff]
        %v2305 = vld [vmem:[#allocation8 + $0x1a8] sm:$0xff]
        %v2306 = vld [vmem:[#allocation8 + $0x1b0] sm:$0xff]
        %v2307 = vld [vmem:[#allocation8 + $0x1b8] sm:$0xff]
        %v2308 = vld [vmem:[#allocation8 + $0x1c0] sm:$0xff]
        %v2309 = vld [vmem:[#allocation8 + $0x1c8] sm:$0xff]
        %v2310 = vld [vmem:[#allocation8 + $0x1d0] sm:$0xff]
        %v2311 = vld [vmem:[#allocation8 + $0x1d8] sm:$0xff]
        %v2312 = vld [vmem:[#allocation8 + $0x1e0] sm:$0xff]
        %v2313 = vld [vmem:[#allocation8 + $0x1e8] sm:$0xff]
        %v2314 = vld [vmem:[#allocation8 + $0x1f0] sm:$0xff]
        %v2315 = vld [vmem:[#allocation8 + $0x1f8] sm:$0xff]
        %v2316 = vld [vmem:[%s4] sm:$0x3]
        %v2318 = vperm.slane %v2316, 0
        %v2319 = vperm.slane %v2316, 1
        %v2386 = vunpack.c.l.b16 %v2252
        %v2387 = vunpack.c.h.b16 %v2252
        %v2388 = vunpack.c.l.b16 %v2253
        %v2389 = vunpack.c.h.b16 %v2253
        %v2390 = vunpack.c.l.b16 %v2254
        %v2391 = vunpack.c.h.b16 %v2254
        %v2392 = vunpack.c.l.b16 %v2255
        %v2393 = vunpack.c.h.b16 %v2255
        %v2394 = vunpack.c.l.b16 %v2256
        %v2395 = vunpack.c.h.b16 %v2256
        %v2396 = vunpack.c.l.b16 %v2257
        %v2397 = vunpack.c.h.b16 %v2257
        %v2398 = vunpack.c.l.b16 %v2258
        %v2399 = vunpack.c.h.b16 %v2258
        %v2400 = vunpack.c.l.b16 %v2259
        %v2401 = vunpack.c.h.b16 %v2259
        %v2402 = vunpack.c.l.b16 %v2260
        %v2403 = vunpack.c.h.b16 %v2260
        %v2404 = vunpack.c.l.b16 %v2261
        %v2405 = vunpack.c.h.b16 %v2261
        %v2406 = vunpack.c.l.b16 %v2262
        %v2407 = vunpack.c.h.b16 %v2262
        %v2408 = vunpack.c.l.b16 %v2263
        %v2409 = vunpack.c.h.b16 %v2263
        %v2410 = vunpack.c.l.b16 %v2264
        %v2411 = vunpack.c.h.b16 %v2264
        %v2412 = vunpack.c.l.b16 %v2265
        %v2413 = vunpack.c.h.b16 %v2265
        %v2414 = vunpack.c.l.b16 %v2266
        %v2415 = vunpack.c.h.b16 %v2266
        %v2416 = vunpack.c.l.b16 %v2267
        %v2417 = vunpack.c.h.b16 %v2267
        %v2418 = vunpack.c.l.b16 %v2268
        %v2419 = vunpack.c.h.b16 %v2268
        %v2420 = vunpack.c.l.b16 %v2269
        %v2421 = vunpack.c.h.b16 %v2269
        %v2422 = vunpack.c.l.b16 %v2270
        %v2423 = vunpack.c.h.b16 %v2270
        %v2424 = vunpack.c.l.b16 %v2271
        %v2425 = vunpack.c.h.b16 %v2271
        %v2426 = vunpack.c.l.b16 %v2272
        %v2427 = vunpack.c.h.b16 %v2272
        %v2428 = vunpack.c.l.b16 %v2273
        %v2429 = vunpack.c.h.b16 %v2273
        %v2430 = vunpack.c.l.b16 %v2274
        %v2431 = vunpack.c.h.b16 %v2274
        %v2432 = vunpack.c.l.b16 %v2275
        %v2433 = vunpack.c.h.b16 %v2275
        %v2434 = vunpack.c.l.b16 %v2276
        %v2435 = vunpack.c.h.b16 %v2276
        %v2436 = vunpack.c.l.b16 %v2277
        %v2437 = vunpack.c.h.b16 %v2277
        %v2438 = vunpack.c.l.b16 %v2278
        %v2439 = vunpack.c.h.b16 %v2278
        %v2440 = vunpack.c.l.b16 %v2279
        %v2441 = vunpack.c.h.b16 %v2279
        %v2442 = vunpack.c.l.b16 %v2280
        %v2443 = vunpack.c.h.b16 %v2280
        %v2444 = vunpack.c.l.b16 %v2281
        %v2445 = vunpack.c.h.b16 %v2281
        %v2446 = vunpack.c.l.b16 %v2282
        %v2447 = vunpack.c.h.b16 %v2282
        %v2448 = vunpack.c.l.b16 %v2283
        %v2449 = vunpack.c.h.b16 %v2283
        %v2450 = vunpack.c.l.b16 %v2284
        %v2451 = vunpack.c.h.b16 %v2284
        %v2452 = vunpack.c.l.b16 %v2285
        %v2453 = vunpack.c.h.b16 %v2285
        %v2454 = vunpack.c.l.b16 %v2286
        %v2455 = vunpack.c.h.b16 %v2286
        %v2456 = vunpack.c.l.b16 %v2287
        %v2457 = vunpack.c.h.b16 %v2287
        %v2458 = vunpack.c.l.b16 %v2288
        %v2459 = vunpack.c.h.b16 %v2288
        %v2460 = vunpack.c.l.b16 %v2289
        %v2461 = vunpack.c.h.b16 %v2289
        %v2462 = vunpack.c.l.b16 %v2290
        %v2463 = vunpack.c.h.b16 %v2290
        %v2464 = vunpack.c.l.b16 %v2291
        %v2465 = vunpack.c.h.b16 %v2291
        %v2466 = vunpack.c.l.b16 %v2292
        %v2467 = vunpack.c.h.b16 %v2292
        %v2468 = vunpack.c.l.b16 %v2293
        %v2469 = vunpack.c.h.b16 %v2293
        %v2470 = vunpack.c.l.b16 %v2294
        %v2471 = vunpack.c.h.b16 %v2294
        %v2472 = vunpack.c.l.b16 %v2295
        %v2473 = vunpack.c.h.b16 %v2295
        %v2474 = vunpack.c.l.b16 %v2296
        %v2475 = vunpack.c.h.b16 %v2296
        %v2476 = vunpack.c.l.b16 %v2297
        %v2477 = vunpack.c.h.b16 %v2297
        %v2478 = vunpack.c.l.b16 %v2298
        %v2479 = vunpack.c.h.b16 %v2298
        %v2480 = vunpack.c.l.b16 %v2299
        %v2481 = vunpack.c.h.b16 %v2299
        %v2482 = vunpack.c.l.b16 %v2300
        %v2483 = vunpack.c.h.b16 %v2300
        %v2484 = vunpack.c.l.b16 %v2301
        %v2485 = vunpack.c.h.b16 %v2301
        %v2486 = vunpack.c.l.b16 %v2302
        %v2487 = vunpack.c.h.b16 %v2302
        %v2488 = vunpack.c.l.b16 %v2303
        %v2489 = vunpack.c.h.b16 %v2303
        %v2490 = vunpack.c.l.b16 %v2304
        %v2491 = vunpack.c.h.b16 %v2304
        %v2492 = vunpack.c.l.b16 %v2305
        %v2493 = vunpack.c.h.b16 %v2305
        %v2494 = vunpack.c.l.b16 %v2306
        %v2495 = vunpack.c.h.b16 %v2306
        %v2496 = vunpack.c.l.b16 %v2307
        %v2497 = vunpack.c.h.b16 %v2307
        %v2498 = vunpack.c.l.b16 %v2308
        %v2499 = vunpack.c.h.b16 %v2308
        %v2500 = vunpack.c.l.b16 %v2309
        %v2501 = vunpack.c.h.b16 %v2309
        %v2502 = vunpack.c.l.b16 %v2310
        %v2503 = vunpack.c.h.b16 %v2310
        %v2504 = vunpack.c.l.b16 %v2311
        %v2505 = vunpack.c.h.b16 %v2311
        %v2506 = vunpack.c.l.b16 %v2312
        %v2507 = vunpack.c.h.b16 %v2312
        %v2508 = vunpack.c.l.b16 %v2313
        %v2509 = vunpack.c.h.b16 %v2313
        %v2510 = vunpack.c.l.b16 %v2314
        %v2511 = vunpack.c.h.b16 %v2314
        %v2512 = vunpack.c.l.b16 %v2315
        %v2513 = vunpack.c.h.b16 %v2315
        %v2514 = vpack.c.b16 %v2388, %v2386
        %v2515 = vpack.c.b16 %v2389, %v2387
        %v2516 = vpack.c.b16 %v2392, %v2390
        %v2517 = vpack.c.b16 %v2393, %v2391
        %v2518 = vpack.c.b16 %v2396, %v2394
        %v2519 = vpack.c.b16 %v2397, %v2395
        %v2520 = vpack.c.b16 %v2400, %v2398
        %v2521 = vpack.c.b16 %v2401, %v2399
        %v2522 = vpack.c.b16 %v2404, %v2402
        %v2523 = vpack.c.b16 %v2405, %v2403
        %v2524 = vpack.c.b16 %v2408, %v2406
        %v2525 = vpack.c.b16 %v2409, %v2407
        %v2526 = vpack.c.b16 %v2412, %v2410
        %v2527 = vpack.c.b16 %v2413, %v2411
        %v2528 = vpack.c.b16 %v2416, %v2414
        %v2529 = vpack.c.b16 %v2417, %v2415
        %v2530 = vpack.c.b16 %v2420, %v2418
        %v2531 = vpack.c.b16 %v2421, %v2419
        %v2532 = vpack.c.b16 %v2424, %v2422
        %v2533 = vpack.c.b16 %v2425, %v2423
        %v2534 = vpack.c.b16 %v2428, %v2426
        %v2535 = vpack.c.b16 %v2429, %v2427
        %v2536 = vpack.c.b16 %v2432, %v2430
        %v2537 = vpack.c.b16 %v2433, %v2431
        %v2538 = vpack.c.b16 %v2436, %v2434
        %v2539 = vpack.c.b16 %v2437, %v2435
        %v2540 = vpack.c.b16 %v2440, %v2438
        %v2541 = vpack.c.b16 %v2441, %v2439
        %v2542 = vpack.c.b16 %v2444, %v2442
        %v2543 = vpack.c.b16 %v2445, %v2443
        %v2544 = vpack.c.b16 %v2448, %v2446
        %v2545 = vpack.c.b16 %v2449, %v2447
        %v2546 = vpack.c.b16 %v2452, %v2450
        %v2547 = vpack.c.b16 %v2453, %v2451
        %v2548 = vpack.c.b16 %v2456, %v2454
        %v2549 = vpack.c.b16 %v2457, %v2455
        %v2550 = vpack.c.b16 %v2460, %v2458
        %v2551 = vpack.c.b16 %v2461, %v2459
        %v2552 = vpack.c.b16 %v2464, %v2462
        %v2553 = vpack.c.b16 %v2465, %v2463
        %v2554 = vpack.c.b16 %v2468, %v2466
        %v2555 = vpack.c.b16 %v2469, %v2467
        %v2556 = vpack.c.b16 %v2472, %v2470
        %v2557 = vpack.c.b16 %v2473, %v2471
        %v2558 = vpack.c.b16 %v2476, %v2474
        %v2559 = vpack.c.b16 %v2477, %v2475
        %v2560 = vpack.c.b16 %v2480, %v2478
        %v2561 = vpack.c.b16 %v2481, %v2479
        %v2562 = vpack.c.b16 %v2484, %v2482
        %v2563 = vpack.c.b16 %v2485, %v2483
        %v2564 = vpack.c.b16 %v2488, %v2486
        %v2565 = vpack.c.b16 %v2489, %v2487
        %v2566 = vpack.c.b16 %v2492, %v2490
        %v2567 = vpack.c.b16 %v2493, %v2491
        %v2568 = vpack.c.b16 %v2496, %v2494
        %v2569 = vpack.c.b16 %v2497, %v2495
        %v2570 = vpack.c.b16 %v2500, %v2498
        %v2571 = vpack.c.b16 %v2501, %v2499
        %v2572 = vpack.c.b16 %v2504, %v2502
        %v2573 = vpack.c.b16 %v2505, %v2503
        %v2574 = vpack.c.b16 %v2508, %v2506
        %v2575 = vpack.c.b16 %v2509, %v2507
        %v2576 = vpack.c.b16 %v2512, %v2510
        %v2577 = vpack.c.b16 %v2513, %v2511
        %2642 = vmatpush.bf16.msra.mxu0 %v2528
        %2643 = vmatpush.bf16.msra.mxu0 %v2526
        %2644 = vmatpush.bf16.msra.mxu0 %v2524
        %2645 = vmatpush.bf16.msra.mxu0 %v2522
        %2646 = vmatpush.bf16.msra.mxu0 %v2520
        %2647 = vmatpush.bf16.msra.mxu0 %v2518
        %2648 = vmatpush.bf16.msra.mxu0 %v2516
        %2649 = vmatpush.bf16.msra.mxu0 %v2514
        %2650 = vmatmul.bf16.gmra.mxu0 %v2188
        %v2651 = vpop.f32.mrf.mxu0
        %v2652 = vadd.f32 %v2318, %v2651
        %v2653 = vpop.f32.mrf.mxu0
        %v2654 = vadd.f32 %v2318, %v2653
        %2655 = vmatmul.bf16.gmra.mxu0 %v2192
        %v2656 = vpop.f32.mrf.mxu0
        %v2657 = vadd.f32 %v2318, %v2656
        %v2658 = vpop.f32.mrf.mxu0
        %v2659 = vadd.f32 %v2318, %v2658
        %2660 = vmatmul.bf16.gmra.mxu0 %v2196
        %v2661 = vpop.f32.mrf.mxu0
        %v2662 = vadd.f32 %v2318, %v2661
        %v2663 = vpop.f32.mrf.mxu0
        %v2664 = vadd.f32 %v2318, %v2663
        %2665 = vmatmul.bf16.gmra.mxu0 %v2200
        %v2666 = vpop.f32.mrf.mxu0
        %v2667 = vadd.f32 %v2318, %v2666
        %v2668 = vpop.f32.mrf.mxu0
        %v2669 = vadd.f32 %v2318, %v2668
        %2670 = vmatmul.bf16.gmra.mxu0 %v2204
        %v2671 = vpop.f32.mrf.mxu0
        %v2672 = vadd.f32 %v2318, %v2671
        %v2673 = vpop.f32.mrf.mxu0
        %v2674 = vadd.f32 %v2318, %v2673
        %2675 = vmatmul.bf16.gmra.mxu0 %v2208
        %v2676 = vpop.f32.mrf.mxu0
        %v2677 = vadd.f32 %v2318, %v2676
        %v2678 = vpop.f32.mrf.mxu0
        %v2679 = vadd.f32 %v2318, %v2678
        %2680 = vmatmul.bf16.gmra.mxu0 %v2212
        %v2681 = vpop.f32.mrf.mxu0
        %v2682 = vadd.f32 %v2318, %v2681
        %v2683 = vpop.f32.mrf.mxu0
        %v2684 = vadd.f32 %v2318, %v2683
        %2685 = vmatmul.bf16.gmra.mxu0 %v2216
        %v2686 = vpop.f32.mrf.mxu0
        %v2687 = vadd.f32 %v2318, %v2686
        %v2688 = vpop.f32.mrf.mxu0
        %v2689 = vadd.f32 %v2318, %v2688
        %2690 = vmatmul.bf16.gmra.mxu0 %v2220
        %v2691 = vpop.f32.mrf.mxu0
        %v2692 = vadd.f32 %v2318, %v2691
        %v2693 = vpop.f32.mrf.mxu0
        %v2694 = vadd.f32 %v2318, %v2693
        %2695 = vmatmul.bf16.gmra.mxu0 %v2224
        %v2696 = vpop.f32.mrf.mxu0
        %v2697 = vadd.f32 %v2318, %v2696
        %v2698 = vpop.f32.mrf.mxu0
        %v2699 = vadd.f32 %v2318, %v2698
        %2700 = vmatmul.bf16.gmra.mxu0 %v2228
        %v2701 = vpop.f32.mrf.mxu0
        %v2702 = vadd.f32 %v2318, %v2701
        %v2703 = vpop.f32.mrf.mxu0
        %v2704 = vadd.f32 %v2318, %v2703
        %2705 = vmatmul.bf16.gmra.mxu0 %v2232
        %v2706 = vpop.f32.mrf.mxu0
        %v2707 = vadd.f32 %v2318, %v2706
        %v2708 = vpop.f32.mrf.mxu0
        %v2709 = vadd.f32 %v2318, %v2708
        %2710 = vmatmul.bf16.gmra.mxu0 %v2236
        %v2711 = vpop.f32.mrf.mxu0
        %v2712 = vadd.f32 %v2318, %v2711
        %v2713 = vpop.f32.mrf.mxu0
        %v2714 = vadd.f32 %v2318, %v2713
        %2715 = vmatmul.bf16.gmra.mxu0 %v2240
        %v2716 = vpop.f32.mrf.mxu0
        %v2717 = vadd.f32 %v2318, %v2716
        %v2718 = vpop.f32.mrf.mxu0
        %v2719 = vadd.f32 %v2318, %v2718
        %2720 = vmatmul.bf16.gmra.mxu0 %v2244
        %v2721 = vpop.f32.mrf.mxu0
        %v2722 = vadd.f32 %v2318, %v2721
        %v2723 = vpop.f32.mrf.mxu0
        %v2724 = vadd.f32 %v2318, %v2723
        %2725 = vmatmul.bf16.gmra.mxu0 %v2248
        %v2726 = vpop.f32.mrf.mxu0
        %v2727 = vadd.f32 %v2318, %v2726
        %v2728 = vpop.f32.mrf.mxu0
        %v2729 = vadd.f32 %v2318, %v2728
        %2730 = vdwg.mxu0
        %2731 = vmatpush.bf16.msra.mxu0 %v2544
        %2732 = vmatpush.bf16.msra.mxu0 %v2542
        %2733 = vmatpush.bf16.msra.mxu0 %v2540
        %2734 = vmatpush.bf16.msra.mxu0 %v2538
        %2735 = vmatpush.bf16.msra.mxu0 %v2536
        %2736 = vmatpush.bf16.msra.mxu0 %v2534
        %2737 = vmatpush.bf16.msra.mxu0 %v2532
        %2738 = vmatpush.bf16.msra.mxu0 %v2530
        %2739 = vmatmul.bf16.gmra.mxu0 %v2189
        %v2740 = vpop.f32.mrf.mxu0
        %v2741 = vadd.f32 %v2652, %v2740
        %v2742 = vpop.f32.mrf.mxu0
        %v2743 = vadd.f32 %v2654, %v2742
        %2744 = vmatmul.bf16.gmra.mxu0 %v2193
        %v2745 = vpop.f32.mrf.mxu0
        %v2746 = vadd.f32 %v2657, %v2745
        %v2747 = vpop.f32.mrf.mxu0
        %v2748 = vadd.f32 %v2659, %v2747
        %2749 = vmatmul.bf16.gmra.mxu0 %v2197
        %v2750 = vpop.f32.mrf.mxu0
        %v2751 = vadd.f32 %v2662, %v2750
        %v2752 = vpop.f32.mrf.mxu0
        %v2753 = vadd.f32 %v2664, %v2752
        %2754 = vmatmul.bf16.gmra.mxu0 %v2201
        %v2755 = vpop.f32.mrf.mxu0
        %v2756 = vadd.f32 %v2667, %v2755
        %v2757 = vpop.f32.mrf.mxu0
        %v2758 = vadd.f32 %v2669, %v2757
        %2759 = vmatmul.bf16.gmra.mxu0 %v2205
        %v2760 = vpop.f32.mrf.mxu0
        %v2761 = vadd.f32 %v2672, %v2760
        %v2762 = vpop.f32.mrf.mxu0
        %v2763 = vadd.f32 %v2674, %v2762
        %2764 = vmatmul.bf16.gmra.mxu0 %v2209
        %v2765 = vpop.f32.mrf.mxu0
        %v2766 = vadd.f32 %v2677, %v2765
        %v2767 = vpop.f32.mrf.mxu0
        %v2768 = vadd.f32 %v2679, %v2767
        %2769 = vmatmul.bf16.gmra.mxu0 %v2213
        %v2770 = vpop.f32.mrf.mxu0
        %v2771 = vadd.f32 %v2682, %v2770
        %v2772 = vpop.f32.mrf.mxu0
        %v2773 = vadd.f32 %v2684, %v2772
        %2774 = vmatmul.bf16.gmra.mxu0 %v2217
        %v2775 = vpop.f32.mrf.mxu0
        %v2776 = vadd.f32 %v2687, %v2775
        %v2777 = vpop.f32.mrf.mxu0
        %v2778 = vadd.f32 %v2689, %v2777
        %2779 = vmatmul.bf16.gmra.mxu0 %v2221
        %v2780 = vpop.f32.mrf.mxu0
        %v2781 = vadd.f32 %v2692, %v2780
        %v2782 = vpop.f32.mrf.mxu0
        %v2783 = vadd.f32 %v2694, %v2782
        %2784 = vmatmul.bf16.gmra.mxu0 %v2225
        %v2785 = vpop.f32.mrf.mxu0
        %v2786 = vadd.f32 %v2697, %v2785
        %v2787 = vpop.f32.mrf.mxu0
        %v2788 = vadd.f32 %v2699, %v2787
        %2789 = vmatmul.bf16.gmra.mxu0 %v2229
        %v2790 = vpop.f32.mrf.mxu0
        %v2791 = vadd.f32 %v2702, %v2790
        %v2792 = vpop.f32.mrf.mxu0
        %v2793 = vadd.f32 %v2704, %v2792
        %2794 = vmatmul.bf16.gmra.mxu0 %v2233
        %v2795 = vpop.f32.mrf.mxu0
        %v2796 = vadd.f32 %v2707, %v2795
        %v2797 = vpop.f32.mrf.mxu0
        %v2798 = vadd.f32 %v2709, %v2797
        %2799 = vmatmul.bf16.gmra.mxu0 %v2237
        %v2800 = vpop.f32.mrf.mxu0
        %v2801 = vadd.f32 %v2712, %v2800
        %v2802 = vpop.f32.mrf.mxu0
        %v2803 = vadd.f32 %v2714, %v2802
        %2804 = vmatmul.bf16.gmra.mxu0 %v2241
        %v2805 = vpop.f32.mrf.mxu0
        %v2806 = vadd.f32 %v2717, %v2805
        %v2807 = vpop.f32.mrf.mxu0
        %v2808 = vadd.f32 %v2719, %v2807
        %2809 = vmatmul.bf16.gmra.mxu0 %v2245
        %v2810 = vpop.f32.mrf.mxu0
        %v2811 = vadd.f32 %v2722, %v2810
        %v2812 = vpop.f32.mrf.mxu0
        %v2813 = vadd.f32 %v2724, %v2812
        %2814 = vmatmul.bf16.gmra.mxu0 %v2249
        %v2815 = vpop.f32.mrf.mxu0
        %v2816 = vadd.f32 %v2727, %v2815
        %v2817 = vpop.f32.mrf.mxu0
        %v2818 = vadd.f32 %v2729, %v2817
        %2819 = vdwg.mxu0
        %2820 = vmatpush.bf16.msra.mxu0 %v2560
        %2821 = vmatpush.bf16.msra.mxu0 %v2558
        %2822 = vmatpush.bf16.msra.mxu0 %v2556
        %2823 = vmatpush.bf16.msra.mxu0 %v2554
        %2824 = vmatpush.bf16.msra.mxu0 %v2552
        %2825 = vmatpush.bf16.msra.mxu0 %v2550
        %2826 = vmatpush.bf16.msra.mxu0 %v2548
        %2827 = vmatpush.bf16.msra.mxu0 %v2546
        %2828 = vmatmul.bf16.gmra.mxu0 %v2190
        %v2829 = vpop.f32.mrf.mxu0
        %v2830 = vadd.f32 %v2741, %v2829
        %v2831 = vpop.f32.mrf.mxu0
        %v2832 = vadd.f32 %v2743, %v2831
        %2833 = vmatmul.bf16.gmra.mxu0 %v2194
        %v2834 = vpop.f32.mrf.mxu0
        %v2835 = vadd.f32 %v2746, %v2834
        %v2836 = vpop.f32.mrf.mxu0
        %v2837 = vadd.f32 %v2748, %v2836
        %2838 = vmatmul.bf16.gmra.mxu0 %v2198
        %v2839 = vpop.f32.mrf.mxu0
        %v2840 = vadd.f32 %v2751, %v2839
        %v2841 = vpop.f32.mrf.mxu0
        %v2842 = vadd.f32 %v2753, %v2841
        %2843 = vmatmul.bf16.gmra.mxu0 %v2202
        %v2844 = vpop.f32.mrf.mxu0
        %v2845 = vadd.f32 %v2756, %v2844
        %v2846 = vpop.f32.mrf.mxu0
        %v2847 = vadd.f32 %v2758, %v2846
        %2848 = vmatmul.bf16.gmra.mxu0 %v2206
        %v2849 = vpop.f32.mrf.mxu0
        %v2850 = vadd.f32 %v2761, %v2849
        %v2851 = vpop.f32.mrf.mxu0
        %v2852 = vadd.f32 %v2763, %v2851
        %2853 = vmatmul.bf16.gmra.mxu0 %v2210
        %v2854 = vpop.f32.mrf.mxu0
        %v2855 = vadd.f32 %v2766, %v2854
        %v2856 = vpop.f32.mrf.mxu0
        %v2857 = vadd.f32 %v2768, %v2856
        %2858 = vmatmul.bf16.gmra.mxu0 %v2214
        %v2859 = vpop.f32.mrf.mxu0
        %v2860 = vadd.f32 %v2771, %v2859
        %v2861 = vpop.f32.mrf.mxu0
        %v2862 = vadd.f32 %v2773, %v2861
        %2863 = vmatmul.bf16.gmra.mxu0 %v2218
        %v2864 = vpop.f32.mrf.mxu0
        %v2865 = vadd.f32 %v2776, %v2864
        %v2866 = vpop.f32.mrf.mxu0
        %v2867 = vadd.f32 %v2778, %v2866
        %2868 = vmatmul.bf16.gmra.mxu0 %v2222
        %v2869 = vpop.f32.mrf.mxu0
        %v2870 = vadd.f32 %v2781, %v2869
        %v2871 = vpop.f32.mrf.mxu0
        %v2872 = vadd.f32 %v2783, %v2871
        %2873 = vmatmul.bf16.gmra.mxu0 %v2226
        %v2874 = vpop.f32.mrf.mxu0
        %v2875 = vadd.f32 %v2786, %v2874
        %v2876 = vpop.f32.mrf.mxu0
        %v2877 = vadd.f32 %v2788, %v2876
        %2878 = vmatmul.bf16.gmra.mxu0 %v2230
        %v2879 = vpop.f32.mrf.mxu0
        %v2880 = vadd.f32 %v2791, %v2879
        %v2881 = vpop.f32.mrf.mxu0
        %v2882 = vadd.f32 %v2793, %v2881
        %2883 = vmatmul.bf16.gmra.mxu0 %v2234
        %v2884 = vpop.f32.mrf.mxu0
        %v2885 = vadd.f32 %v2796, %v2884
        %v2886 = vpop.f32.mrf.mxu0
        %v2887 = vadd.f32 %v2798, %v2886
        %2888 = vmatmul.bf16.gmra.mxu0 %v2238
        %v2889 = vpop.f32.mrf.mxu0
        %v2890 = vadd.f32 %v2801, %v2889
        %v2891 = vpop.f32.mrf.mxu0
        %v2892 = vadd.f32 %v2803, %v2891
        %2893 = vmatmul.bf16.gmra.mxu0 %v2242
        %v2894 = vpop.f32.mrf.mxu0
        %v2895 = vadd.f32 %v2806, %v2894
        %v2896 = vpop.f32.mrf.mxu0
        %v2897 = vadd.f32 %v2808, %v2896
        %2898 = vmatmul.bf16.gmra.mxu0 %v2246
        %v2899 = vpop.f32.mrf.mxu0
        %v2900 = vadd.f32 %v2811, %v2899
        %v2901 = vpop.f32.mrf.mxu0
        %v2902 = vadd.f32 %v2813, %v2901
        %2903 = vmatmul.bf16.gmra.mxu0 %v2250
        %v2904 = vpop.f32.mrf.mxu0
        %v2905 = vadd.f32 %v2816, %v2904
        %v2906 = vpop.f32.mrf.mxu0
        %v2907 = vadd.f32 %v2818, %v2906
        %2908 = vdwg.mxu0
        %2909 = vmatpush.bf16.msra.mxu0 %v2576
        %2910 = vmatpush.bf16.msra.mxu0 %v2574
        %2911 = vmatpush.bf16.msra.mxu0 %v2572
        %2912 = vmatpush.bf16.msra.mxu0 %v2570
        %2913 = vmatpush.bf16.msra.mxu0 %v2568
        %2914 = vmatpush.bf16.msra.mxu0 %v2566
        %2915 = vmatpush.bf16.msra.mxu0 %v2564
        %2916 = vmatpush.bf16.msra.mxu0 %v2562
        %2917 = vmatmul.bf16.gmra.mxu0 %v2191
        %v2918 = vpop.f32.mrf.mxu0
        %v2919 = vadd.f32 %v2830, %v2918
        %v2920 = vpop.f32.mrf.mxu0
        %v2921 = vadd.f32 %v2832, %v2920
        %2922 = vmatmul.bf16.gmra.mxu0 %v2195
        %v2923 = vpop.f32.mrf.mxu0
        %v2924 = vadd.f32 %v2835, %v2923
        %v2925 = vpop.f32.mrf.mxu0
        %v2926 = vadd.f32 %v2837, %v2925
        %2927 = vmatmul.bf16.gmra.mxu0 %v2199
        %v2928 = vpop.f32.mrf.mxu0
        %v2929 = vadd.f32 %v2840, %v2928
        %v2930 = vpop.f32.mrf.mxu0
        %v2931 = vadd.f32 %v2842, %v2930
        %2932 = vmatmul.bf16.gmra.mxu0 %v2203
        %v2933 = vpop.f32.mrf.mxu0
        %v2934 = vadd.f32 %v2845, %v2933
        %v2935 = vpop.f32.mrf.mxu0
        %v2936 = vadd.f32 %v2847, %v2935
        %2937 = vmatmul.bf16.gmra.mxu0 %v2207
        %v2938 = vpop.f32.mrf.mxu0
        %v2939 = vadd.f32 %v2850, %v2938
        %v2940 = vpop.f32.mrf.mxu0
        %v2941 = vadd.f32 %v2852, %v2940
        %2942 = vmatmul.bf16.gmra.mxu0 %v2211
        %v2943 = vpop.f32.mrf.mxu0
        %v2944 = vadd.f32 %v2855, %v2943
        %v2945 = vpop.f32.mrf.mxu0
        %v2946 = vadd.f32 %v2857, %v2945
        %2947 = vmatmul.bf16.gmra.mxu0 %v2215
        %v2948 = vpop.f32.mrf.mxu0
        %v2949 = vadd.f32 %v2860, %v2948
        %v2950 = vpop.f32.mrf.mxu0
        %v2951 = vadd.f32 %v2862, %v2950
        %2952 = vmatmul.bf16.gmra.mxu0 %v2219
        %v2953 = vpop.f32.mrf.mxu0
        %v2954 = vadd.f32 %v2865, %v2953
        %v2955 = vpop.f32.mrf.mxu0
        %v2956 = vadd.f32 %v2867, %v2955
        %2957 = vmatmul.bf16.gmra.mxu0 %v2223
        %v2958 = vpop.f32.mrf.mxu0
        %v2959 = vadd.f32 %v2870, %v2958
        %v2960 = vpop.f32.mrf.mxu0
        %v2961 = vadd.f32 %v2872, %v2960
        %2962 = vmatmul.bf16.gmra.mxu0 %v2227
        %v2963 = vpop.f32.mrf.mxu0
        %v2964 = vadd.f32 %v2875, %v2963
        %v2965 = vpop.f32.mrf.mxu0
        %v2966 = vadd.f32 %v2877, %v2965
        %2967 = vmatmul.bf16.gmra.mxu0 %v2231
        %v2968 = vpop.f32.mrf.mxu0
        %v2969 = vadd.f32 %v2880, %v2968
        %v2970 = vpop.f32.mrf.mxu0
        %v2971 = vadd.f32 %v2882, %v2970
        %2972 = vmatmul.bf16.gmra.mxu0 %v2235
        %v2973 = vpop.f32.mrf.mxu0
        %v2974 = vadd.f32 %v2885, %v2973
        %v2975 = vpop.f32.mrf.mxu0
        %v2976 = vadd.f32 %v2887, %v2975
        %2977 = vmatmul.bf16.gmra.mxu0 %v2239
        %v2978 = vpop.f32.mrf.mxu0
        %v2979 = vadd.f32 %v2890, %v2978
        %v2980 = vpop.f32.mrf.mxu0
        %v2981 = vadd.f32 %v2892, %v2980
        %2982 = vmatmul.bf16.gmra.mxu0 %v2243
        %v2983 = vpop.f32.mrf.mxu0
        %v2984 = vadd.f32 %v2895, %v2983
        %v2985 = vpop.f32.mrf.mxu0
        %v2986 = vadd.f32 %v2897, %v2985
        %2987 = vmatmul.bf16.gmra.mxu0 %v2247
        %v2988 = vpop.f32.mrf.mxu0
        %v2989 = vadd.f32 %v2900, %v2988
        %v2990 = vpop.f32.mrf.mxu0
        %v2991 = vadd.f32 %v2902, %v2990
        %2992 = vmatmul.bf16.gmra.mxu0 %v2251
        %v2993 = vpop.f32.mrf.mxu0
        %v2994 = vadd.f32 %v2905, %v2993
        %v2995 = vpop.f32.mrf.mxu0
        %v2996 = vadd.f32 %v2907, %v2995
        %2997 = vdwg.mxu0
        %2998 = vmatpush.bf16.msra.mxu0 %v2529
        %2999 = vmatpush.bf16.msra.mxu0 %v2527
        %3000 = vmatpush.bf16.msra.mxu0 %v2525
        %3001 = vmatpush.bf16.msra.mxu0 %v2523
        %3002 = vmatpush.bf16.msra.mxu0 %v2521
        %3003 = vmatpush.bf16.msra.mxu0 %v2519
        %3004 = vmatpush.bf16.msra.mxu0 %v2517
        %3005 = vmatpush.bf16.msra.mxu0 %v2515
        %3006 = vmatmul.bf16.gmra.mxu0 %v2188
        %v3007 = vpop.f32.mrf.mxu0
        %v3008 = vadd.f32 %v2319, %v3007
        %v3009 = vpop.f32.mrf.mxu0
        %v3010 = vadd.f32 %v2319, %v3009
        %3011 = vmatmul.bf16.gmra.mxu0 %v2192
        %v3012 = vpop.f32.mrf.mxu0
        %v3013 = vadd.f32 %v2319, %v3012
        %v3014 = vpop.f32.mrf.mxu0
        %v3015 = vadd.f32 %v2319, %v3014
        %3016 = vmatmul.bf16.gmra.mxu0 %v2196
        %v3017 = vpop.f32.mrf.mxu0
        %v3018 = vadd.f32 %v2319, %v3017
        %v3019 = vpop.f32.mrf.mxu0
        %v3020 = vadd.f32 %v2319, %v3019
        %3021 = vmatmul.bf16.gmra.mxu0 %v2200
        %v3022 = vpop.f32.mrf.mxu0
        %v3023 = vadd.f32 %v2319, %v3022
        %v3024 = vpop.f32.mrf.mxu0
        %v3025 = vadd.f32 %v2319, %v3024
        %3026 = vmatmul.bf16.gmra.mxu0 %v2204
        %v3027 = vpop.f32.mrf.mxu0
        %v3028 = vadd.f32 %v2319, %v3027
        %v3029 = vpop.f32.mrf.mxu0
        %v3030 = vadd.f32 %v2319, %v3029
        %3031 = vmatmul.bf16.gmra.mxu0 %v2208
        %v3032 = vpop.f32.mrf.mxu0
        %v3033 = vadd.f32 %v2319, %v3032
        %v3034 = vpop.f32.mrf.mxu0
        %v3035 = vadd.f32 %v2319, %v3034
        %3036 = vmatmul.bf16.gmra.mxu0 %v2212
        %v3037 = vpop.f32.mrf.mxu0
        %v3038 = vadd.f32 %v2319, %v3037
        %v3039 = vpop.f32.mrf.mxu0
        %v3040 = vadd.f32 %v2319, %v3039
        %3041 = vmatmul.bf16.gmra.mxu0 %v2216
        %v3042 = vpop.f32.mrf.mxu0
        %v3043 = vadd.f32 %v2319, %v3042
        %v3044 = vpop.f32.mrf.mxu0
        %v3045 = vadd.f32 %v2319, %v3044
        %3046 = vmatmul.bf16.gmra.mxu0 %v2220
        %v3047 = vpop.f32.mrf.mxu0
        %v3048 = vadd.f32 %v2319, %v3047
        %v3049 = vpop.f32.mrf.mxu0
        %v3050 = vadd.f32 %v2319, %v3049
        %3051 = vmatmul.bf16.gmra.mxu0 %v2224
        %v3052 = vpop.f32.mrf.mxu0
        %v3053 = vadd.f32 %v2319, %v3052
        %v3054 = vpop.f32.mrf.mxu0
        %v3055 = vadd.f32 %v2319, %v3054
        %3056 = vmatmul.bf16.gmra.mxu0 %v2228
        %v3057 = vpop.f32.mrf.mxu0
        %v3058 = vadd.f32 %v2319, %v3057
        %v3059 = vpop.f32.mrf.mxu0
        %v3060 = vadd.f32 %v2319, %v3059
        %3061 = vmatmul.bf16.gmra.mxu0 %v2232
        %v3062 = vpop.f32.mrf.mxu0
        %v3063 = vadd.f32 %v2319, %v3062
        %v3064 = vpop.f32.mrf.mxu0
        %v3065 = vadd.f32 %v2319, %v3064
        %3066 = vmatmul.bf16.gmra.mxu0 %v2236
        %v3067 = vpop.f32.mrf.mxu0
        %v3068 = vadd.f32 %v2319, %v3067
        %v3069 = vpop.f32.mrf.mxu0
        %v3070 = vadd.f32 %v2319, %v3069
        %3071 = vmatmul.bf16.gmra.mxu0 %v2240
        %v3072 = vpop.f32.mrf.mxu0
        %v3073 = vadd.f32 %v2319, %v3072
        %v3074 = vpop.f32.mrf.mxu0
        %v3075 = vadd.f32 %v2319, %v3074
        %3076 = vmatmul.bf16.gmra.mxu0 %v2244
        %v3077 = vpop.f32.mrf.mxu0
        %v3078 = vadd.f32 %v2319, %v3077
        %v3079 = vpop.f32.mrf.mxu0
        %v3080 = vadd.f32 %v2319, %v3079
        %3081 = vmatmul.bf16.gmra.mxu0 %v2248
        %v3082 = vpop.f32.mrf.mxu0
        %v3083 = vadd.f32 %v2319, %v3082
        %v3084 = vpop.f32.mrf.mxu0
        %v3085 = vadd.f32 %v2319, %v3084
        %3086 = vdwg.mxu0
        %3087 = vmatpush.bf16.msra.mxu0 %v2545
        %3088 = vmatpush.bf16.msra.mxu0 %v2543
        %3089 = vmatpush.bf16.msra.mxu0 %v2541
        %3090 = vmatpush.bf16.msra.mxu0 %v2539
        %3091 = vmatpush.bf16.msra.mxu0 %v2537
        %3092 = vmatpush.bf16.msra.mxu0 %v2535
        %3093 = vmatpush.bf16.msra.mxu0 %v2533
        %3094 = vmatpush.bf16.msra.mxu0 %v2531
        %3095 = vmatmul.bf16.gmra.mxu0 %v2189
        %v3096 = vpop.f32.mrf.mxu0
        %v3097 = vadd.f32 %v3008, %v3096
        %v3098 = vpop.f32.mrf.mxu0
        %v3099 = vadd.f32 %v3010, %v3098
        %3100 = vmatmul.bf16.gmra.mxu0 %v2193
        %v3101 = vpop.f32.mrf.mxu0
        %v3102 = vadd.f32 %v3013, %v3101
        %v3103 = vpop.f32.mrf.mxu0
        %v3104 = vadd.f32 %v3015, %v3103
        %3105 = vmatmul.bf16.gmra.mxu0 %v2197
        %v3106 = vpop.f32.mrf.mxu0
        %v3107 = vadd.f32 %v3018, %v3106
        %v3108 = vpop.f32.mrf.mxu0
        %v3109 = vadd.f32 %v3020, %v3108
        %3110 = vmatmul.bf16.gmra.mxu0 %v2201
        %v3111 = vpop.f32.mrf.mxu0
        %v3112 = vadd.f32 %v3023, %v3111
        %v3113 = vpop.f32.mrf.mxu0
        %v3114 = vadd.f32 %v3025, %v3113
        %3115 = vmatmul.bf16.gmra.mxu0 %v2205
        %v3116 = vpop.f32.mrf.mxu0
        %v3117 = vadd.f32 %v3028, %v3116
        %v3118 = vpop.f32.mrf.mxu0
        %v3119 = vadd.f32 %v3030, %v3118
        %3120 = vmatmul.bf16.gmra.mxu0 %v2209
        %v3121 = vpop.f32.mrf.mxu0
        %v3122 = vadd.f32 %v3033, %v3121
        %v3123 = vpop.f32.mrf.mxu0
        %v3124 = vadd.f32 %v3035, %v3123
        %3125 = vmatmul.bf16.gmra.mxu0 %v2213
        %v3126 = vpop.f32.mrf.mxu0
        %v3127 = vadd.f32 %v3038, %v3126
        %v3128 = vpop.f32.mrf.mxu0
        %v3129 = vadd.f32 %v3040, %v3128
        %3130 = vmatmul.bf16.gmra.mxu0 %v2217
        %v3131 = vpop.f32.mrf.mxu0
        %v3132 = vadd.f32 %v3043, %v3131
        %v3133 = vpop.f32.mrf.mxu0
        %v3134 = vadd.f32 %v3045, %v3133
        %3135 = vmatmul.bf16.gmra.mxu0 %v2221
        %v3136 = vpop.f32.mrf.mxu0
        %v3137 = vadd.f32 %v3048, %v3136
        %v3138 = vpop.f32.mrf.mxu0
        %v3139 = vadd.f32 %v3050, %v3138
        %3140 = vmatmul.bf16.gmra.mxu0 %v2225
        %v3141 = vpop.f32.mrf.mxu0
        %v3142 = vadd.f32 %v3053, %v3141
        %v3143 = vpop.f32.mrf.mxu0
        %v3144 = vadd.f32 %v3055, %v3143
        %3145 = vmatmul.bf16.gmra.mxu0 %v2229
        %v3146 = vpop.f32.mrf.mxu0
        %v3147 = vadd.f32 %v3058, %v3146
        %v3148 = vpop.f32.mrf.mxu0
        %v3149 = vadd.f32 %v3060, %v3148
        %3150 = vmatmul.bf16.gmra.mxu0 %v2233
        %v3151 = vpop.f32.mrf.mxu0
        %v3152 = vadd.f32 %v3063, %v3151
        %v3153 = vpop.f32.mrf.mxu0
        %v3154 = vadd.f32 %v3065, %v3153
        %3155 = vmatmul.bf16.gmra.mxu0 %v2237
        %v3156 = vpop.f32.mrf.mxu0
        %v3157 = vadd.f32 %v3068, %v3156
        %v3158 = vpop.f32.mrf.mxu0
        %v3159 = vadd.f32 %v3070, %v3158
        %3160 = vmatmul.bf16.gmra.mxu0 %v2241
        %v3161 = vpop.f32.mrf.mxu0
        %v3162 = vadd.f32 %v3073, %v3161
        %v3163 = vpop.f32.mrf.mxu0
        %v3164 = vadd.f32 %v3075, %v3163
        %3165 = vmatmul.bf16.gmra.mxu0 %v2245
        %v3166 = vpop.f32.mrf.mxu0
        %v3167 = vadd.f32 %v3078, %v3166
        %v3168 = vpop.f32.mrf.mxu0
        %v3169 = vadd.f32 %v3080, %v3168
        %3170 = vmatmul.bf16.gmra.mxu0 %v2249
        %v3171 = vpop.f32.mrf.mxu0
        %v3172 = vadd.f32 %v3083, %v3171
        %v3173 = vpop.f32.mrf.mxu0
        %v3174 = vadd.f32 %v3085, %v3173
        %3175 = vdwg.mxu0
        %3176 = vmatpush.bf16.msra.mxu0 %v2561
        %3177 = vmatpush.bf16.msra.mxu0 %v2559
        %3178 = vmatpush.bf16.msra.mxu0 %v2557
        %3179 = vmatpush.bf16.msra.mxu0 %v2555
        %3180 = vmatpush.bf16.msra.mxu0 %v2553
        %3181 = vmatpush.bf16.msra.mxu0 %v2551
        %3182 = vmatpush.bf16.msra.mxu0 %v2549
        %3183 = vmatpush.bf16.msra.mxu0 %v2547
        %3184 = vmatmul.bf16.gmra.mxu0 %v2190
        %v3185 = vpop.f32.mrf.mxu0
        %v3186 = vadd.f32 %v3097, %v3185
        %v3187 = vpop.f32.mrf.mxu0
        %v3188 = vadd.f32 %v3099, %v3187
        %3189 = vmatmul.bf16.gmra.mxu0 %v2194
        %v3190 = vpop.f32.mrf.mxu0
        %v3191 = vadd.f32 %v3102, %v3190
        %v3192 = vpop.f32.mrf.mxu0
        %v3193 = vadd.f32 %v3104, %v3192
        %3194 = vmatmul.bf16.gmra.mxu0 %v2198
        %v3195 = vpop.f32.mrf.mxu0
        %v3196 = vadd.f32 %v3107, %v3195
        %v3197 = vpop.f32.mrf.mxu0
        %v3198 = vadd.f32 %v3109, %v3197
        %3199 = vmatmul.bf16.gmra.mxu0 %v2202
        %v3200 = vpop.f32.mrf.mxu0
        %v3201 = vadd.f32 %v3112, %v3200
        %v3202 = vpop.f32.mrf.mxu0
        %v3203 = vadd.f32 %v3114, %v3202
        %3204 = vmatmul.bf16.gmra.mxu0 %v2206
        %v3205 = vpop.f32.mrf.mxu0
        %v3206 = vadd.f32 %v3117, %v3205
        %v3207 = vpop.f32.mrf.mxu0
        %v3208 = vadd.f32 %v3119, %v3207
        %3209 = vmatmul.bf16.gmra.mxu0 %v2210
        %v3210 = vpop.f32.mrf.mxu0
        %v3211 = vadd.f32 %v3122, %v3210
        %v3212 = vpop.f32.mrf.mxu0
        %v3213 = vadd.f32 %v3124, %v3212
        %3214 = vmatmul.bf16.gmra.mxu0 %v2214
        %v3215 = vpop.f32.mrf.mxu0
        %v3216 = vadd.f32 %v3127, %v3215
        %v3217 = vpop.f32.mrf.mxu0
        %v3218 = vadd.f32 %v3129, %v3217
        %3219 = vmatmul.bf16.gmra.mxu0 %v2218
        %v3220 = vpop.f32.mrf.mxu0
        %v3221 = vadd.f32 %v3132, %v3220
        %v3222 = vpop.f32.mrf.mxu0
        %v3223 = vadd.f32 %v3134, %v3222
        %3224 = vmatmul.bf16.gmra.mxu0 %v2222
        %v3225 = vpop.f32.mrf.mxu0
        %v3226 = vadd.f32 %v3137, %v3225
        %v3227 = vpop.f32.mrf.mxu0
        %v3228 = vadd.f32 %v3139, %v3227
        %3229 = vmatmul.bf16.gmra.mxu0 %v2226
        %v3230 = vpop.f32.mrf.mxu0
        %v3231 = vadd.f32 %v3142, %v3230
        %v3232 = vpop.f32.mrf.mxu0
        %v3233 = vadd.f32 %v3144, %v3232
        %3234 = vmatmul.bf16.gmra.mxu0 %v2230
        %v3235 = vpop.f32.mrf.mxu0
        %v3236 = vadd.f32 %v3147, %v3235
        %v3237 = vpop.f32.mrf.mxu0
        %v3238 = vadd.f32 %v3149, %v3237
        %3239 = vmatmul.bf16.gmra.mxu0 %v2234
        %v3240 = vpop.f32.mrf.mxu0
        %v3241 = vadd.f32 %v3152, %v3240
        %v3242 = vpop.f32.mrf.mxu0
        %v3243 = vadd.f32 %v3154, %v3242
        %3244 = vmatmul.bf16.gmra.mxu0 %v2238
        %v3245 = vpop.f32.mrf.mxu0
        %v3246 = vadd.f32 %v3157, %v3245
        %v3247 = vpop.f32.mrf.mxu0
        %v3248 = vadd.f32 %v3159, %v3247
        %3249 = vmatmul.bf16.gmra.mxu0 %v2242
        %v3250 = vpop.f32.mrf.mxu0
        %v3251 = vadd.f32 %v3162, %v3250
        %v3252 = vpop.f32.mrf.mxu0
        %v3253 = vadd.f32 %v3164, %v3252
        %3254 = vmatmul.bf16.gmra.mxu0 %v2246
        %v3255 = vpop.f32.mrf.mxu0
        %v3256 = vadd.f32 %v3167, %v3255
        %v3257 = vpop.f32.mrf.mxu0
        %v3258 = vadd.f32 %v3169, %v3257
        %3259 = vmatmul.bf16.gmra.mxu0 %v2250
        %v3260 = vpop.f32.mrf.mxu0
        %v3261 = vadd.f32 %v3172, %v3260
        %v3262 = vpop.f32.mrf.mxu0
        %v3263 = vadd.f32 %v3174, %v3262
        %3264 = vdwg.mxu0
        %3265 = vmatpush.bf16.msra.mxu0 %v2577
        %3266 = vmatpush.bf16.msra.mxu0 %v2575
        %3267 = vmatpush.bf16.msra.mxu0 %v2573
        %3268 = vmatpush.bf16.msra.mxu0 %v2571
        %3269 = vmatpush.bf16.msra.mxu0 %v2569
        %3270 = vmatpush.bf16.msra.mxu0 %v2567
        %3271 = vmatpush.bf16.msra.mxu0 %v2565
        %3272 = vmatpush.bf16.msra.mxu0 %v2563
        %3273 = vmatmul.bf16.gmra.mxu0 %v2191
        %v3274 = vpop.f32.mrf.mxu0
        %v3275 = vadd.f32 %v3186, %v3274
        %v3276 = vpop.f32.mrf.mxu0
        %v3277 = vadd.f32 %v3188, %v3276
        %3278 = vmatmul.bf16.gmra.mxu0 %v2195
        %v3279 = vpop.f32.mrf.mxu0
        %v3280 = vadd.f32 %v3191, %v3279
        %v3281 = vpop.f32.mrf.mxu0
        %v3282 = vadd.f32 %v3193, %v3281
        %3283 = vmatmul.bf16.gmra.mxu0 %v2199
        %v3284 = vpop.f32.mrf.mxu0
        %v3285 = vadd.f32 %v3196, %v3284
        %v3286 = vpop.f32.mrf.mxu0
        %v3287 = vadd.f32 %v3198, %v3286
        %3288 = vmatmul.bf16.gmra.mxu0 %v2203
        %v3289 = vpop.f32.mrf.mxu0
        %v3290 = vadd.f32 %v3201, %v3289
        %v3291 = vpop.f32.mrf.mxu0
        %v3292 = vadd.f32 %v3203, %v3291
        %3293 = vmatmul.bf16.gmra.mxu0 %v2207
        %v3294 = vpop.f32.mrf.mxu0
        %v3295 = vadd.f32 %v3206, %v3294
        %v3296 = vpop.f32.mrf.mxu0
        %v3297 = vadd.f32 %v3208, %v3296
        %3298 = vmatmul.bf16.gmra.mxu0 %v2211
        %v3299 = vpop.f32.mrf.mxu0
        %v3300 = vadd.f32 %v3211, %v3299
        %v3301 = vpop.f32.mrf.mxu0
        %v3302 = vadd.f32 %v3213, %v3301
        %3303 = vmatmul.bf16.gmra.mxu0 %v2215
        %v3304 = vpop.f32.mrf.mxu0
        %v3305 = vadd.f32 %v3216, %v3304
        %v3306 = vpop.f32.mrf.mxu0
        %v3307 = vadd.f32 %v3218, %v3306
        %3308 = vmatmul.bf16.gmra.mxu0 %v2219
        %v3309 = vpop.f32.mrf.mxu0
        %v3310 = vadd.f32 %v3221, %v3309
        %v3311 = vpop.f32.mrf.mxu0
        %v3312 = vadd.f32 %v3223, %v3311
        %3313 = vmatmul.bf16.gmra.mxu0 %v2223
        %v3314 = vpop.f32.mrf.mxu0
        %v3315 = vadd.f32 %v3226, %v3314
        %v3316 = vpop.f32.mrf.mxu0
        %v3317 = vadd.f32 %v3228, %v3316
        %3318 = vmatmul.bf16.gmra.mxu0 %v2227
        %v3319 = vpop.f32.mrf.mxu0
        %v3320 = vadd.f32 %v3231, %v3319
        %v3321 = vpop.f32.mrf.mxu0
        %v3322 = vadd.f32 %v3233, %v3321
        %3323 = vmatmul.bf16.gmra.mxu0 %v2231
        %v3324 = vpop.f32.mrf.mxu0
        %v3325 = vadd.f32 %v3236, %v3324
        %v3326 = vpop.f32.mrf.mxu0
        %v3327 = vadd.f32 %v3238, %v3326
        %3328 = vmatmul.bf16.gmra.mxu0 %v2235
        %v3329 = vpop.f32.mrf.mxu0
        %v3330 = vadd.f32 %v3241, %v3329
        %v3331 = vpop.f32.mrf.mxu0
        %v3332 = vadd.f32 %v3243, %v3331
        %3333 = vmatmul.bf16.gmra.mxu0 %v2239
        %v3334 = vpop.f32.mrf.mxu0
        %v3335 = vadd.f32 %v3246, %v3334
        %v3336 = vpop.f32.mrf.mxu0
        %v3337 = vadd.f32 %v3248, %v3336
        %3338 = vmatmul.bf16.gmra.mxu0 %v2243
        %v3339 = vpop.f32.mrf.mxu0
        %v3340 = vadd.f32 %v3251, %v3339
        %v3341 = vpop.f32.mrf.mxu0
        %v3342 = vadd.f32 %v3253, %v3341
        %3343 = vmatmul.bf16.gmra.mxu0 %v2247
        %v3344 = vpop.f32.mrf.mxu0
        %v3345 = vadd.f32 %v3256, %v3344
        %v3346 = vpop.f32.mrf.mxu0
        %v3347 = vadd.f32 %v3258, %v3346
        %3348 = vmatmul.bf16.gmra.mxu0 %v2251
        %v3349 = vpop.f32.mrf.mxu0
        %v3350 = vadd.f32 %v3261, %v3349
        %v3351 = vpop.f32.mrf.mxu0
        %v3352 = vadd.f32 %v3263, %v3351
        %3353 = vdwg.mxu0
        %v3354 = vmax.f32 %v2919, 0.0
        %v3355 = vmax.f32 %v3275, 0.0
        %v3356 = vmax.f32 %v2921, 0.0
        %v3357 = vmax.f32 %v3277, 0.0
        %v3358 = vmax.f32 %v2924, 0.0
        %v3359 = vmax.f32 %v3280, 0.0
        %v3360 = vmax.f32 %v2926, 0.0
        %v3361 = vmax.f32 %v3282, 0.0
        %v3362 = vmax.f32 %v2929, 0.0
        %v3363 = vmax.f32 %v3285, 0.0
        %v3364 = vmax.f32 %v2931, 0.0
        %v3365 = vmax.f32 %v3287, 0.0
        %v3366 = vmax.f32 %v2934, 0.0
        %v3367 = vmax.f32 %v3290, 0.0
        %v3368 = vmax.f32 %v2936, 0.0
        %v3369 = vmax.f32 %v3292, 0.0
        %v3370 = vmax.f32 %v2939, 0.0
        %v3371 = vmax.f32 %v3295, 0.0
        %v3372 = vmax.f32 %v2941, 0.0
        %v3373 = vmax.f32 %v3297, 0.0
        %v3374 = vmax.f32 %v2944, 0.0
        %v3375 = vmax.f32 %v3300, 0.0
        %v3376 = vmax.f32 %v2946, 0.0
        %v3377 = vmax.f32 %v3302, 0.0
        %v3378 = vmax.f32 %v2949, 0.0
        %v3379 = vmax.f32 %v3305, 0.0
        %v3380 = vmax.f32 %v2951, 0.0
        %v3381 = vmax.f32 %v3307, 0.0
        %v3382 = vmax.f32 %v2954, 0.0
        %v3383 = vmax.f32 %v3310, 0.0
        %v3384 = vmax.f32 %v2956, 0.0
        %v3385 = vmax.f32 %v3312, 0.0
        %v3386 = vmax.f32 %v2959, 0.0
        %v3387 = vmax.f32 %v3315, 0.0
        %v3388 = vmax.f32 %v2961, 0.0
        %v3389 = vmax.f32 %v3317, 0.0
        %v3390 = vmax.f32 %v2964, 0.0
        %v3391 = vmax.f32 %v3320, 0.0
        %v3392 = vmax.f32 %v2966, 0.0
        %v3393 = vmax.f32 %v3322, 0.0
        %v3394 = vmax.f32 %v2969, 0.0
        %v3395 = vmax.f32 %v3325, 0.0
        %v3396 = vmax.f32 %v2971, 0.0
        %v3397 = vmax.f32 %v3327, 0.0
        %v3398 = vmax.f32 %v2974, 0.0
        %v3399 = vmax.f32 %v3330, 0.0
        %v3400 = vmax.f32 %v2976, 0.0
        %v3401 = vmax.f32 %v3332, 0.0
        %v3402 = vmax.f32 %v2979, 0.0
        %v3403 = vmax.f32 %v3335, 0.0
        %v3404 = vmax.f32 %v2981, 0.0
        %v3405 = vmax.f32 %v3337, 0.0
        %v3406 = vmax.f32 %v2984, 0.0
        %v3407 = vmax.f32 %v3340, 0.0
        %v3408 = vmax.f32 %v2986, 0.0
        %v3409 = vmax.f32 %v3342, 0.0
        %v3410 = vmax.f32 %v2989, 0.0
        %v3411 = vmax.f32 %v3345, 0.0
        %v3412 = vmax.f32 %v2991, 0.0
        %v3413 = vmax.f32 %v3347, 0.0
        %v3414 = vmax.f32 %v2994, 0.0
        %v3415 = vmax.f32 %v3350, 0.0
        %v3416 = vmax.f32 %v2996, 0.0
        %v3417 = vmax.f32 %v3352, 0.0
        %v3418 = vpack.c.bf16 %v3356, %v3354
        %v3419 = vpack.c.bf16 %v3357, %v3355
        %v3420 = vpack.c.bf16 %v3360, %v3358
        %v3421 = vpack.c.bf16 %v3361, %v3359
        %v3422 = vpack.c.bf16 %v3364, %v3362
        %v3423 = vpack.c.bf16 %v3365, %v3363
        %v3424 = vpack.c.bf16 %v3368, %v3366
        %v3425 = vpack.c.bf16 %v3369, %v3367
        %v3426 = vpack.c.bf16 %v3372, %v3370
        %v3427 = vpack.c.bf16 %v3373, %v3371
        %v3428 = vpack.c.bf16 %v3376, %v3374
        %v3429 = vpack.c.bf16 %v3377, %v3375
        %v3430 = vpack.c.bf16 %v3380, %v3378
        %v3431 = vpack.c.bf16 %v3381, %v3379
        %v3432 = vpack.c.bf16 %v3384, %v3382
        %v3433 = vpack.c.bf16 %v3385, %v3383
        %v3434 = vpack.c.bf16 %v3388, %v3386
        %v3435 = vpack.c.bf16 %v3389, %v3387
        %v3436 = vpack.c.bf16 %v3392, %v3390
        %v3437 = vpack.c.bf16 %v3393, %v3391
        %v3438 = vpack.c.bf16 %v3396, %v3394
        %v3439 = vpack.c.bf16 %v3397, %v3395
        %v3440 = vpack.c.bf16 %v3400, %v3398
        %v3441 = vpack.c.bf16 %v3401, %v3399
        %v3442 = vpack.c.bf16 %v3404, %v3402
        %v3443 = vpack.c.bf16 %v3405, %v3403
        %v3444 = vpack.c.bf16 %v3408, %v3406
        %v3445 = vpack.c.bf16 %v3409, %v3407
        %v3446 = vpack.c.bf16 %v3412, %v3410
        %v3447 = vpack.c.bf16 %v3413, %v3411
        %v3448 = vpack.c.bf16 %v3416, %v3414
        %v3449 = vpack.c.bf16 %v3417, %v3415
        %v3450 = vld [vmem:[#allocation10] sm:$0xf]
        %v3451 = vld [vmem:[#allocation10 + $0x4] sm:$0xf]
        %v3452 = vld [vmem:[#allocation10 + $0x8] sm:$0xf]
        %v3453 = vld [vmem:[#allocation10 + $0xc] sm:$0xf]
        %v3454 = vld [vmem:[#allocation10 + $0x10] sm:$0xf]
        %v3455 = vld [vmem:[#allocation10 + $0x14] sm:$0xf]
        %v3456 = vld [vmem:[#allocation10 + $0x18] sm:$0xf]
        %v3457 = vld [vmem:[#allocation10 + $0x1c] sm:$0xf]
        %v3458 = vld [vmem:[#allocation10 + $0x20] sm:$0xf]
        %v3459 = vld [vmem:[#allocation10 + $0x24] sm:$0xf]
        %v3460 = vld [vmem:[#allocation10 + $0x28] sm:$0xf]
        %v3461 = vld [vmem:[#allocation10 + $0x2c] sm:$0xf]
        %v3462 = vld [vmem:[#allocation10 + $0x30] sm:$0xf]
        %v3463 = vld [vmem:[#allocation10 + $0x34] sm:$0xf]
        %v3464 = vld [vmem:[#allocation10 + $0x38] sm:$0xf]
        %v3465 = vld [vmem:[#allocation10 + $0x3c] sm:$0xf]
        %v3466 = vld [vmem:[#allocation10 + $0x40] sm:$0xf]
        %v3467 = vld [vmem:[#allocation10 + $0x44] sm:$0xf]
        %v3468 = vld [vmem:[#allocation10 + $0x48] sm:$0xf]
        %v3469 = vld [vmem:[#allocation10 + $0x4c] sm:$0xf]
        %v3470 = vld [vmem:[#allocation10 + $0x50] sm:$0xf]
        %v3471 = vld [vmem:[#allocation10 + $0x54] sm:$0xf]
        %v3472 = vld [vmem:[#allocation10 + $0x58] sm:$0xf]
        %v3473 = vld [vmem:[#allocation10 + $0x5c] sm:$0xf]
        %v3474 = vld [vmem:[#allocation10 + $0x60] sm:$0xf]
        %v3475 = vld [vmem:[#allocation10 + $0x64] sm:$0xf]
        %v3476 = vld [vmem:[#allocation10 + $0x68] sm:$0xf]
        %v3477 = vld [vmem:[#allocation10 + $0x6c] sm:$0xf]
        %v3478 = vld [vmem:[#allocation10 + $0x70] sm:$0xf]
        %v3479 = vld [vmem:[#allocation10 + $0x74] sm:$0xf]
        %v3480 = vld [vmem:[#allocation10 + $0x78] sm:$0xf]
        %v3481 = vld [vmem:[#allocation10 + $0x7c] sm:$0xf]
        %v3482 = vld [vmem:[#allocation11] sm:$0x1]
        %v3484 = vperm.slane %v3482, 0
        %v3518 = vunpack.c.l.b16 %v3450
        %v3519 = vunpack.c.l.b16 %v3451
        %v3520 = vunpack.c.l.b16 %v3452
        %v3521 = vunpack.c.l.b16 %v3453
        %v3522 = vunpack.c.l.b16 %v3454
        %v3523 = vunpack.c.l.b16 %v3455
        %v3524 = vunpack.c.l.b16 %v3456
        %v3525 = vunpack.c.l.b16 %v3457
        %v3526 = vunpack.c.l.b16 %v3458
        %v3527 = vunpack.c.l.b16 %v3459
        %v3528 = vunpack.c.l.b16 %v3460
        %v3529 = vunpack.c.l.b16 %v3461
        %v3530 = vunpack.c.l.b16 %v3462
        %v3531 = vunpack.c.l.b16 %v3463
        %v3532 = vunpack.c.l.b16 %v3464
        %v3533 = vunpack.c.l.b16 %v3465
        %v3534 = vunpack.c.l.b16 %v3466
        %v3535 = vunpack.c.l.b16 %v3467
        %v3536 = vunpack.c.l.b16 %v3468
        %v3537 = vunpack.c.l.b16 %v3469
        %v3538 = vunpack.c.l.b16 %v3470
        %v3539 = vunpack.c.l.b16 %v3471
        %v3540 = vunpack.c.l.b16 %v3472
        %v3541 = vunpack.c.l.b16 %v3473
        %v3542 = vunpack.c.l.b16 %v3474
        %v3543 = vunpack.c.l.b16 %v3475
        %v3544 = vunpack.c.l.b16 %v3476
        %v3545 = vunpack.c.l.b16 %v3477
        %v3546 = vunpack.c.l.b16 %v3478
        %v3547 = vunpack.c.l.b16 %v3479
        %v3548 = vunpack.c.l.b16 %v3480
        %v3549 = vunpack.c.l.b16 %v3481
        %v3550 = vpack.c.b16 %v3519, %v3518
        %v3551 = vpack.c.b16 %v3521, %v3520
        %v3552 = vpack.c.b16 %v3523, %v3522
        %v3553 = vpack.c.b16 %v3525, %v3524
        %v3554 = vpack.c.b16 %v3527, %v3526
        %v3555 = vpack.c.b16 %v3529, %v3528
        %v3556 = vpack.c.b16 %v3531, %v3530
        %v3557 = vpack.c.b16 %v3533, %v3532
        %v3558 = vpack.c.b16 %v3535, %v3534
        %v3559 = vpack.c.b16 %v3537, %v3536
        %v3560 = vpack.c.b16 %v3539, %v3538
        %v3561 = vpack.c.b16 %v3541, %v3540
        %v3562 = vpack.c.b16 %v3543, %v3542
        %v3563 = vpack.c.b16 %v3545, %v3544
        %v3564 = vpack.c.b16 %v3547, %v3546
        %v3565 = vpack.c.b16 %v3549, %v3548
        %3582 = vmatpush.bf16.msra.mxu0 %v3557
        %3583 = vmatpush.bf16.msra.mxu0 %v3556
        %3584 = vmatpush.bf16.msra.mxu0 %v3555
        %3585 = vmatpush.bf16.msra.mxu0 %v3554
        %3586 = vmatpush.bf16.msra.mxu0 %v3553
        %3587 = vmatpush.bf16.msra.mxu0 %v3552
        %3588 = vmatpush.bf16.msra.mxu0 %v3551
        %3589 = vmatpush.bf16.msra.mxu0 %v3550
        %3590 = vmatmul.bf16.gmra.mxu0 %v3418
        %v3591 = vpop.f32.mrf.mxu0
        %v3592 = vadd.f32 %v3484, %v3591
        %v3593 = vpop.f32.mrf.mxu0
        %v3594 = vadd.f32 %v3484, %v3593
        %3595 = vmatmul.bf16.gmra.mxu0 %v3420
        %v3596 = vpop.f32.mrf.mxu0
        %v3597 = vadd.f32 %v3484, %v3596
        %v3598 = vpop.f32.mrf.mxu0
        %v3599 = vadd.f32 %v3484, %v3598
        %3600 = vmatmul.bf16.gmra.mxu0 %v3422
        %v3601 = vpop.f32.mrf.mxu0
        %v3602 = vadd.f32 %v3484, %v3601
        %v3603 = vpop.f32.mrf.mxu0
        %v3604 = vadd.f32 %v3484, %v3603
        %3605 = vmatmul.bf16.gmra.mxu0 %v3424
        %v3606 = vpop.f32.mrf.mxu0
        %v3607 = vadd.f32 %v3484, %v3606
        %v3608 = vpop.f32.mrf.mxu0
        %v3609 = vadd.f32 %v3484, %v3608
        %3610 = vmatmul.bf16.gmra.mxu0 %v3426
        %v3611 = vpop.f32.mrf.mxu0
        %v3612 = vadd.f32 %v3484, %v3611
        %v3613 = vpop.f32.mrf.mxu0
        %v3614 = vadd.f32 %v3484, %v3613
        %3615 = vmatmul.bf16.gmra.mxu0 %v3428
        %v3616 = vpop.f32.mrf.mxu0
        %v3617 = vadd.f32 %v3484, %v3616
        %v3618 = vpop.f32.mrf.mxu0
        %v3619 = vadd.f32 %v3484, %v3618
        %3620 = vmatmul.bf16.gmra.mxu0 %v3430
        %v3621 = vpop.f32.mrf.mxu0
        %v3622 = vadd.f32 %v3484, %v3621
        %v3623 = vpop.f32.mrf.mxu0
        %v3624 = vadd.f32 %v3484, %v3623
        %3625 = vmatmul.bf16.gmra.mxu0 %v3432
        %v3626 = vpop.f32.mrf.mxu0
        %v3627 = vadd.f32 %v3484, %v3626
        %v3628 = vpop.f32.mrf.mxu0
        %v3629 = vadd.f32 %v3484, %v3628
        %3630 = vmatmul.bf16.gmra.mxu0 %v3434
        %v3631 = vpop.f32.mrf.mxu0
        %v3632 = vadd.f32 %v3484, %v3631
        %v3633 = vpop.f32.mrf.mxu0
        %v3634 = vadd.f32 %v3484, %v3633
        %3635 = vmatmul.bf16.gmra.mxu0 %v3436
        %v3636 = vpop.f32.mrf.mxu0
        %v3637 = vadd.f32 %v3484, %v3636
        %v3638 = vpop.f32.mrf.mxu0
        %v3639 = vadd.f32 %v3484, %v3638
        %3640 = vmatmul.bf16.gmra.mxu0 %v3438
        %v3641 = vpop.f32.mrf.mxu0
        %v3642 = vadd.f32 %v3484, %v3641
        %v3643 = vpop.f32.mrf.mxu0
        %v3644 = vadd.f32 %v3484, %v3643
        %3645 = vmatmul.bf16.gmra.mxu0 %v3440
        %v3646 = vpop.f32.mrf.mxu0
        %v3647 = vadd.f32 %v3484, %v3646
        %v3648 = vpop.f32.mrf.mxu0
        %v3649 = vadd.f32 %v3484, %v3648
        %3650 = vmatmul.bf16.gmra.mxu0 %v3442
        %v3651 = vpop.f32.mrf.mxu0
        %v3652 = vadd.f32 %v3484, %v3651
        %v3653 = vpop.f32.mrf.mxu0
        %v3654 = vadd.f32 %v3484, %v3653
        %3655 = vmatmul.bf16.gmra.mxu0 %v3444
        %v3656 = vpop.f32.mrf.mxu0
        %v3657 = vadd.f32 %v3484, %v3656
        %v3658 = vpop.f32.mrf.mxu0
        %v3659 = vadd.f32 %v3484, %v3658
        %3660 = vmatmul.bf16.gmra.mxu0 %v3446
        %v3661 = vpop.f32.mrf.mxu0
        %v3662 = vadd.f32 %v3484, %v3661
        %v3663 = vpop.f32.mrf.mxu0
        %v3664 = vadd.f32 %v3484, %v3663
        %3665 = vmatmul.bf16.gmra.mxu0 %v3448
        %v3666 = vpop.f32.mrf.mxu0
        %v3667 = vadd.f32 %v3484, %v3666
        %v3668 = vpop.f32.mrf.mxu0
        %v3669 = vadd.f32 %v3484, %v3668
        %3670 = vdwg.mxu0
        %3671 = vmatpush.bf16.msra.mxu0 %v3565
        %3672 = vmatpush.bf16.msra.mxu0 %v3564
        %3673 = vmatpush.bf16.msra.mxu0 %v3563
        %3674 = vmatpush.bf16.msra.mxu0 %v3562
        %3675 = vmatpush.bf16.msra.mxu0 %v3561
        %3676 = vmatpush.bf16.msra.mxu0 %v3560
        %3677 = vmatpush.bf16.msra.mxu0 %v3559
        %3678 = vmatpush.bf16.msra.mxu0 %v3558
        %3679 = vmatmul.bf16.gmra.mxu0 %v3419
        %v3680 = vpop.f32.mrf.mxu0
        %v3681 = vadd.f32 %v3592, %v3680
        %v3682 = vpop.f32.mrf.mxu0
        %v3683 = vadd.f32 %v3594, %v3682
        %3684 = vmatmul.bf16.gmra.mxu0 %v3421
        %v3685 = vpop.f32.mrf.mxu0
        %v3686 = vadd.f32 %v3597, %v3685
        %v3687 = vpop.f32.mrf.mxu0
        %v3688 = vadd.f32 %v3599, %v3687
        %3689 = vmatmul.bf16.gmra.mxu0 %v3423
        %v3690 = vpop.f32.mrf.mxu0
        %v3691 = vadd.f32 %v3602, %v3690
        %v3692 = vpop.f32.mrf.mxu0
        %v3693 = vadd.f32 %v3604, %v3692
        %3694 = vmatmul.bf16.gmra.mxu0 %v3425
        %v3695 = vpop.f32.mrf.mxu0
        %v3696 = vadd.f32 %v3607, %v3695
        %v3697 = vpop.f32.mrf.mxu0
        %v3698 = vadd.f32 %v3609, %v3697
        %3699 = vmatmul.bf16.gmra.mxu0 %v3427
        %v3700 = vpop.f32.mrf.mxu0
        %v3701 = vadd.f32 %v3612, %v3700
        %v3702 = vpop.f32.mrf.mxu0
        %v3703 = vadd.f32 %v3614, %v3702
        %3704 = vmatmul.bf16.gmra.mxu0 %v3429
        %v3705 = vpop.f32.mrf.mxu0
        %v3706 = vadd.f32 %v3617, %v3705
        %v3707 = vpop.f32.mrf.mxu0
        %v3708 = vadd.f32 %v3619, %v3707
        %3709 = vmatmul.bf16.gmra.mxu0 %v3431
        %v3710 = vpop.f32.mrf.mxu0
        %v3711 = vadd.f32 %v3622, %v3710
        %v3712 = vpop.f32.mrf.mxu0
        %v3713 = vadd.f32 %v3624, %v3712
        %3714 = vmatmul.bf16.gmra.mxu0 %v3433
        %v3715 = vpop.f32.mrf.mxu0
        %v3716 = vadd.f32 %v3627, %v3715
        %v3717 = vpop.f32.mrf.mxu0
        %v3718 = vadd.f32 %v3629, %v3717
        %3719 = vmatmul.bf16.gmra.mxu0 %v3435
        %v3720 = vpop.f32.mrf.mxu0
        %v3721 = vadd.f32 %v3632, %v3720
        %v3722 = vpop.f32.mrf.mxu0
        %v3723 = vadd.f32 %v3634, %v3722
        %3724 = vmatmul.bf16.gmra.mxu0 %v3437
        %v3725 = vpop.f32.mrf.mxu0
        %v3726 = vadd.f32 %v3637, %v3725
        %v3727 = vpop.f32.mrf.mxu0
        %v3728 = vadd.f32 %v3639, %v3727
        %3729 = vmatmul.bf16.gmra.mxu0 %v3439
        %v3730 = vpop.f32.mrf.mxu0
        %v3731 = vadd.f32 %v3642, %v3730
        %v3732 = vpop.f32.mrf.mxu0
        %v3733 = vadd.f32 %v3644, %v3732
        %3734 = vmatmul.bf16.gmra.mxu0 %v3441
        %v3735 = vpop.f32.mrf.mxu0
        %v3736 = vadd.f32 %v3647, %v3735
        %v3737 = vpop.f32.mrf.mxu0
        %v3738 = vadd.f32 %v3649, %v3737
        %3739 = vmatmul.bf16.gmra.mxu0 %v3443
        %v3740 = vpop.f32.mrf.mxu0
        %v3741 = vadd.f32 %v3652, %v3740
        %v3742 = vpop.f32.mrf.mxu0
        %v3743 = vadd.f32 %v3654, %v3742
        %3744 = vmatmul.bf16.gmra.mxu0 %v3445
        %v3745 = vpop.f32.mrf.mxu0
        %v3746 = vadd.f32 %v3657, %v3745
        %v3747 = vpop.f32.mrf.mxu0
        %v3748 = vadd.f32 %v3659, %v3747
        %3749 = vmatmul.bf16.gmra.mxu0 %v3447
        %v3750 = vpop.f32.mrf.mxu0
        %v3751 = vadd.f32 %v3662, %v3750
        %v3752 = vpop.f32.mrf.mxu0
        %v3753 = vadd.f32 %v3664, %v3752
        %3754 = vmatmul.bf16.gmra.mxu0 %v3449
        %v3755 = vpop.f32.mrf.mxu0
        %v3756 = vadd.f32 %v3667, %v3755
        %v3757 = vpop.f32.mrf.mxu0
        %v3758 = vadd.f32 %v3669, %v3757
        %3759 = vdwg.mxu0
        %v3760 = vmax.f32 %v3681, 0.0
        %v3761 = vmax.f32 %v3683, 0.0
        %v3762 = vmax.f32 %v3686, 0.0
        %v3763 = vmax.f32 %v3688, 0.0
        %v3764 = vmax.f32 %v3691, 0.0
        %v3765 = vmax.f32 %v3693, 0.0
        %v3766 = vmax.f32 %v3696, 0.0
        %v3767 = vmax.f32 %v3698, 0.0
        %v3768 = vmax.f32 %v3701, 0.0
        %v3769 = vmax.f32 %v3703, 0.0
        %v3770 = vmax.f32 %v3706, 0.0
        %v3771 = vmax.f32 %v3708, 0.0
        %v3772 = vmax.f32 %v3711, 0.0
        %v3773 = vmax.f32 %v3713, 0.0
        %v3774 = vmax.f32 %v3716, 0.0
        %v3775 = vmax.f32 %v3718, 0.0
        %v3776 = vmax.f32 %v3721, 0.0
        %v3777 = vmax.f32 %v3723, 0.0
        %v3778 = vmax.f32 %v3726, 0.0
        %v3779 = vmax.f32 %v3728, 0.0
        %v3780 = vmax.f32 %v3731, 0.0
        %v3781 = vmax.f32 %v3733, 0.0
        %v3782 = vmax.f32 %v3736, 0.0
        %v3783 = vmax.f32 %v3738, 0.0
        %v3784 = vmax.f32 %v3741, 0.0
        %v3785 = vmax.f32 %v3743, 0.0
        %v3786 = vmax.f32 %v3746, 0.0
        %v3787 = vmax.f32 %v3748, 0.0
        %v3788 = vmax.f32 %v3751, 0.0
        %v3789 = vmax.f32 %v3753, 0.0
        %v3790 = vmax.f32 %v3756, 0.0
        %v3791 = vmax.f32 %v3758, 0.0
        %v3792 = vpack.c.bf16 %v3761, %v3760
        %v3793 = vpack.c.bf16 %v3763, %v3762
        %v3794 = vpack.c.bf16 %v3765, %v3764
        %v3795 = vpack.c.bf16 %v3767, %v3766
        %v3796 = vpack.c.bf16 %v3769, %v3768
        %v3797 = vpack.c.bf16 %v3771, %v3770
        %v3798 = vpack.c.bf16 %v3773, %v3772
        %v3799 = vpack.c.bf16 %v3775, %v3774
        %v3800 = vpack.c.bf16 %v3777, %v3776
        %v3801 = vpack.c.bf16 %v3779, %v3778
        %v3802 = vpack.c.bf16 %v3781, %v3780
        %v3803 = vpack.c.bf16 %v3783, %v3782
        %v3804 = vpack.c.bf16 %v3785, %v3784
        %v3805 = vpack.c.bf16 %v3787, %v3786
        %v3806 = vpack.c.bf16 %v3789, %v3788
        %v3807 = vpack.c.bf16 %v3791, %v3790
        %v3808 = vld [vmem:[#allocation13] sm:$0xf]
        %v3809 = vld [vmem:[#allocation13 + $0x4] sm:$0xf]
        %v3810 = vld [vmem:[#allocation13 + $0x8] sm:$0xf]
        %v3811 = vld [vmem:[#allocation13 + $0xc] sm:$0xf]
        %v3812 = vld [vmem:[#allocation13 + $0x10] sm:$0xf]
        %v3813 = vld [vmem:[#allocation13 + $0x14] sm:$0xf]
        %v3814 = vld [vmem:[#allocation13 + $0x18] sm:$0xf]
        %v3815 = vld [vmem:[#allocation13 + $0x1c] sm:$0xf]
        %v3816 = vld [vmem:[#allocation13 + $0x20] sm:$0xf]
        %v3817 = vld [vmem:[#allocation13 + $0x24] sm:$0xf]
        %v3818 = vld [vmem:[#allocation13 + $0x28] sm:$0xf]
        %v3819 = vld [vmem:[#allocation13 + $0x2c] sm:$0xf]
        %v3820 = vld [vmem:[#allocation13 + $0x30] sm:$0xf]
        %v3821 = vld [vmem:[#allocation13 + $0x34] sm:$0xf]
        %v3822 = vld [vmem:[#allocation13 + $0x38] sm:$0xf]
        %v3823 = vld [vmem:[#allocation13 + $0x3c] sm:$0xf]
        %v3824 = vld [vmem:[#allocation14] sm:$0x1]
        %v3826 = vperm.slane %v3824, 0
        %v3844 = vunpack.c.l.b16 %v3808
        %v3845 = vunpack.c.l.b16 %v3809
        %v3846 = vunpack.c.l.b16 %v3810
        %v3847 = vunpack.c.l.b16 %v3811
        %v3848 = vunpack.c.l.b16 %v3812
        %v3849 = vunpack.c.l.b16 %v3813
        %v3850 = vunpack.c.l.b16 %v3814
        %v3851 = vunpack.c.l.b16 %v3815
        %v3852 = vunpack.c.l.b16 %v3816
        %v3853 = vunpack.c.l.b16 %v3817
        %v3854 = vunpack.c.l.b16 %v3818
        %v3855 = vunpack.c.l.b16 %v3819
        %v3856 = vunpack.c.l.b16 %v3820
        %v3857 = vunpack.c.l.b16 %v3821
        %v3858 = vunpack.c.l.b16 %v3822
        %v3859 = vunpack.c.l.b16 %v3823
        %v3860 = vpack.c.b16 %v3845, %v3844
        %v3861 = vpack.c.b16 %v3847, %v3846
        %v3862 = vpack.c.b16 %v3849, %v3848
        %v3863 = vpack.c.b16 %v3851, %v3850
        %v3864 = vpack.c.b16 %v3853, %v3852
        %v3865 = vpack.c.b16 %v3855, %v3854
        %v3866 = vpack.c.b16 %v3857, %v3856
        %v3867 = vpack.c.b16 %v3859, %v3858
        %3876 = vmatpush.bf16.msra.mxu0 %v3867
        %3877 = vmatpush.bf16.msra.mxu0 %v3866
        %3878 = vmatpush.bf16.msra.mxu0 %v3865
        %3879 = vmatpush.bf16.msra.mxu0 %v3864
        %3880 = vmatpush.bf16.msra.mxu0 %v3863
        %3881 = vmatpush.bf16.msra.mxu0 %v3862
        %3882 = vmatpush.bf16.msra.mxu0 %v3861
        %3883 = vmatpush.bf16.msra.mxu0 %v3860
        %3884 = vmatmul.bf16.gmra.mxu0 %v3792
        %v3885 = vpop.f32.mrf.mxu0
        %v3886 = vadd.f32 %v3826, %v3885
        %v3887 = vpop.f32.mrf.mxu0
        %v3888 = vadd.f32 %v3826, %v3887
        %3889 = vmatmul.bf16.gmra.mxu0 %v3793
        %v3890 = vpop.f32.mrf.mxu0
        %v3891 = vadd.f32 %v3826, %v3890
        %v3892 = vpop.f32.mrf.mxu0
        %v3893 = vadd.f32 %v3826, %v3892
        %3894 = vmatmul.bf16.gmra.mxu0 %v3794
        %v3895 = vpop.f32.mrf.mxu0
        %v3896 = vadd.f32 %v3826, %v3895
        %v3897 = vpop.f32.mrf.mxu0
        %v3898 = vadd.f32 %v3826, %v3897
        %3899 = vmatmul.bf16.gmra.mxu0 %v3795
        %v3900 = vpop.f32.mrf.mxu0
        %v3901 = vadd.f32 %v3826, %v3900
        %v3902 = vpop.f32.mrf.mxu0
        %v3903 = vadd.f32 %v3826, %v3902
        %3904 = vmatmul.bf16.gmra.mxu0 %v3796
        %v3905 = vpop.f32.mrf.mxu0
        %v3906 = vadd.f32 %v3826, %v3905
        %v3907 = vpop.f32.mrf.mxu0
        %v3908 = vadd.f32 %v3826, %v3907
        %3909 = vmatmul.bf16.gmra.mxu0 %v3797
        %v3910 = vpop.f32.mrf.mxu0
        %v3911 = vadd.f32 %v3826, %v3910
        %v3912 = vpop.f32.mrf.mxu0
        %v3913 = vadd.f32 %v3826, %v3912
        %3914 = vmatmul.bf16.gmra.mxu0 %v3798
        %v3915 = vpop.f32.mrf.mxu0
        %v3916 = vadd.f32 %v3826, %v3915
        %v3917 = vpop.f32.mrf.mxu0
        %v3918 = vadd.f32 %v3826, %v3917
        %3919 = vmatmul.bf16.gmra.mxu0 %v3799
        %v3920 = vpop.f32.mrf.mxu0
        %v3921 = vadd.f32 %v3826, %v3920
        %v3922 = vpop.f32.mrf.mxu0
        %v3923 = vadd.f32 %v3826, %v3922
        %3924 = vmatmul.bf16.gmra.mxu0 %v3800
        %v3925 = vpop.f32.mrf.mxu0
        %v3926 = vadd.f32 %v3826, %v3925
        %v3927 = vpop.f32.mrf.mxu0
        %v3928 = vadd.f32 %v3826, %v3927
        %3929 = vmatmul.bf16.gmra.mxu0 %v3801
        %v3930 = vpop.f32.mrf.mxu0
        %v3931 = vadd.f32 %v3826, %v3930
        %v3932 = vpop.f32.mrf.mxu0
        %v3933 = vadd.f32 %v3826, %v3932
        %3934 = vmatmul.bf16.gmra.mxu0 %v3802
        %v3935 = vpop.f32.mrf.mxu0
        %v3936 = vadd.f32 %v3826, %v3935
        %v3937 = vpop.f32.mrf.mxu0
        %v3938 = vadd.f32 %v3826, %v3937
        %3939 = vmatmul.bf16.gmra.mxu0 %v3803
        %v3940 = vpop.f32.mrf.mxu0
        %v3941 = vadd.f32 %v3826, %v3940
        %v3942 = vpop.f32.mrf.mxu0
        %v3943 = vadd.f32 %v3826, %v3942
        %3944 = vmatmul.bf16.gmra.mxu0 %v3804
        %v3945 = vpop.f32.mrf.mxu0
        %v3946 = vadd.f32 %v3826, %v3945
        %v3947 = vpop.f32.mrf.mxu0
        %v3948 = vadd.f32 %v3826, %v3947
        %3949 = vmatmul.bf16.gmra.mxu0 %v3805
        %v3950 = vpop.f32.mrf.mxu0
        %v3951 = vadd.f32 %v3826, %v3950
        %v3952 = vpop.f32.mrf.mxu0
        %v3953 = vadd.f32 %v3826, %v3952
        %3954 = vmatmul.bf16.gmra.mxu0 %v3806
        %v3955 = vpop.f32.mrf.mxu0
        %v3956 = vadd.f32 %v3826, %v3955
        %v3957 = vpop.f32.mrf.mxu0
        %v3958 = vadd.f32 %v3826, %v3957
        %3959 = vmatmul.bf16.gmra.mxu0 %v3807
        %v3960 = vpop.f32.mrf.mxu0
        %v3961 = vadd.f32 %v3826, %v3960
        %v3962 = vpop.f32.mrf.mxu0
        %v3963 = vadd.f32 %v3826, %v3962
        %3964 = vdwg.mxu0
        %v3965 = vmax.f32 %v3886, 0.0
        %v3966 = vmax.f32 %v3888, 0.0
        %v3967 = vmax.f32 %v3891, 0.0
        %v3968 = vmax.f32 %v3893, 0.0
        %v3969 = vmax.f32 %v3896, 0.0
        %v3970 = vmax.f32 %v3898, 0.0
        %v3971 = vmax.f32 %v3901, 0.0
        %v3972 = vmax.f32 %v3903, 0.0
        %v3973 = vmax.f32 %v3906, 0.0
        %v3974 = vmax.f32 %v3908, 0.0
        %v3975 = vmax.f32 %v3911, 0.0
        %v3976 = vmax.f32 %v3913, 0.0
        %v3977 = vmax.f32 %v3916, 0.0
        %v3978 = vmax.f32 %v3918, 0.0
        %v3979 = vmax.f32 %v3921, 0.0
        %v3980 = vmax.f32 %v3923, 0.0
        %v3981 = vmax.f32 %v3926, 0.0
        %v3982 = vmax.f32 %v3928, 0.0
        %v3983 = vmax.f32 %v3931, 0.0
        %v3984 = vmax.f32 %v3933, 0.0
        %v3985 = vmax.f32 %v3936, 0.0
        %v3986 = vmax.f32 %v3938, 0.0
        %v3987 = vmax.f32 %v3941, 0.0
        %v3988 = vmax.f32 %v3943, 0.0
        %v3989 = vmax.f32 %v3946, 0.0
        %v3990 = vmax.f32 %v3948, 0.0
        %v3991 = vmax.f32 %v3951, 0.0
        %v3992 = vmax.f32 %v3953, 0.0
        %v3993 = vmax.f32 %v3956, 0.0
        %v3994 = vmax.f32 %v3958, 0.0
        %v3995 = vmax.f32 %v3961, 0.0
        %v3996 = vmax.f32 %v3963, 0.0
        %v3997 = vpack.c.bf16 %v3966, %v3965
        %v3998 = vpack.c.bf16 %v3968, %v3967
        %v3999 = vpack.c.bf16 %v3970, %v3969
        %v4000 = vpack.c.bf16 %v3972, %v3971
        %v4001 = vpack.c.bf16 %v3974, %v3973
        %v4002 = vpack.c.bf16 %v3976, %v3975
        %v4003 = vpack.c.bf16 %v3978, %v3977
        %v4004 = vpack.c.bf16 %v3980, %v3979
        %v4005 = vpack.c.bf16 %v3982, %v3981
        %v4006 = vpack.c.bf16 %v3984, %v3983
        %v4007 = vpack.c.bf16 %v3986, %v3985
        %v4008 = vpack.c.bf16 %v3988, %v3987
        %v4009 = vpack.c.bf16 %v3990, %v3989
        %v4010 = vpack.c.bf16 %v3992, %v3991
        %v4011 = vpack.c.bf16 %v3994, %v3993
        %v4012 = vpack.c.bf16 %v3996, %v3995
        %v4013 = vld [vmem:[#allocation16] sm:$0xf]
        %v4014 = vld [vmem:[#allocation16 + $0x4] sm:$0xf]
        %v4015 = vld [vmem:[#allocation16 + $0x8] sm:$0xf]
        %v4016 = vld [vmem:[#allocation16 + $0xc] sm:$0xf]
        %v4017 = vld [vmem:[#allocation16 + $0x10] sm:$0xf]
        %v4018 = vld [vmem:[#allocation16 + $0x14] sm:$0xf]
        %v4019 = vld [vmem:[#allocation16 + $0x18] sm:$0xf]
        %v4020 = vld [vmem:[#allocation16 + $0x1c] sm:$0xf]
        %v4021 = vld [vmem:[#allocation16 + $0x20] sm:$0xf]
        %v4022 = vld [vmem:[#allocation16 + $0x24] sm:$0xf]
        %v4023 = vld [vmem:[#allocation16 + $0x28] sm:$0xf]
        %v4024 = vld [vmem:[#allocation16 + $0x2c] sm:$0xf]
        %v4025 = vld [vmem:[#allocation16 + $0x30] sm:$0xf]
        %v4026 = vld [vmem:[#allocation16 + $0x34] sm:$0xf]
        %v4027 = vld [vmem:[#allocation16 + $0x38] sm:$0xf]
        %v4028 = vld [vmem:[#allocation16 + $0x3c] sm:$0xf]
        %v4029 = vld [vmem:[#allocation17] sm:$0x1]
        %v4031 = vperm.slane %v4029, 0
        %v4049 = vunpack.c.l.b16 %v4013
        %v4050 = vunpack.c.l.b16 %v4014
        %v4051 = vunpack.c.l.b16 %v4015
        %v4052 = vunpack.c.l.b16 %v4016
        %v4053 = vunpack.c.l.b16 %v4017
        %v4054 = vunpack.c.l.b16 %v4018
        %v4055 = vunpack.c.l.b16 %v4019
        %v4056 = vunpack.c.l.b16 %v4020
        %v4057 = vunpack.c.l.b16 %v4021
        %v4058 = vunpack.c.l.b16 %v4022
        %v4059 = vunpack.c.l.b16 %v4023
        %v4060 = vunpack.c.l.b16 %v4024
        %v4061 = vunpack.c.l.b16 %v4025
        %v4062 = vunpack.c.l.b16 %v4026
        %v4063 = vunpack.c.l.b16 %v4027
        %v4064 = vunpack.c.l.b16 %v4028
        %v4065 = vpack.c.b16 %v4050, %v4049
        %v4066 = vpack.c.b16 %v4052, %v4051
        %v4067 = vpack.c.b16 %v4054, %v4053
        %v4068 = vpack.c.b16 %v4056, %v4055
        %v4069 = vpack.c.b16 %v4058, %v4057
        %v4070 = vpack.c.b16 %v4060, %v4059
        %v4071 = vpack.c.b16 %v4062, %v4061
        %v4072 = vpack.c.b16 %v4064, %v4063
        %4081 = vmatpush.bf16.msra.mxu0 %v4072
        %4082 = vmatpush.bf16.msra.mxu0 %v4071
        %4083 = vmatpush.bf16.msra.mxu0 %v4070
        %4084 = vmatpush.bf16.msra.mxu0 %v4069
        %4085 = vmatpush.bf16.msra.mxu0 %v4068
        %4086 = vmatpush.bf16.msra.mxu0 %v4067
        %4087 = vmatpush.bf16.msra.mxu0 %v4066
        %4088 = vmatpush.bf16.msra.mxu0 %v4065
        %4089 = vmatmul.bf16.gmra.mxu0 %v3997
        %v4090 = vpop.f32.mrf.mxu0
        %v4091 = vadd.f32 %v4031, %v4090
        %v4092 = vpop.f32.mrf.mxu0
        %v4093 = vadd.f32 %v4031, %v4092
        %4094 = vmatmul.bf16.gmra.mxu0 %v3998
        %v4095 = vpop.f32.mrf.mxu0
        %v4096 = vadd.f32 %v4031, %v4095
        %v4097 = vpop.f32.mrf.mxu0
        %v4098 = vadd.f32 %v4031, %v4097
        %4099 = vmatmul.bf16.gmra.mxu0 %v3999
        %v4100 = vpop.f32.mrf.mxu0
        %v4101 = vadd.f32 %v4031, %v4100
        %v4102 = vpop.f32.mrf.mxu0
        %v4103 = vadd.f32 %v4031, %v4102
        %4104 = vmatmul.bf16.gmra.mxu0 %v4000
        %v4105 = vpop.f32.mrf.mxu0
        %v4106 = vadd.f32 %v4031, %v4105
        %v4107 = vpop.f32.mrf.mxu0
        %v4108 = vadd.f32 %v4031, %v4107
        %4109 = vmatmul.bf16.gmra.mxu0 %v4001
        %v4110 = vpop.f32.mrf.mxu0
        %v4111 = vadd.f32 %v4031, %v4110
        %v4112 = vpop.f32.mrf.mxu0
        %v4113 = vadd.f32 %v4031, %v4112
        %4114 = vmatmul.bf16.gmra.mxu0 %v4002
        %v4115 = vpop.f32.mrf.mxu0
        %v4116 = vadd.f32 %v4031, %v4115
        %v4117 = vpop.f32.mrf.mxu0
        %v4118 = vadd.f32 %v4031, %v4117
        %4119 = vmatmul.bf16.gmra.mxu0 %v4003
        %v4120 = vpop.f32.mrf.mxu0
        %v4121 = vadd.f32 %v4031, %v4120
        %v4122 = vpop.f32.mrf.mxu0
        %v4123 = vadd.f32 %v4031, %v4122
        %4124 = vmatmul.bf16.gmra.mxu0 %v4004
        %v4125 = vpop.f32.mrf.mxu0
        %v4126 = vadd.f32 %v4031, %v4125
        %v4127 = vpop.f32.mrf.mxu0
        %v4128 = vadd.f32 %v4031, %v4127
        %4129 = vmatmul.bf16.gmra.mxu0 %v4005
        %v4130 = vpop.f32.mrf.mxu0
        %v4131 = vadd.f32 %v4031, %v4130
        %v4132 = vpop.f32.mrf.mxu0
        %v4133 = vadd.f32 %v4031, %v4132
        %4134 = vmatmul.bf16.gmra.mxu0 %v4006
        %v4135 = vpop.f32.mrf.mxu0
        %v4136 = vadd.f32 %v4031, %v4135
        %v4137 = vpop.f32.mrf.mxu0
        %v4138 = vadd.f32 %v4031, %v4137
        %4139 = vmatmul.bf16.gmra.mxu0 %v4007
        %v4140 = vpop.f32.mrf.mxu0
        %v4141 = vadd.f32 %v4031, %v4140
        %v4142 = vpop.f32.mrf.mxu0
        %v4143 = vadd.f32 %v4031, %v4142
        %4144 = vmatmul.bf16.gmra.mxu0 %v4008
        %v4145 = vpop.f32.mrf.mxu0
        %v4146 = vadd.f32 %v4031, %v4145
        %v4147 = vpop.f32.mrf.mxu0
        %v4148 = vadd.f32 %v4031, %v4147
        %4149 = vmatmul.bf16.gmra.mxu0 %v4009
        %v4150 = vpop.f32.mrf.mxu0
        %v4151 = vadd.f32 %v4031, %v4150
        %v4152 = vpop.f32.mrf.mxu0
        %v4153 = vadd.f32 %v4031, %v4152
        %4154 = vmatmul.bf16.gmra.mxu0 %v4010
        %v4155 = vpop.f32.mrf.mxu0
        %v4156 = vadd.f32 %v4031, %v4155
        %v4157 = vpop.f32.mrf.mxu0
        %v4158 = vadd.f32 %v4031, %v4157
        %4159 = vmatmul.bf16.gmra.mxu0 %v4011
        %v4160 = vpop.f32.mrf.mxu0
        %v4161 = vadd.f32 %v4031, %v4160
        %v4162 = vpop.f32.mrf.mxu0
        %v4163 = vadd.f32 %v4031, %v4162
        %4164 = vmatmul.bf16.gmra.mxu0 %v4012
        %v4165 = vpop.f32.mrf.mxu0
        %v4166 = vadd.f32 %v4031, %v4165
        %v4167 = vpop.f32.mrf.mxu0
        %v4168 = vadd.f32 %v4031, %v4167
        %4169 = vdwg.mxu0
        %v4170 = vmax.f32 %v4091, 0.0
        %v4171 = vmax.f32 %v4093, 0.0
        %v4172 = vmax.f32 %v4096, 0.0
        %v4173 = vmax.f32 %v4098, 0.0
        %v4174 = vmax.f32 %v4101, 0.0
        %v4175 = vmax.f32 %v4103, 0.0
        %v4176 = vmax.f32 %v4106, 0.0
        %v4177 = vmax.f32 %v4108, 0.0
        %v4178 = vmax.f32 %v4111, 0.0
        %v4179 = vmax.f32 %v4113, 0.0
        %v4180 = vmax.f32 %v4116, 0.0
        %v4181 = vmax.f32 %v4118, 0.0
        %v4182 = vmax.f32 %v4121, 0.0
        %v4183 = vmax.f32 %v4123, 0.0
        %v4184 = vmax.f32 %v4126, 0.0
        %v4185 = vmax.f32 %v4128, 0.0
        %v4186 = vmax.f32 %v4131, 0.0
        %v4187 = vmax.f32 %v4133, 0.0
        %v4188 = vmax.f32 %v4136, 0.0
        %v4189 = vmax.f32 %v4138, 0.0
        %v4190 = vmax.f32 %v4141, 0.0
        %v4191 = vmax.f32 %v4143, 0.0
        %v4192 = vmax.f32 %v4146, 0.0
        %v4193 = vmax.f32 %v4148, 0.0
        %v4194 = vmax.f32 %v4151, 0.0
        %v4195 = vmax.f32 %v4153, 0.0
        %v4196 = vmax.f32 %v4156, 0.0
        %v4197 = vmax.f32 %v4158, 0.0
        %v4198 = vmax.f32 %v4161, 0.0
        %v4199 = vmax.f32 %v4163, 0.0
        %v4200 = vmax.f32 %v4166, 0.0
        %v4201 = vmax.f32 %v4168, 0.0
        %v4202 = vpack.c.bf16 %v4171, %v4170
        %v4203 = vpack.c.bf16 %v4173, %v4172
        %v4204 = vpack.c.bf16 %v4175, %v4174
        %v4205 = vpack.c.bf16 %v4177, %v4176
        %v4206 = vpack.c.bf16 %v4179, %v4178
        %v4207 = vpack.c.bf16 %v4181, %v4180
        %v4208 = vpack.c.bf16 %v4183, %v4182
        %v4209 = vpack.c.bf16 %v4185, %v4184
        %v4210 = vpack.c.bf16 %v4187, %v4186
        %v4211 = vpack.c.bf16 %v4189, %v4188
        %v4212 = vpack.c.bf16 %v4191, %v4190
        %v4213 = vpack.c.bf16 %v4193, %v4192
        %v4214 = vpack.c.bf16 %v4195, %v4194
        %v4215 = vpack.c.bf16 %v4197, %v4196
        %v4216 = vpack.c.bf16 %v4199, %v4198
        %v4217 = vpack.c.bf16 %v4201, %v4200
        %v4218 = vld [vmem:[#allocation19] sm:$0xff]
        %v4219 = vld [vmem:[#allocation19 + $0x8] sm:$0xff]
        %v4220 = vld [vmem:[#allocation19 + $0x10] sm:$0xff]
        %v4221 = vld [vmem:[#allocation19 + $0x18] sm:$0xff]
        %v4222 = vld [vmem:[#allocation19 + $0x20] sm:$0xff]
        %v4223 = vld [vmem:[#allocation19 + $0x28] sm:$0xff]
        %v4224 = vld [vmem:[#allocation19 + $0x30] sm:$0xff]
        %v4225 = vld [vmem:[#allocation19 + $0x38] sm:$0xff]
        %v4226 = vld [vmem:[#allocation19 + $0x40] sm:$0xff]
        %v4227 = vld [vmem:[#allocation19 + $0x48] sm:$0xff]
        %v4228 = vld [vmem:[#allocation19 + $0x50] sm:$0xff]
        %v4229 = vld [vmem:[#allocation19 + $0x58] sm:$0xff]
        %v4230 = vld [vmem:[#allocation19 + $0x60] sm:$0xff]
        %v4231 = vld [vmem:[#allocation19 + $0x68] sm:$0xff]
        %v4232 = vld [vmem:[#allocation19 + $0x70] sm:$0xff]
        %v4233 = vld [vmem:[#allocation19 + $0x78] sm:$0xff]
        %v4234 = vld [vmem:[%s12] sm:$0x3]
        %v4236 = vperm.slane %v4234, 0
        %v4237 = vperm.slane %v4234, 1
        %v4256 = vunpack.c.l.b16 %v4218
        %v4257 = vunpack.c.h.b16 %v4218
        %v4258 = vunpack.c.l.b16 %v4219
        %v4259 = vunpack.c.h.b16 %v4219
        %v4260 = vunpack.c.l.b16 %v4220
        %v4261 = vunpack.c.h.b16 %v4220
        %v4262 = vunpack.c.l.b16 %v4221
        %v4263 = vunpack.c.h.b16 %v4221
        %v4264 = vunpack.c.l.b16 %v4222
        %v4265 = vunpack.c.h.b16 %v4222
        %v4266 = vunpack.c.l.b16 %v4223
        %v4267 = vunpack.c.h.b16 %v4223
        %v4268 = vunpack.c.l.b16 %v4224
        %v4269 = vunpack.c.h.b16 %v4224
        %v4270 = vunpack.c.l.b16 %v4225
        %v4271 = vunpack.c.h.b16 %v4225
        %v4272 = vunpack.c.l.b16 %v4226
        %v4273 = vunpack.c.h.b16 %v4226
        %v4274 = vunpack.c.l.b16 %v4227
        %v4275 = vunpack.c.h.b16 %v4227
        %v4276 = vunpack.c.l.b16 %v4228
        %v4277 = vunpack.c.h.b16 %v4228
        %v4278 = vunpack.c.l.b16 %v4229
        %v4279 = vunpack.c.h.b16 %v4229
        %v4280 = vunpack.c.l.b16 %v4230
        %v4281 = vunpack.c.h.b16 %v4230
        %v4282 = vunpack.c.l.b16 %v4231
        %v4283 = vunpack.c.h.b16 %v4231
        %v4284 = vunpack.c.l.b16 %v4232
        %v4285 = vunpack.c.h.b16 %v4232
        %v4286 = vunpack.c.l.b16 %v4233
        %v4287 = vunpack.c.h.b16 %v4233
        %v4288 = vpack.c.b16 %v4258, %v4256
        %v4289 = vpack.c.b16 %v4259, %v4257
        %v4290 = vpack.c.b16 %v4262, %v4260
        %v4291 = vpack.c.b16 %v4263, %v4261
        %v4292 = vpack.c.b16 %v4266, %v4264
        %v4293 = vpack.c.b16 %v4267, %v4265
        %v4294 = vpack.c.b16 %v4270, %v4268
        %v4295 = vpack.c.b16 %v4271, %v4269
        %v4296 = vpack.c.b16 %v4274, %v4272
        %v4297 = vpack.c.b16 %v4275, %v4273
        %v4298 = vpack.c.b16 %v4278, %v4276
        %v4299 = vpack.c.b16 %v4279, %v4277
        %v4300 = vpack.c.b16 %v4282, %v4280
        %v4301 = vpack.c.b16 %v4283, %v4281
        %v4302 = vpack.c.b16 %v4286, %v4284
        %v4303 = vpack.c.b16 %v4287, %v4285
        %4320 = vmatpush.bf16.msra.mxu0 %v4302
        %4321 = vmatpush.bf16.msra.mxu0 %v4300
        %4322 = vmatpush.bf16.msra.mxu0 %v4298
        %4323 = vmatpush.bf16.msra.mxu0 %v4296
        %4324 = vmatpush.bf16.msra.mxu0 %v4294
        %4325 = vmatpush.bf16.msra.mxu0 %v4292
        %4326 = vmatpush.bf16.msra.mxu0 %v4290
        %4327 = vmatpush.bf16.msra.mxu0 %v4288
        %4328 = vmatmul.bf16.gmra.mxu0 %v4202
        %v4329 = vpop.f32.mrf.mxu0
        %v4330 = vadd.f32 %v4236, %v4329
        %v4331 = vpop.f32.mrf.mxu0
        %v4332 = vadd.f32 %v4236, %v4331
        %4333 = vmatmul.bf16.gmra.mxu0 %v4203
        %v4334 = vpop.f32.mrf.mxu0
        %v4335 = vadd.f32 %v4236, %v4334
        %v4336 = vpop.f32.mrf.mxu0
        %v4337 = vadd.f32 %v4236, %v4336
        %4338 = vmatmul.bf16.gmra.mxu0 %v4204
        %v4339 = vpop.f32.mrf.mxu0
        %v4340 = vadd.f32 %v4236, %v4339
        %v4341 = vpop.f32.mrf.mxu0
        %v4342 = vadd.f32 %v4236, %v4341
        %4343 = vmatmul.bf16.gmra.mxu0 %v4205
        %v4344 = vpop.f32.mrf.mxu0
        %v4345 = vadd.f32 %v4236, %v4344
        %v4346 = vpop.f32.mrf.mxu0
        %v4347 = vadd.f32 %v4236, %v4346
        %4348 = vmatmul.bf16.gmra.mxu0 %v4206
        %v4349 = vpop.f32.mrf.mxu0
        %v4350 = vadd.f32 %v4236, %v4349
        %v4351 = vpop.f32.mrf.mxu0
        %v4352 = vadd.f32 %v4236, %v4351
        %4353 = vmatmul.bf16.gmra.mxu0 %v4207
        %v4354 = vpop.f32.mrf.mxu0
        %v4355 = vadd.f32 %v4236, %v4354
        %v4356 = vpop.f32.mrf.mxu0
        %v4357 = vadd.f32 %v4236, %v4356
        %4358 = vmatmul.bf16.gmra.mxu0 %v4208
        %v4359 = vpop.f32.mrf.mxu0
        %v4360 = vadd.f32 %v4236, %v4359
        %v4361 = vpop.f32.mrf.mxu0
        %v4362 = vadd.f32 %v4236, %v4361
        %4363 = vmatmul.bf16.gmra.mxu0 %v4209
        %v4364 = vpop.f32.mrf.mxu0
        %v4365 = vadd.f32 %v4236, %v4364
        %v4366 = vpop.f32.mrf.mxu0
        %v4367 = vadd.f32 %v4236, %v4366
        %4368 = vmatmul.bf16.gmra.mxu0 %v4210
        %v4369 = vpop.f32.mrf.mxu0
        %v4370 = vadd.f32 %v4236, %v4369
        %v4371 = vpop.f32.mrf.mxu0
        %v4372 = vadd.f32 %v4236, %v4371
        %4373 = vmatmul.bf16.gmra.mxu0 %v4211
        %v4374 = vpop.f32.mrf.mxu0
        %v4375 = vadd.f32 %v4236, %v4374
        %v4376 = vpop.f32.mrf.mxu0
        %v4377 = vadd.f32 %v4236, %v4376
        %4378 = vmatmul.bf16.gmra.mxu0 %v4212
        %v4379 = vpop.f32.mrf.mxu0
        %v4380 = vadd.f32 %v4236, %v4379
        %v4381 = vpop.f32.mrf.mxu0
        %v4382 = vadd.f32 %v4236, %v4381
        %4383 = vmatmul.bf16.gmra.mxu0 %v4213
        %v4384 = vpop.f32.mrf.mxu0
        %v4385 = vadd.f32 %v4236, %v4384
        %v4386 = vpop.f32.mrf.mxu0
        %v4387 = vadd.f32 %v4236, %v4386
        %4388 = vmatmul.bf16.gmra.mxu0 %v4214
        %v4389 = vpop.f32.mrf.mxu0
        %v4390 = vadd.f32 %v4236, %v4389
        %v4391 = vpop.f32.mrf.mxu0
        %v4392 = vadd.f32 %v4236, %v4391
        %4393 = vmatmul.bf16.gmra.mxu0 %v4215
        %v4394 = vpop.f32.mrf.mxu0
        %v4395 = vadd.f32 %v4236, %v4394
        %v4396 = vpop.f32.mrf.mxu0
        %v4397 = vadd.f32 %v4236, %v4396
        %4398 = vmatmul.bf16.gmra.mxu0 %v4216
        %v4399 = vpop.f32.mrf.mxu0
        %v4400 = vadd.f32 %v4236, %v4399
        %v4401 = vpop.f32.mrf.mxu0
        %v4402 = vadd.f32 %v4236, %v4401
        %4403 = vmatmul.bf16.gmra.mxu0 %v4217
        %v4404 = vpop.f32.mrf.mxu0
        %v4405 = vadd.f32 %v4236, %v4404
        %v4406 = vpop.f32.mrf.mxu0
        %v4407 = vadd.f32 %v4236, %v4406
        %4408 = vdwg.mxu0
        %4409 = vmatpush.bf16.msra.mxu0 %v4303
        %4410 = vmatpush.bf16.msra.mxu0 %v4301
        %4411 = vmatpush.bf16.msra.mxu0 %v4299
        %4412 = vmatpush.bf16.msra.mxu0 %v4297
        %4413 = vmatpush.bf16.msra.mxu0 %v4295
        %4414 = vmatpush.bf16.msra.mxu0 %v4293
        %4415 = vmatpush.bf16.msra.mxu0 %v4291
        %4416 = vmatpush.bf16.msra.mxu0 %v4289
        %4417 = vmatmul.bf16.gmra.mxu0 %v4202
        %v4418 = vpop.f32.mrf.mxu0
        %v4419 = vadd.f32 %v4237, %v4418
        %v4420 = vpop.f32.mrf.mxu0
        %v4421 = vadd.f32 %v4237, %v4420
        %4422 = vmatmul.bf16.gmra.mxu0 %v4203
        %v4423 = vpop.f32.mrf.mxu0
        %v4424 = vadd.f32 %v4237, %v4423
        %v4425 = vpop.f32.mrf.mxu0
        %v4426 = vadd.f32 %v4237, %v4425
        %4427 = vmatmul.bf16.gmra.mxu0 %v4204
        %v4428 = vpop.f32.mrf.mxu0
        %v4429 = vadd.f32 %v4237, %v4428
        %v4430 = vpop.f32.mrf.mxu0
        %v4431 = vadd.f32 %v4237, %v4430
        %4432 = vmatmul.bf16.gmra.mxu0 %v4205
        %v4433 = vpop.f32.mrf.mxu0
        %v4434 = vadd.f32 %v4237, %v4433
        %v4435 = vpop.f32.mrf.mxu0
        %v4436 = vadd.f32 %v4237, %v4435
        %4437 = vmatmul.bf16.gmra.mxu0 %v4206
        %v4438 = vpop.f32.mrf.mxu0
        %v4439 = vadd.f32 %v4237, %v4438
        %v4440 = vpop.f32.mrf.mxu0
        %v4441 = vadd.f32 %v4237, %v4440
        %4442 = vmatmul.bf16.gmra.mxu0 %v4207
        %v4443 = vpop.f32.mrf.mxu0
        %v4444 = vadd.f32 %v4237, %v4443
        %v4445 = vpop.f32.mrf.mxu0
        %v4446 = vadd.f32 %v4237, %v4445
        %4447 = vmatmul.bf16.gmra.mxu0 %v4208
        %v4448 = vpop.f32.mrf.mxu0
        %v4449 = vadd.f32 %v4237, %v4448
        %v4450 = vpop.f32.mrf.mxu0
        %v4451 = vadd.f32 %v4237, %v4450
        %4452 = vmatmul.bf16.gmra.mxu0 %v4209
        %v4453 = vpop.f32.mrf.mxu0
        %v4454 = vadd.f32 %v4237, %v4453
        %v4455 = vpop.f32.mrf.mxu0
        %v4456 = vadd.f32 %v4237, %v4455
        %4457 = vmatmul.bf16.gmra.mxu0 %v4210
        %v4458 = vpop.f32.mrf.mxu0
        %v4459 = vadd.f32 %v4237, %v4458
        %v4460 = vpop.f32.mrf.mxu0
        %v4461 = vadd.f32 %v4237, %v4460
        %4462 = vmatmul.bf16.gmra.mxu0 %v4211
        %v4463 = vpop.f32.mrf.mxu0
        %v4464 = vadd.f32 %v4237, %v4463
        %v4465 = vpop.f32.mrf.mxu0
        %v4466 = vadd.f32 %v4237, %v4465
        %4467 = vmatmul.bf16.gmra.mxu0 %v4212
        %v4468 = vpop.f32.mrf.mxu0
        %v4469 = vadd.f32 %v4237, %v4468
        %v4470 = vpop.f32.mrf.mxu0
        %v4471 = vadd.f32 %v4237, %v4470
        %4472 = vmatmul.bf16.gmra.mxu0 %v4213
        %v4473 = vpop.f32.mrf.mxu0
        %v4474 = vadd.f32 %v4237, %v4473
        %v4475 = vpop.f32.mrf.mxu0
        %v4476 = vadd.f32 %v4237, %v4475
        %4477 = vmatmul.bf16.gmra.mxu0 %v4214
        %v4478 = vpop.f32.mrf.mxu0
        %v4479 = vadd.f32 %v4237, %v4478
        %v4480 = vpop.f32.mrf.mxu0
        %v4481 = vadd.f32 %v4237, %v4480
        %4482 = vmatmul.bf16.gmra.mxu0 %v4215
        %v4483 = vpop.f32.mrf.mxu0
        %v4484 = vadd.f32 %v4237, %v4483
        %v4485 = vpop.f32.mrf.mxu0
        %v4486 = vadd.f32 %v4237, %v4485
        %4487 = vmatmul.bf16.gmra.mxu0 %v4216
        %v4488 = vpop.f32.mrf.mxu0
        %v4489 = vadd.f32 %v4237, %v4488
        %v4490 = vpop.f32.mrf.mxu0
        %v4491 = vadd.f32 %v4237, %v4490
        %4492 = vmatmul.bf16.gmra.mxu0 %v4217
        %v4493 = vpop.f32.mrf.mxu0
        %v4494 = vadd.f32 %v4237, %v4493
        %v4495 = vpop.f32.mrf.mxu0
        %v4496 = vadd.f32 %v4237, %v4495
        %4497 = vdwg.mxu0
        %v4498 = vmax.f32 %v4330, 0.0
        %v4499 = vmax.f32 %v4419, 0.0
        %v4500 = vmax.f32 %v4332, 0.0
        %v4501 = vmax.f32 %v4421, 0.0
        %v4502 = vmax.f32 %v4335, 0.0
        %v4503 = vmax.f32 %v4424, 0.0
        %v4504 = vmax.f32 %v4337, 0.0
        %v4505 = vmax.f32 %v4426, 0.0
        %v4506 = vmax.f32 %v4340, 0.0
        %v4507 = vmax.f32 %v4429, 0.0
        %v4508 = vmax.f32 %v4342, 0.0
        %v4509 = vmax.f32 %v4431, 0.0
        %v4510 = vmax.f32 %v4345, 0.0
        %v4511 = vmax.f32 %v4434, 0.0
        %v4512 = vmax.f32 %v4347, 0.0
        %v4513 = vmax.f32 %v4436, 0.0
        %v4514 = vmax.f32 %v4350, 0.0
        %v4515 = vmax.f32 %v4439, 0.0
        %v4516 = vmax.f32 %v4352, 0.0
        %v4517 = vmax.f32 %v4441, 0.0
        %v4518 = vmax.f32 %v4355, 0.0
        %v4519 = vmax.f32 %v4444, 0.0
        %v4520 = vmax.f32 %v4357, 0.0
        %v4521 = vmax.f32 %v4446, 0.0
        %v4522 = vmax.f32 %v4360, 0.0
        %v4523 = vmax.f32 %v4449, 0.0
        %v4524 = vmax.f32 %v4362, 0.0
        %v4525 = vmax.f32 %v4451, 0.0
        %v4526 = vmax.f32 %v4365, 0.0
        %v4527 = vmax.f32 %v4454, 0.0
        %v4528 = vmax.f32 %v4367, 0.0
        %v4529 = vmax.f32 %v4456, 0.0
        %v4530 = vmax.f32 %v4370, 0.0
        %v4531 = vmax.f32 %v4459, 0.0
        %v4532 = vmax.f32 %v4372, 0.0
        %v4533 = vmax.f32 %v4461, 0.0
        %v4534 = vmax.f32 %v4375, 0.0
        %v4535 = vmax.f32 %v4464, 0.0
        %v4536 = vmax.f32 %v4377, 0.0
        %v4537 = vmax.f32 %v4466, 0.0
        %v4538 = vmax.f32 %v4380, 0.0
        %v4539 = vmax.f32 %v4469, 0.0
        %v4540 = vmax.f32 %v4382, 0.0
        %v4541 = vmax.f32 %v4471, 0.0
        %v4542 = vmax.f32 %v4385, 0.0
        %v4543 = vmax.f32 %v4474, 0.0
        %v4544 = vmax.f32 %v4387, 0.0
        %v4545 = vmax.f32 %v4476, 0.0
        %v4546 = vmax.f32 %v4390, 0.0
        %v4547 = vmax.f32 %v4479, 0.0
        %v4548 = vmax.f32 %v4392, 0.0
        %v4549 = vmax.f32 %v4481, 0.0
        %v4550 = vmax.f32 %v4395, 0.0
        %v4551 = vmax.f32 %v4484, 0.0
        %v4552 = vmax.f32 %v4397, 0.0
        %v4553 = vmax.f32 %v4486, 0.0
        %v4554 = vmax.f32 %v4400, 0.0
        %v4555 = vmax.f32 %v4489, 0.0
        %v4556 = vmax.f32 %v4402, 0.0
        %v4557 = vmax.f32 %v4491, 0.0
        %v4558 = vmax.f32 %v4405, 0.0
        %v4559 = vmax.f32 %v4494, 0.0
        %v4560 = vmax.f32 %v4407, 0.0
        %v4561 = vmax.f32 %v4496, 0.0
        %v4562 = vpack.c.bf16 %v4500, %v4498
        %v4563 = vpack.c.bf16 %v4501, %v4499
        %v4564 = vpack.c.bf16 %v4504, %v4502
        %v4565 = vpack.c.bf16 %v4505, %v4503
        %v4566 = vpack.c.bf16 %v4508, %v4506
        %v4567 = vpack.c.bf16 %v4509, %v4507
        %v4568 = vpack.c.bf16 %v4512, %v4510
        %v4569 = vpack.c.bf16 %v4513, %v4511
        %v4570 = vpack.c.bf16 %v4516, %v4514
        %v4571 = vpack.c.bf16 %v4517, %v4515
        %v4572 = vpack.c.bf16 %v4520, %v4518
        %v4573 = vpack.c.bf16 %v4521, %v4519
        %v4574 = vpack.c.bf16 %v4524, %v4522
        %v4575 = vpack.c.bf16 %v4525, %v4523
        %v4576 = vpack.c.bf16 %v4528, %v4526
        %v4577 = vpack.c.bf16 %v4529, %v4527
        %v4578 = vpack.c.bf16 %v4532, %v4530
        %v4579 = vpack.c.bf16 %v4533, %v4531
        %v4580 = vpack.c.bf16 %v4536, %v4534
        %v4581 = vpack.c.bf16 %v4537, %v4535
        %v4582 = vpack.c.bf16 %v4540, %v4538
        %v4583 = vpack.c.bf16 %v4541, %v4539
        %v4584 = vpack.c.bf16 %v4544, %v4542
        %v4585 = vpack.c.bf16 %v4545, %v4543
        %v4586 = vpack.c.bf16 %v4548, %v4546
        %v4587 = vpack.c.bf16 %v4549, %v4547
        %v4588 = vpack.c.bf16 %v4552, %v4550
        %v4589 = vpack.c.bf16 %v4553, %v4551
        %v4590 = vpack.c.bf16 %v4556, %v4554
        %v4591 = vpack.c.bf16 %v4557, %v4555
        %v4592 = vpack.c.bf16 %v4560, %v4558
        %v4593 = vpack.c.bf16 %v4561, %v4559
        %v4594 = vld [vmem:[#allocation20] sm:$0xff]
        %v4595 = vld [vmem:[#allocation20 + $0x8] sm:$0xff]
        %v4596 = vld [vmem:[#allocation20 + $0x10] sm:$0xff]
        %v4597 = vld [vmem:[#allocation20 + $0x18] sm:$0xff]
        %v4598 = vld [vmem:[#allocation20 + $0x20] sm:$0xff]
        %v4599 = vld [vmem:[#allocation20 + $0x28] sm:$0xff]
        %v4600 = vld [vmem:[#allocation20 + $0x30] sm:$0xff]
        %v4601 = vld [vmem:[#allocation20 + $0x38] sm:$0xff]
        %v4602 = vld [vmem:[#allocation20 + $0x40] sm:$0xff]
        %v4603 = vld [vmem:[#allocation20 + $0x48] sm:$0xff]
        %v4604 = vld [vmem:[#allocation20 + $0x50] sm:$0xff]
        %v4605 = vld [vmem:[#allocation20 + $0x58] sm:$0xff]
        %v4606 = vld [vmem:[#allocation20 + $0x60] sm:$0xff]
        %v4607 = vld [vmem:[#allocation20 + $0x68] sm:$0xff]
        %v4608 = vld [vmem:[#allocation20 + $0x70] sm:$0xff]
        %v4609 = vld [vmem:[#allocation20 + $0x78] sm:$0xff]
        %v4610 = vld [vmem:[#allocation20 + $0x80] sm:$0xff]
        %v4611 = vld [vmem:[#allocation20 + $0x88] sm:$0xff]
        %v4612 = vld [vmem:[#allocation20 + $0x90] sm:$0xff]
        %v4613 = vld [vmem:[#allocation20 + $0x98] sm:$0xff]
        %v4614 = vld [vmem:[#allocation20 + $0xa0] sm:$0xff]
        %v4615 = vld [vmem:[#allocation20 + $0xa8] sm:$0xff]
        %v4616 = vld [vmem:[#allocation20 + $0xb0] sm:$0xff]
        %v4617 = vld [vmem:[#allocation20 + $0xb8] sm:$0xff]
        %v4618 = vld [vmem:[#allocation20 + $0xc0] sm:$0xff]
        %v4619 = vld [vmem:[#allocation20 + $0xc8] sm:$0xff]
        %v4620 = vld [vmem:[#allocation20 + $0xd0] sm:$0xff]
        %v4621 = vld [vmem:[#allocation20 + $0xd8] sm:$0xff]
        %v4622 = vld [vmem:[#allocation20 + $0xe0] sm:$0xff]
        %v4623 = vld [vmem:[#allocation20 + $0xe8] sm:$0xff]
        %v4624 = vld [vmem:[#allocation20 + $0xf0] sm:$0xff]
        %v4625 = vld [vmem:[#allocation20 + $0xf8] sm:$0xff]
        %v4626 = vld [vmem:[#allocation20 + $0x100] sm:$0xff]
        %v4627 = vld [vmem:[#allocation20 + $0x108] sm:$0xff]
        %v4628 = vld [vmem:[#allocation20 + $0x110] sm:$0xff]
        %v4629 = vld [vmem:[#allocation20 + $0x118] sm:$0xff]
        %v4630 = vld [vmem:[#allocation20 + $0x120] sm:$0xff]
        %v4631 = vld [vmem:[#allocation20 + $0x128] sm:$0xff]
        %v4632 = vld [vmem:[#allocation20 + $0x130] sm:$0xff]
        %v4633 = vld [vmem:[#allocation20 + $0x138] sm:$0xff]
        %v4634 = vld [vmem:[#allocation20 + $0x140] sm:$0xff]
        %v4635 = vld [vmem:[#allocation20 + $0x148] sm:$0xff]
        %v4636 = vld [vmem:[#allocation20 + $0x150] sm:$0xff]
        %v4637 = vld [vmem:[#allocation20 + $0x158] sm:$0xff]
        %v4638 = vld [vmem:[#allocation20 + $0x160] sm:$0xff]
        %v4639 = vld [vmem:[#allocation20 + $0x168] sm:$0xff]
        %v4640 = vld [vmem:[#allocation20 + $0x170] sm:$0xff]
        %v4641 = vld [vmem:[#allocation20 + $0x178] sm:$0xff]
        %v4642 = vld [vmem:[#allocation20 + $0x180] sm:$0xff]
        %v4643 = vld [vmem:[#allocation20 + $0x188] sm:$0xff]
        %v4644 = vld [vmem:[#allocation20 + $0x190] sm:$0xff]
        %v4645 = vld [vmem:[#allocation20 + $0x198] sm:$0xff]
        %v4646 = vld [vmem:[#allocation20 + $0x1a0] sm:$0xff]
        %v4647 = vld [vmem:[#allocation20 + $0x1a8] sm:$0xff]
        %v4648 = vld [vmem:[#allocation20 + $0x1b0] sm:$0xff]
        %v4649 = vld [vmem:[#allocation20 + $0x1b8] sm:$0xff]
        %v4650 = vld [vmem:[#allocation20 + $0x1c0] sm:$0xff]
        %v4651 = vld [vmem:[#allocation20 + $0x1c8] sm:$0xff]
        %v4652 = vld [vmem:[#allocation20 + $0x1d0] sm:$0xff]
        %v4653 = vld [vmem:[#allocation20 + $0x1d8] sm:$0xff]
        %v4654 = vld [vmem:[#allocation20 + $0x1e0] sm:$0xff]
        %v4655 = vld [vmem:[#allocation20 + $0x1e8] sm:$0xff]
        %v4656 = vld [vmem:[#allocation20 + $0x1f0] sm:$0xff]
        %v4657 = vld [vmem:[#allocation20 + $0x1f8] sm:$0xff]
        %v4658 = vld [vmem:[%s14] sm:$0xf]
        %v4660 = vperm.slane %v4658, 0
        %v4661 = vperm.slane %v4658, 1
        %v4662 = vperm.slane %v4658, 2
        %v4663 = vperm.slane %v4658, 3
        %v4732 = vunpack.c.l.b16 %v4594
        %v4733 = vunpack.c.h.b16 %v4594
        %v4734 = vunpack.c.l.b16 %v4595
        %v4735 = vunpack.c.h.b16 %v4595
        %v4736 = vunpack.c.l.b16 %v4596
        %v4737 = vunpack.c.h.b16 %v4596
        %v4738 = vunpack.c.l.b16 %v4597
        %v4739 = vunpack.c.h.b16 %v4597
        %v4740 = vunpack.c.l.b16 %v4598
        %v4741 = vunpack.c.h.b16 %v4598
        %v4742 = vunpack.c.l.b16 %v4599
        %v4743 = vunpack.c.h.b16 %v4599
        %v4744 = vunpack.c.l.b16 %v4600
        %v4745 = vunpack.c.h.b16 %v4600
        %v4746 = vunpack.c.l.b16 %v4601
        %v4747 = vunpack.c.h.b16 %v4601
        %v4748 = vunpack.c.l.b16 %v4602
        %v4749 = vunpack.c.h.b16 %v4602
        %v4750 = vunpack.c.l.b16 %v4603
        %v4751 = vunpack.c.h.b16 %v4603
        %v4752 = vunpack.c.l.b16 %v4604
        %v4753 = vunpack.c.h.b16 %v4604
        %v4754 = vunpack.c.l.b16 %v4605
        %v4755 = vunpack.c.h.b16 %v4605
        %v4756 = vunpack.c.l.b16 %v4606
        %v4757 = vunpack.c.h.b16 %v4606
        %v4758 = vunpack.c.l.b16 %v4607
        %v4759 = vunpack.c.h.b16 %v4607
        %v4760 = vunpack.c.l.b16 %v4608
        %v4761 = vunpack.c.h.b16 %v4608
        %v4762 = vunpack.c.l.b16 %v4609
        %v4763 = vunpack.c.h.b16 %v4609
        %v4764 = vunpack.c.l.b16 %v4610
        %v4765 = vunpack.c.h.b16 %v4610
        %v4766 = vunpack.c.l.b16 %v4611
        %v4767 = vunpack.c.h.b16 %v4611
        %v4768 = vunpack.c.l.b16 %v4612
        %v4769 = vunpack.c.h.b16 %v4612
        %v4770 = vunpack.c.l.b16 %v4613
        %v4771 = vunpack.c.h.b16 %v4613
        %v4772 = vunpack.c.l.b16 %v4614
        %v4773 = vunpack.c.h.b16 %v4614
        %v4774 = vunpack.c.l.b16 %v4615
        %v4775 = vunpack.c.h.b16 %v4615
        %v4776 = vunpack.c.l.b16 %v4616
        %v4777 = vunpack.c.h.b16 %v4616
        %v4778 = vunpack.c.l.b16 %v4617
        %v4779 = vunpack.c.h.b16 %v4617
        %v4780 = vunpack.c.l.b16 %v4618
        %v4781 = vunpack.c.h.b16 %v4618
        %v4782 = vunpack.c.l.b16 %v4619
        %v4783 = vunpack.c.h.b16 %v4619
        %v4784 = vunpack.c.l.b16 %v4620
        %v4785 = vunpack.c.h.b16 %v4620
        %v4786 = vunpack.c.l.b16 %v4621
        %v4787 = vunpack.c.h.b16 %v4621
        %v4788 = vunpack.c.l.b16 %v4622
        %v4789 = vunpack.c.h.b16 %v4622
        %v4790 = vunpack.c.l.b16 %v4623
        %v4791 = vunpack.c.h.b16 %v4623
        %v4792 = vunpack.c.l.b16 %v4624
        %v4793 = vunpack.c.h.b16 %v4624
        %v4794 = vunpack.c.l.b16 %v4625
        %v4795 = vunpack.c.h.b16 %v4625
        %v4796 = vunpack.c.l.b16 %v4626
        %v4797 = vunpack.c.h.b16 %v4626
        %v4798 = vunpack.c.l.b16 %v4627
        %v4799 = vunpack.c.h.b16 %v4627
        %v4800 = vunpack.c.l.b16 %v4628
        %v4801 = vunpack.c.h.b16 %v4628
        %v4802 = vunpack.c.l.b16 %v4629
        %v4803 = vunpack.c.h.b16 %v4629
        %v4804 = vunpack.c.l.b16 %v4630
        %v4805 = vunpack.c.h.b16 %v4630
        %v4806 = vunpack.c.l.b16 %v4631
        %v4807 = vunpack.c.h.b16 %v4631
        %v4808 = vunpack.c.l.b16 %v4632
        %v4809 = vunpack.c.h.b16 %v4632
        %v4810 = vunpack.c.l.b16 %v4633
        %v4811 = vunpack.c.h.b16 %v4633
        %v4812 = vunpack.c.l.b16 %v4634
        %v4813 = vunpack.c.h.b16 %v4634
        %v4814 = vunpack.c.l.b16 %v4635
        %v4815 = vunpack.c.h.b16 %v4635
        %v4816 = vunpack.c.l.b16 %v4636
        %v4817 = vunpack.c.h.b16 %v4636
        %v4818 = vunpack.c.l.b16 %v4637
        %v4819 = vunpack.c.h.b16 %v4637
        %v4820 = vunpack.c.l.b16 %v4638
        %v4821 = vunpack.c.h.b16 %v4638
        %v4822 = vunpack.c.l.b16 %v4639
        %v4823 = vunpack.c.h.b16 %v4639
        %v4824 = vunpack.c.l.b16 %v4640
        %v4825 = vunpack.c.h.b16 %v4640
        %v4826 = vunpack.c.l.b16 %v4641
        %v4827 = vunpack.c.h.b16 %v4641
        %v4828 = vunpack.c.l.b16 %v4642
        %v4829 = vunpack.c.h.b16 %v4642
        %v4830 = vunpack.c.l.b16 %v4643
        %v4831 = vunpack.c.h.b16 %v4643
        %v4832 = vunpack.c.l.b16 %v4644
        %v4833 = vunpack.c.h.b16 %v4644
        %v4834 = vunpack.c.l.b16 %v4645
        %v4835 = vunpack.c.h.b16 %v4645
        %v4836 = vunpack.c.l.b16 %v4646
        %v4837 = vunpack.c.h.b16 %v4646
        %v4838 = vunpack.c.l.b16 %v4647
        %v4839 = vunpack.c.h.b16 %v4647
        %v4840 = vunpack.c.l.b16 %v4648
        %v4841 = vunpack.c.h.b16 %v4648
        %v4842 = vunpack.c.l.b16 %v4649
        %v4843 = vunpack.c.h.b16 %v4649
        %v4844 = vunpack.c.l.b16 %v4650
        %v4845 = vunpack.c.h.b16 %v4650
        %v4846 = vunpack.c.l.b16 %v4651
        %v4847 = vunpack.c.h.b16 %v4651
        %v4848 = vunpack.c.l.b16 %v4652
        %v4849 = vunpack.c.h.b16 %v4652
        %v4850 = vunpack.c.l.b16 %v4653
        %v4851 = vunpack.c.h.b16 %v4653
        %v4852 = vunpack.c.l.b16 %v4654
        %v4853 = vunpack.c.h.b16 %v4654
        %v4854 = vunpack.c.l.b16 %v4655
        %v4855 = vunpack.c.h.b16 %v4655
        %v4856 = vunpack.c.l.b16 %v4656
        %v4857 = vunpack.c.h.b16 %v4656
        %v4858 = vunpack.c.l.b16 %v4657
        %v4859 = vunpack.c.h.b16 %v4657
        %v4860 = vpack.c.b16 %v4736, %v4732
        %v4861 = vpack.c.b16 %v4737, %v4733
        %v4862 = vpack.c.b16 %v4738, %v4734
        %v4863 = vpack.c.b16 %v4739, %v4735
        %v4864 = vpack.c.b16 %v4744, %v4740
        %v4865 = vpack.c.b16 %v4745, %v4741
        %v4866 = vpack.c.b16 %v4746, %v4742
        %v4867 = vpack.c.b16 %v4747, %v4743
        %v4868 = vpack.c.b16 %v4752, %v4748
        %v4869 = vpack.c.b16 %v4753, %v4749
        %v4870 = vpack.c.b16 %v4754, %v4750
        %v4871 = vpack.c.b16 %v4755, %v4751
        %v4872 = vpack.c.b16 %v4760, %v4756
        %v4873 = vpack.c.b16 %v4761, %v4757
        %v4874 = vpack.c.b16 %v4762, %v4758
        %v4875 = vpack.c.b16 %v4763, %v4759
        %v4876 = vpack.c.b16 %v4768, %v4764
        %v4877 = vpack.c.b16 %v4769, %v4765
        %v4878 = vpack.c.b16 %v4770, %v4766
        %v4879 = vpack.c.b16 %v4771, %v4767
        %v4880 = vpack.c.b16 %v4776, %v4772
        %v4881 = vpack.c.b16 %v4777, %v4773
        %v4882 = vpack.c.b16 %v4778, %v4774
        %v4883 = vpack.c.b16 %v4779, %v4775
        %v4884 = vpack.c.b16 %v4784, %v4780
        %v4885 = vpack.c.b16 %v4785, %v4781
        %v4886 = vpack.c.b16 %v4786, %v4782
        %v4887 = vpack.c.b16 %v4787, %v4783
        %v4888 = vpack.c.b16 %v4792, %v4788
        %v4889 = vpack.c.b16 %v4793, %v4789
        %v4890 = vpack.c.b16 %v4794, %v4790
        %v4891 = vpack.c.b16 %v4795, %v4791
        %v4892 = vpack.c.b16 %v4800, %v4796
        %v4893 = vpack.c.b16 %v4801, %v4797
        %v4894 = vpack.c.b16 %v4802, %v4798
        %v4895 = vpack.c.b16 %v4803, %v4799
        %v4896 = vpack.c.b16 %v4808, %v4804
        %v4897 = vpack.c.b16 %v4809, %v4805
        %v4898 = vpack.c.b16 %v4810, %v4806
        %v4899 = vpack.c.b16 %v4811, %v4807
        %v4900 = vpack.c.b16 %v4816, %v4812
        %v4901 = vpack.c.b16 %v4817, %v4813
        %v4902 = vpack.c.b16 %v4818, %v4814
        %v4903 = vpack.c.b16 %v4819, %v4815
        %v4904 = vpack.c.b16 %v4824, %v4820
        %v4905 = vpack.c.b16 %v4825, %v4821
        %v4906 = vpack.c.b16 %v4826, %v4822
        %v4907 = vpack.c.b16 %v4827, %v4823
        %v4908 = vpack.c.b16 %v4832, %v4828
        %v4909 = vpack.c.b16 %v4833, %v4829
        %v4910 = vpack.c.b16 %v4834, %v4830
        %v4911 = vpack.c.b16 %v4835, %v4831
        %v4912 = vpack.c.b16 %v4840, %v4836
        %v4913 = vpack.c.b16 %v4841, %v4837
        %v4914 = vpack.c.b16 %v4842, %v4838
        %v4915 = vpack.c.b16 %v4843, %v4839
        %v4916 = vpack.c.b16 %v4848, %v4844
        %v4917 = vpack.c.b16 %v4849, %v4845
        %v4918 = vpack.c.b16 %v4850, %v4846
        %v4919 = vpack.c.b16 %v4851, %v4847
        %v4920 = vpack.c.b16 %v4856, %v4852
        %v4921 = vpack.c.b16 %v4857, %v4853
        %v4922 = vpack.c.b16 %v4858, %v4854
        %v4923 = vpack.c.b16 %v4859, %v4855
        %4988 = vmatpush.bf16.msra.mxu0 %v4888
        %4989 = vmatpush.bf16.msra.mxu0 %v4884
        %4990 = vmatpush.bf16.msra.mxu0 %v4880
        %4991 = vmatpush.bf16.msra.mxu0 %v4876
        %4992 = vmatpush.bf16.msra.mxu0 %v4872
        %4993 = vmatpush.bf16.msra.mxu0 %v4868
        %4994 = vmatpush.bf16.msra.mxu0 %v4864
        %4995 = vmatpush.bf16.msra.mxu0 %v4860
        %4996 = vmatmul.bf16.gmra.mxu0 %v4562
        %v4997 = vpop.f32.mrf.mxu0
        %v4998 = vadd.f32 %v4660, %v4997
        %v4999 = vpop.f32.mrf.mxu0
        %v5000 = vadd.f32 %v4660, %v4999
        %5001 = vmatmul.bf16.gmra.mxu0 %v4564
        %v5002 = vpop.f32.mrf.mxu0
        %v5003 = vadd.f32 %v4660, %v5002
        %v5004 = vpop.f32.mrf.mxu0
        %v5005 = vadd.f32 %v4660, %v5004
        %5006 = vmatmul.bf16.gmra.mxu0 %v4566
        %v5007 = vpop.f32.mrf.mxu0
        %v5008 = vadd.f32 %v4660, %v5007
        %v5009 = vpop.f32.mrf.mxu0
        %v5010 = vadd.f32 %v4660, %v5009
        %5011 = vmatmul.bf16.gmra.mxu0 %v4568
        %v5012 = vpop.f32.mrf.mxu0
        %v5013 = vadd.f32 %v4660, %v5012
        %v5014 = vpop.f32.mrf.mxu0
        %v5015 = vadd.f32 %v4660, %v5014
        %5016 = vmatmul.bf16.gmra.mxu0 %v4570
        %v5017 = vpop.f32.mrf.mxu0
        %v5018 = vadd.f32 %v4660, %v5017
        %v5019 = vpop.f32.mrf.mxu0
        %v5020 = vadd.f32 %v4660, %v5019
        %5021 = vmatmul.bf16.gmra.mxu0 %v4572
        %v5022 = vpop.f32.mrf.mxu0
        %v5023 = vadd.f32 %v4660, %v5022
        %v5024 = vpop.f32.mrf.mxu0
        %v5025 = vadd.f32 %v4660, %v5024
        %5026 = vmatmul.bf16.gmra.mxu0 %v4574
        %v5027 = vpop.f32.mrf.mxu0
        %v5028 = vadd.f32 %v4660, %v5027
        %v5029 = vpop.f32.mrf.mxu0
        %v5030 = vadd.f32 %v4660, %v5029
        %5031 = vmatmul.bf16.gmra.mxu0 %v4576
        %v5032 = vpop.f32.mrf.mxu0
        %v5033 = vadd.f32 %v4660, %v5032
        %v5034 = vpop.f32.mrf.mxu0
        %v5035 = vadd.f32 %v4660, %v5034
        %5036 = vmatmul.bf16.gmra.mxu0 %v4578
        %v5037 = vpop.f32.mrf.mxu0
        %v5038 = vadd.f32 %v4660, %v5037
        %v5039 = vpop.f32.mrf.mxu0
        %v5040 = vadd.f32 %v4660, %v5039
        %5041 = vmatmul.bf16.gmra.mxu0 %v4580
        %v5042 = vpop.f32.mrf.mxu0
        %v5043 = vadd.f32 %v4660, %v5042
        %v5044 = vpop.f32.mrf.mxu0
        %v5045 = vadd.f32 %v4660, %v5044
        %5046 = vmatmul.bf16.gmra.mxu0 %v4582
        %v5047 = vpop.f32.mrf.mxu0
        %v5048 = vadd.f32 %v4660, %v5047
        %v5049 = vpop.f32.mrf.mxu0
        %v5050 = vadd.f32 %v4660, %v5049
        %5051 = vmatmul.bf16.gmra.mxu0 %v4584
        %v5052 = vpop.f32.mrf.mxu0
        %v5053 = vadd.f32 %v4660, %v5052
        %v5054 = vpop.f32.mrf.mxu0
        %v5055 = vadd.f32 %v4660, %v5054
        %5056 = vmatmul.bf16.gmra.mxu0 %v4586
        %v5057 = vpop.f32.mrf.mxu0
        %v5058 = vadd.f32 %v4660, %v5057
        %v5059 = vpop.f32.mrf.mxu0
        %v5060 = vadd.f32 %v4660, %v5059
        %5061 = vmatmul.bf16.gmra.mxu0 %v4588
        %v5062 = vpop.f32.mrf.mxu0
        %v5063 = vadd.f32 %v4660, %v5062
        %v5064 = vpop.f32.mrf.mxu0
        %v5065 = vadd.f32 %v4660, %v5064
        %5066 = vmatmul.bf16.gmra.mxu0 %v4590
        %v5067 = vpop.f32.mrf.mxu0
        %v5068 = vadd.f32 %v4660, %v5067
        %v5069 = vpop.f32.mrf.mxu0
        %v5070 = vadd.f32 %v4660, %v5069
        %5071 = vmatmul.bf16.gmra.mxu0 %v4592
        %v5072 = vpop.f32.mrf.mxu0
        %v5073 = vadd.f32 %v4660, %v5072
        %v5074 = vpop.f32.mrf.mxu0
        %v5075 = vadd.f32 %v4660, %v5074
        %5076 = vdwg.mxu0
        %5077 = vmatpush.bf16.msra.mxu0 %v4920
        %5078 = vmatpush.bf16.msra.mxu0 %v4916
        %5079 = vmatpush.bf16.msra.mxu0 %v4912
        %5080 = vmatpush.bf16.msra.mxu0 %v4908
        %5081 = vmatpush.bf16.msra.mxu0 %v4904
        %5082 = vmatpush.bf16.msra.mxu0 %v4900
        %5083 = vmatpush.bf16.msra.mxu0 %v4896
        %5084 = vmatpush.bf16.msra.mxu0 %v4892
        %5085 = vmatmul.bf16.gmra.mxu0 %v4563
        %v5086 = vpop.f32.mrf.mxu0
        %v5087 = vadd.f32 %v4998, %v5086
        %v5088 = vpop.f32.mrf.mxu0
        %v5089 = vadd.f32 %v5000, %v5088
        %5090 = vmatmul.bf16.gmra.mxu0 %v4565
        %v5091 = vpop.f32.mrf.mxu0
        %v5092 = vadd.f32 %v5003, %v5091
        %v5093 = vpop.f32.mrf.mxu0
        %v5094 = vadd.f32 %v5005, %v5093
        %5095 = vmatmul.bf16.gmra.mxu0 %v4567
        %v5096 = vpop.f32.mrf.mxu0
        %v5097 = vadd.f32 %v5008, %v5096
        %v5098 = vpop.f32.mrf.mxu0
        %v5099 = vadd.f32 %v5010, %v5098
        %5100 = vmatmul.bf16.gmra.mxu0 %v4569
        %v5101 = vpop.f32.mrf.mxu0
        %v5102 = vadd.f32 %v5013, %v5101
        %v5103 = vpop.f32.mrf.mxu0
        %v5104 = vadd.f32 %v5015, %v5103
        %5105 = vmatmul.bf16.gmra.mxu0 %v4571
        %v5106 = vpop.f32.mrf.mxu0
        %v5107 = vadd.f32 %v5018, %v5106
        %v5108 = vpop.f32.mrf.mxu0
        %v5109 = vadd.f32 %v5020, %v5108
        %5110 = vmatmul.bf16.gmra.mxu0 %v4573
        %v5111 = vpop.f32.mrf.mxu0
        %v5112 = vadd.f32 %v5023, %v5111
        %v5113 = vpop.f32.mrf.mxu0
        %v5114 = vadd.f32 %v5025, %v5113
        %5115 = vmatmul.bf16.gmra.mxu0 %v4575
        %v5116 = vpop.f32.mrf.mxu0
        %v5117 = vadd.f32 %v5028, %v5116
        %v5118 = vpop.f32.mrf.mxu0
        %v5119 = vadd.f32 %v5030, %v5118
        %5120 = vmatmul.bf16.gmra.mxu0 %v4577
        %v5121 = vpop.f32.mrf.mxu0
        %v5122 = vadd.f32 %v5033, %v5121
        %v5123 = vpop.f32.mrf.mxu0
        %v5124 = vadd.f32 %v5035, %v5123
        %5125 = vmatmul.bf16.gmra.mxu0 %v4579
        %v5126 = vpop.f32.mrf.mxu0
        %v5127 = vadd.f32 %v5038, %v5126
        %v5128 = vpop.f32.mrf.mxu0
        %v5129 = vadd.f32 %v5040, %v5128
        %5130 = vmatmul.bf16.gmra.mxu0 %v4581
        %v5131 = vpop.f32.mrf.mxu0
        %v5132 = vadd.f32 %v5043, %v5131
        %v5133 = vpop.f32.mrf.mxu0
        %v5134 = vadd.f32 %v5045, %v5133
        %5135 = vmatmul.bf16.gmra.mxu0 %v4583
        %v5136 = vpop.f32.mrf.mxu0
        %v5137 = vadd.f32 %v5048, %v5136
        %v5138 = vpop.f32.mrf.mxu0
        %v5139 = vadd.f32 %v5050, %v5138
        %5140 = vmatmul.bf16.gmra.mxu0 %v4585
        %v5141 = vpop.f32.mrf.mxu0
        %v5142 = vadd.f32 %v5053, %v5141
        %v5143 = vpop.f32.mrf.mxu0
        %v5144 = vadd.f32 %v5055, %v5143
        %5145 = vmatmul.bf16.gmra.mxu0 %v4587
        %v5146 = vpop.f32.mrf.mxu0
        %v5147 = vadd.f32 %v5058, %v5146
        %v5148 = vpop.f32.mrf.mxu0
        %v5149 = vadd.f32 %v5060, %v5148
        %5150 = vmatmul.bf16.gmra.mxu0 %v4589
        %v5151 = vpop.f32.mrf.mxu0
        %v5152 = vadd.f32 %v5063, %v5151
        %v5153 = vpop.f32.mrf.mxu0
        %v5154 = vadd.f32 %v5065, %v5153
        %5155 = vmatmul.bf16.gmra.mxu0 %v4591
        %v5156 = vpop.f32.mrf.mxu0
        %v5157 = vadd.f32 %v5068, %v5156
        %v5158 = vpop.f32.mrf.mxu0
        %v5159 = vadd.f32 %v5070, %v5158
        %5160 = vmatmul.bf16.gmra.mxu0 %v4593
        %v5161 = vpop.f32.mrf.mxu0
        %v5162 = vadd.f32 %v5073, %v5161
        %v5163 = vpop.f32.mrf.mxu0
        %v5164 = vadd.f32 %v5075, %v5163
        %5165 = vdwg.mxu0
        %5166 = vmatpush.bf16.msra.mxu0 %v4889
        %5167 = vmatpush.bf16.msra.mxu0 %v4885
        %5168 = vmatpush.bf16.msra.mxu0 %v4881
        %5169 = vmatpush.bf16.msra.mxu0 %v4877
        %5170 = vmatpush.bf16.msra.mxu0 %v4873
        %5171 = vmatpush.bf16.msra.mxu0 %v4869
        %5172 = vmatpush.bf16.msra.mxu0 %v4865
        %5173 = vmatpush.bf16.msra.mxu0 %v4861
        %5174 = vmatmul.bf16.gmra.mxu0 %v4562
        %v5175 = vpop.f32.mrf.mxu0
        %v5176 = vadd.f32 %v4661, %v5175
        %v5177 = vpop.f32.mrf.mxu0
        %v5178 = vadd.f32 %v4661, %v5177
        %5179 = vmatmul.bf16.gmra.mxu0 %v4564
        %v5180 = vpop.f32.mrf.mxu0
        %v5181 = vadd.f32 %v4661, %v5180
        %v5182 = vpop.f32.mrf.mxu0
        %v5183 = vadd.f32 %v4661, %v5182
        %5184 = vmatmul.bf16.gmra.mxu0 %v4566
        %v5185 = vpop.f32.mrf.mxu0
        %v5186 = vadd.f32 %v4661, %v5185
        %v5187 = vpop.f32.mrf.mxu0
        %v5188 = vadd.f32 %v4661, %v5187
        %5189 = vmatmul.bf16.gmra.mxu0 %v4568
        %v5190 = vpop.f32.mrf.mxu0
        %v5191 = vadd.f32 %v4661, %v5190
        %v5192 = vpop.f32.mrf.mxu0
        %v5193 = vadd.f32 %v4661, %v5192
        %5194 = vmatmul.bf16.gmra.mxu0 %v4570
        %v5195 = vpop.f32.mrf.mxu0
        %v5196 = vadd.f32 %v4661, %v5195
        %v5197 = vpop.f32.mrf.mxu0
        %v5198 = vadd.f32 %v4661, %v5197
        %5199 = vmatmul.bf16.gmra.mxu0 %v4572
        %v5200 = vpop.f32.mrf.mxu0
        %v5201 = vadd.f32 %v4661, %v5200
        %v5202 = vpop.f32.mrf.mxu0
        %v5203 = vadd.f32 %v4661, %v5202
        %5204 = vmatmul.bf16.gmra.mxu0 %v4574
        %v5205 = vpop.f32.mrf.mxu0
        %v5206 = vadd.f32 %v4661, %v5205
        %v5207 = vpop.f32.mrf.mxu0
        %v5208 = vadd.f32 %v4661, %v5207
        %5209 = vmatmul.bf16.gmra.mxu0 %v4576
        %v5210 = vpop.f32.mrf.mxu0
        %v5211 = vadd.f32 %v4661, %v5210
        %v5212 = vpop.f32.mrf.mxu0
        %v5213 = vadd.f32 %v4661, %v5212
        %5214 = vmatmul.bf16.gmra.mxu0 %v4578
        %v5215 = vpop.f32.mrf.mxu0
        %v5216 = vadd.f32 %v4661, %v5215
        %v5217 = vpop.f32.mrf.mxu0
        %v5218 = vadd.f32 %v4661, %v5217
        %5219 = vmatmul.bf16.gmra.mxu0 %v4580
        %v5220 = vpop.f32.mrf.mxu0
        %v5221 = vadd.f32 %v4661, %v5220
        %v5222 = vpop.f32.mrf.mxu0
        %v5223 = vadd.f32 %v4661, %v5222
        %5224 = vmatmul.bf16.gmra.mxu0 %v4582
        %v5225 = vpop.f32.mrf.mxu0
        %v5226 = vadd.f32 %v4661, %v5225
        %v5227 = vpop.f32.mrf.mxu0
        %v5228 = vadd.f32 %v4661, %v5227
        %5229 = vmatmul.bf16.gmra.mxu0 %v4584
        %v5230 = vpop.f32.mrf.mxu0
        %v5231 = vadd.f32 %v4661, %v5230
        %v5232 = vpop.f32.mrf.mxu0
        %v5233 = vadd.f32 %v4661, %v5232
        %5234 = vmatmul.bf16.gmra.mxu0 %v4586
        %v5235 = vpop.f32.mrf.mxu0
        %v5236 = vadd.f32 %v4661, %v5235
        %v5237 = vpop.f32.mrf.mxu0
        %v5238 = vadd.f32 %v4661, %v5237
        %5239 = vmatmul.bf16.gmra.mxu0 %v4588
        %v5240 = vpop.f32.mrf.mxu0
        %v5241 = vadd.f32 %v4661, %v5240
        %v5242 = vpop.f32.mrf.mxu0
        %v5243 = vadd.f32 %v4661, %v5242
        %5244 = vmatmul.bf16.gmra.mxu0 %v4590
        %v5245 = vpop.f32.mrf.mxu0
        %v5246 = vadd.f32 %v4661, %v5245
        %v5247 = vpop.f32.mrf.mxu0
        %v5248 = vadd.f32 %v4661, %v5247
        %5249 = vmatmul.bf16.gmra.mxu0 %v4592
        %v5250 = vpop.f32.mrf.mxu0
        %v5251 = vadd.f32 %v4661, %v5250
        %v5252 = vpop.f32.mrf.mxu0
        %v5253 = vadd.f32 %v4661, %v5252
        %5254 = vdwg.mxu0
        %5255 = vmatpush.bf16.msra.mxu0 %v4921
        %5256 = vmatpush.bf16.msra.mxu0 %v4917
        %5257 = vmatpush.bf16.msra.mxu0 %v4913
        %5258 = vmatpush.bf16.msra.mxu0 %v4909
        %5259 = vmatpush.bf16.msra.mxu0 %v4905
        %5260 = vmatpush.bf16.msra.mxu0 %v4901
        %5261 = vmatpush.bf16.msra.mxu0 %v4897
        %5262 = vmatpush.bf16.msra.mxu0 %v4893
        %5263 = vmatmul.bf16.gmra.mxu0 %v4563
        %v5264 = vpop.f32.mrf.mxu0
        %v5265 = vadd.f32 %v5176, %v5264
        %v5266 = vpop.f32.mrf.mxu0
        %v5267 = vadd.f32 %v5178, %v5266
        %5268 = vmatmul.bf16.gmra.mxu0 %v4565
        %v5269 = vpop.f32.mrf.mxu0
        %v5270 = vadd.f32 %v5181, %v5269
        %v5271 = vpop.f32.mrf.mxu0
        %v5272 = vadd.f32 %v5183, %v5271
        %5273 = vmatmul.bf16.gmra.mxu0 %v4567
        %v5274 = vpop.f32.mrf.mxu0
        %v5275 = vadd.f32 %v5186, %v5274
        %v5276 = vpop.f32.mrf.mxu0
        %v5277 = vadd.f32 %v5188, %v5276
        %5278 = vmatmul.bf16.gmra.mxu0 %v4569
        %v5279 = vpop.f32.mrf.mxu0
        %v5280 = vadd.f32 %v5191, %v5279
        %v5281 = vpop.f32.mrf.mxu0
        %v5282 = vadd.f32 %v5193, %v5281
        %5283 = vmatmul.bf16.gmra.mxu0 %v4571
        %v5284 = vpop.f32.mrf.mxu0
        %v5285 = vadd.f32 %v5196, %v5284
        %v5286 = vpop.f32.mrf.mxu0
        %v5287 = vadd.f32 %v5198, %v5286
        %5288 = vmatmul.bf16.gmra.mxu0 %v4573
        %v5289 = vpop.f32.mrf.mxu0
        %v5290 = vadd.f32 %v5201, %v5289
        %v5291 = vpop.f32.mrf.mxu0
        %v5292 = vadd.f32 %v5203, %v5291
        %5293 = vmatmul.bf16.gmra.mxu0 %v4575
        %v5294 = vpop.f32.mrf.mxu0
        %v5295 = vadd.f32 %v5206, %v5294
        %v5296 = vpop.f32.mrf.mxu0
        %v5297 = vadd.f32 %v5208, %v5296
        %5298 = vmatmul.bf16.gmra.mxu0 %v4577
        %v5299 = vpop.f32.mrf.mxu0
        %v5300 = vadd.f32 %v5211, %v5299
        %v5301 = vpop.f32.mrf.mxu0
        %v5302 = vadd.f32 %v5213, %v5301
        %5303 = vmatmul.bf16.gmra.mxu0 %v4579
        %v5304 = vpop.f32.mrf.mxu0
        %v5305 = vadd.f32 %v5216, %v5304
        %v5306 = vpop.f32.mrf.mxu0
        %v5307 = vadd.f32 %v5218, %v5306
        %5308 = vmatmul.bf16.gmra.mxu0 %v4581
        %v5309 = vpop.f32.mrf.mxu0
        %v5310 = vadd.f32 %v5221, %v5309
        %v5311 = vpop.f32.mrf.mxu0
        %v5312 = vadd.f32 %v5223, %v5311
        %5313 = vmatmul.bf16.gmra.mxu0 %v4583
        %v5314 = vpop.f32.mrf.mxu0
        %v5315 = vadd.f32 %v5226, %v5314
        %v5316 = vpop.f32.mrf.mxu0
        %v5317 = vadd.f32 %v5228, %v5316
        %5318 = vmatmul.bf16.gmra.mxu0 %v4585
        %v5319 = vpop.f32.mrf.mxu0
        %v5320 = vadd.f32 %v5231, %v5319
        %v5321 = vpop.f32.mrf.mxu0
        %v5322 = vadd.f32 %v5233, %v5321
        %5323 = vmatmul.bf16.gmra.mxu0 %v4587
        %v5324 = vpop.f32.mrf.mxu0
        %v5325 = vadd.f32 %v5236, %v5324
        %v5326 = vpop.f32.mrf.mxu0
        %v5327 = vadd.f32 %v5238, %v5326
        %5328 = vmatmul.bf16.gmra.mxu0 %v4589
        %v5329 = vpop.f32.mrf.mxu0
        %v5330 = vadd.f32 %v5241, %v5329
        %v5331 = vpop.f32.mrf.mxu0
        %v5332 = vadd.f32 %v5243, %v5331
        %5333 = vmatmul.bf16.gmra.mxu0 %v4591
        %v5334 = vpop.f32.mrf.mxu0
        %v5335 = vadd.f32 %v5246, %v5334
        %v5336 = vpop.f32.mrf.mxu0
        %v5337 = vadd.f32 %v5248, %v5336
        %5338 = vmatmul.bf16.gmra.mxu0 %v4593
        %v5339 = vpop.f32.mrf.mxu0
        %v5340 = vadd.f32 %v5251, %v5339
        %v5341 = vpop.f32.mrf.mxu0
        %v5342 = vadd.f32 %v5253, %v5341
        %5343 = vdwg.mxu0
        %5344 = vmatpush.bf16.msra.mxu0 %v4890
        %5345 = vmatpush.bf16.msra.mxu0 %v4886
        %5346 = vmatpush.bf16.msra.mxu0 %v4882
        %5347 = vmatpush.bf16.msra.mxu0 %v4878
        %5348 = vmatpush.bf16.msra.mxu0 %v4874
        %5349 = vmatpush.bf16.msra.mxu0 %v4870
        %5350 = vmatpush.bf16.msra.mxu0 %v4866
        %5351 = vmatpush.bf16.msra.mxu0 %v4862
        %5352 = vmatmul.bf16.gmra.mxu0 %v4562
        %v5353 = vpop.f32.mrf.mxu0
        %v5354 = vadd.f32 %v4662, %v5353
        %v5355 = vpop.f32.mrf.mxu0
        %v5356 = vadd.f32 %v4662, %v5355
        %5357 = vmatmul.bf16.gmra.mxu0 %v4564
        %v5358 = vpop.f32.mrf.mxu0
        %v5359 = vadd.f32 %v4662, %v5358
        %v5360 = vpop.f32.mrf.mxu0
        %v5361 = vadd.f32 %v4662, %v5360
        %5362 = vmatmul.bf16.gmra.mxu0 %v4566
        %v5363 = vpop.f32.mrf.mxu0
        %v5364 = vadd.f32 %v4662, %v5363
        %v5365 = vpop.f32.mrf.mxu0
        %v5366 = vadd.f32 %v4662, %v5365
        %5367 = vmatmul.bf16.gmra.mxu0 %v4568
        %v5368 = vpop.f32.mrf.mxu0
        %v5369 = vadd.f32 %v4662, %v5368
        %v5370 = vpop.f32.mrf.mxu0
        %v5371 = vadd.f32 %v4662, %v5370
        %5372 = vmatmul.bf16.gmra.mxu0 %v4570
        %v5373 = vpop.f32.mrf.mxu0
        %v5374 = vadd.f32 %v4662, %v5373
        %v5375 = vpop.f32.mrf.mxu0
        %v5376 = vadd.f32 %v4662, %v5375
        %5377 = vmatmul.bf16.gmra.mxu0 %v4572
        %v5378 = vpop.f32.mrf.mxu0
        %v5379 = vadd.f32 %v4662, %v5378
        %v5380 = vpop.f32.mrf.mxu0
        %v5381 = vadd.f32 %v4662, %v5380
        %5382 = vmatmul.bf16.gmra.mxu0 %v4574
        %v5383 = vpop.f32.mrf.mxu0
        %v5384 = vadd.f32 %v4662, %v5383
        %v5385 = vpop.f32.mrf.mxu0
        %v5386 = vadd.f32 %v4662, %v5385
        %5387 = vmatmul.bf16.gmra.mxu0 %v4576
        %v5388 = vpop.f32.mrf.mxu0
        %v5389 = vadd.f32 %v4662, %v5388
        %v5390 = vpop.f32.mrf.mxu0
        %v5391 = vadd.f32 %v4662, %v5390
        %5392 = vmatmul.bf16.gmra.mxu0 %v4578
        %v5393 = vpop.f32.mrf.mxu0
        %v5394 = vadd.f32 %v4662, %v5393
        %v5395 = vpop.f32.mrf.mxu0
        %v5396 = vadd.f32 %v4662, %v5395
        %5397 = vmatmul.bf16.gmra.mxu0 %v4580
        %v5398 = vpop.f32.mrf.mxu0
        %v5399 = vadd.f32 %v4662, %v5398
        %v5400 = vpop.f32.mrf.mxu0
        %v5401 = vadd.f32 %v4662, %v5400
        %5402 = vmatmul.bf16.gmra.mxu0 %v4582
        %v5403 = vpop.f32.mrf.mxu0
        %v5404 = vadd.f32 %v4662, %v5403
        %v5405 = vpop.f32.mrf.mxu0
        %v5406 = vadd.f32 %v4662, %v5405
        %5407 = vmatmul.bf16.gmra.mxu0 %v4584
        %v5408 = vpop.f32.mrf.mxu0
        %v5409 = vadd.f32 %v4662, %v5408
        %v5410 = vpop.f32.mrf.mxu0
        %v5411 = vadd.f32 %v4662, %v5410
        %5412 = vmatmul.bf16.gmra.mxu0 %v4586
        %v5413 = vpop.f32.mrf.mxu0
        %v5414 = vadd.f32 %v4662, %v5413
        %v5415 = vpop.f32.mrf.mxu0
        %v5416 = vadd.f32 %v4662, %v5415
        %5417 = vmatmul.bf16.gmra.mxu0 %v4588
        %v5418 = vpop.f32.mrf.mxu0
        %v5419 = vadd.f32 %v4662, %v5418
        %v5420 = vpop.f32.mrf.mxu0
        %v5421 = vadd.f32 %v4662, %v5420
        %5422 = vmatmul.bf16.gmra.mxu0 %v4590
        %v5423 = vpop.f32.mrf.mxu0
        %v5424 = vadd.f32 %v4662, %v5423
        %v5425 = vpop.f32.mrf.mxu0
        %v5426 = vadd.f32 %v4662, %v5425
        %5427 = vmatmul.bf16.gmra.mxu0 %v4592
        %v5428 = vpop.f32.mrf.mxu0
        %v5429 = vadd.f32 %v4662, %v5428
        %v5430 = vpop.f32.mrf.mxu0
        %v5431 = vadd.f32 %v4662, %v5430
        %5432 = vdwg.mxu0
        %5433 = vmatpush.bf16.msra.mxu0 %v4922
        %5434 = vmatpush.bf16.msra.mxu0 %v4918
        %5435 = vmatpush.bf16.msra.mxu0 %v4914
        %5436 = vmatpush.bf16.msra.mxu0 %v4910
        %5437 = vmatpush.bf16.msra.mxu0 %v4906
        %5438 = vmatpush.bf16.msra.mxu0 %v4902
        %5439 = vmatpush.bf16.msra.mxu0 %v4898
        %5440 = vmatpush.bf16.msra.mxu0 %v4894
        %5441 = vmatmul.bf16.gmra.mxu0 %v4563
        %v5442 = vpop.f32.mrf.mxu0
        %v5443 = vadd.f32 %v5354, %v5442
        %v5444 = vpop.f32.mrf.mxu0
        %v5445 = vadd.f32 %v5356, %v5444
        %5446 = vmatmul.bf16.gmra.mxu0 %v4565
        %v5447 = vpop.f32.mrf.mxu0
        %v5448 = vadd.f32 %v5359, %v5447
        %v5449 = vpop.f32.mrf.mxu0
        %v5450 = vadd.f32 %v5361, %v5449
        %5451 = vmatmul.bf16.gmra.mxu0 %v4567
        %v5452 = vpop.f32.mrf.mxu0
        %v5453 = vadd.f32 %v5364, %v5452
        %v5454 = vpop.f32.mrf.mxu0
        %v5455 = vadd.f32 %v5366, %v5454
        %5456 = vmatmul.bf16.gmra.mxu0 %v4569
        %v5457 = vpop.f32.mrf.mxu0
        %v5458 = vadd.f32 %v5369, %v5457
        %v5459 = vpop.f32.mrf.mxu0
        %v5460 = vadd.f32 %v5371, %v5459
        %5461 = vmatmul.bf16.gmra.mxu0 %v4571
        %v5462 = vpop.f32.mrf.mxu0
        %v5463 = vadd.f32 %v5374, %v5462
        %v5464 = vpop.f32.mrf.mxu0
        %v5465 = vadd.f32 %v5376, %v5464
        %5466 = vmatmul.bf16.gmra.mxu0 %v4573
        %v5467 = vpop.f32.mrf.mxu0
        %v5468 = vadd.f32 %v5379, %v5467
        %v5469 = vpop.f32.mrf.mxu0
        %v5470 = vadd.f32 %v5381, %v5469
        %5471 = vmatmul.bf16.gmra.mxu0 %v4575
        %v5472 = vpop.f32.mrf.mxu0
        %v5473 = vadd.f32 %v5384, %v5472
        %v5474 = vpop.f32.mrf.mxu0
        %v5475 = vadd.f32 %v5386, %v5474
        %5476 = vmatmul.bf16.gmra.mxu0 %v4577
        %v5477 = vpop.f32.mrf.mxu0
        %v5478 = vadd.f32 %v5389, %v5477
        %v5479 = vpop.f32.mrf.mxu0
        %v5480 = vadd.f32 %v5391, %v5479
        %5481 = vmatmul.bf16.gmra.mxu0 %v4579
        %v5482 = vpop.f32.mrf.mxu0
        %v5483 = vadd.f32 %v5394, %v5482
        %v5484 = vpop.f32.mrf.mxu0
        %v5485 = vadd.f32 %v5396, %v5484
        %5486 = vmatmul.bf16.gmra.mxu0 %v4581
        %v5487 = vpop.f32.mrf.mxu0
        %v5488 = vadd.f32 %v5399, %v5487
        %v5489 = vpop.f32.mrf.mxu0
        %v5490 = vadd.f32 %v5401, %v5489
        %5491 = vmatmul.bf16.gmra.mxu0 %v4583
        %v5492 = vpop.f32.mrf.mxu0
        %v5493 = vadd.f32 %v5404, %v5492
        %v5494 = vpop.f32.mrf.mxu0
        %v5495 = vadd.f32 %v5406, %v5494
        %5496 = vmatmul.bf16.gmra.mxu0 %v4585
        %v5497 = vpop.f32.mrf.mxu0
        %v5498 = vadd.f32 %v5409, %v5497
        %v5499 = vpop.f32.mrf.mxu0
        %v5500 = vadd.f32 %v5411, %v5499
        %5501 = vmatmul.bf16.gmra.mxu0 %v4587
        %v5502 = vpop.f32.mrf.mxu0
        %v5503 = vadd.f32 %v5414, %v5502
        %v5504 = vpop.f32.mrf.mxu0
        %v5505 = vadd.f32 %v5416, %v5504
        %5506 = vmatmul.bf16.gmra.mxu0 %v4589
        %v5507 = vpop.f32.mrf.mxu0
        %v5508 = vadd.f32 %v5419, %v5507
        %v5509 = vpop.f32.mrf.mxu0
        %v5510 = vadd.f32 %v5421, %v5509
        %5511 = vmatmul.bf16.gmra.mxu0 %v4591
        %v5512 = vpop.f32.mrf.mxu0
        %v5513 = vadd.f32 %v5424, %v5512
        %v5514 = vpop.f32.mrf.mxu0
        %v5515 = vadd.f32 %v5426, %v5514
        %5516 = vmatmul.bf16.gmra.mxu0 %v4593
        %v5517 = vpop.f32.mrf.mxu0
        %v5518 = vadd.f32 %v5429, %v5517
        %v5519 = vpop.f32.mrf.mxu0
        %v5520 = vadd.f32 %v5431, %v5519
        %5521 = vdwg.mxu0
        %5522 = vmatpush.bf16.msra.mxu0 %v4891
        %5523 = vmatpush.bf16.msra.mxu0 %v4887
        %5524 = vmatpush.bf16.msra.mxu0 %v4883
        %5525 = vmatpush.bf16.msra.mxu0 %v4879
        %5526 = vmatpush.bf16.msra.mxu0 %v4875
        %5527 = vmatpush.bf16.msra.mxu0 %v4871
        %5528 = vmatpush.bf16.msra.mxu0 %v4867
        %5529 = vmatpush.bf16.msra.mxu0 %v4863
        %5530 = vmatmul.bf16.gmra.mxu0 %v4562
        %v5531 = vpop.f32.mrf.mxu0
        %v5532 = vadd.f32 %v4663, %v5531
        %v5533 = vpop.f32.mrf.mxu0
        %v5534 = vadd.f32 %v4663, %v5533
        %5535 = vmatmul.bf16.gmra.mxu0 %v4564
        %v5536 = vpop.f32.mrf.mxu0
        %v5537 = vadd.f32 %v4663, %v5536
        %v5538 = vpop.f32.mrf.mxu0
        %v5539 = vadd.f32 %v4663, %v5538
        %5540 = vmatmul.bf16.gmra.mxu0 %v4566
        %v5541 = vpop.f32.mrf.mxu0
        %v5542 = vadd.f32 %v4663, %v5541
        %v5543 = vpop.f32.mrf.mxu0
        %v5544 = vadd.f32 %v4663, %v5543
        %5545 = vmatmul.bf16.gmra.mxu0 %v4568
        %v5546 = vpop.f32.mrf.mxu0
        %v5547 = vadd.f32 %v4663, %v5546
        %v5548 = vpop.f32.mrf.mxu0
        %v5549 = vadd.f32 %v4663, %v5548
        %5550 = vmatmul.bf16.gmra.mxu0 %v4570
        %v5551 = vpop.f32.mrf.mxu0
        %v5552 = vadd.f32 %v4663, %v5551
        %v5553 = vpop.f32.mrf.mxu0
        %v5554 = vadd.f32 %v4663, %v5553
        %5555 = vmatmul.bf16.gmra.mxu0 %v4572
        %v5556 = vpop.f32.mrf.mxu0
        %v5557 = vadd.f32 %v4663, %v5556
        %v5558 = vpop.f32.mrf.mxu0
        %v5559 = vadd.f32 %v4663, %v5558
        %5560 = vmatmul.bf16.gmra.mxu0 %v4574
        %v5561 = vpop.f32.mrf.mxu0
        %v5562 = vadd.f32 %v4663, %v5561
        %v5563 = vpop.f32.mrf.mxu0
        %v5564 = vadd.f32 %v4663, %v5563
        %5565 = vmatmul.bf16.gmra.mxu0 %v4576
        %v5566 = vpop.f32.mrf.mxu0
        %v5567 = vadd.f32 %v4663, %v5566
        %v5568 = vpop.f32.mrf.mxu0
        %v5569 = vadd.f32 %v4663, %v5568
        %5570 = vmatmul.bf16.gmra.mxu0 %v4578
        %v5571 = vpop.f32.mrf.mxu0
        %v5572 = vadd.f32 %v4663, %v5571
        %v5573 = vpop.f32.mrf.mxu0
        %v5574 = vadd.f32 %v4663, %v5573
        %5575 = vmatmul.bf16.gmra.mxu0 %v4580
        %v5576 = vpop.f32.mrf.mxu0
        %v5577 = vadd.f32 %v4663, %v5576
        %v5578 = vpop.f32.mrf.mxu0
        %v5579 = vadd.f32 %v4663, %v5578
        %5580 = vmatmul.bf16.gmra.mxu0 %v4582
        %v5581 = vpop.f32.mrf.mxu0
        %v5582 = vadd.f32 %v4663, %v5581
        %v5583 = vpop.f32.mrf.mxu0
        %v5584 = vadd.f32 %v4663, %v5583
        %5585 = vmatmul.bf16.gmra.mxu0 %v4584
        %v5586 = vpop.f32.mrf.mxu0
        %v5587 = vadd.f32 %v4663, %v5586
        %v5588 = vpop.f32.mrf.mxu0
        %v5589 = vadd.f32 %v4663, %v5588
        %5590 = vmatmul.bf16.gmra.mxu0 %v4586
        %v5591 = vpop.f32.mrf.mxu0
        %v5592 = vadd.f32 %v4663, %v5591
        %v5593 = vpop.f32.mrf.mxu0
        %v5594 = vadd.f32 %v4663, %v5593
        %5595 = vmatmul.bf16.gmra.mxu0 %v4588
        %v5596 = vpop.f32.mrf.mxu0
        %v5597 = vadd.f32 %v4663, %v5596
        %v5598 = vpop.f32.mrf.mxu0
        %v5599 = vadd.f32 %v4663, %v5598
        %5600 = vmatmul.bf16.gmra.mxu0 %v4590
        %v5601 = vpop.f32.mrf.mxu0
        %v5602 = vadd.f32 %v4663, %v5601
        %v5603 = vpop.f32.mrf.mxu0
        %v5604 = vadd.f32 %v4663, %v5603
        %5605 = vmatmul.bf16.gmra.mxu0 %v4592
        %v5606 = vpop.f32.mrf.mxu0
        %v5607 = vadd.f32 %v4663, %v5606
        %v5608 = vpop.f32.mrf.mxu0
        %v5609 = vadd.f32 %v4663, %v5608
        %5610 = vdwg.mxu0
        %5611 = vmatpush.bf16.msra.mxu0 %v4923
        %5612 = vmatpush.bf16.msra.mxu0 %v4919
        %5613 = vmatpush.bf16.msra.mxu0 %v4915
        %5614 = vmatpush.bf16.msra.mxu0 %v4911
        %5615 = vmatpush.bf16.msra.mxu0 %v4907
        %5616 = vmatpush.bf16.msra.mxu0 %v4903
        %5617 = vmatpush.bf16.msra.mxu0 %v4899
        %5618 = vmatpush.bf16.msra.mxu0 %v4895
        %5619 = vmatmul.bf16.gmra.mxu0 %v4563
        %v5620 = vpop.f32.mrf.mxu0
        %v5621 = vadd.f32 %v5532, %v5620
        %v5622 = vpop.f32.mrf.mxu0
        %v5623 = vadd.f32 %v5534, %v5622
        %5624 = vmatmul.bf16.gmra.mxu0 %v4565
        %v5625 = vpop.f32.mrf.mxu0
        %v5626 = vadd.f32 %v5537, %v5625
        %v5627 = vpop.f32.mrf.mxu0
        %v5628 = vadd.f32 %v5539, %v5627
        %5629 = vmatmul.bf16.gmra.mxu0 %v4567
        %v5630 = vpop.f32.mrf.mxu0
        %v5631 = vadd.f32 %v5542, %v5630
        %v5632 = vpop.f32.mrf.mxu0
        %v5633 = vadd.f32 %v5544, %v5632
        %5634 = vmatmul.bf16.gmra.mxu0 %v4569
        %v5635 = vpop.f32.mrf.mxu0
        %v5636 = vadd.f32 %v5547, %v5635
        %v5637 = vpop.f32.mrf.mxu0
        %v5638 = vadd.f32 %v5549, %v5637
        %5639 = vmatmul.bf16.gmra.mxu0 %v4571
        %v5640 = vpop.f32.mrf.mxu0
        %v5641 = vadd.f32 %v5552, %v5640
        %v5642 = vpop.f32.mrf.mxu0
        %v5643 = vadd.f32 %v5554, %v5642
        %5644 = vmatmul.bf16.gmra.mxu0 %v4573
        %v5645 = vpop.f32.mrf.mxu0
        %v5646 = vadd.f32 %v5557, %v5645
        %v5647 = vpop.f32.mrf.mxu0
        %v5648 = vadd.f32 %v5559, %v5647
        %5649 = vmatmul.bf16.gmra.mxu0 %v4575
        %v5650 = vpop.f32.mrf.mxu0
        %v5651 = vadd.f32 %v5562, %v5650
        %v5652 = vpop.f32.mrf.mxu0
        %v5653 = vadd.f32 %v5564, %v5652
        %5654 = vmatmul.bf16.gmra.mxu0 %v4577
        %v5655 = vpop.f32.mrf.mxu0
        %v5656 = vadd.f32 %v5567, %v5655
        %v5657 = vpop.f32.mrf.mxu0
        %v5658 = vadd.f32 %v5569, %v5657
        %5659 = vmatmul.bf16.gmra.mxu0 %v4579
        %v5660 = vpop.f32.mrf.mxu0
        %v5661 = vadd.f32 %v5572, %v5660
        %v5662 = vpop.f32.mrf.mxu0
        %v5663 = vadd.f32 %v5574, %v5662
        %5664 = vmatmul.bf16.gmra.mxu0 %v4581
        %v5665 = vpop.f32.mrf.mxu0
        %v5666 = vadd.f32 %v5577, %v5665
        %v5667 = vpop.f32.mrf.mxu0
        %v5668 = vadd.f32 %v5579, %v5667
        %5669 = vmatmul.bf16.gmra.mxu0 %v4583
        %v5670 = vpop.f32.mrf.mxu0
        %v5671 = vadd.f32 %v5582, %v5670
        %v5672 = vpop.f32.mrf.mxu0
        %v5673 = vadd.f32 %v5584, %v5672
        %5674 = vmatmul.bf16.gmra.mxu0 %v4585
        %v5675 = vpop.f32.mrf.mxu0
        %v5676 = vadd.f32 %v5587, %v5675
        %v5677 = vpop.f32.mrf.mxu0
        %v5678 = vadd.f32 %v5589, %v5677
        %5679 = vmatmul.bf16.gmra.mxu0 %v4587
        %v5680 = vpop.f32.mrf.mxu0
        %v5681 = vadd.f32 %v5592, %v5680
        %v5682 = vpop.f32.mrf.mxu0
        %v5683 = vadd.f32 %v5594, %v5682
        %5684 = vmatmul.bf16.gmra.mxu0 %v4589
        %v5685 = vpop.f32.mrf.mxu0
        %v5686 = vadd.f32 %v5597, %v5685
        %v5687 = vpop.f32.mrf.mxu0
        %v5688 = vadd.f32 %v5599, %v5687
        %5689 = vmatmul.bf16.gmra.mxu0 %v4591
        %v5690 = vpop.f32.mrf.mxu0
        %v5691 = vadd.f32 %v5602, %v5690
        %v5692 = vpop.f32.mrf.mxu0
        %v5693 = vadd.f32 %v5604, %v5692
        %5694 = vmatmul.bf16.gmra.mxu0 %v4593
        %v5695 = vpop.f32.mrf.mxu0
        %v5696 = vadd.f32 %v5607, %v5695
        %v5697 = vpop.f32.mrf.mxu0
        %v5698 = vadd.f32 %v5609, %v5697
        %5699 = vdwg.mxu0
        %v5700 = vmax.f32 %v5087, 0.0
        %v5701 = vmax.f32 %v5265, 0.0
        %v5702 = vmax.f32 %v5443, 0.0
        %v5703 = vmax.f32 %v5621, 0.0
        %v5704 = vmax.f32 %v5089, 0.0
        %v5705 = vmax.f32 %v5267, 0.0
        %v5706 = vmax.f32 %v5445, 0.0
        %v5707 = vmax.f32 %v5623, 0.0
        %v5708 = vmax.f32 %v5092, 0.0
        %v5709 = vmax.f32 %v5270, 0.0
        %v5710 = vmax.f32 %v5448, 0.0
        %v5711 = vmax.f32 %v5626, 0.0
        %v5712 = vmax.f32 %v5094, 0.0
        %v5713 = vmax.f32 %v5272, 0.0
        %v5714 = vmax.f32 %v5450, 0.0
        %v5715 = vmax.f32 %v5628, 0.0
        %v5716 = vmax.f32 %v5097, 0.0
        %v5717 = vmax.f32 %v5275, 0.0
        %v5718 = vmax.f32 %v5453, 0.0
        %v5719 = vmax.f32 %v5631, 0.0
        %v5720 = vmax.f32 %v5099, 0.0
        %v5721 = vmax.f32 %v5277, 0.0
        %v5722 = vmax.f32 %v5455, 0.0
        %v5723 = vmax.f32 %v5633, 0.0
        %v5724 = vmax.f32 %v5102, 0.0
        %v5725 = vmax.f32 %v5280, 0.0
        %v5726 = vmax.f32 %v5458, 0.0
        %v5727 = vmax.f32 %v5636, 0.0
        %v5728 = vmax.f32 %v5104, 0.0
        %v5729 = vmax.f32 %v5282, 0.0
        %v5730 = vmax.f32 %v5460, 0.0
        %v5731 = vmax.f32 %v5638, 0.0
        %v5732 = vmax.f32 %v5107, 0.0
        %v5733 = vmax.f32 %v5285, 0.0
        %v5734 = vmax.f32 %v5463, 0.0
        %v5735 = vmax.f32 %v5641, 0.0
        %v5736 = vmax.f32 %v5109, 0.0
        %v5737 = vmax.f32 %v5287, 0.0
        %v5738 = vmax.f32 %v5465, 0.0
        %v5739 = vmax.f32 %v5643, 0.0
        %v5740 = vmax.f32 %v5112, 0.0
        %v5741 = vmax.f32 %v5290, 0.0
        %v5742 = vmax.f32 %v5468, 0.0
        %v5743 = vmax.f32 %v5646, 0.0
        %v5744 = vmax.f32 %v5114, 0.0
        %v5745 = vmax.f32 %v5292, 0.0
        %v5746 = vmax.f32 %v5470, 0.0
        %v5747 = vmax.f32 %v5648, 0.0
        %v5748 = vmax.f32 %v5117, 0.0
        %v5749 = vmax.f32 %v5295, 0.0
        %v5750 = vmax.f32 %v5473, 0.0
        %v5751 = vmax.f32 %v5651, 0.0
        %v5752 = vmax.f32 %v5119, 0.0
        %v5753 = vmax.f32 %v5297, 0.0
        %v5754 = vmax.f32 %v5475, 0.0
        %v5755 = vmax.f32 %v5653, 0.0
        %v5756 = vmax.f32 %v5122, 0.0
        %v5757 = vmax.f32 %v5300, 0.0
        %v5758 = vmax.f32 %v5478, 0.0
        %v5759 = vmax.f32 %v5656, 0.0
        %v5760 = vmax.f32 %v5124, 0.0
        %v5761 = vmax.f32 %v5302, 0.0
        %v5762 = vmax.f32 %v5480, 0.0
        %v5763 = vmax.f32 %v5658, 0.0
        %v5764 = vmax.f32 %v5127, 0.0
        %v5765 = vmax.f32 %v5305, 0.0
        %v5766 = vmax.f32 %v5483, 0.0
        %v5767 = vmax.f32 %v5661, 0.0
        %v5768 = vmax.f32 %v5129, 0.0
        %v5769 = vmax.f32 %v5307, 0.0
        %v5770 = vmax.f32 %v5485, 0.0
        %v5771 = vmax.f32 %v5663, 0.0
        %v5772 = vmax.f32 %v5132, 0.0
        %v5773 = vmax.f32 %v5310, 0.0
        %v5774 = vmax.f32 %v5488, 0.0
        %v5775 = vmax.f32 %v5666, 0.0
        %v5776 = vmax.f32 %v5134, 0.0
        %v5777 = vmax.f32 %v5312, 0.0
        %v5778 = vmax.f32 %v5490, 0.0
        %v5779 = vmax.f32 %v5668, 0.0
        %v5780 = vmax.f32 %v5137, 0.0
        %v5781 = vmax.f32 %v5315, 0.0
        %v5782 = vmax.f32 %v5493, 0.0
        %v5783 = vmax.f32 %v5671, 0.0
        %v5784 = vmax.f32 %v5139, 0.0
        %v5785 = vmax.f32 %v5317, 0.0
        %v5786 = vmax.f32 %v5495, 0.0
        %v5787 = vmax.f32 %v5673, 0.0
        %v5788 = vmax.f32 %v5142, 0.0
        %v5789 = vmax.f32 %v5320, 0.0
        %v5790 = vmax.f32 %v5498, 0.0
        %v5791 = vmax.f32 %v5676, 0.0
        %v5792 = vmax.f32 %v5144, 0.0
        %v5793 = vmax.f32 %v5322, 0.0
        %v5794 = vmax.f32 %v5500, 0.0
        %v5795 = vmax.f32 %v5678, 0.0
        %v5796 = vmax.f32 %v5147, 0.0
        %v5797 = vmax.f32 %v5325, 0.0
        %v5798 = vmax.f32 %v5503, 0.0
        %v5799 = vmax.f32 %v5681, 0.0
        %v5800 = vmax.f32 %v5149, 0.0
        %v5801 = vmax.f32 %v5327, 0.0
        %v5802 = vmax.f32 %v5505, 0.0
        %v5803 = vmax.f32 %v5683, 0.0
        %v5804 = vmax.f32 %v5152, 0.0
        %v5805 = vmax.f32 %v5330, 0.0
        %v5806 = vmax.f32 %v5508, 0.0
        %v5807 = vmax.f32 %v5686, 0.0
        %v5808 = vmax.f32 %v5154, 0.0
        %v5809 = vmax.f32 %v5332, 0.0
        %v5810 = vmax.f32 %v5510, 0.0
        %v5811 = vmax.f32 %v5688, 0.0
        %v5812 = vmax.f32 %v5157, 0.0
        %v5813 = vmax.f32 %v5335, 0.0
        %v5814 = vmax.f32 %v5513, 0.0
        %v5815 = vmax.f32 %v5691, 0.0
        %v5816 = vmax.f32 %v5159, 0.0
        %v5817 = vmax.f32 %v5337, 0.0
        %v5818 = vmax.f32 %v5515, 0.0
        %v5819 = vmax.f32 %v5693, 0.0
        %v5820 = vmax.f32 %v5162, 0.0
        %v5821 = vmax.f32 %v5340, 0.0
        %v5822 = vmax.f32 %v5518, 0.0
        %v5823 = vmax.f32 %v5696, 0.0
        %v5824 = vmax.f32 %v5164, 0.0
        %v5825 = vmax.f32 %v5342, 0.0
        %v5826 = vmax.f32 %v5520, 0.0
        %v5827 = vmax.f32 %v5698, 0.0
        %v5828 = vpack.c.bf16 %v5704, %v5700
        %v5829 = vpack.c.bf16 %v5705, %v5701
        %v5830 = vpack.c.bf16 %v5706, %v5702
        %v5831 = vpack.c.bf16 %v5707, %v5703
        %v5832 = vpack.c.bf16 %v5712, %v5708
        %v5833 = vpack.c.bf16 %v5713, %v5709
        %v5834 = vpack.c.bf16 %v5714, %v5710
        %v5835 = vpack.c.bf16 %v5715, %v5711
        %v5836 = vpack.c.bf16 %v5720, %v5716
        %v5837 = vpack.c.bf16 %v5721, %v5717
        %v5838 = vpack.c.bf16 %v5722, %v5718
        %v5839 = vpack.c.bf16 %v5723, %v5719
        %v5840 = vpack.c.bf16 %v5728, %v5724
        %v5841 = vpack.c.bf16 %v5729, %v5725
        %v5842 = vpack.c.bf16 %v5730, %v5726
        %v5843 = vpack.c.bf16 %v5731, %v5727
        %v5844 = vpack.c.bf16 %v5736, %v5732
        %v5845 = vpack.c.bf16 %v5737, %v5733
        %v5846 = vpack.c.bf16 %v5738, %v5734
        %v5847 = vpack.c.bf16 %v5739, %v5735
        %v5848 = vpack.c.bf16 %v5744, %v5740
        %v5849 = vpack.c.bf16 %v5745, %v5741
        %v5850 = vpack.c.bf16 %v5746, %v5742
        %v5851 = vpack.c.bf16 %v5747, %v5743
        %v5852 = vpack.c.bf16 %v5752, %v5748
        %v5853 = vpack.c.bf16 %v5753, %v5749
        %v5854 = vpack.c.bf16 %v5754, %v5750
        %v5855 = vpack.c.bf16 %v5755, %v5751
        %v5856 = vpack.c.bf16 %v5760, %v5756
        %v5857 = vpack.c.bf16 %v5761, %v5757
        %v5858 = vpack.c.bf16 %v5762, %v5758
        %v5859 = vpack.c.bf16 %v5763, %v5759
        %v5860 = vpack.c.bf16 %v5768, %v5764
        %v5861 = vpack.c.bf16 %v5769, %v5765
        %v5862 = vpack.c.bf16 %v5770, %v5766
        %v5863 = vpack.c.bf16 %v5771, %v5767
        %v5864 = vpack.c.bf16 %v5776, %v5772
        %v5865 = vpack.c.bf16 %v5777, %v5773
        %v5866 = vpack.c.bf16 %v5778, %v5774
        %v5867 = vpack.c.bf16 %v5779, %v5775
        %v5868 = vpack.c.bf16 %v5784, %v5780
        %v5869 = vpack.c.bf16 %v5785, %v5781
        %v5870 = vpack.c.bf16 %v5786, %v5782
        %v5871 = vpack.c.bf16 %v5787, %v5783
        %v5872 = vpack.c.bf16 %v5792, %v5788
        %v5873 = vpack.c.bf16 %v5793, %v5789
        %v5874 = vpack.c.bf16 %v5794, %v5790
        %v5875 = vpack.c.bf16 %v5795, %v5791
        %v5876 = vpack.c.bf16 %v5800, %v5796
        %v5877 = vpack.c.bf16 %v5801, %v5797
        %v5878 = vpack.c.bf16 %v5802, %v5798
        %v5879 = vpack.c.bf16 %v5803, %v5799
        %v5880 = vpack.c.bf16 %v5808, %v5804
        %v5881 = vpack.c.bf16 %v5809, %v5805
        %v5882 = vpack.c.bf16 %v5810, %v5806
        %v5883 = vpack.c.bf16 %v5811, %v5807
        %v5884 = vpack.c.bf16 %v5816, %v5812
        %v5885 = vpack.c.bf16 %v5817, %v5813
        %v5886 = vpack.c.bf16 %v5818, %v5814
        %v5887 = vpack.c.bf16 %v5819, %v5815
        %v5888 = vpack.c.bf16 %v5824, %v5820
        %v5889 = vpack.c.bf16 %v5825, %v5821
        %v5890 = vpack.c.bf16 %v5826, %v5822
        %v5891 = vpack.c.bf16 %v5827, %v5823
        %v5892 = vld [vmem:[#allocation22] sm:$0xff]
        %v5893 = vld [vmem:[#allocation22 + $0x8] sm:$0xff]
        %v5894 = vld [vmem:[#allocation22 + $0x10] sm:$0xff]
        %v5895 = vld [vmem:[#allocation22 + $0x18] sm:$0xff]
        %v5896 = vld [vmem:[#allocation22 + $0x20] sm:$0xff]
        %v5897 = vld [vmem:[#allocation22 + $0x28] sm:$0xff]
        %v5898 = vld [vmem:[#allocation22 + $0x30] sm:$0xff]
        %v5899 = vld [vmem:[#allocation22 + $0x38] sm:$0xff]
        %v5900 = vld [vmem:[#allocation22 + $0x40] sm:$0xff]
        %v5901 = vld [vmem:[#allocation22 + $0x48] sm:$0xff]
        %v5902 = vld [vmem:[#allocation22 + $0x50] sm:$0xff]
        %v5903 = vld [vmem:[#allocation22 + $0x58] sm:$0xff]
        %v5904 = vld [vmem:[#allocation22 + $0x60] sm:$0xff]
        %v5905 = vld [vmem:[#allocation22 + $0x68] sm:$0xff]
        %v5906 = vld [vmem:[#allocation22 + $0x70] sm:$0xff]
        %v5907 = vld [vmem:[#allocation22 + $0x78] sm:$0xff]
        %v5908 = vld [vmem:[#allocation22 + $0x80] sm:$0xff]
        %v5909 = vld [vmem:[#allocation22 + $0x88] sm:$0xff]
        %v5910 = vld [vmem:[#allocation22 + $0x90] sm:$0xff]
        %v5911 = vld [vmem:[#allocation22 + $0x98] sm:$0xff]
        %v5912 = vld [vmem:[#allocation22 + $0xa0] sm:$0xff]
        %v5913 = vld [vmem:[#allocation22 + $0xa8] sm:$0xff]
        %v5914 = vld [vmem:[#allocation22 + $0xb0] sm:$0xff]
        %v5915 = vld [vmem:[#allocation22 + $0xb8] sm:$0xff]
        %v5916 = vld [vmem:[#allocation22 + $0xc0] sm:$0xff]
        %v5917 = vld [vmem:[#allocation22 + $0xc8] sm:$0xff]
        %v5918 = vld [vmem:[#allocation22 + $0xd0] sm:$0xff]
        %v5919 = vld [vmem:[#allocation22 + $0xd8] sm:$0xff]
        %v5920 = vld [vmem:[#allocation22 + $0xe0] sm:$0xff]
        %v5921 = vld [vmem:[#allocation22 + $0xe8] sm:$0xff]
        %v5922 = vld [vmem:[#allocation22 + $0xf0] sm:$0xff]
        %v5923 = vld [vmem:[#allocation22 + $0xf8] sm:$0xff]
        %v5924 = vld [vmem:[#allocation22 + $0x100] sm:$0xff]
        %v5925 = vld [vmem:[#allocation22 + $0x108] sm:$0xff]
        %v5926 = vld [vmem:[#allocation22 + $0x110] sm:$0xff]
        %v5927 = vld [vmem:[#allocation22 + $0x118] sm:$0xff]
        %v5928 = vld [vmem:[#allocation22 + $0x120] sm:$0xff]
        %v5929 = vld [vmem:[#allocation22 + $0x128] sm:$0xff]
        %v5930 = vld [vmem:[#allocation22 + $0x130] sm:$0xff]
        %v5931 = vld [vmem:[#allocation22 + $0x138] sm:$0xff]
        %v5932 = vld [vmem:[#allocation22 + $0x140] sm:$0xff]
        %v5933 = vld [vmem:[#allocation22 + $0x148] sm:$0xff]
        %v5934 = vld [vmem:[#allocation22 + $0x150] sm:$0xff]
        %v5935 = vld [vmem:[#allocation22 + $0x158] sm:$0xff]
        %v5936 = vld [vmem:[#allocation22 + $0x160] sm:$0xff]
        %v5937 = vld [vmem:[#allocation22 + $0x168] sm:$0xff]
        %v5938 = vld [vmem:[#allocation22 + $0x170] sm:$0xff]
        %v5939 = vld [vmem:[#allocation22 + $0x178] sm:$0xff]
        %v5940 = vld [vmem:[#allocation22 + $0x180] sm:$0xff]
        %v5941 = vld [vmem:[#allocation22 + $0x188] sm:$0xff]
        %v5942 = vld [vmem:[#allocation22 + $0x190] sm:$0xff]
        %v5943 = vld [vmem:[#allocation22 + $0x198] sm:$0xff]
        %v5944 = vld [vmem:[#allocation22 + $0x1a0] sm:$0xff]
        %v5945 = vld [vmem:[#allocation22 + $0x1a8] sm:$0xff]
        %v5946 = vld [vmem:[#allocation22 + $0x1b0] sm:$0xff]
        %v5947 = vld [vmem:[#allocation22 + $0x1b8] sm:$0xff]
        %v5948 = vld [vmem:[#allocation22 + $0x1c0] sm:$0xff]
        %v5949 = vld [vmem:[#allocation22 + $0x1c8] sm:$0xff]
        %v5950 = vld [vmem:[#allocation22 + $0x1d0] sm:$0xff]
        %v5951 = vld [vmem:[#allocation22 + $0x1d8] sm:$0xff]
        %v5952 = vld [vmem:[#allocation22 + $0x1e0] sm:$0xff]
        %v5953 = vld [vmem:[#allocation22 + $0x1e8] sm:$0xff]
        %v5954 = vld [vmem:[#allocation22 + $0x1f0] sm:$0xff]
        %v5955 = vld [vmem:[#allocation22 + $0x1f8] sm:$0xff]
        %v5956 = vld [vmem:[%s16] sm:$0x3]
        %v5958 = vperm.slane %v5956, 0
        %v5959 = vperm.slane %v5956, 1
        %v6026 = vunpack.c.l.b16 %v5892
        %v6027 = vunpack.c.h.b16 %v5892
        %v6028 = vunpack.c.l.b16 %v5893
        %v6029 = vunpack.c.h.b16 %v5893
        %v6030 = vunpack.c.l.b16 %v5894
        %v6031 = vunpack.c.h.b16 %v5894
        %v6032 = vunpack.c.l.b16 %v5895
        %v6033 = vunpack.c.h.b16 %v5895
        %v6034 = vunpack.c.l.b16 %v5896
        %v6035 = vunpack.c.h.b16 %v5896
        %v6036 = vunpack.c.l.b16 %v5897
        %v6037 = vunpack.c.h.b16 %v5897
        %v6038 = vunpack.c.l.b16 %v5898
        %v6039 = vunpack.c.h.b16 %v5898
        %v6040 = vunpack.c.l.b16 %v5899
        %v6041 = vunpack.c.h.b16 %v5899
        %v6042 = vunpack.c.l.b16 %v5900
        %v6043 = vunpack.c.h.b16 %v5900
        %v6044 = vunpack.c.l.b16 %v5901
        %v6045 = vunpack.c.h.b16 %v5901
        %v6046 = vunpack.c.l.b16 %v5902
        %v6047 = vunpack.c.h.b16 %v5902
        %v6048 = vunpack.c.l.b16 %v5903
        %v6049 = vunpack.c.h.b16 %v5903
        %v6050 = vunpack.c.l.b16 %v5904
        %v6051 = vunpack.c.h.b16 %v5904
        %v6052 = vunpack.c.l.b16 %v5905
        %v6053 = vunpack.c.h.b16 %v5905
        %v6054 = vunpack.c.l.b16 %v5906
        %v6055 = vunpack.c.h.b16 %v5906
        %v6056 = vunpack.c.l.b16 %v5907
        %v6057 = vunpack.c.h.b16 %v5907
        %v6058 = vunpack.c.l.b16 %v5908
        %v6059 = vunpack.c.h.b16 %v5908
        %v6060 = vunpack.c.l.b16 %v5909
        %v6061 = vunpack.c.h.b16 %v5909
        %v6062 = vunpack.c.l.b16 %v5910
        %v6063 = vunpack.c.h.b16 %v5910
        %v6064 = vunpack.c.l.b16 %v5911
        %v6065 = vunpack.c.h.b16 %v5911
        %v6066 = vunpack.c.l.b16 %v5912
        %v6067 = vunpack.c.h.b16 %v5912
        %v6068 = vunpack.c.l.b16 %v5913
        %v6069 = vunpack.c.h.b16 %v5913
        %v6070 = vunpack.c.l.b16 %v5914
        %v6071 = vunpack.c.h.b16 %v5914
        %v6072 = vunpack.c.l.b16 %v5915
        %v6073 = vunpack.c.h.b16 %v5915
        %v6074 = vunpack.c.l.b16 %v5916
        %v6075 = vunpack.c.h.b16 %v5916
        %v6076 = vunpack.c.l.b16 %v5917
        %v6077 = vunpack.c.h.b16 %v5917
        %v6078 = vunpack.c.l.b16 %v5918
        %v6079 = vunpack.c.h.b16 %v5918
        %v6080 = vunpack.c.l.b16 %v5919
        %v6081 = vunpack.c.h.b16 %v5919
        %v6082 = vunpack.c.l.b16 %v5920
        %v6083 = vunpack.c.h.b16 %v5920
        %v6084 = vunpack.c.l.b16 %v5921
        %v6085 = vunpack.c.h.b16 %v5921
        %v6086 = vunpack.c.l.b16 %v5922
        %v6087 = vunpack.c.h.b16 %v5922
        %v6088 = vunpack.c.l.b16 %v5923
        %v6089 = vunpack.c.h.b16 %v5923
        %v6090 = vunpack.c.l.b16 %v5924
        %v6091 = vunpack.c.h.b16 %v5924
        %v6092 = vunpack.c.l.b16 %v5925
        %v6093 = vunpack.c.h.b16 %v5925
        %v6094 = vunpack.c.l.b16 %v5926
        %v6095 = vunpack.c.h.b16 %v5926
        %v6096 = vunpack.c.l.b16 %v5927
        %v6097 = vunpack.c.h.b16 %v5927
        %v6098 = vunpack.c.l.b16 %v5928
        %v6099 = vunpack.c.h.b16 %v5928
        %v6100 = vunpack.c.l.b16 %v5929
        %v6101 = vunpack.c.h.b16 %v5929
        %v6102 = vunpack.c.l.b16 %v5930
        %v6103 = vunpack.c.h.b16 %v5930
        %v6104 = vunpack.c.l.b16 %v5931
        %v6105 = vunpack.c.h.b16 %v5931
        %v6106 = vunpack.c.l.b16 %v5932
        %v6107 = vunpack.c.h.b16 %v5932
        %v6108 = vunpack.c.l.b16 %v5933
        %v6109 = vunpack.c.h.b16 %v5933
        %v6110 = vunpack.c.l.b16 %v5934
        %v6111 = vunpack.c.h.b16 %v5934
        %v6112 = vunpack.c.l.b16 %v5935
        %v6113 = vunpack.c.h.b16 %v5935
        %v6114 = vunpack.c.l.b16 %v5936
        %v6115 = vunpack.c.h.b16 %v5936
        %v6116 = vunpack.c.l.b16 %v5937
        %v6117 = vunpack.c.h.b16 %v5937
        %v6118 = vunpack.c.l.b16 %v5938
        %v6119 = vunpack.c.h.b16 %v5938
        %v6120 = vunpack.c.l.b16 %v5939
        %v6121 = vunpack.c.h.b16 %v5939
        %v6122 = vunpack.c.l.b16 %v5940
        %v6123 = vunpack.c.h.b16 %v5940
        %v6124 = vunpack.c.l.b16 %v5941
        %v6125 = vunpack.c.h.b16 %v5941
        %v6126 = vunpack.c.l.b16 %v5942
        %v6127 = vunpack.c.h.b16 %v5942
        %v6128 = vunpack.c.l.b16 %v5943
        %v6129 = vunpack.c.h.b16 %v5943
        %v6130 = vunpack.c.l.b16 %v5944
        %v6131 = vunpack.c.h.b16 %v5944
        %v6132 = vunpack.c.l.b16 %v5945
        %v6133 = vunpack.c.h.b16 %v5945
        %v6134 = vunpack.c.l.b16 %v5946
        %v6135 = vunpack.c.h.b16 %v5946
        %v6136 = vunpack.c.l.b16 %v5947
        %v6137 = vunpack.c.h.b16 %v5947
        %v6138 = vunpack.c.l.b16 %v5948
        %v6139 = vunpack.c.h.b16 %v5948
        %v6140 = vunpack.c.l.b16 %v5949
        %v6141 = vunpack.c.h.b16 %v5949
        %v6142 = vunpack.c.l.b16 %v5950
        %v6143 = vunpack.c.h.b16 %v5950
        %v6144 = vunpack.c.l.b16 %v5951
        %v6145 = vunpack.c.h.b16 %v5951
        %v6146 = vunpack.c.l.b16 %v5952
        %v6147 = vunpack.c.h.b16 %v5952
        %v6148 = vunpack.c.l.b16 %v5953
        %v6149 = vunpack.c.h.b16 %v5953
        %v6150 = vunpack.c.l.b16 %v5954
        %v6151 = vunpack.c.h.b16 %v5954
        %v6152 = vunpack.c.l.b16 %v5955
        %v6153 = vunpack.c.h.b16 %v5955
        %v6154 = vpack.c.b16 %v6028, %v6026
        %v6155 = vpack.c.b16 %v6029, %v6027
        %v6156 = vpack.c.b16 %v6032, %v6030
        %v6157 = vpack.c.b16 %v6033, %v6031
        %v6158 = vpack.c.b16 %v6036, %v6034
        %v6159 = vpack.c.b16 %v6037, %v6035
        %v6160 = vpack.c.b16 %v6040, %v6038
        %v6161 = vpack.c.b16 %v6041, %v6039
        %v6162 = vpack.c.b16 %v6044, %v6042
        %v6163 = vpack.c.b16 %v6045, %v6043
        %v6164 = vpack.c.b16 %v6048, %v6046
        %v6165 = vpack.c.b16 %v6049, %v6047
        %v6166 = vpack.c.b16 %v6052, %v6050
        %v6167 = vpack.c.b16 %v6053, %v6051
        %v6168 = vpack.c.b16 %v6056, %v6054
        %v6169 = vpack.c.b16 %v6057, %v6055
        %v6170 = vpack.c.b16 %v6060, %v6058
        %v6171 = vpack.c.b16 %v6061, %v6059
        %v6172 = vpack.c.b16 %v6064, %v6062
        %v6173 = vpack.c.b16 %v6065, %v6063
        %v6174 = vpack.c.b16 %v6068, %v6066
        %v6175 = vpack.c.b16 %v6069, %v6067
        %v6176 = vpack.c.b16 %v6072, %v6070
        %v6177 = vpack.c.b16 %v6073, %v6071
        %v6178 = vpack.c.b16 %v6076, %v6074
        %v6179 = vpack.c.b16 %v6077, %v6075
        %v6180 = vpack.c.b16 %v6080, %v6078
        %v6181 = vpack.c.b16 %v6081, %v6079
        %v6182 = vpack.c.b16 %v6084, %v6082
        %v6183 = vpack.c.b16 %v6085, %v6083
        %v6184 = vpack.c.b16 %v6088, %v6086
        %v6185 = vpack.c.b16 %v6089, %v6087
        %v6186 = vpack.c.b16 %v6092, %v6090
        %v6187 = vpack.c.b16 %v6093, %v6091
        %v6188 = vpack.c.b16 %v6096, %v6094
        %v6189 = vpack.c.b16 %v6097, %v6095
        %v6190 = vpack.c.b16 %v6100, %v6098
        %v6191 = vpack.c.b16 %v6101, %v6099
        %v6192 = vpack.c.b16 %v6104, %v6102
        %v6193 = vpack.c.b16 %v6105, %v6103
        %v6194 = vpack.c.b16 %v6108, %v6106
        %v6195 = vpack.c.b16 %v6109, %v6107
        %v6196 = vpack.c.b16 %v6112, %v6110
        %v6197 = vpack.c.b16 %v6113, %v6111
        %v6198 = vpack.c.b16 %v6116, %v6114
        %v6199 = vpack.c.b16 %v6117, %v6115
        %v6200 = vpack.c.b16 %v6120, %v6118
        %v6201 = vpack.c.b16 %v6121, %v6119
        %v6202 = vpack.c.b16 %v6124, %v6122
        %v6203 = vpack.c.b16 %v6125, %v6123
        %v6204 = vpack.c.b16 %v6128, %v6126
        %v6205 = vpack.c.b16 %v6129, %v6127
        %v6206 = vpack.c.b16 %v6132, %v6130
        %v6207 = vpack.c.b16 %v6133, %v6131
        %v6208 = vpack.c.b16 %v6136, %v6134
        %v6209 = vpack.c.b16 %v6137, %v6135
        %v6210 = vpack.c.b16 %v6140, %v6138
        %v6211 = vpack.c.b16 %v6141, %v6139
        %v6212 = vpack.c.b16 %v6144, %v6142
        %v6213 = vpack.c.b16 %v6145, %v6143
        %v6214 = vpack.c.b16 %v6148, %v6146
        %v6215 = vpack.c.b16 %v6149, %v6147
        %v6216 = vpack.c.b16 %v6152, %v6150
        %v6217 = vpack.c.b16 %v6153, %v6151
        %6282 = vmatpush.bf16.msra.mxu0 %v6168
        %6283 = vmatpush.bf16.msra.mxu0 %v6166
        %6284 = vmatpush.bf16.msra.mxu0 %v6164
        %6285 = vmatpush.bf16.msra.mxu0 %v6162
        %6286 = vmatpush.bf16.msra.mxu0 %v6160
        %6287 = vmatpush.bf16.msra.mxu0 %v6158
        %6288 = vmatpush.bf16.msra.mxu0 %v6156
        %6289 = vmatpush.bf16.msra.mxu0 %v6154
        %6290 = vmatmul.bf16.gmra.mxu0 %v5828
        %v6291 = vpop.f32.mrf.mxu0
        %v6292 = vadd.f32 %v5958, %v6291
        %v6293 = vpop.f32.mrf.mxu0
        %v6294 = vadd.f32 %v5958, %v6293
        %6295 = vmatmul.bf16.gmra.mxu0 %v5832
        %v6296 = vpop.f32.mrf.mxu0
        %v6297 = vadd.f32 %v5958, %v6296
        %v6298 = vpop.f32.mrf.mxu0
        %v6299 = vadd.f32 %v5958, %v6298
        %6300 = vmatmul.bf16.gmra.mxu0 %v5836
        %v6301 = vpop.f32.mrf.mxu0
        %v6302 = vadd.f32 %v5958, %v6301
        %v6303 = vpop.f32.mrf.mxu0
        %v6304 = vadd.f32 %v5958, %v6303
        %6305 = vmatmul.bf16.gmra.mxu0 %v5840
        %v6306 = vpop.f32.mrf.mxu0
        %v6307 = vadd.f32 %v5958, %v6306
        %v6308 = vpop.f32.mrf.mxu0
        %v6309 = vadd.f32 %v5958, %v6308
        %6310 = vmatmul.bf16.gmra.mxu0 %v5844
        %v6311 = vpop.f32.mrf.mxu0
        %v6312 = vadd.f32 %v5958, %v6311
        %v6313 = vpop.f32.mrf.mxu0
        %v6314 = vadd.f32 %v5958, %v6313
        %6315 = vmatmul.bf16.gmra.mxu0 %v5848
        %v6316 = vpop.f32.mrf.mxu0
        %v6317 = vadd.f32 %v5958, %v6316
        %v6318 = vpop.f32.mrf.mxu0
        %v6319 = vadd.f32 %v5958, %v6318
        %6320 = vmatmul.bf16.gmra.mxu0 %v5852
        %v6321 = vpop.f32.mrf.mxu0
        %v6322 = vadd.f32 %v5958, %v6321
        %v6323 = vpop.f32.mrf.mxu0
        %v6324 = vadd.f32 %v5958, %v6323
        %6325 = vmatmul.bf16.gmra.mxu0 %v5856
        %v6326 = vpop.f32.mrf.mxu0
        %v6327 = vadd.f32 %v5958, %v6326
        %v6328 = vpop.f32.mrf.mxu0
        %v6329 = vadd.f32 %v5958, %v6328
        %6330 = vmatmul.bf16.gmra.mxu0 %v5860
        %v6331 = vpop.f32.mrf.mxu0
        %v6332 = vadd.f32 %v5958, %v6331
        %v6333 = vpop.f32.mrf.mxu0
        %v6334 = vadd.f32 %v5958, %v6333
        %6335 = vmatmul.bf16.gmra.mxu0 %v5864
        %v6336 = vpop.f32.mrf.mxu0
        %v6337 = vadd.f32 %v5958, %v6336
        %v6338 = vpop.f32.mrf.mxu0
        %v6339 = vadd.f32 %v5958, %v6338
        %6340 = vmatmul.bf16.gmra.mxu0 %v5868
        %v6341 = vpop.f32.mrf.mxu0
        %v6342 = vadd.f32 %v5958, %v6341
        %v6343 = vpop.f32.mrf.mxu0
        %v6344 = vadd.f32 %v5958, %v6343
        %6345 = vmatmul.bf16.gmra.mxu0 %v5872
        %v6346 = vpop.f32.mrf.mxu0
        %v6347 = vadd.f32 %v5958, %v6346
        %v6348 = vpop.f32.mrf.mxu0
        %v6349 = vadd.f32 %v5958, %v6348
        %6350 = vmatmul.bf16.gmra.mxu0 %v5876
        %v6351 = vpop.f32.mrf.mxu0
        %v6352 = vadd.f32 %v5958, %v6351
        %v6353 = vpop.f32.mrf.mxu0
        %v6354 = vadd.f32 %v5958, %v6353
        %6355 = vmatmul.bf16.gmra.mxu0 %v5880
        %v6356 = vpop.f32.mrf.mxu0
        %v6357 = vadd.f32 %v5958, %v6356
        %v6358 = vpop.f32.mrf.mxu0
        %v6359 = vadd.f32 %v5958, %v6358
        %6360 = vmatmul.bf16.gmra.mxu0 %v5884
        %v6361 = vpop.f32.mrf.mxu0
        %v6362 = vadd.f32 %v5958, %v6361
        %v6363 = vpop.f32.mrf.mxu0
        %v6364 = vadd.f32 %v5958, %v6363
        %6365 = vmatmul.bf16.gmra.mxu0 %v5888
        %v6366 = vpop.f32.mrf.mxu0
        %v6367 = vadd.f32 %v5958, %v6366
        %v6368 = vpop.f32.mrf.mxu0
        %v6369 = vadd.f32 %v5958, %v6368
        %6370 = vdwg.mxu0
        %6371 = vmatpush.bf16.msra.mxu0 %v6184
        %6372 = vmatpush.bf16.msra.mxu0 %v6182
        %6373 = vmatpush.bf16.msra.mxu0 %v6180
        %6374 = vmatpush.bf16.msra.mxu0 %v6178
        %6375 = vmatpush.bf16.msra.mxu0 %v6176
        %6376 = vmatpush.bf16.msra.mxu0 %v6174
        %6377 = vmatpush.bf16.msra.mxu0 %v6172
        %6378 = vmatpush.bf16.msra.mxu0 %v6170
        %6379 = vmatmul.bf16.gmra.mxu0 %v5829
        %v6380 = vpop.f32.mrf.mxu0
        %v6381 = vadd.f32 %v6292, %v6380
        %v6382 = vpop.f32.mrf.mxu0
        %v6383 = vadd.f32 %v6294, %v6382
        %6384 = vmatmul.bf16.gmra.mxu0 %v5833
        %v6385 = vpop.f32.mrf.mxu0
        %v6386 = vadd.f32 %v6297, %v6385
        %v6387 = vpop.f32.mrf.mxu0
        %v6388 = vadd.f32 %v6299, %v6387
        %6389 = vmatmul.bf16.gmra.mxu0 %v5837
        %v6390 = vpop.f32.mrf.mxu0
        %v6391 = vadd.f32 %v6302, %v6390
        %v6392 = vpop.f32.mrf.mxu0
        %v6393 = vadd.f32 %v6304, %v6392
        %6394 = vmatmul.bf16.gmra.mxu0 %v5841
        %v6395 = vpop.f32.mrf.mxu0
        %v6396 = vadd.f32 %v6307, %v6395
        %v6397 = vpop.f32.mrf.mxu0
        %v6398 = vadd.f32 %v6309, %v6397
        %6399 = vmatmul.bf16.gmra.mxu0 %v5845
        %v6400 = vpop.f32.mrf.mxu0
        %v6401 = vadd.f32 %v6312, %v6400
        %v6402 = vpop.f32.mrf.mxu0
        %v6403 = vadd.f32 %v6314, %v6402
        %6404 = vmatmul.bf16.gmra.mxu0 %v5849
        %v6405 = vpop.f32.mrf.mxu0
        %v6406 = vadd.f32 %v6317, %v6405
        %v6407 = vpop.f32.mrf.mxu0
        %v6408 = vadd.f32 %v6319, %v6407
        %6409 = vmatmul.bf16.gmra.mxu0 %v5853
        %v6410 = vpop.f32.mrf.mxu0
        %v6411 = vadd.f32 %v6322, %v6410
        %v6412 = vpop.f32.mrf.mxu0
        %v6413 = vadd.f32 %v6324, %v6412
        %6414 = vmatmul.bf16.gmra.mxu0 %v5857
        %v6415 = vpop.f32.mrf.mxu0
        %v6416 = vadd.f32 %v6327, %v6415
        %v6417 = vpop.f32.mrf.mxu0
        %v6418 = vadd.f32 %v6329, %v6417
        %6419 = vmatmul.bf16.gmra.mxu0 %v5861
        %v6420 = vpop.f32.mrf.mxu0
        %v6421 = vadd.f32 %v6332, %v6420
        %v6422 = vpop.f32.mrf.mxu0
        %v6423 = vadd.f32 %v6334, %v6422
        %6424 = vmatmul.bf16.gmra.mxu0 %v5865
        %v6425 = vpop.f32.mrf.mxu0
        %v6426 = vadd.f32 %v6337, %v6425
        %v6427 = vpop.f32.mrf.mxu0
        %v6428 = vadd.f32 %v6339, %v6427
        %6429 = vmatmul.bf16.gmra.mxu0 %v5869
        %v6430 = vpop.f32.mrf.mxu0
        %v6431 = vadd.f32 %v6342, %v6430
        %v6432 = vpop.f32.mrf.mxu0
        %v6433 = vadd.f32 %v6344, %v6432
        %6434 = vmatmul.bf16.gmra.mxu0 %v5873
        %v6435 = vpop.f32.mrf.mxu0
        %v6436 = vadd.f32 %v6347, %v6435
        %v6437 = vpop.f32.mrf.mxu0
        %v6438 = vadd.f32 %v6349, %v6437
        %6439 = vmatmul.bf16.gmra.mxu0 %v5877
        %v6440 = vpop.f32.mrf.mxu0
        %v6441 = vadd.f32 %v6352, %v6440
        %v6442 = vpop.f32.mrf.mxu0
        %v6443 = vadd.f32 %v6354, %v6442
        %6444 = vmatmul.bf16.gmra.mxu0 %v5881
        %v6445 = vpop.f32.mrf.mxu0
        %v6446 = vadd.f32 %v6357, %v6445
        %v6447 = vpop.f32.mrf.mxu0
        %v6448 = vadd.f32 %v6359, %v6447
        %6449 = vmatmul.bf16.gmra.mxu0 %v5885
        %v6450 = vpop.f32.mrf.mxu0
        %v6451 = vadd.f32 %v6362, %v6450
        %v6452 = vpop.f32.mrf.mxu0
        %v6453 = vadd.f32 %v6364, %v6452
        %6454 = vmatmul.bf16.gmra.mxu0 %v5889
        %v6455 = vpop.f32.mrf.mxu0
        %v6456 = vadd.f32 %v6367, %v6455
        %v6457 = vpop.f32.mrf.mxu0
        %v6458 = vadd.f32 %v6369, %v6457
        %6459 = vdwg.mxu0
        %6460 = vmatpush.bf16.msra.mxu0 %v6200
        %6461 = vmatpush.bf16.msra.mxu0 %v6198
        %6462 = vmatpush.bf16.msra.mxu0 %v6196
        %6463 = vmatpush.bf16.msra.mxu0 %v6194
        %6464 = vmatpush.bf16.msra.mxu0 %v6192
        %6465 = vmatpush.bf16.msra.mxu0 %v6190
        %6466 = vmatpush.bf16.msra.mxu0 %v6188
        %6467 = vmatpush.bf16.msra.mxu0 %v6186
        %6468 = vmatmul.bf16.gmra.mxu0 %v5830
        %v6469 = vpop.f32.mrf.mxu0
        %v6470 = vadd.f32 %v6381, %v6469
        %v6471 = vpop.f32.mrf.mxu0
        %v6472 = vadd.f32 %v6383, %v6471
        %6473 = vmatmul.bf16.gmra.mxu0 %v5834
        %v6474 = vpop.f32.mrf.mxu0
        %v6475 = vadd.f32 %v6386, %v6474
        %v6476 = vpop.f32.mrf.mxu0
        %v6477 = vadd.f32 %v6388, %v6476
        %6478 = vmatmul.bf16.gmra.mxu0 %v5838
        %v6479 = vpop.f32.mrf.mxu0
        %v6480 = vadd.f32 %v6391, %v6479
        %v6481 = vpop.f32.mrf.mxu0
        %v6482 = vadd.f32 %v6393, %v6481
        %6483 = vmatmul.bf16.gmra.mxu0 %v5842
        %v6484 = vpop.f32.mrf.mxu0
        %v6485 = vadd.f32 %v6396, %v6484
        %v6486 = vpop.f32.mrf.mxu0
        %v6487 = vadd.f32 %v6398, %v6486
        %6488 = vmatmul.bf16.gmra.mxu0 %v5846
        %v6489 = vpop.f32.mrf.mxu0
        %v6490 = vadd.f32 %v6401, %v6489
        %v6491 = vpop.f32.mrf.mxu0
        %v6492 = vadd.f32 %v6403, %v6491
        %6493 = vmatmul.bf16.gmra.mxu0 %v5850
        %v6494 = vpop.f32.mrf.mxu0
        %v6495 = vadd.f32 %v6406, %v6494
        %v6496 = vpop.f32.mrf.mxu0
        %v6497 = vadd.f32 %v6408, %v6496
        %6498 = vmatmul.bf16.gmra.mxu0 %v5854
        %v6499 = vpop.f32.mrf.mxu0
        %v6500 = vadd.f32 %v6411, %v6499
        %v6501 = vpop.f32.mrf.mxu0
        %v6502 = vadd.f32 %v6413, %v6501
        %6503 = vmatmul.bf16.gmra.mxu0 %v5858
        %v6504 = vpop.f32.mrf.mxu0
        %v6505 = vadd.f32 %v6416, %v6504
        %v6506 = vpop.f32.mrf.mxu0
        %v6507 = vadd.f32 %v6418, %v6506
        %6508 = vmatmul.bf16.gmra.mxu0 %v5862
        %v6509 = vpop.f32.mrf.mxu0
        %v6510 = vadd.f32 %v6421, %v6509
        %v6511 = vpop.f32.mrf.mxu0
        %v6512 = vadd.f32 %v6423, %v6511
        %6513 = vmatmul.bf16.gmra.mxu0 %v5866
        %v6514 = vpop.f32.mrf.mxu0
        %v6515 = vadd.f32 %v6426, %v6514
        %v6516 = vpop.f32.mrf.mxu0
        %v6517 = vadd.f32 %v6428, %v6516
        %6518 = vmatmul.bf16.gmra.mxu0 %v5870
        %v6519 = vpop.f32.mrf.mxu0
        %v6520 = vadd.f32 %v6431, %v6519
        %v6521 = vpop.f32.mrf.mxu0
        %v6522 = vadd.f32 %v6433, %v6521
        %6523 = vmatmul.bf16.gmra.mxu0 %v5874
        %v6524 = vpop.f32.mrf.mxu0
        %v6525 = vadd.f32 %v6436, %v6524
        %v6526 = vpop.f32.mrf.mxu0
        %v6527 = vadd.f32 %v6438, %v6526
        %6528 = vmatmul.bf16.gmra.mxu0 %v5878
        %v6529 = vpop.f32.mrf.mxu0
        %v6530 = vadd.f32 %v6441, %v6529
        %v6531 = vpop.f32.mrf.mxu0
        %v6532 = vadd.f32 %v6443, %v6531
        %6533 = vmatmul.bf16.gmra.mxu0 %v5882
        %v6534 = vpop.f32.mrf.mxu0
        %v6535 = vadd.f32 %v6446, %v6534
        %v6536 = vpop.f32.mrf.mxu0
        %v6537 = vadd.f32 %v6448, %v6536
        %6538 = vmatmul.bf16.gmra.mxu0 %v5886
        %v6539 = vpop.f32.mrf.mxu0
        %v6540 = vadd.f32 %v6451, %v6539
        %v6541 = vpop.f32.mrf.mxu0
        %v6542 = vadd.f32 %v6453, %v6541
        %6543 = vmatmul.bf16.gmra.mxu0 %v5890
        %v6544 = vpop.f32.mrf.mxu0
        %v6545 = vadd.f32 %v6456, %v6544
        %v6546 = vpop.f32.mrf.mxu0
        %v6547 = vadd.f32 %v6458, %v6546
        %6548 = vdwg.mxu0
        %6549 = vmatpush.bf16.msra.mxu0 %v6216
        %6550 = vmatpush.bf16.msra.mxu0 %v6214
        %6551 = vmatpush.bf16.msra.mxu0 %v6212
        %6552 = vmatpush.bf16.msra.mxu0 %v6210
        %6553 = vmatpush.bf16.msra.mxu0 %v6208
        %6554 = vmatpush.bf16.msra.mxu0 %v6206
        %6555 = vmatpush.bf16.msra.mxu0 %v6204
        %6556 = vmatpush.bf16.msra.mxu0 %v6202
        %6557 = vmatmul.bf16.gmra.mxu0 %v5831
        %v6558 = vpop.f32.mrf.mxu0
        %v6559 = vadd.f32 %v6470, %v6558
        %v6560 = vpop.f32.mrf.mxu0
        %v6561 = vadd.f32 %v6472, %v6560
        %6562 = vmatmul.bf16.gmra.mxu0 %v5835
        %v6563 = vpop.f32.mrf.mxu0
        %v6564 = vadd.f32 %v6475, %v6563
        %v6565 = vpop.f32.mrf.mxu0
        %v6566 = vadd.f32 %v6477, %v6565
        %6567 = vmatmul.bf16.gmra.mxu0 %v5839
        %v6568 = vpop.f32.mrf.mxu0
        %v6569 = vadd.f32 %v6480, %v6568
        %v6570 = vpop.f32.mrf.mxu0
        %v6571 = vadd.f32 %v6482, %v6570
        %6572 = vmatmul.bf16.gmra.mxu0 %v5843
        %v6573 = vpop.f32.mrf.mxu0
        %v6574 = vadd.f32 %v6485, %v6573
        %v6575 = vpop.f32.mrf.mxu0
        %v6576 = vadd.f32 %v6487, %v6575
        %6577 = vmatmul.bf16.gmra.mxu0 %v5847
        %v6578 = vpop.f32.mrf.mxu0
        %v6579 = vadd.f32 %v6490, %v6578
        %v6580 = vpop.f32.mrf.mxu0
        %v6581 = vadd.f32 %v6492, %v6580
        %6582 = vmatmul.bf16.gmra.mxu0 %v5851
        %v6583 = vpop.f32.mrf.mxu0
        %v6584 = vadd.f32 %v6495, %v6583
        %v6585 = vpop.f32.mrf.mxu0
        %v6586 = vadd.f32 %v6497, %v6585
        %6587 = vmatmul.bf16.gmra.mxu0 %v5855
        %v6588 = vpop.f32.mrf.mxu0
        %v6589 = vadd.f32 %v6500, %v6588
        %v6590 = vpop.f32.mrf.mxu0
        %v6591 = vadd.f32 %v6502, %v6590
        %6592 = vmatmul.bf16.gmra.mxu0 %v5859
        %v6593 = vpop.f32.mrf.mxu0
        %v6594 = vadd.f32 %v6505, %v6593
        %v6595 = vpop.f32.mrf.mxu0
        %v6596 = vadd.f32 %v6507, %v6595
        %6597 = vmatmul.bf16.gmra.mxu0 %v5863
        %v6598 = vpop.f32.mrf.mxu0
        %v6599 = vadd.f32 %v6510, %v6598
        %v6600 = vpop.f32.mrf.mxu0
        %v6601 = vadd.f32 %v6512, %v6600
        %6602 = vmatmul.bf16.gmra.mxu0 %v5867
        %v6603 = vpop.f32.mrf.mxu0
        %v6604 = vadd.f32 %v6515, %v6603
        %v6605 = vpop.f32.mrf.mxu0
        %v6606 = vadd.f32 %v6517, %v6605
        %6607 = vmatmul.bf16.gmra.mxu0 %v5871
        %v6608 = vpop.f32.mrf.mxu0
        %v6609 = vadd.f32 %v6520, %v6608
        %v6610 = vpop.f32.mrf.mxu0
        %v6611 = vadd.f32 %v6522, %v6610
        %6612 = vmatmul.bf16.gmra.mxu0 %v5875
        %v6613 = vpop.f32.mrf.mxu0
        %v6614 = vadd.f32 %v6525, %v6613
        %v6615 = vpop.f32.mrf.mxu0
        %v6616 = vadd.f32 %v6527, %v6615
        %6617 = vmatmul.bf16.gmra.mxu0 %v5879
        %v6618 = vpop.f32.mrf.mxu0
        %v6619 = vadd.f32 %v6530, %v6618
        %v6620 = vpop.f32.mrf.mxu0
        %v6621 = vadd.f32 %v6532, %v6620
        %6622 = vmatmul.bf16.gmra.mxu0 %v5883
        %v6623 = vpop.f32.mrf.mxu0
        %v6624 = vadd.f32 %v6535, %v6623
        %v6625 = vpop.f32.mrf.mxu0
        %v6626 = vadd.f32 %v6537, %v6625
        %6627 = vmatmul.bf16.gmra.mxu0 %v5887
        %v6628 = vpop.f32.mrf.mxu0
        %v6629 = vadd.f32 %v6540, %v6628
        %v6630 = vpop.f32.mrf.mxu0
        %v6631 = vadd.f32 %v6542, %v6630
        %6632 = vmatmul.bf16.gmra.mxu0 %v5891
        %v6633 = vpop.f32.mrf.mxu0
        %v6634 = vadd.f32 %v6545, %v6633
        %v6635 = vpop.f32.mrf.mxu0
        %v6636 = vadd.f32 %v6547, %v6635
        %6637 = vdwg.mxu0
        %6638 = vmatpush.bf16.msra.mxu0 %v6169
        %6639 = vmatpush.bf16.msra.mxu0 %v6167
        %6640 = vmatpush.bf16.msra.mxu0 %v6165
        %6641 = vmatpush.bf16.msra.mxu0 %v6163
        %6642 = vmatpush.bf16.msra.mxu0 %v6161
        %6643 = vmatpush.bf16.msra.mxu0 %v6159
        %6644 = vmatpush.bf16.msra.mxu0 %v6157
        %6645 = vmatpush.bf16.msra.mxu0 %v6155
        %6646 = vmatmul.bf16.gmra.mxu0 %v5828
        %v6647 = vpop.f32.mrf.mxu0
        %v6648 = vadd.f32 %v5959, %v6647
        %v6649 = vpop.f32.mrf.mxu0
        %v6650 = vadd.f32 %v5959, %v6649
        %6651 = vmatmul.bf16.gmra.mxu0 %v5832
        %v6652 = vpop.f32.mrf.mxu0
        %v6653 = vadd.f32 %v5959, %v6652
        %v6654 = vpop.f32.mrf.mxu0
        %v6655 = vadd.f32 %v5959, %v6654
        %6656 = vmatmul.bf16.gmra.mxu0 %v5836
        %v6657 = vpop.f32.mrf.mxu0
        %v6658 = vadd.f32 %v5959, %v6657
        %v6659 = vpop.f32.mrf.mxu0
        %v6660 = vadd.f32 %v5959, %v6659
        %6661 = vmatmul.bf16.gmra.mxu0 %v5840
        %v6662 = vpop.f32.mrf.mxu0
        %v6663 = vadd.f32 %v5959, %v6662
        %v6664 = vpop.f32.mrf.mxu0
        %v6665 = vadd.f32 %v5959, %v6664
        %6666 = vmatmul.bf16.gmra.mxu0 %v5844
        %v6667 = vpop.f32.mrf.mxu0
        %v6668 = vadd.f32 %v5959, %v6667
        %v6669 = vpop.f32.mrf.mxu0
        %v6670 = vadd.f32 %v5959, %v6669
        %6671 = vmatmul.bf16.gmra.mxu0 %v5848
        %v6672 = vpop.f32.mrf.mxu0
        %v6673 = vadd.f32 %v5959, %v6672
        %v6674 = vpop.f32.mrf.mxu0
        %v6675 = vadd.f32 %v5959, %v6674
        %6676 = vmatmul.bf16.gmra.mxu0 %v5852
        %v6677 = vpop.f32.mrf.mxu0
        %v6678 = vadd.f32 %v5959, %v6677
        %v6679 = vpop.f32.mrf.mxu0
        %v6680 = vadd.f32 %v5959, %v6679
        %6681 = vmatmul.bf16.gmra.mxu0 %v5856
        %v6682 = vpop.f32.mrf.mxu0
        %v6683 = vadd.f32 %v5959, %v6682
        %v6684 = vpop.f32.mrf.mxu0
        %v6685 = vadd.f32 %v5959, %v6684
        %6686 = vmatmul.bf16.gmra.mxu0 %v5860
        %v6687 = vpop.f32.mrf.mxu0
        %v6688 = vadd.f32 %v5959, %v6687
        %v6689 = vpop.f32.mrf.mxu0
        %v6690 = vadd.f32 %v5959, %v6689
        %6691 = vmatmul.bf16.gmra.mxu0 %v5864
        %v6692 = vpop.f32.mrf.mxu0
        %v6693 = vadd.f32 %v5959, %v6692
        %v6694 = vpop.f32.mrf.mxu0
        %v6695 = vadd.f32 %v5959, %v6694
        %6696 = vmatmul.bf16.gmra.mxu0 %v5868
        %v6697 = vpop.f32.mrf.mxu0
        %v6698 = vadd.f32 %v5959, %v6697
        %v6699 = vpop.f32.mrf.mxu0
        %v6700 = vadd.f32 %v5959, %v6699
        %6701 = vmatmul.bf16.gmra.mxu0 %v5872
        %v6702 = vpop.f32.mrf.mxu0
        %v6703 = vadd.f32 %v5959, %v6702
        %v6704 = vpop.f32.mrf.mxu0
        %v6705 = vadd.f32 %v5959, %v6704
        %6706 = vmatmul.bf16.gmra.mxu0 %v5876
        %v6707 = vpop.f32.mrf.mxu0
        %v6708 = vadd.f32 %v5959, %v6707
        %v6709 = vpop.f32.mrf.mxu0
        %v6710 = vadd.f32 %v5959, %v6709
        %6711 = vmatmul.bf16.gmra.mxu0 %v5880
        %v6712 = vpop.f32.mrf.mxu0
        %v6713 = vadd.f32 %v5959, %v6712
        %v6714 = vpop.f32.mrf.mxu0
        %v6715 = vadd.f32 %v5959, %v6714
        %6716 = vmatmul.bf16.gmra.mxu0 %v5884
        %v6717 = vpop.f32.mrf.mxu0
        %v6718 = vadd.f32 %v5959, %v6717
        %v6719 = vpop.f32.mrf.mxu0
        %v6720 = vadd.f32 %v5959, %v6719
        %6721 = vmatmul.bf16.gmra.mxu0 %v5888
        %v6722 = vpop.f32.mrf.mxu0
        %v6723 = vadd.f32 %v5959, %v6722
        %v6724 = vpop.f32.mrf.mxu0
        %v6725 = vadd.f32 %v5959, %v6724
        %6726 = vdwg.mxu0
        %6727 = vmatpush.bf16.msra.mxu0 %v6185
        %6728 = vmatpush.bf16.msra.mxu0 %v6183
        %6729 = vmatpush.bf16.msra.mxu0 %v6181
        %6730 = vmatpush.bf16.msra.mxu0 %v6179
        %6731 = vmatpush.bf16.msra.mxu0 %v6177
        %6732 = vmatpush.bf16.msra.mxu0 %v6175
        %6733 = vmatpush.bf16.msra.mxu0 %v6173
        %6734 = vmatpush.bf16.msra.mxu0 %v6171
        %6735 = vmatmul.bf16.gmra.mxu0 %v5829
        %v6736 = vpop.f32.mrf.mxu0
        %v6737 = vadd.f32 %v6648, %v6736
        %v6738 = vpop.f32.mrf.mxu0
        %v6739 = vadd.f32 %v6650, %v6738
        %6740 = vmatmul.bf16.gmra.mxu0 %v5833
        %v6741 = vpop.f32.mrf.mxu0
        %v6742 = vadd.f32 %v6653, %v6741
        %v6743 = vpop.f32.mrf.mxu0
        %v6744 = vadd.f32 %v6655, %v6743
        %6745 = vmatmul.bf16.gmra.mxu0 %v5837
        %v6746 = vpop.f32.mrf.mxu0
        %v6747 = vadd.f32 %v6658, %v6746
        %v6748 = vpop.f32.mrf.mxu0
        %v6749 = vadd.f32 %v6660, %v6748
        %6750 = vmatmul.bf16.gmra.mxu0 %v5841
        %v6751 = vpop.f32.mrf.mxu0
        %v6752 = vadd.f32 %v6663, %v6751
        %v6753 = vpop.f32.mrf.mxu0
        %v6754 = vadd.f32 %v6665, %v6753
        %6755 = vmatmul.bf16.gmra.mxu0 %v5845
        %v6756 = vpop.f32.mrf.mxu0
        %v6757 = vadd.f32 %v6668, %v6756
        %v6758 = vpop.f32.mrf.mxu0
        %v6759 = vadd.f32 %v6670, %v6758
        %6760 = vmatmul.bf16.gmra.mxu0 %v5849
        %v6761 = vpop.f32.mrf.mxu0
        %v6762 = vadd.f32 %v6673, %v6761
        %v6763 = vpop.f32.mrf.mxu0
        %v6764 = vadd.f32 %v6675, %v6763
        %6765 = vmatmul.bf16.gmra.mxu0 %v5853
        %v6766 = vpop.f32.mrf.mxu0
        %v6767 = vadd.f32 %v6678, %v6766
        %v6768 = vpop.f32.mrf.mxu0
        %v6769 = vadd.f32 %v6680, %v6768
        %6770 = vmatmul.bf16.gmra.mxu0 %v5857
        %v6771 = vpop.f32.mrf.mxu0
        %v6772 = vadd.f32 %v6683, %v6771
        %v6773 = vpop.f32.mrf.mxu0
        %v6774 = vadd.f32 %v6685, %v6773
        %6775 = vmatmul.bf16.gmra.mxu0 %v5861
        %v6776 = vpop.f32.mrf.mxu0
        %v6777 = vadd.f32 %v6688, %v6776
        %v6778 = vpop.f32.mrf.mxu0
        %v6779 = vadd.f32 %v6690, %v6778
        %6780 = vmatmul.bf16.gmra.mxu0 %v5865
        %v6781 = vpop.f32.mrf.mxu0
        %v6782 = vadd.f32 %v6693, %v6781
        %v6783 = vpop.f32.mrf.mxu0
        %v6784 = vadd.f32 %v6695, %v6783
        %6785 = vmatmul.bf16.gmra.mxu0 %v5869
        %v6786 = vpop.f32.mrf.mxu0
        %v6787 = vadd.f32 %v6698, %v6786
        %v6788 = vpop.f32.mrf.mxu0
        %v6789 = vadd.f32 %v6700, %v6788
        %6790 = vmatmul.bf16.gmra.mxu0 %v5873
        %v6791 = vpop.f32.mrf.mxu0
        %v6792 = vadd.f32 %v6703, %v6791
        %v6793 = vpop.f32.mrf.mxu0
        %v6794 = vadd.f32 %v6705, %v6793
        %6795 = vmatmul.bf16.gmra.mxu0 %v5877
        %v6796 = vpop.f32.mrf.mxu0
        %v6797 = vadd.f32 %v6708, %v6796
        %v6798 = vpop.f32.mrf.mxu0
        %v6799 = vadd.f32 %v6710, %v6798
        %6800 = vmatmul.bf16.gmra.mxu0 %v5881
        %v6801 = vpop.f32.mrf.mxu0
        %v6802 = vadd.f32 %v6713, %v6801
        %v6803 = vpop.f32.mrf.mxu0
        %v6804 = vadd.f32 %v6715, %v6803
        %6805 = vmatmul.bf16.gmra.mxu0 %v5885
        %v6806 = vpop.f32.mrf.mxu0
        %v6807 = vadd.f32 %v6718, %v6806
        %v6808 = vpop.f32.mrf.mxu0
        %v6809 = vadd.f32 %v6720, %v6808
        %6810 = vmatmul.bf16.gmra.mxu0 %v5889
        %v6811 = vpop.f32.mrf.mxu0
        %v6812 = vadd.f32 %v6723, %v6811
        %v6813 = vpop.f32.mrf.mxu0
        %v6814 = vadd.f32 %v6725, %v6813
        %6815 = vdwg.mxu0
        %6816 = vmatpush.bf16.msra.mxu0 %v6201
        %6817 = vmatpush.bf16.msra.mxu0 %v6199
        %6818 = vmatpush.bf16.msra.mxu0 %v6197
        %6819 = vmatpush.bf16.msra.mxu0 %v6195
        %6820 = vmatpush.bf16.msra.mxu0 %v6193
        %6821 = vmatpush.bf16.msra.mxu0 %v6191
        %6822 = vmatpush.bf16.msra.mxu0 %v6189
        %6823 = vmatpush.bf16.msra.mxu0 %v6187
        %6824 = vmatmul.bf16.gmra.mxu0 %v5830
        %v6825 = vpop.f32.mrf.mxu0
        %v6826 = vadd.f32 %v6737, %v6825
        %v6827 = vpop.f32.mrf.mxu0
        %v6828 = vadd.f32 %v6739, %v6827
        %6829 = vmatmul.bf16.gmra.mxu0 %v5834
        %v6830 = vpop.f32.mrf.mxu0
        %v6831 = vadd.f32 %v6742, %v6830
        %v6832 = vpop.f32.mrf.mxu0
        %v6833 = vadd.f32 %v6744, %v6832
        %6834 = vmatmul.bf16.gmra.mxu0 %v5838
        %v6835 = vpop.f32.mrf.mxu0
        %v6836 = vadd.f32 %v6747, %v6835
        %v6837 = vpop.f32.mrf.mxu0
        %v6838 = vadd.f32 %v6749, %v6837
        %6839 = vmatmul.bf16.gmra.mxu0 %v5842
        %v6840 = vpop.f32.mrf.mxu0
        %v6841 = vadd.f32 %v6752, %v6840
        %v6842 = vpop.f32.mrf.mxu0
        %v6843 = vadd.f32 %v6754, %v6842
        %6844 = vmatmul.bf16.gmra.mxu0 %v5846
        %v6845 = vpop.f32.mrf.mxu0
        %v6846 = vadd.f32 %v6757, %v6845
        %v6847 = vpop.f32.mrf.mxu0
        %v6848 = vadd.f32 %v6759, %v6847
        %6849 = vmatmul.bf16.gmra.mxu0 %v5850
        %v6850 = vpop.f32.mrf.mxu0
        %v6851 = vadd.f32 %v6762, %v6850
        %v6852 = vpop.f32.mrf.mxu0
        %v6853 = vadd.f32 %v6764, %v6852
        %6854 = vmatmul.bf16.gmra.mxu0 %v5854
        %v6855 = vpop.f32.mrf.mxu0
        %v6856 = vadd.f32 %v6767, %v6855
        %v6857 = vpop.f32.mrf.mxu0
        %v6858 = vadd.f32 %v6769, %v6857
        %6859 = vmatmul.bf16.gmra.mxu0 %v5858
        %v6860 = vpop.f32.mrf.mxu0
        %v6861 = vadd.f32 %v6772, %v6860
        %v6862 = vpop.f32.mrf.mxu0
        %v6863 = vadd.f32 %v6774, %v6862
        %6864 = vmatmul.bf16.gmra.mxu0 %v5862
        %v6865 = vpop.f32.mrf.mxu0
        %v6866 = vadd.f32 %v6777, %v6865
        %v6867 = vpop.f32.mrf.mxu0
        %v6868 = vadd.f32 %v6779, %v6867
        %6869 = vmatmul.bf16.gmra.mxu0 %v5866
        %v6870 = vpop.f32.mrf.mxu0
        %v6871 = vadd.f32 %v6782, %v6870
        %v6872 = vpop.f32.mrf.mxu0
        %v6873 = vadd.f32 %v6784, %v6872
        %6874 = vmatmul.bf16.gmra.mxu0 %v5870
        %v6875 = vpop.f32.mrf.mxu0
        %v6876 = vadd.f32 %v6787, %v6875
        %v6877 = vpop.f32.mrf.mxu0
        %v6878 = vadd.f32 %v6789, %v6877
        %6879 = vmatmul.bf16.gmra.mxu0 %v5874
        %v6880 = vpop.f32.mrf.mxu0
        %v6881 = vadd.f32 %v6792, %v6880
        %v6882 = vpop.f32.mrf.mxu0
        %v6883 = vadd.f32 %v6794, %v6882
        %6884 = vmatmul.bf16.gmra.mxu0 %v5878
        %v6885 = vpop.f32.mrf.mxu0
        %v6886 = vadd.f32 %v6797, %v6885
        %v6887 = vpop.f32.mrf.mxu0
        %v6888 = vadd.f32 %v6799, %v6887
        %6889 = vmatmul.bf16.gmra.mxu0 %v5882
        %v6890 = vpop.f32.mrf.mxu0
        %v6891 = vadd.f32 %v6802, %v6890
        %v6892 = vpop.f32.mrf.mxu0
        %v6893 = vadd.f32 %v6804, %v6892
        %6894 = vmatmul.bf16.gmra.mxu0 %v5886
        %v6895 = vpop.f32.mrf.mxu0
        %v6896 = vadd.f32 %v6807, %v6895
        %v6897 = vpop.f32.mrf.mxu0
        %v6898 = vadd.f32 %v6809, %v6897
        %6899 = vmatmul.bf16.gmra.mxu0 %v5890
        %v6900 = vpop.f32.mrf.mxu0
        %v6901 = vadd.f32 %v6812, %v6900
        %v6902 = vpop.f32.mrf.mxu0
        %v6903 = vadd.f32 %v6814, %v6902
        %6904 = vdwg.mxu0
        %6905 = vmatpush.bf16.msra.mxu0 %v6217
        %6906 = vmatpush.bf16.msra.mxu0 %v6215
        %6907 = vmatpush.bf16.msra.mxu0 %v6213
        %6908 = vmatpush.bf16.msra.mxu0 %v6211
        %6909 = vmatpush.bf16.msra.mxu0 %v6209
        %6910 = vmatpush.bf16.msra.mxu0 %v6207
        %6911 = vmatpush.bf16.msra.mxu0 %v6205
        %6912 = vmatpush.bf16.msra.mxu0 %v6203
        %6913 = vmatmul.bf16.gmra.mxu0 %v5831
        %v6914 = vpop.f32.mrf.mxu0
        %v6915 = vadd.f32 %v6826, %v6914
        %v6916 = vpop.f32.mrf.mxu0
        %v6917 = vadd.f32 %v6828, %v6916
        %6918 = vmatmul.bf16.gmra.mxu0 %v5835
        %v6919 = vpop.f32.mrf.mxu0
        %v6920 = vadd.f32 %v6831, %v6919
        %v6921 = vpop.f32.mrf.mxu0
        %v6922 = vadd.f32 %v6833, %v6921
        %6923 = vmatmul.bf16.gmra.mxu0 %v5839
        %v6924 = vpop.f32.mrf.mxu0
        %v6925 = vadd.f32 %v6836, %v6924
        %v6926 = vpop.f32.mrf.mxu0
        %v6927 = vadd.f32 %v6838, %v6926
        %6928 = vmatmul.bf16.gmra.mxu0 %v5843
        %v6929 = vpop.f32.mrf.mxu0
        %v6930 = vadd.f32 %v6841, %v6929
        %v6931 = vpop.f32.mrf.mxu0
        %v6932 = vadd.f32 %v6843, %v6931
        %6933 = vmatmul.bf16.gmra.mxu0 %v5847
        %v6934 = vpop.f32.mrf.mxu0
        %v6935 = vadd.f32 %v6846, %v6934
        %v6936 = vpop.f32.mrf.mxu0
        %v6937 = vadd.f32 %v6848, %v6936
        %6938 = vmatmul.bf16.gmra.mxu0 %v5851
        %v6939 = vpop.f32.mrf.mxu0
        %v6940 = vadd.f32 %v6851, %v6939
        %v6941 = vpop.f32.mrf.mxu0
        %v6942 = vadd.f32 %v6853, %v6941
        %6943 = vmatmul.bf16.gmra.mxu0 %v5855
        %v6944 = vpop.f32.mrf.mxu0
        %v6945 = vadd.f32 %v6856, %v6944
        %v6946 = vpop.f32.mrf.mxu0
        %v6947 = vadd.f32 %v6858, %v6946
        %6948 = vmatmul.bf16.gmra.mxu0 %v5859
        %v6949 = vpop.f32.mrf.mxu0
        %v6950 = vadd.f32 %v6861, %v6949
        %v6951 = vpop.f32.mrf.mxu0
        %v6952 = vadd.f32 %v6863, %v6951
        %6953 = vmatmul.bf16.gmra.mxu0 %v5863
        %v6954 = vpop.f32.mrf.mxu0
        %v6955 = vadd.f32 %v6866, %v6954
        %v6956 = vpop.f32.mrf.mxu0
        %v6957 = vadd.f32 %v6868, %v6956
        %6958 = vmatmul.bf16.gmra.mxu0 %v5867
        %v6959 = vpop.f32.mrf.mxu0
        %v6960 = vadd.f32 %v6871, %v6959
        %v6961 = vpop.f32.mrf.mxu0
        %v6962 = vadd.f32 %v6873, %v6961
        %6963 = vmatmul.bf16.gmra.mxu0 %v5871
        %v6964 = vpop.f32.mrf.mxu0
        %v6965 = vadd.f32 %v6876, %v6964
        %v6966 = vpop.f32.mrf.mxu0
        %v6967 = vadd.f32 %v6878, %v6966
        %6968 = vmatmul.bf16.gmra.mxu0 %v5875
        %v6969 = vpop.f32.mrf.mxu0
        %v6970 = vadd.f32 %v6881, %v6969
        %v6971 = vpop.f32.mrf.mxu0
        %v6972 = vadd.f32 %v6883, %v6971
        %6973 = vmatmul.bf16.gmra.mxu0 %v5879
        %v6974 = vpop.f32.mrf.mxu0
        %v6975 = vadd.f32 %v6886, %v6974
        %v6976 = vpop.f32.mrf.mxu0
        %v6977 = vadd.f32 %v6888, %v6976
        %6978 = vmatmul.bf16.gmra.mxu0 %v5883
        %v6979 = vpop.f32.mrf.mxu0
        %v6980 = vadd.f32 %v6891, %v6979
        %v6981 = vpop.f32.mrf.mxu0
        %v6982 = vadd.f32 %v6893, %v6981
        %6983 = vmatmul.bf16.gmra.mxu0 %v5887
        %v6984 = vpop.f32.mrf.mxu0
        %v6985 = vadd.f32 %v6896, %v6984
        %v6986 = vpop.f32.mrf.mxu0
        %v6987 = vadd.f32 %v6898, %v6986
        %6988 = vmatmul.bf16.gmra.mxu0 %v5891
        %v6989 = vpop.f32.mrf.mxu0
        %v6990 = vadd.f32 %v6901, %v6989
        %v6991 = vpop.f32.mrf.mxu0
        %v6992 = vadd.f32 %v6903, %v6991
        %6993 = vdwg.mxu0
        %v6994 = vmul.f32 %v6559, 0.5
        %v6995 = vmul.f32 %v6915, 0.5
        %v6996 = vmul.f32 %v6561, 0.5
        %v6997 = vmul.f32 %v6917, 0.5
        %v6998 = vmul.f32 %v6564, 0.5
        %v6999 = vmul.f32 %v6920, 0.5
        %v7000 = vmul.f32 %v6566, 0.5
        %v7001 = vmul.f32 %v6922, 0.5
        %v7002 = vmul.f32 %v6569, 0.5
        %v7003 = vmul.f32 %v6925, 0.5
        %v7004 = vmul.f32 %v6571, 0.5
        %v7005 = vmul.f32 %v6927, 0.5
        %v7006 = vmul.f32 %v6574, 0.5
        %v7007 = vmul.f32 %v6930, 0.5
        %v7008 = vmul.f32 %v6576, 0.5
        %v7009 = vmul.f32 %v6932, 0.5
        %v7010 = vmul.f32 %v6579, 0.5
        %v7011 = vmul.f32 %v6935, 0.5
        %v7012 = vmul.f32 %v6581, 0.5
        %v7013 = vmul.f32 %v6937, 0.5
        %v7014 = vmul.f32 %v6584, 0.5
        %v7015 = vmul.f32 %v6940, 0.5
        %v7016 = vmul.f32 %v6586, 0.5
        %v7017 = vmul.f32 %v6942, 0.5
        %v7018 = vmul.f32 %v6589, 0.5
        %v7019 = vmul.f32 %v6945, 0.5
        %v7020 = vmul.f32 %v6591, 0.5
        %v7021 = vmul.f32 %v6947, 0.5
        %v7022 = vmul.f32 %v6594, 0.5
        %v7023 = vmul.f32 %v6950, 0.5
        %v7024 = vmul.f32 %v6596, 0.5
        %v7025 = vmul.f32 %v6952, 0.5
        %v7026 = vmul.f32 %v6599, 0.5
        %v7027 = vmul.f32 %v6955, 0.5
        %v7028 = vmul.f32 %v6601, 0.5
        %v7029 = vmul.f32 %v6957, 0.5
        %v7030 = vmul.f32 %v6604, 0.5
        %v7031 = vmul.f32 %v6960, 0.5
        %v7032 = vmul.f32 %v6606, 0.5
        %v7033 = vmul.f32 %v6962, 0.5
        %v7034 = vmul.f32 %v6609, 0.5
        %v7035 = vmul.f32 %v6965, 0.5
        %v7036 = vmul.f32 %v6611, 0.5
        %v7037 = vmul.f32 %v6967, 0.5
        %v7038 = vmul.f32 %v6614, 0.5
        %v7039 = vmul.f32 %v6970, 0.5
        %v7040 = vmul.f32 %v6616, 0.5
        %v7041 = vmul.f32 %v6972, 0.5
        %v7042 = vmul.f32 %v6619, 0.5
        %v7043 = vmul.f32 %v6975, 0.5
        %v7044 = vmul.f32 %v6621, 0.5
        %v7045 = vmul.f32 %v6977, 0.5
        %v7046 = vmul.f32 %v6624, 0.5
        %v7047 = vmul.f32 %v6980, 0.5
        %v7048 = vmul.f32 %v6626, 0.5
        %v7049 = vmul.f32 %v6982, 0.5
        %v7050 = vmul.f32 %v6629, 0.5
        %v7051 = vmul.f32 %v6985, 0.5
        %v7052 = vmul.f32 %v6631, 0.5
        %v7053 = vmul.f32 %v6987, 0.5
        %v7054 = vmul.f32 %v6634, 0.5
        %v7055 = vmul.f32 %v6990, 0.5
        %v7056 = vmul.f32 %v6636, 0.5
        %v7057 = vmul.f32 %v6992, 0.5
        %v7058 = vtanh.pop %v6994
        %v7059 = vtanh.pop %v6995
        %v7060 = vtanh.pop %v6996
        %v7061 = vtanh.pop %v6997
        %v7062 = vtanh.pop %v6998
        %v7063 = vtanh.pop %v6999
        %v7064 = vtanh.pop %v7000
        %v7065 = vtanh.pop %v7001
        %v7066 = vtanh.pop %v7002
        %v7067 = vtanh.pop %v7003
        %v7068 = vtanh.pop %v7004
        %v7069 = vtanh.pop %v7005
        %v7070 = vtanh.pop %v7006
        %v7071 = vtanh.pop %v7007
        %v7072 = vtanh.pop %v7008
        %v7073 = vtanh.pop %v7009
        %v7074 = vtanh.pop %v7010
        %v7075 = vtanh.pop %v7011
        %v7076 = vtanh.pop %v7012
        %v7077 = vtanh.pop %v7013
        %v7078 = vtanh.pop %v7014
        %v7079 = vtanh.pop %v7015
        %v7080 = vtanh.pop %v7016
        %v7081 = vtanh.pop %v7017
        %v7082 = vtanh.pop %v7018
        %v7083 = vtanh.pop %v7019
        %v7084 = vtanh.pop %v7020
        %v7085 = vtanh.pop %v7021
        %v7086 = vtanh.pop %v7022
        %v7087 = vtanh.pop %v7023
        %v7088 = vtanh.pop %v7024
        %v7089 = vtanh.pop %v7025
        %v7090 = vtanh.pop %v7026
        %v7091 = vtanh.pop %v7027
        %v7092 = vtanh.pop %v7028
        %v7093 = vtanh.pop %v7029
        %v7094 = vtanh.pop %v7030
        %v7095 = vtanh.pop %v7031
        %v7096 = vtanh.pop %v7032
        %v7097 = vtanh.pop %v7033
        %v7098 = vtanh.pop %v7034
        %v7099 = vtanh.pop %v7035
        %v7100 = vtanh.pop %v7036
        %v7101 = vtanh.pop %v7037
        %v7102 = vtanh.pop %v7038
        %v7103 = vtanh.pop %v7039
        %v7104 = vtanh.pop %v7040
        %v7105 = vtanh.pop %v7041
        %v7106 = vtanh.pop %v7042
        %v7107 = vtanh.pop %v7043
        %v7108 = vtanh.pop %v7044
        %v7109 = vtanh.pop %v7045
        %v7110 = vtanh.pop %v7046
        %v7111 = vtanh.pop %v7047
        %v7112 = vtanh.pop %v7048
        %v7113 = vtanh.pop %v7049
        %v7114 = vtanh.pop %v7050
        %v7115 = vtanh.pop %v7051
        %v7116 = vtanh.pop %v7052
        %v7117 = vtanh.pop %v7053
        %v7118 = vtanh.pop %v7054
        %v7119 = vtanh.pop %v7055
        %v7120 = vtanh.pop %v7056
        %v7121 = vtanh.pop %v7057
        %v7122 = vmul.f32 %v7058, 0.5
        %v7123 = vmul.f32 %v7059, 0.5
        %v7124 = vmul.f32 %v7060, 0.5
        %v7125 = vmul.f32 %v7061, 0.5
        %v7126 = vmul.f32 %v7062, 0.5
        %v7127 = vmul.f32 %v7063, 0.5
        %v7128 = vmul.f32 %v7064, 0.5
        %v7129 = vmul.f32 %v7065, 0.5
        %v7130 = vmul.f32 %v7066, 0.5
        %v7131 = vmul.f32 %v7067, 0.5
        %v7132 = vmul.f32 %v7068, 0.5
        %v7133 = vmul.f32 %v7069, 0.5
        %v7134 = vmul.f32 %v7070, 0.5
        %v7135 = vmul.f32 %v7071, 0.5
        %v7136 = vmul.f32 %v7072, 0.5
        %v7137 = vmul.f32 %v7073, 0.5
        %v7138 = vmul.f32 %v7074, 0.5
        %v7139 = vmul.f32 %v7075, 0.5
        %v7140 = vmul.f32 %v7076, 0.5
        %v7141 = vmul.f32 %v7077, 0.5
        %v7142 = vmul.f32 %v7078, 0.5
        %v7143 = vmul.f32 %v7079, 0.5
        %v7144 = vmul.f32 %v7080, 0.5
        %v7145 = vmul.f32 %v7081, 0.5
        %v7146 = vmul.f32 %v7082, 0.5
        %v7147 = vmul.f32 %v7083, 0.5
        %v7148 = vmul.f32 %v7084, 0.5
        %v7149 = vmul.f32 %v7085, 0.5
        %v7150 = vmul.f32 %v7086, 0.5
        %v7151 = vmul.f32 %v7087, 0.5
        %v7152 = vmul.f32 %v7088, 0.5
        %v7153 = vmul.f32 %v7089, 0.5
        %v7154 = vmul.f32 %v7090, 0.5
        %v7155 = vmul.f32 %v7091, 0.5
        %v7156 = vmul.f32 %v7092, 0.5
        %v7157 = vmul.f32 %v7093, 0.5
        %v7158 = vmul.f32 %v7094, 0.5
        %v7159 = vmul.f32 %v7095, 0.5
        %v7160 = vmul.f32 %v7096, 0.5
        %v7161 = vmul.f32 %v7097, 0.5
        %v7162 = vmul.f32 %v7098, 0.5
        %v7163 = vmul.f32 %v7099, 0.5
        %v7164 = vmul.f32 %v7100, 0.5
        %v7165 = vmul.f32 %v7101, 0.5
        %v7166 = vmul.f32 %v7102, 0.5
        %v7167 = vmul.f32 %v7103, 0.5
        %v7168 = vmul.f32 %v7104, 0.5
        %v7169 = vmul.f32 %v7105, 0.5
        %v7170 = vmul.f32 %v7106, 0.5
        %v7171 = vmul.f32 %v7107, 0.5
        %v7172 = vmul.f32 %v7108, 0.5
        %v7173 = vmul.f32 %v7109, 0.5
        %v7174 = vmul.f32 %v7110, 0.5
        %v7175 = vmul.f32 %v7111, 0.5
        %v7176 = vmul.f32 %v7112, 0.5
        %v7177 = vmul.f32 %v7113, 0.5
        %v7178 = vmul.f32 %v7114, 0.5
        %v7179 = vmul.f32 %v7115, 0.5
        %v7180 = vmul.f32 %v7116, 0.5
        %v7181 = vmul.f32 %v7117, 0.5
        %v7182 = vmul.f32 %v7118, 0.5
        %v7183 = vmul.f32 %v7119, 0.5
        %v7184 = vmul.f32 %v7120, 0.5
        %v7185 = vmul.f32 %v7121, 0.5
        %v7186 = vadd.f32 %v7122, 0.5
        %v7187 = vadd.f32 %v7123, 0.5
        %v7188 = vadd.f32 %v7124, 0.5
        %v7189 = vadd.f32 %v7125, 0.5
        %v7190 = vadd.f32 %v7126, 0.5
        %v7191 = vadd.f32 %v7127, 0.5
        %v7192 = vadd.f32 %v7128, 0.5
        %v7193 = vadd.f32 %v7129, 0.5
        %v7194 = vadd.f32 %v7130, 0.5
        %v7195 = vadd.f32 %v7131, 0.5
        %v7196 = vadd.f32 %v7132, 0.5
        %v7197 = vadd.f32 %v7133, 0.5
        %v7198 = vadd.f32 %v7134, 0.5
        %v7199 = vadd.f32 %v7135, 0.5
        %v7200 = vadd.f32 %v7136, 0.5
        %v7201 = vadd.f32 %v7137, 0.5
        %v7202 = vadd.f32 %v7138, 0.5
        %v7203 = vadd.f32 %v7139, 0.5
        %v7204 = vadd.f32 %v7140, 0.5
        %v7205 = vadd.f32 %v7141, 0.5
        %v7206 = vadd.f32 %v7142, 0.5
        %v7207 = vadd.f32 %v7143, 0.5
        %v7208 = vadd.f32 %v7144, 0.5
        %v7209 = vadd.f32 %v7145, 0.5
        %v7210 = vadd.f32 %v7146, 0.5
        %v7211 = vadd.f32 %v7147, 0.5
        %v7212 = vadd.f32 %v7148, 0.5
        %v7213 = vadd.f32 %v7149, 0.5
        %v7214 = vadd.f32 %v7150, 0.5
        %v7215 = vadd.f32 %v7151, 0.5
        %v7216 = vadd.f32 %v7152, 0.5
        %v7217 = vadd.f32 %v7153, 0.5
        %v7218 = vadd.f32 %v7154, 0.5
        %v7219 = vadd.f32 %v7155, 0.5
        %v7220 = vadd.f32 %v7156, 0.5
        %v7221 = vadd.f32 %v7157, 0.5
        %v7222 = vadd.f32 %v7158, 0.5
        %v7223 = vadd.f32 %v7159, 0.5
        %v7224 = vadd.f32 %v7160, 0.5
        %v7225 = vadd.f32 %v7161, 0.5
        %v7226 = vadd.f32 %v7162, 0.5
        %v7227 = vadd.f32 %v7163, 0.5
        %v7228 = vadd.f32 %v7164, 0.5
        %v7229 = vadd.f32 %v7165, 0.5
        %v7230 = vadd.f32 %v7166, 0.5
        %v7231 = vadd.f32 %v7167, 0.5
        %v7232 = vadd.f32 %v7168, 0.5
        %v7233 = vadd.f32 %v7169, 0.5
        %v7234 = vadd.f32 %v7170, 0.5
        %v7235 = vadd.f32 %v7171, 0.5
        %v7236 = vadd.f32 %v7172, 0.5
        %v7237 = vadd.f32 %v7173, 0.5
        %v7238 = vadd.f32 %v7174, 0.5
        %v7239 = vadd.f32 %v7175, 0.5
        %v7240 = vadd.f32 %v7176, 0.5
        %v7241 = vadd.f32 %v7177, 0.5
        %v7242 = vadd.f32 %v7178, 0.5
        %v7243 = vadd.f32 %v7179, 0.5
        %v7244 = vadd.f32 %v7180, 0.5
        %v7245 = vadd.f32 %v7181, 0.5
        %v7246 = vadd.f32 %v7182, 0.5
        %v7247 = vadd.f32 %v7183, 0.5
        %v7248 = vadd.f32 %v7184, 0.5
        %v7249 = vadd.f32 %v7185, 0.5
        %v7250 = vpack.c.bf16 %v7187, %v7186
        %v7251 = vpack.c.bf16 %v7189, %v7188
        %v7252 = vpack.c.bf16 %v7191, %v7190
        %v7253 = vpack.c.bf16 %v7193, %v7192
        %v7254 = vpack.c.bf16 %v7195, %v7194
        %v7255 = vpack.c.bf16 %v7197, %v7196
        %v7256 = vpack.c.bf16 %v7199, %v7198
        %v7257 = vpack.c.bf16 %v7201, %v7200
        %v7258 = vpack.c.bf16 %v7203, %v7202
        %v7259 = vpack.c.bf16 %v7205, %v7204
        %v7260 = vpack.c.bf16 %v7207, %v7206
        %v7261 = vpack.c.bf16 %v7209, %v7208
        %v7262 = vpack.c.bf16 %v7211, %v7210
        %v7263 = vpack.c.bf16 %v7213, %v7212
        %v7264 = vpack.c.bf16 %v7215, %v7214
        %v7265 = vpack.c.bf16 %v7217, %v7216
        %v7266 = vpack.c.bf16 %v7219, %v7218
        %v7267 = vpack.c.bf16 %v7221, %v7220
        %v7268 = vpack.c.bf16 %v7223, %v7222
        %v7269 = vpack.c.bf16 %v7225, %v7224
        %v7270 = vpack.c.bf16 %v7227, %v7226
        %v7271 = vpack.c.bf16 %v7229, %v7228
        %v7272 = vpack.c.bf16 %v7231, %v7230
        %v7273 = vpack.c.bf16 %v7233, %v7232
        %v7274 = vpack.c.bf16 %v7235, %v7234
        %v7275 = vpack.c.bf16 %v7237, %v7236
        %v7276 = vpack.c.bf16 %v7239, %v7238
        %v7277 = vpack.c.bf16 %v7241, %v7240
        %v7278 = vpack.c.bf16 %v7243, %v7242
        %v7279 = vpack.c.bf16 %v7245, %v7244
        %v7280 = vpack.c.bf16 %v7247, %v7246
        %v7281 = vpack.c.bf16 %v7249, %v7248
        %7282 = vst [vmem:[%s759] sm:$0xff] %v7250
        %7283 = vst [vmem:[%s759 + $0x8] sm:$0xff] %v7251
        %7284 = vst [vmem:[%s759 + $0x10] sm:$0xff] %v7252
        %7285 = vst [vmem:[%s759 + $0x18] sm:$0xff] %v7253
        %7286 = vst [vmem:[%s759 + $0x20] sm:$0xff] %v7254
        %7287 = vst [vmem:[%s759 + $0x28] sm:$0xff] %v7255
        %7288 = vst [vmem:[%s759 + $0x30] sm:$0xff] %v7256
        %7289 = vst [vmem:[%s759 + $0x38] sm:$0xff] %v7257
        %7290 = vst [vmem:[%s759 + $0x40] sm:$0xff] %v7258
        %7291 = vst [vmem:[%s759 + $0x48] sm:$0xff] %v7259
        %7292 = vst [vmem:[%s759 + $0x50] sm:$0xff] %v7260
        %7293 = vst [vmem:[%s759 + $0x58] sm:$0xff] %v7261
        %7294 = vst [vmem:[%s759 + $0x60] sm:$0xff] %v7262
        %7295 = vst [vmem:[%s759 + $0x68] sm:$0xff] %v7263
        %7296 = vst [vmem:[%s759 + $0x70] sm:$0xff] %v7264
        %7297 = vst [vmem:[%s759 + $0x78] sm:$0xff] %v7265
        %7298 = vst [vmem:[%s759 + $0x80] sm:$0xff] %v7266
        %7299 = vst [vmem:[%s759 + $0x88] sm:$0xff] %v7267
        %7300 = vst [vmem:[%s759 + $0x90] sm:$0xff] %v7268
        %7301 = vst [vmem:[%s759 + $0x98] sm:$0xff] %v7269
        %7302 = vst [vmem:[%s759 + $0xa0] sm:$0xff] %v7270
        %7303 = vst [vmem:[%s759 + $0xa8] sm:$0xff] %v7271
        %7304 = vst [vmem:[%s759 + $0xb0] sm:$0xff] %v7272
        %7305 = vst [vmem:[%s759 + $0xb8] sm:$0xff] %v7273
        %7306 = vst [vmem:[%s759 + $0xc0] sm:$0xff] %v7274
        %7307 = vst [vmem:[%s759 + $0xc8] sm:$0xff] %v7275
        %7308 = vst [vmem:[%s759 + $0xd0] sm:$0xff] %v7276
        %7309 = vst [vmem:[%s759 + $0xd8] sm:$0xff] %v7277
        %7310 = vst [vmem:[%s759 + $0xe0] sm:$0xff] %v7278
        %7311 = vst [vmem:[%s759 + $0xe8] sm:$0xff] %v7279
        %7312 = vst [vmem:[%s759 + $0xf0] sm:$0xff] %v7280
        %7313 = vst [vmem:[%s759 + $0xf8] sm:$0xff] %v7281
        %s7314 = sand.u32 %s410, 1
        %s7315 = scalar_lea.sflag [#allocation4], %s7314
        %s7316 = sand.u32 %s410, 1
        %s7317 = smul.addr %s7316, 256
        %s7318 = scalar_lea.vmem [#allocation23], %s7317
        // Predicated region
        $region141: #{tpu_custom_call.1} parent=87 // pred_check
          %p7319 = pneg %p420
        $region142: #{tpu_custom_call.1} parent=87 // pred_check_branch
          %7321 = sbr.rel (%p7319) target = $region144
        $region143: #{tpu_custom_call.1} parent=87 // pred_region
          %s7322 = smul.u32 32, %s40
          %7324 = vsyncadd %s7315, 0
          %s7325 = smul.addr %s7322, 2
          %s7326 = smul.addr %s7325, 4
          %s7327 = scalar_lea.hbm %s17, %s7326
          %s7328 = sshll.u32 %s7318, 4
          %s7329 = int_to_ptr.vmem [resolvable:$true] %s7328
          %s7330 = sshll.u32 %s7327, 4
          %s7331 = int_to_ptr.hbm [resolvable:$true] %s7330
          %7336 = dma.vmem_to_hbm [thread:$0]  %s7329, 4096, %s7331, %s7315, 128, 128, 8
        $region144: #{tpu_custom_call.1} parent=87 // pred_fallthru
          _
      $region88: #{tpu_custom_call.1} parent=5 // pred_fallthru
        _
      %p7337 = scmp.le.s32.totalorder 2, %s35
      // Predicated region
      $region145: #{tpu_custom_call.1} parent=5 // pred_check
        %p7338 = pneg %p7337
      $region146: #{tpu_custom_call.1} parent=5 // pred_check_branch
        %7340 = sbr.rel (%p7338) target = $region148
      $region147: #{tpu_custom_call.1} parent=5 // pred_region
        %s7341 = ssub.s32 %s35, 2
        // Predicated region
        $region149: #{tpu_custom_call.1} parent=147 // pred_check
          %p7342 = pneg %p426
        $region150: #{tpu_custom_call.1} parent=147 // pred_check_branch
          %7344 = sbr.rel (%p7342) target = $region152
        $region151: #{tpu_custom_call.1} parent=147 // pred_region
          %s7345 = sand.u32 %s411, 1
          %s7346 = scalar_lea.sflag [#allocation4], %s7345
          %s7347 = sand.u32 %s411, 1
          %s7348 = smul.addr %s7347, 256
          %s7349 = scalar_lea.vmem [#allocation23], %s7348
          %7351 = dma.done %s7346, 4096
        $region152: #{tpu_custom_call.1} parent=147 // pred_fallthru
          _
      $region148: #{tpu_custom_call.1} parent=5 // pred_fallthru
        _
    $region6: #{tpu_custom_call.1} parent=1 // loop_footer
      %s39 = sadd.s32 1, %s35
    $region7: #{tpu_custom_call.1} parent=1 // loop_footer_branch
      %34 = sbr.rel target = $region3
    $region8: #{tpu_custom_call.1} parent=1 // loop_exit
      _
    %7352 = vsyncpa [#allocation3], 1
    %s7353 = scalar_lea.sflag [#allocation3], 1
    %7354 = vsyncpa %s7353, 1
    %7355 = vsyncpa [#allocation6], 1
    %7356 = vsyncpa [#allocation9], 1
    %7357 = vsyncpa [#allocation12], 1
    %7358 = vsyncpa [#allocation15], 1
    %7359 = vsyncpa [#allocation18], 1
    %7360 = vsyncpa [#allocation21], 1
    %7361 = vsyncpa [#allocation4], 1
    %s7362 = scalar_lea.sflag [#allocation4], 1
    %7363 = vsyncpa %s7362, 1

</llo_original>
